<compile_context>
chip_gen: v5e
topology: v5e:2x2
jax: 0.10.0
libtpu: 0.0.40
codegen_flags: <defaults>
</compile_context>

<pallas_src>
import functools
import math

import jax
import jax.numpy as jnp
from jax.experimental import pallas as pl
from jax.experimental.pallas import tpu as pltpu


def _round_up(x, m):
    return ((x + m - 1) // m) * m


# -----------------------------------------------------------------------------
# Pallas fused matmul + bias + activation kernel
#   Grid: 1-D over M tiles only.  K and N use full-extent blocks (satisfies the
#   (8,128) rule via "block dim == array dim"), so no K/N padding, no reduction
#   axis, no accumulator scratch.  A/B are bf16 on the MXU, f32 accumulation.
# -----------------------------------------------------------------------------
def _matmul_kernel(a_ref, b_ref, bias_ref, o_ref, *, activation):
    r = jnp.dot(a_ref[...], b_ref[...], preferred_element_type=jnp.float32)
    r = r + bias_ref[...]
    if activation == "relu":
        r = jnp.maximum(r, 0.0)
    elif activation == "sigmoid":
        r = jax.nn.sigmoid(r)
    elif activation == "tanh":
        r = jnp.tanh(r)
    o_ref[...] = r.astype(o_ref.dtype)


def pallas_matmul(a, b, bias=None, activation="none", tm=256):
    """out = act(a @ b + bias). a: (M,K), b: (K,N), bias: (N,). f32 output."""
    M, K = a.shape
    K2, N = b.shape
    assert K == K2
    if bias is None:
        bias = jnp.zeros((N,), jnp.float32)

    # Only the M dimension is tiled / padded (multiple of 16 for bf16 sublanes).
    tm = min(tm, _round_up(M, 16))
    Mp = _round_up(M, tm)
    a_p = a.astype(jnp.bfloat16)
    if Mp != M:
        a_p = jnp.pad(a_p, ((0, Mp - M), (0, 0)))
    b_p = b.astype(jnp.bfloat16)
    bias_p = bias.astype(jnp.float32).reshape(1, N)

    out = pl.pallas_call(
        functools.partial(_matmul_kernel, activation=activation),
        out_shape=jax.ShapeDtypeStruct((Mp, N), jnp.float32),
        grid_spec=pltpu.PrefetchScalarGridSpec(
            num_scalar_prefetch=0,
            grid=(Mp // tm,),
            in_specs=[
                pl.BlockSpec((tm, K), lambda i: (i, 0)),
                pl.BlockSpec((K, N), lambda i: (0, 0)),   # constant index: resident
                pl.BlockSpec((1, N), lambda i: (0, 0)),
            ],
            out_specs=pl.BlockSpec((tm, N), lambda i: (i, 0)),
        ),
        compiler_params=pltpu.CompilerParams(
            dimension_semantics=("parallel",)),
    )(a_p, b_p, bias_p)
    if Mp != M:
        out = out[:M]
    return out


# -----------------------------------------------------------------------------
# Batched keypoint-feature cross-correlation kernel:  sim[p] = f1[p] @ f2[p].T
# One pallas_call over all (pair, batch) slices instead of a Python loop.
# -----------------------------------------------------------------------------
def _sim_kernel(f1_ref, f2_ref, o_ref):
    o_ref[...] = jax.lax.dot_general(
        f1_ref[...], f2_ref[...],
        dimension_numbers=(((1,), (1,)), ((), ())),
        preferred_element_type=jnp.float32)


def pallas_batched_similarity(f1, f2):
    """f1: (P, N1, D), f2: (P, N2, D) -> (P, N1, N2)."""
    P, N1, D = f1.shape
    _, N2, _ = f2.shape
    f1b = f1.astype(jnp.bfloat16)
    f2b = f2.astype(jnp.bfloat16)
    return pl.pallas_call(
        _sim_kernel,
        out_shape=jax.ShapeDtypeStruct((P, N1, N2), jnp.float32),
        grid_spec=pltpu.PrefetchScalarGridSpec(
            num_scalar_prefetch=0,
            grid=(P,),
            in_specs=[
                pl.BlockSpec((None, N1, D), lambda p: (p, 0, 0)),
                pl.BlockSpec((None, N2, D), lambda p: (p, 0, 0)),
            ],
            out_specs=pl.BlockSpec((None, N1, N2), lambda p: (p, 0, 0)),
        ),
        compiler_params=pltpu.CompilerParams(
            dimension_semantics=("parallel",)),
    )(f1b, f2b)


# -----------------------------------------------------------------------------
# Convolution via channels-last im2col (glue) + Pallas matmul (compute)
# -----------------------------------------------------------------------------
def _im2col_nhwc(x, kh, kw, stride, padding):
    # x: (B, H, W, C) -> (B*Hout*Wout, kh*kw*C), K ordered (dy, dx, c).
    B, H, W, C = x.shape
    if padding:
        x = jnp.pad(x, ((0, 0), (padding, padding), (padding, padding), (0, 0)))
    Hout = (H + 2 * padding - kh) // stride + 1
    Wout = (W + 2 * padding - kw) // stride + 1
    cols = []
    for dy in range(kh):
        for dx in range(kw):
            cols.append(x[:, dy:dy + stride * Hout:stride,
                          dx:dx + stride * Wout:stride, :])
    cols = jnp.concatenate(cols, axis=-1)          # (B, Hout, Wout, kh*kw*C)
    return cols.reshape(B * Hout * Wout, kh * kw * C), Hout, Wout


def conv2d_nhwc(x, w, b, stride=1, padding=1, activation="none"):
    # x: (B, H, W, Cin) NHWC ; w: (Cout, Cin, kh, kw) torch layout ; b: (Cout,)
    B = x.shape[0]
    Cout, Cin, kh, kw = w.shape
    cols, Hout, Wout = _im2col_nhwc(x, kh, kw, stride, padding)
    # reorder weight K-axis to (dy, dx, cin) to match the NHWC im2col ordering
    w2 = jnp.transpose(w, (2, 3, 1, 0)).reshape(kh * kw * Cin, Cout)
    out = pallas_matmul(cols, w2, b, activation)   # (B*Hout*Wout, Cout)
    return out.reshape(B, Hout, Wout, Cout)        # stays NHWC, no transpose


def upsample2x(x):
    # nearest-neighbour, NHWC (glue)
    x = jnp.repeat(x, 2, axis=1)
    x = jnp.repeat(x, 2, axis=2)
    return x


# -----------------------------------------------------------------------------
# Parameter construction (deterministic, synthetic)
# -----------------------------------------------------------------------------
def _init_conv(key, cout, cin, k):
    w = jax.random.normal(key, (cout, cin, k, k), jnp.float32)
    w = w * (1.0 / math.sqrt(cin * k * k))
    b = jnp.zeros((cout,), jnp.float32)
    return w, b


def build_params(key):
    p = {}
    names = [
        # depth encoder (ResNet-style strided stack, scaled down)
        ("enc1", 16, 3, 3), ("enc2", 32, 16, 3), ("enc3", 64, 32, 3),
        # depth decoder
        ("dec1", 32, 64, 3), ("dec2", 16, 32, 3), ("dec3", 16, 16, 3),
        ("disp", 1, 16, 3),
        # keypoint net backbone (cell = 8)
        ("kp1", 32, 3, 3), ("kp2", 64, 32, 3), ("kp3", 64, 64, 3),
        # keypoint heads (fused at run time into one N=259 matmul)
        ("kp_score", 1, 64, 1), ("kp_coord", 2, 64, 1), ("kp_feat", 256, 64, 1),
    ]
    keys = jax.random.split(key, len(names))
    for k_i, (name, cout, cin, ksz) in zip(keys, names):
        w, b = _init_conv(k_i, cout, cin, ksz)
        p[name + "_w"], p[name + "_b"] = w, b
    return p


# -----------------------------------------------------------------------------
# Sub-networks (all NHWC internally)
# -----------------------------------------------------------------------------
def depth_encoder(p, x):
    f1 = conv2d_nhwc(x, p["enc1_w"], p["enc1_b"], stride=2, padding=1, activation="relu")
    f2 = conv2d_nhwc(f1, p["enc2_w"], p["enc2_b"], stride=2, padding=1, activation="relu")
    f3 = conv2d_nhwc(f2, p["enc3_w"], p["enc3_b"], stride=2, padding=1, activation="relu")
    return [f1, f2, f3]


def depth_decoder(p, feats):
    h = feats[-1]
    h = conv2d_nhwc(h, p["dec1_w"], p["dec1_b"], activation="relu")
    h = upsample2x(h)
    h = conv2d_nhwc(h, p["dec2_w"], p["dec2_b"], activation="relu")
    h = upsample2x(h)
    h = conv2d_nhwc(h, p["dec3_w"], p["dec3_b"], activation="relu")
    h = upsample2x(h)
    disp = conv2d_nhwc(h, p["disp_w"], p["disp_b"], activation="sigmoid")
    return disp  # (B, H, W, 1) NHWC


def keypoint_net(p, x, cell=8):
    h = conv2d_nhwc(x, p["kp1_w"], p["kp1_b"], stride=2, padding=1, activation="relu")
    h = conv2d_nhwc(h, p["kp2_w"], p["kp2_b"], stride=2, padding=1, activation="relu")
    h = conv2d_nhwc(h, p["kp3_w"], p["kp3_b"], stride=2, padding=1, activation="relu")
    B, Hc, Wc, C = h.shape

    # Fused 1x1 heads: [score(1) | coord(2) | feat(256)] -> one lane-dense
    # N=259 matmul over the shared backbone feature map.
    w_heads = jnp.concatenate([
        p["kp_score_w"].reshape(1, C).T,
        p["kp_coord_w"].reshape(2, C).T,
        p["kp_feat_w"].reshape(256, C).T], axis=1)                  # (C, 259)
    b_heads = jnp.concatenate([p["kp_score_b"], p["kp_coord_b"], p["kp_feat_b"]])
    heads = pallas_matmul(h.reshape(B * Hc * Wc, C), w_heads, b_heads)
    heads = heads.reshape(B, Hc, Wc, 1 + 2 + 256)

    score = jax.nn.sigmoid(heads[..., 0:1])
    offset = jnp.tanh(heads[..., 1:3])
    feat = heads[..., 3:]

    # KP2D-style cell-anchored coordinates (glue)
    ys = jnp.arange(Hc, dtype=jnp.float32) * cell + cell / 2.0
    xs = jnp.arange(Wc, dtype=jnp.float32) * cell + cell / 2.0
    gy, gx = jnp.meshgrid(ys, xs, indexing="ij")
    base = jnp.stack([gx, gy], axis=-1)[None]                       # (1,Hc,Wc,2)
    coord = base + offset * (cell / 2.0)
    return score, coord, feat


def reshape_kp2d(score, coord, feat):
    # eval-mode (self.training == 0) semantics of the original forward.
    # Activations are already NHWC, so permute(0,2,3,1) is a no-op here.
    B, Hc, Wc, _ = score.shape
    N = Hc * Wc
    return [score.reshape(B, N), coord.reshape(B, N, 2), feat.reshape(B, N, 256)]


def pose_estimator_get_pose_pairs(coord_a, coord_b, feat_a, feat_b):
    """Batched over P = num_pairs * B. Returns R: (P,3,3), t: (P,3,1)."""
    f1n = feat_a / (jnp.linalg.norm(feat_a, axis=-1, keepdims=True) + 1e-6)
    f2n = feat_b / (jnp.linalg.norm(feat_b, axis=-1, keepdims=True) + 1e-6)
    sim = pallas_batched_similarity(f1n, f2n)                       # (P, N, N)
    match = jnp.argmax(sim, axis=-1)                                # (P, N)
    matched_c2 = jnp.take_along_axis(coord_b, match[..., None], axis=1)
    disp = jnp.mean(matched_c2 - coord_a, axis=1)                   # (P, 2)
    P = disp.shape[0]
    t = jnp.concatenate([disp, jnp.zeros((P, 1), jnp.float32)], axis=-1)[..., None]
    R = jnp.broadcast_to(jnp.eye(3, dtype=jnp.float32), (P, 3, 3))
    # TODO(synk): essential-matrix estimation / RANSAC (cv2-based in
    # PoseEstimation.get_pose) has no Pallas equivalent; R is identity and t is
    # the mean matched-keypoint displacement (z component 0).
    return R, t


# -----------------------------------------------------------------------------
# KP3D_Baseline.forward (eval mode, optional branches disabled by options)
# -----------------------------------------------------------------------------
class Options:
    scales = [0]
    use_pnp = False
    kp_training_2dwarp = False
    kp_training_3dwarp_next = False
    kp_training_3dwarp_previous = False
    kp_training_2dwarp_start_epoch = 10 ** 9
    kp_training_3dwarp_start_epoch = 10 ** 9
    use_posenet_for_3dwarping = False


@jax.jit
def _forward_impl(params, img_aug0, img0, img1, imgm1):
    to_nhwc = lambda x: jnp.transpose(x, (0, 2, 3, 1))

    # depth branch
    depth_features = depth_encoder(params, to_nhwc(img_aug0))
    disp_nhwc = depth_decoder(params, depth_features)
    disp = jnp.transpose(disp_nhwc, (0, 3, 1, 2))                   # back to NCHW

    # keypoint branch: frames 0, +1, -1 batched through ONE keypoint_net pass
    B = img0.shape[0]
    kp_in = jnp.concatenate([to_nhwc(img0), to_nhwc(img1), to_nhwc(imgm1)], axis=0)
    score, coord, feat = reshape_kp2d(*keypoint_net(params, kp_in))
    coord1, coord2, coord3 = coord[:B], coord[B:2 * B], coord[2 * B:]
    feat1, feat2, feat3 = feat[:B], feat[B:2 * B], feat[2 * B:]

    # pose estimation (non-PnP branch), both frame pairs batched together
    coord_a = jnp.concatenate([coord1, coord1], axis=0)
    coord_b = jnp.concatenate([coord2, coord3], axis=0)
    feat_a = jnp.concatenate([feat1, feat1], axis=0)
    feat_b = jnp.concatenate([feat2, feat3], axis=0)
    R, t = pose_estimator_get_pose_pairs(coord_a, coord_b, feat_a, feat_b)
    return disp, R[:B], t[:B], R[B:], t[B:]


def kp3d_forward(params, input_image, epoch, batch_idx, opt):
    outputs = {}
    disp, R_t1, t_t1, R_t2, t_t2 = _forward_impl(
        params,
        input_image[("color_aug", 0, 0)],
        input_image[("color", 0, 0)],
        input_image[("color", 1, 0)],
        input_image[("color", -1, 0)])

    outputs[("disp", 0)] = disp
    # (optional 2d/3d-warp, PnP and PoseNet outputs are gated off by
    #  epoch/options, exactly as in the original forward when those flags are
    #  false)
    outputs["R_t1"] = R_t1
    outputs["t_t1"] = t_t1
    outputs["R_t2"] = R_t2
    outputs["t_t2"] = t_t2
    return outputs


# -----------------------------------------------------------------------------
if __name__ == "__main__":
    key = jax.random.PRNGKey(0)
    k_params, k0, k1, k2, k3 = jax.random.split(key, 5)

    params = build_params(k_params)

    B, C, H, W = 2, 3, 32, 32
    input_image = {
        ("color_aug", 0, 0): jax.random.uniform(k0, (B, C, H, W), jnp.float32),
        ("color", 0, 0): jax.random.uniform(k1, (B, C, H, W), jnp.float32),
        ("color", 1, 0): jax.random.uniform(k2, (B, C, H, W), jnp.float32),
        ("color", -1, 0): jax.random.uniform(k3, (B, C, H, W), jnp.float32),
    }

    outputs = kp3d_forward(params, input_image, epoch=0, batch_idx=0, opt=Options())
    # NOTE: block on the list of values (the dict has mixed str/tuple keys, so
    # it is not a sortable pytree itself).
    jax.block_until_ready(list(outputs.values()))

    # light sanity checks on shapes implied by the forward
    assert outputs[("disp", 0)].shape == (B, 1, H, W)
    assert outputs["R_t1"].shape == (B, 3, 3)
    assert outputs["t_t1"].shape == (B, 3, 1)
    assert outputs["R_t2"].shape == (B, 3, 3)
    assert outputs["t_t2"].shape == (B, 3, 1)
    assert bool(jnp.all(jnp.isfinite(outputs[("disp", 0)])))

    print("KERNEL_OK")
</pallas_src>

<mosaic_0001>
module attributes {stable_mosaic.version = 11 : i64} {
  func.func @_matmul_kernel(%arg0: i32, %arg1: memref<256x27xbf16, #tpu.memory_space<vmem>>, %arg2: memref<27x16xbf16, #tpu.memory_space<vmem>>, %arg3: memref<1x16xf32, #tpu.memory_space<vmem>>, %arg4: memref<256x16xf32, #tpu.memory_space<vmem>>) attributes {dimension_semantics = [#tpu.dimension_semantics<parallel>], iteration_bounds = array<i64: 2>, scalar_prefetch = 0 : i64, scratch_operands = 0 : i64, tpu.core_type = #tpu.core_type<tc>, window_params = [{transform_indices = @transform_0, window_bounds = array<i64: 256, 27>}, {pipeline_mode = #tpu.pipeline_mode<synchronous>, transform_indices = @transform_1, window_bounds = array<i64: 27, 16>}, {pipeline_mode = #tpu.pipeline_mode<synchronous>, transform_indices = @transform_2, window_bounds = array<i64: 1, 16>}, {transform_indices = @transform_3, window_bounds = array<i64: 256, 16>}]} {
    %c0 = arith.constant 0 : index
    %c0_0 = arith.constant 0 : index
    %0 = vector.load %arg1[%c0, %c0_0] : memref<256x27xbf16, #tpu.memory_space<vmem>>, vector<256x27xbf16>
    %c0_1 = arith.constant 0 : index
    %c0_2 = arith.constant 0 : index
    %1 = vector.load %arg2[%c0_1, %c0_2] : memref<27x16xbf16, #tpu.memory_space<vmem>>, vector<27x16xbf16>
    %cst = arith.constant dense<0.000000e+00> : vector<256x16xf32>
    %2 = tpu.matmul %0, %1, %cst {dimension_numbers = #tpu.dot_dimension_numbers<[1], [0], [0], [1], [0, 0, 1, 1], [], []>} : vector<256x27xbf16>, vector<27x16xbf16>, vector<256x16xf32> -> vector<256x16xf32>
    %c0_3 = arith.constant 0 : index
    %c0_4 = arith.constant 0 : index
    %3 = vector.load %arg3[%c0_3, %c0_4] : memref<1x16xf32, #tpu.memory_space<vmem>>, vector<1x16xf32>
    %4 = vector.broadcast %3 : vector<1x16xf32> to vector<256x16xf32>
    %5 = arith.addf %2, %4 : vector<256x16xf32>
    %cst_5 = arith.constant 0.000000e+00 : f32
    %6 = vector.broadcast %cst_5 : f32 to vector<256x16xf32>
    %7 = arith.maximumf %5, %6 : vector<256x16xf32>
    %c0_6 = arith.constant 0 : index
    %c0_7 = arith.constant 0 : index
    %8 = vector.load %arg4[%c0_6, %c0_7] : memref<256x16xf32, #tpu.memory_space<vmem>>, vector<256x16xf32>
    tpu.vector_store %arg4[%c0_6, %c0_7], %7 {strides = array<i32>} : memref<256x16xf32, #tpu.memory_space<vmem>>, vector<256x16xf32>,
    return
  }
  func.func @transform_0(%arg0: i32) -> (i32, i32) {
    %c0_i32 = arith.constant 0 : i32
    %c0_i32_0 = arith.constant 0 : i32
    return %arg0, %c0_i32 : i32, i32
  }
  func.func @transform_1(%arg0: i32) -> (i32, i32) {
    %c0_i32 = arith.constant 0 : i32
    %c0_i32_0 = arith.constant 0 : i32
    %c0_i32_1 = arith.constant 0 : i32
    return %c0_i32, %c0_i32_0 : i32, i32
  }
  func.func @transform_2(%arg0: i32) -> (i32, i32) {
    %c0_i32 = arith.constant 0 : i32
    %c0_i32_0 = arith.constant 0 : i32
    %c0_i32_1 = arith.constant 0 : i32
    return %c0_i32, %c0_i32_0 : i32, i32
  }
  func.func @transform_3(%arg0: i32) -> (i32, i32) {
    %c0_i32 = arith.constant 0 : i32
    %c0_i32_0 = arith.constant 0 : i32
    return %arg0, %c0_i32 : i32, i32
  }
}

module attributes {stable_mosaic.version = 11 : i64} {
  func.func @_matmul_kernel(%arg0: i32, %arg1: memref<128x144xbf16, #tpu.memory_space<vmem>>, %arg2: memref<144x32xbf16, #tpu.memory_space<vmem>>, %arg3: memref<1x32xf32, #tpu.memory_space<vmem>>, %arg4: memref<128x32xf32, #tpu.memory_space<vmem>>) attributes {dimension_semantics = [#tpu.dimension_semantics<parallel>], iteration_bounds = array<i64: 1>, scalar_prefetch = 0 : i64, scratch_operands = 0 : i64, tpu.core_type = #tpu.core_type<tc>, window_params = [{transform_indices = @transform_0, window_bounds = array<i64: 128, 144>}, {pipeline_mode = #tpu.pipeline_mode<synchronous>, transform_indices = @transform_1, window_bounds = array<i64: 144, 32>}, {pipeline_mode = #tpu.pipeline_mode<synchronous>, transform_indices = @transform_2, window_bounds = array<i64: 1, 32>}, {transform_indices = @transform_3, window_bounds = array<i64: 128, 32>}]} {
    %c0 = arith.constant 0 : index
    %c0_0 = arith.constant 0 : index
    %0 = vector.load %arg1[%c0, %c0_0] : memref<128x144xbf16, #tpu.memory_space<vmem>>, vector<128x144xbf16>
    %c0_1 = arith.constant 0 : index
    %c0_2 = arith.constant 0 : index
    %1 = vector.load %arg2[%c0_1, %c0_2] : memref<144x32xbf16, #tpu.memory_space<vmem>>, vector<144x32xbf16>
    %cst = arith.constant dense<0.000000e+00> : vector<128x32xf32>
    %2 = tpu.matmul %0, %1, %cst {dimension_numbers = #tpu.dot_dimension_numbers<[1], [0], [0], [1], [0, 0, 1, 1], [], []>} : vector<128x144xbf16>, vector<144x32xbf16>, vector<128x32xf32> -> vector<128x32xf32>
    %c0_3 = arith.constant 0 : index
    %c0_4 = arith.constant 0 : index
    %3 = vector.load %arg3[%c0_3, %c0_4] : memref<1x32xf32, #tpu.memory_space<vmem>>, vector<1x32xf32>
    %4 = vector.broadcast %3 : vector<1x32xf32> to vector<128x32xf32>
    %5 = arith.addf %2, %4 : vector<128x32xf32>
    %cst_5 = arith.constant 0.000000e+00 : f32
    %6 = vector.broadcast %cst_5 : f32 to vector<128x32xf32>
    %7 = arith.maximumf %5, %6 : vector<128x32xf32>
    %c0_6 = arith.constant 0 : index
    %c0_7 = arith.constant 0 : index
    %8 = vector.load %arg4[%c0_6, %c0_7] : memref<128x32xf32, #tpu.memory_space<vmem>>, vector<128x32xf32>
    tpu.vector_store %arg4[%c0_6, %c0_7], %7 {strides = array<i32>} : memref<128x32xf32, #tpu.memory_space<vmem>>, vector<128x32xf32>,
    return
  }
  func.func @transform_0(%arg0: i32) -> (i32, i32) {
    %c0_i32 = arith.constant 0 : i32
    %c0_i32_0 = arith.constant 0 : i32
    return %arg0, %c0_i32 : i32, i32
  }
  func.func @transform_1(%arg0: i32) -> (i32, i32) {
    %c0_i32 = arith.constant 0 : i32
    %c0_i32_0 = arith.constant 0 : i32
    %c0_i32_1 = arith.constant 0 : i32
    return %c0_i32, %c0_i32_0 : i32, i32
  }
  func.func @transform_2(%arg0: i32) -> (i32, i32) {
    %c0_i32 = arith.constant 0 : i32
    %c0_i32_0 = arith.constant 0 : i32
    %c0_i32_1 = arith.constant 0 : i32
    return %c0_i32, %c0_i32_0 : i32, i32
  }
  func.func @transform_3(%arg0: i32) -> (i32, i32) {
    %c0_i32 = arith.constant 0 : i32
    %c0_i32_0 = arith.constant 0 : i32
    return %arg0, %c0_i32 : i32, i32
  }
}

module attributes {stable_mosaic.version = 11 : i64} {
  func.func @_matmul_kernel(%arg0: i32, %arg1: memref<32x288xbf16, #tpu.memory_space<vmem>>, %arg2: memref<288x64xbf16, #tpu.memory_space<vmem>>, %arg3: memref<1x64xf32, #tpu.memory_space<vmem>>, %arg4: memref<32x64xf32, #tpu.memory_space<vmem>>) attributes {dimension_semantics = [#tpu.dimension_semantics<parallel>], iteration_bounds = array<i64: 1>, scalar_prefetch = 0 : i64, scratch_operands = 0 : i64, tpu.core_type = #tpu.core_type<tc>, window_params = [{transform_indices = @transform_0, window_bounds = array<i64: 32, 288>}, {pipeline_mode = #tpu.pipeline_mode<synchronous>, transform_indices = @transform_1, window_bounds = array<i64: 288, 64>}, {pipeline_mode = #tpu.pipeline_mode<synchronous>, transform_indices = @transform_2, window_bounds = array<i64: 1, 64>}, {transform_indices = @transform_3, window_bounds = array<i64: 32, 64>}]} {
    %c0 = arith.constant 0 : index
    %c0_0 = arith.constant 0 : index
    %0 = vector.load %arg1[%c0, %c0_0] : memref<32x288xbf16, #tpu.memory_space<vmem>>, vector<32x288xbf16>
    %c0_1 = arith.constant 0 : index
    %c0_2 = arith.constant 0 : index
    %1 = vector.load %arg2[%c0_1, %c0_2] : memref<288x64xbf16, #tpu.memory_space<vmem>>, vector<288x64xbf16>
    %cst = arith.constant dense<0.000000e+00> : vector<32x64xf32>
    %2 = tpu.matmul %0, %1, %cst {dimension_numbers = #tpu.dot_dimension_numbers<[1], [0], [0], [1], [0, 0, 1, 1], [], []>} : vector<32x288xbf16>, vector<288x64xbf16>, vector<32x64xf32> -> vector<32x64xf32>
    %c0_3 = arith.constant 0 : index
    %c0_4 = arith.constant 0 : index
    %3 = vector.load %arg3[%c0_3, %c0_4] : memref<1x64xf32, #tpu.memory_space<vmem>>, vector<1x64xf32>
    %4 = vector.broadcast %3 : vector<1x64xf32> to vector<32x64xf32>
    %5 = arith.addf %2, %4 : vector<32x64xf32>
    %cst_5 = arith.constant 0.000000e+00 : f32
    %6 = vector.broadcast %cst_5 : f32 to vector<32x64xf32>
    %7 = arith.maximumf %5, %6 : vector<32x64xf32>
    %c0_6 = arith.constant 0 : index
    %c0_7 = arith.constant 0 : index
    %8 = vector.load %arg4[%c0_6, %c0_7] : memref<32x64xf32, #tpu.memory_space<vmem>>, vector<32x64xf32>
    tpu.vector_store %arg4[%c0_6, %c0_7], %7 {strides = array<i32>} : memref<32x64xf32, #tpu.memory_space<vmem>>, vector<32x64xf32>,
    return
  }
  func.func @transform_0(%arg0: i32) -> (i32, i32) {
    %c0_i32 = arith.constant 0 : i32
    %c0_i32_0 = arith.constant 0 : i32
    return %arg0, %c0_i32 : i32, i32
  }
  func.func @transform_1(%arg0: i32) -> (i32, i32) {
    %c0_i32 = arith.constant 0 : i32
    %c0_i32_0 = arith.constant 0 : i32
    %c0_i32_1 = arith.constant 0 : i32
    return %c0_i32, %c0_i32_0 : i32, i32
  }
  func.func @transform_2(%arg0: i32) -> (i32, i32) {
    %c0_i32 = arith.constant 0 : i32
    %c0_i32_0 = arith.constant 0 : i32
    %c0_i32_1 = arith.constant 0 : i32
    return %c0_i32, %c0_i32_0 : i32, i32
  }
  func.func @transform_3(%arg0: i32) -> (i32, i32) {
    %c0_i32 = arith.constant 0 : i32
    %c0_i32_0 = arith.constant 0 : i32
    return %arg0, %c0_i32 : i32, i32
  }
}

module attributes {stable_mosaic.version = 11 : i64} {
  func.func @_matmul_kernel(%arg0: i32, %arg1: memref<32x576xbf16, #tpu.memory_space<vmem>>, %arg2: memref<576x32xbf16, #tpu.memory_space<vmem>>, %arg3: memref<1x32xf32, #tpu.memory_space<vmem>>, %arg4: memref<32x32xf32, #tpu.memory_space<vmem>>) attributes {dimension_semantics = [#tpu.dimension_semantics<parallel>], iteration_bounds = array<i64: 1>, scalar_prefetch = 0 : i64, scratch_operands = 0 : i64, tpu.core_type = #tpu.core_type<tc>, window_params = [{transform_indices = @transform_0, window_bounds = array<i64: 32, 576>}, {pipeline_mode = #tpu.pipeline_mode<synchronous>, transform_indices = @transform_1, window_bounds = array<i64: 576, 32>}, {pipeline_mode = #tpu.pipeline_mode<synchronous>, transform_indices = @transform_2, window_bounds = array<i64: 1, 32>}, {transform_indices = @transform_3, window_bounds = array<i64: 32, 32>}]} {
    %c0 = arith.constant 0 : index
    %c0_0 = arith.constant 0 : index
    %0 = vector.load %arg1[%c0, %c0_0] : memref<32x576xbf16, #tpu.memory_space<vmem>>, vector<32x576xbf16>
    %c0_1 = arith.constant 0 : index
    %c0_2 = arith.constant 0 : index
    %1 = vector.load %arg2[%c0_1, %c0_2] : memref<576x32xbf16, #tpu.memory_space<vmem>>, vector<576x32xbf16>
    %cst = arith.constant dense<0.000000e+00> : vector<32x32xf32>
    %2 = tpu.matmul %0, %1, %cst {dimension_numbers = #tpu.dot_dimension_numbers<[1], [0], [0], [1], [0, 0, 1, 1], [], []>} : vector<32x576xbf16>, vector<576x32xbf16>, vector<32x32xf32> -> vector<32x32xf32>
    %c0_3 = arith.constant 0 : index
    %c0_4 = arith.constant 0 : index
    %3 = vector.load %arg3[%c0_3, %c0_4] : memref<1x32xf32, #tpu.memory_space<vmem>>, vector<1x32xf32>
    %4 = vector.broadcast %3 : vector<1x32xf32> to vector<32x32xf32>
    %5 = arith.addf %2, %4 : vector<32x32xf32>
    %cst_5 = arith.constant 0.000000e+00 : f32
    %6 = vector.broadcast %cst_5 : f32 to vector<32x32xf32>
    %7 = arith.maximumf %5, %6 : vector<32x32xf32>
    %c0_6 = arith.constant 0 : index
    %c0_7 = arith.constant 0 : index
    %8 = vector.load %arg4[%c0_6, %c0_7] : memref<32x32xf32, #tpu.memory_space<vmem>>, vector<32x32xf32>
    tpu.vector_store %arg4[%c0_6, %c0_7], %7 {strides = array<i32>} : memref<32x32xf32, #tpu.memory_space<vmem>>, vector<32x32xf32>,
    return
  }
  func.func @transform_0(%arg0: i32) -> (i32, i32) {
    %c0_i32 = arith.constant 0 : i32
    %c0_i32_0 = arith.constant 0 : i32
    return %arg0, %c0_i32 : i32, i32
  }
  func.func @transform_1(%arg0: i32) -> (i32, i32) {
    %c0_i32 = arith.constant 0 : i32
    %c0_i32_0 = arith.constant 0 : i32
    %c0_i32_1 = arith.constant 0 : i32
    return %c0_i32, %c0_i32_0 : i32, i32
  }
  func.func @transform_2(%arg0: i32) -> (i32, i32) {
    %c0_i32 = arith.constant 0 : i32
    %c0_i32_0 = arith.constant 0 : i32
    %c0_i32_1 = arith.constant 0 : i32
    return %c0_i32, %c0_i32_0 : i32, i32
  }
  func.func @transform_3(%arg0: i32) -> (i32, i32) {
    %c0_i32 = arith.constant 0 : i32
    %c0_i32_0 = arith.constant 0 : i32
    return %arg0, %c0_i32 : i32, i32
  }
}

module attributes {stable_mosaic.version = 11 : i64} {
  func.func @_matmul_kernel(%arg0: i32, %arg1: memref<128x288xbf16, #tpu.memory_space<vmem>>, %arg2: memref<288x16xbf16, #tpu.memory_space<vmem>>, %arg3: memref<1x16xf32, #tpu.memory_space<vmem>>, %arg4: memref<128x16xf32, #tpu.memory_space<vmem>>) attributes {dimension_semantics = [#tpu.dimension_semantics<parallel>], iteration_bounds = array<i64: 1>, scalar_prefetch = 0 : i64, scratch_operands = 0 : i64, tpu.core_type = #tpu.core_type<tc>, window_params = [{transform_indices = @transform_0, window_bounds = array<i64: 128, 288>}, {pipeline_mode = #tpu.pipeline_mode<synchronous>, transform_indices = @transform_1, window_bounds = array<i64: 288, 16>}, {pipeline_mode = #tpu.pipeline_mode<synchronous>, transform_indices = @transform_2, window_bounds = array<i64: 1, 16>}, {transform_indices = @transform_3, window_bounds = array<i64: 128, 16>}]} {
    %c0 = arith.constant 0 : index
    %c0_0 = arith.constant 0 : index
    %0 = vector.load %arg1[%c0, %c0_0] : memref<128x288xbf16, #tpu.memory_space<vmem>>, vector<128x288xbf16>
    %c0_1 = arith.constant 0 : index
    %c0_2 = arith.constant 0 : index
    %1 = vector.load %arg2[%c0_1, %c0_2] : memref<288x16xbf16, #tpu.memory_space<vmem>>, vector<288x16xbf16>
    %cst = arith.constant dense<0.000000e+00> : vector<128x16xf32>
    %2 = tpu.matmul %0, %1, %cst {dimension_numbers = #tpu.dot_dimension_numbers<[1], [0], [0], [1], [0, 0, 1, 1], [], []>} : vector<128x288xbf16>, vector<288x16xbf16>, vector<128x16xf32> -> vector<128x16xf32>
    %c0_3 = arith.constant 0 : index
    %c0_4 = arith.constant 0 : index
    %3 = vector.load %arg3[%c0_3, %c0_4] : memref<1x16xf32, #tpu.memory_space<vmem>>, vector<1x16xf32>
    %4 = vector.broadcast %3 : vector<1x16xf32> to vector<128x16xf32>
    %5 = arith.addf %2, %4 : vector<128x16xf32>
    %cst_5 = arith.constant 0.000000e+00 : f32
    %6 = vector.broadcast %cst_5 : f32 to vector<128x16xf32>
    %7 = arith.maximumf %5, %6 : vector<128x16xf32>
    %c0_6 = arith.constant 0 : index
    %c0_7 = arith.constant 0 : index
    %8 = vector.load %arg4[%c0_6, %c0_7] : memref<128x16xf32, #tpu.memory_space<vmem>>, vector<128x16xf32>
    tpu.vector_store %arg4[%c0_6, %c0_7], %7 {strides = array<i32>} : memref<128x16xf32, #tpu.memory_space<vmem>>, vector<128x16xf32>,
    return
  }
  func.func @transform_0(%arg0: i32) -> (i32, i32) {
    %c0_i32 = arith.constant 0 : i32
    %c0_i32_0 = arith.constant 0 : i32
    return %arg0, %c0_i32 : i32, i32
  }
  func.func @transform_1(%arg0: i32) -> (i32, i32) {
    %c0_i32 = arith.constant 0 : i32
    %c0_i32_0 = arith.constant 0 : i32
    %c0_i32_1 = arith.constant 0 : i32
    return %c0_i32, %c0_i32_0 : i32, i32
  }
  func.func @transform_2(%arg0: i32) -> (i32, i32) {
    %c0_i32 = arith.constant 0 : i32
    %c0_i32_0 = arith.constant 0 : i32
    %c0_i32_1 = arith.constant 0 : i32
    return %c0_i32, %c0_i32_0 : i32, i32
  }
  func.func @transform_3(%arg0: i32) -> (i32, i32) {
    %c0_i32 = arith.constant 0 : i32
    %c0_i32_0 = arith.constant 0 : i32
    return %arg0, %c0_i32 : i32, i32
  }
}

module attributes {stable_mosaic.version = 11 : i64} {
  func.func @_matmul_kernel(%arg0: i32, %arg1: memref<256x144xbf16, #tpu.memory_space<vmem>>, %arg2: memref<144x16xbf16, #tpu.memory_space<vmem>>, %arg3: memref<1x16xf32, #tpu.memory_space<vmem>>, %arg4: memref<256x16xf32, #tpu.memory_space<vmem>>) attributes {dimension_semantics = [#tpu.dimension_semantics<parallel>], iteration_bounds = array<i64: 2>, scalar_prefetch = 0 : i64, scratch_operands = 0 : i64, tpu.core_type = #tpu.core_type<tc>, window_params = [{transform_indices = @transform_0, window_bounds = array<i64: 256, 144>}, {pipeline_mode = #tpu.pipeline_mode<synchronous>, transform_indices = @transform_1, window_bounds = array<i64: 144, 16>}, {pipeline_mode = #tpu.pipeline_mode<synchronous>, transform_indices = @transform_2, window_bounds = array<i64: 1, 16>}, {transform_indices = @transform_3, window_bounds = array<i64: 256, 16>}]} {
    %c0 = arith.constant 0 : index
    %c0_0 = arith.constant 0 : index
    %0 = vector.load %arg1[%c0, %c0_0] : memref<256x144xbf16, #tpu.memory_space<vmem>>, vector<256x144xbf16>
    %c0_1 = arith.constant 0 : index
    %c0_2 = arith.constant 0 : index
    %1 = vector.load %arg2[%c0_1, %c0_2] : memref<144x16xbf16, #tpu.memory_space<vmem>>, vector<144x16xbf16>
    %cst = arith.constant dense<0.000000e+00> : vector<256x16xf32>
    %2 = tpu.matmul %0, %1, %cst {dimension_numbers = #tpu.dot_dimension_numbers<[1], [0], [0], [1], [0, 0, 1, 1], [], []>} : vector<256x144xbf16>, vector<144x16xbf16>, vector<256x16xf32> -> vector<256x16xf32>
    %c0_3 = arith.constant 0 : index
    %c0_4 = arith.constant 0 : index
    %3 = vector.load %arg3[%c0_3, %c0_4] : memref<1x16xf32, #tpu.memory_space<vmem>>, vector<1x16xf32>
    %4 = vector.broadcast %3 : vector<1x16xf32> to vector<256x16xf32>
    %5 = arith.addf %2, %4 : vector<256x16xf32>
    %cst_5 = arith.constant 0.000000e+00 : f32
    %6 = vector.broadcast %cst_5 : f32 to vector<256x16xf32>
    %7 = arith.maximumf %5, %6 : vector<256x16xf32>
    %c0_6 = arith.constant 0 : index
    %c0_7 = arith.constant 0 : index
    %8 = vector.load %arg4[%c0_6, %c0_7] : memref<256x16xf32, #tpu.memory_space<vmem>>, vector<256x16xf32>
    tpu.vector_store %arg4[%c0_6, %c0_7], %7 {strides = array<i32>} : memref<256x16xf32, #tpu.memory_space<vmem>>, vector<256x16xf32>,
    return
  }
  func.func @transform_0(%arg0: i32) -> (i32, i32) {
    %c0_i32 = arith.constant 0 : i32
    %c0_i32_0 = arith.constant 0 : i32
    return %arg0, %c0_i32 : i32, i32
  }
  func.func @transform_1(%arg0: i32) -> (i32, i32) {
    %c0_i32 = arith.constant 0 : i32
    %c0_i32_0 = arith.constant 0 : i32
    %c0_i32_1 = arith.constant 0 : i32
    return %c0_i32, %c0_i32_0 : i32, i32
  }
  func.func @transform_2(%arg0: i32) -> (i32, i32) {
    %c0_i32 = arith.constant 0 : i32
    %c0_i32_0 = arith.constant 0 : i32
    %c0_i32_1 = arith.constant 0 : i32
    return %c0_i32, %c0_i32_0 : i32, i32
  }
  func.func @transform_3(%arg0: i32) -> (i32, i32) {
    %c0_i32 = arith.constant 0 : i32
    %c0_i32_0 = arith.constant 0 : i32
    return %arg0, %c0_i32 : i32, i32
  }
}

module attributes {stable_mosaic.version = 11 : i64} {
  func.func @_matmul_kernel(%arg0: i32, %arg1: memref<256x144xbf16, #tpu.memory_space<vmem>>, %arg2: memref<144x1xbf16, #tpu.memory_space<vmem>>, %arg3: memref<1x1xf32, #tpu.memory_space<vmem>>, %arg4: memref<256x1xf32, #tpu.memory_space<vmem>>) attributes {dimension_semantics = [#tpu.dimension_semantics<parallel>], iteration_bounds = array<i64: 8>, scalar_prefetch = 0 : i64, scratch_operands = 0 : i64, tpu.core_type = #tpu.core_type<tc>, window_params = [{transform_indices = @transform_0, window_bounds = array<i64: 256, 144>}, {pipeline_mode = #tpu.pipeline_mode<synchronous>, transform_indices = @transform_1, window_bounds = array<i64: 144, 1>}, {pipeline_mode = #tpu.pipeline_mode<synchronous>, transform_indices = @transform_2, window_bounds = array<i64: 1, 1>}, {transform_indices = @transform_3, window_bounds = array<i64: 256, 1>}]} {
    %c0 = arith.constant 0 : index
    %c0_0 = arith.constant 0 : index
    %0 = vector.load %arg1[%c0, %c0_0] : memref<256x144xbf16, #tpu.memory_space<vmem>>, vector<256x144xbf16>
    %c0_1 = arith.constant 0 : index
    %c0_2 = arith.constant 0 : index
    %1 = vector.load %arg2[%c0_1, %c0_2] : memref<144x1xbf16, #tpu.memory_space<vmem>>, vector<144x1xbf16>
    %cst = arith.constant dense<0.000000e+00> : vector<256x1xf32>
    %2 = tpu.matmul %0, %1, %cst {dimension_numbers = #tpu.dot_dimension_numbers<[1], [0], [0], [1], [0, 0, 1, 1], [], []>} : vector<256x144xbf16>, vector<144x1xbf16>, vector<256x1xf32> -> vector<256x1xf32>
    %c0_3 = arith.constant 0 : index
    %c0_4 = arith.constant 0 : index
    %3 = vector.load %arg3[%c0_3, %c0_4] : memref<1x1xf32, #tpu.memory_space<vmem>>, vector<1x1xf32>
    %4 = vector.broadcast %3 : vector<1x1xf32> to vector<256x1xf32>
    %5 = arith.addf %2, %4 : vector<256x1xf32>
    %6 = arith.negf %5 : vector<256x1xf32>
    %7 = math.exp %6 : vector<256x1xf32>
    %cst_5 = arith.constant 1.000000e+00 : f32
    %8 = vector.broadcast %cst_5 : f32 to vector<256x1xf32>
    %9 = arith.addf %8, %7 : vector<256x1xf32>
    %10 = arith.divf %8, %9 : vector<256x1xf32>
    %c0_6 = arith.constant 0 : index
    %c0_7 = arith.constant 0 : index
    %11 = vector.load %arg4[%c0_6, %c0_7] : memref<256x1xf32, #tpu.memory_space<vmem>>, vector<256x1xf32>
    tpu.vector_store %arg4[%c0_6, %c0_7], %10 {strides = array<i32>} : memref<256x1xf32, #tpu.memory_space<vmem>>, vector<256x1xf32>,
    return
  }
  func.func @transform_0(%arg0: i32) -> (i32, i32) {
    %c0_i32 = arith.constant 0 : i32
    %c0_i32_0 = arith.constant 0 : i32
    return %arg0, %c0_i32 : i32, i32
  }
  func.func @transform_1(%arg0: i32) -> (i32, i32) {
    %c0_i32 = arith.constant 0 : i32
    %c0_i32_0 = arith.constant 0 : i32
    %c0_i32_1 = arith.constant 0 : i32
    return %c0_i32, %c0_i32_0 : i32, i32
  }
  func.func @transform_2(%arg0: i32) -> (i32, i32) {
    %c0_i32 = arith.constant 0 : i32
    %c0_i32_0 = arith.constant 0 : i32
    %c0_i32_1 = arith.constant 0 : i32
    return %c0_i32, %c0_i32_0 : i32, i32
  }
  func.func @transform_3(%arg0: i32) -> (i32, i32) {
    %c0_i32 = arith.constant 0 : i32
    %c0_i32_0 = arith.constant 0 : i32
    return %arg0, %c0_i32 : i32, i32
  }
}

module attributes {stable_mosaic.version = 11 : i64} {
  func.func @_matmul_kernel(%arg0: i32, %arg1: memref<256x27xbf16, #tpu.memory_space<vmem>>, %arg2: memref<27x32xbf16, #tpu.memory_space<vmem>>, %arg3: memref<1x32xf32, #tpu.memory_space<vmem>>, %arg4: memref<256x32xf32, #tpu.memory_space<vmem>>) attributes {dimension_semantics = [#tpu.dimension_semantics<parallel>], iteration_bounds = array<i64: 6>, scalar_prefetch = 0 : i64, scratch_operands = 0 : i64, tpu.core_type = #tpu.core_type<tc>, window_params = [{transform_indices = @transform_0, window_bounds = array<i64: 256, 27>}, {pipeline_mode = #tpu.pipeline_mode<synchronous>, transform_indices = @transform_1, window_bounds = array<i64: 27, 32>}, {pipeline_mode = #tpu.pipeline_mode<synchronous>, transform_indices = @transform_2, window_bounds = array<i64: 1, 32>}, {transform_indices = @transform_3, window_bounds = array<i64: 256, 32>}]} {
    %c0 = arith.constant 0 : index
    %c0_0 = arith.constant 0 : index
    %0 = vector.load %arg1[%c0, %c0_0] : memref<256x27xbf16, #tpu.memory_space<vmem>>, vector<256x27xbf16>
    %c0_1 = arith.constant 0 : index
    %c0_2 = arith.constant 0 : index
    %1 = vector.load %arg2[%c0_1, %c0_2] : memref<27x32xbf16, #tpu.memory_space<vmem>>, vector<27x32xbf16>
    %cst = arith.constant dense<0.000000e+00> : vector<256x32xf32>
    %2 = tpu.matmul %0, %1, %cst {dimension_numbers = #tpu.dot_dimension_numbers<[1], [0], [0], [1], [0, 0, 1, 1], [], []>} : vector<256x27xbf16>, vector<27x32xbf16>, vector<256x32xf32> -> vector<256x32xf32>
    %c0_3 = arith.constant 0 : index
    %c0_4 = arith.constant 0 : index
    %3 = vector.load %arg3[%c0_3, %c0_4] : memref<1x32xf32, #tpu.memory_space<vmem>>, vector<1x32xf32>
    %4 = vector.broadcast %3 : vector<1x32xf32> to vector<256x32xf32>
    %5 = arith.addf %2, %4 : vector<256x32xf32>
    %cst_5 = arith.constant 0.000000e+00 : f32
    %6 = vector.broadcast %cst_5 : f32 to vector<256x32xf32>
    %7 = arith.maximumf %5, %6 : vector<256x32xf32>
    %c0_6 = arith.constant 0 : index
    %c0_7 = arith.constant 0 : index
    %8 = vector.load %arg4[%c0_6, %c0_7] : memref<256x32xf32, #tpu.memory_space<vmem>>, vector<256x32xf32>
    tpu.vector_store %arg4[%c0_6, %c0_7], %7 {strides = array<i32>} : memref<256x32xf32, #tpu.memory_space<vmem>>, vector<256x32xf32>,
    return
  }
  func.func @transform_0(%arg0: i32) -> (i32, i32) {
    %c0_i32 = arith.constant 0 : i32
    %c0_i32_0 = arith.constant 0 : i32
    return %arg0, %c0_i32 : i32, i32
  }
  func.func @transform_1(%arg0: i32) -> (i32, i32) {
    %c0_i32 = arith.constant 0 : i32
    %c0_i32_0 = arith.constant 0 : i32
    %c0_i32_1 = arith.constant 0 : i32
    return %c0_i32, %c0_i32_0 : i32, i32
  }
  func.func @transform_2(%arg0: i32) -> (i32, i32) {
    %c0_i32 = arith.constant 0 : i32
    %c0_i32_0 = arith.constant 0 : i32
    %c0_i32_1 = arith.constant 0 : i32
    return %c0_i32, %c0_i32_0 : i32, i32
  }
  func.func @transform_3(%arg0: i32) -> (i32, i32) {
    %c0_i32 = arith.constant 0 : i32
    %c0_i32_0 = arith.constant 0 : i32
    return %arg0, %c0_i32 : i32, i32
  }
}

module attributes {stable_mosaic.version = 11 : i64} {
  func.func @_matmul_kernel(%arg0: i32, %arg1: memref<256x288xbf16, #tpu.memory_space<vmem>>, %arg2: memref<288x64xbf16, #tpu.memory_space<vmem>>, %arg3: memref<1x64xf32, #tpu.memory_space<vmem>>, %arg4: memref<256x64xf32, #tpu.memory_space<vmem>>) attributes {dimension_semantics = [#tpu.dimension_semantics<parallel>], iteration_bounds = array<i64: 2>, scalar_prefetch = 0 : i64, scratch_operands = 0 : i64, tpu.core_type = #tpu.core_type<tc>, window_params = [{transform_indices = @transform_0, window_bounds = array<i64: 256, 288>}, {pipeline_mode = #tpu.pipeline_mode<synchronous>, transform_indices = @transform_1, window_bounds = array<i64: 288, 64>}, {pipeline_mode = #tpu.pipeline_mode<synchronous>, transform_indices = @transform_2, window_bounds = array<i64: 1, 64>}, {transform_indices = @transform_3, window_bounds = array<i64: 256, 64>}]} {
    %c0 = arith.constant 0 : index
    %c0_0 = arith.constant 0 : index
    %0 = vector.load %arg1[%c0, %c0_0] : memref<256x288xbf16, #tpu.memory_space<vmem>>, vector<256x288xbf16>
    %c0_1 = arith.constant 0 : index
    %c0_2 = arith.constant 0 : index
    %1 = vector.load %arg2[%c0_1, %c0_2] : memref<288x64xbf16, #tpu.memory_space<vmem>>, vector<288x64xbf16>
    %cst = arith.constant dense<0.000000e+00> : vector<256x64xf32>
    %2 = tpu.matmul %0, %1, %cst {dimension_numbers = #tpu.dot_dimension_numbers<[1], [0], [0], [1], [0, 0, 1, 1], [], []>} : vector<256x288xbf16>, vector<288x64xbf16>, vector<256x64xf32> -> vector<256x64xf32>
    %c0_3 = arith.constant 0 : index
    %c0_4 = arith.constant 0 : index
    %3 = vector.load %arg3[%c0_3, %c0_4] : memref<1x64xf32, #tpu.memory_space<vmem>>, vector<1x64xf32>
    %4 = vector.broadcast %3 : vector<1x64xf32> to vector<256x64xf32>
    %5 = arith.addf %2, %4 : vector<256x64xf32>
    %cst_5 = arith.constant 0.000000e+00 : f32
    %6 = vector.broadcast %cst_5 : f32 to vector<256x64xf32>
    %7 = arith.maximumf %5, %6 : vector<256x64xf32>
    %c0_6 = arith.constant 0 : index
    %c0_7 = arith.constant 0 : index
    %8 = vector.load %arg4[%c0_6, %c0_7] : memref<256x64xf32, #tpu.memory_space<vmem>>, vector<256x64xf32>
    tpu.vector_store %arg4[%c0_6, %c0_7], %7 {strides = array<i32>} : memref<256x64xf32, #tpu.memory_space<vmem>>, vector<256x64xf32>,
    return
  }
  func.func @transform_0(%arg0: i32) -> (i32, i32) {
    %c0_i32 = arith.constant 0 : i32
    %c0_i32_0 = arith.constant 0 : i32
    return %arg0, %c0_i32 : i32, i32
  }
  func.func @transform_1(%arg0: i32) -> (i32, i32) {
    %c0_i32 = arith.constant 0 : i32
    %c0_i32_0 = arith.constant 0 : i32
    %c0_i32_1 = arith.constant 0 : i32
    return %c0_i32, %c0_i32_0 : i32, i32
  }
  func.func @transform_2(%arg0: i32) -> (i32, i32) {
    %c0_i32 = arith.constant 0 : i32
    %c0_i32_0 = arith.constant 0 : i32
    %c0_i32_1 = arith.constant 0 : i32
    return %c0_i32, %c0_i32_0 : i32, i32
  }
  func.func @transform_3(%arg0: i32) -> (i32, i32) {
    %c0_i32 = arith.constant 0 : i32
    %c0_i32_0 = arith.constant 0 : i32
    return %arg0, %c0_i32 : i32, i32
  }
}

module attributes {stable_mosaic.version = 11 : i64} {
  func.func @_matmul_kernel(%arg0: i32, %arg1: memref<96x576xbf16, #tpu.memory_space<vmem>>, %arg2: memref<576x64xbf16, #tpu.memory_space<vmem>>, %arg3: memref<1x64xf32, #tpu.memory_space<vmem>>, %arg4: memref<96x64xf32, #tpu.memory_space<vmem>>) attributes {dimension_semantics = [#tpu.dimension_semantics<parallel>], iteration_bounds = array<i64: 1>, scalar_prefetch = 0 : i64, scratch_operands = 0 : i64, tpu.core_type = #tpu.core_type<tc>, window_params = [{transform_indices = @transform_0, window_bounds = array<i64: 96, 576>}, {pipeline_mode = #tpu.pipeline_mode<synchronous>, transform_indices = @transform_1, window_bounds = array<i64: 576, 64>}, {pipeline_mode = #tpu.pipeline_mode<synchronous>, transform_indices = @transform_2, window_bounds = array<i64: 1, 64>}, {transform_indices = @transform_3, window_bounds = array<i64: 96, 64>}]} {
    %c0 = arith.constant 0 : index
    %c0_0 = arith.constant 0 : index
    %0 = vector.load %arg1[%c0, %c0_0] : memref<96x576xbf16, #tpu.memory_space<vmem>>, vector<96x576xbf16>
    %c0_1 = arith.constant 0 : index
    %c0_2 = arith.constant 0 : index
    %1 = vector.load %arg2[%c0_1, %c0_2] : memref<576x64xbf16, #tpu.memory_space<vmem>>, vector<576x64xbf16>
    %cst = arith.constant dense<0.000000e+00> : vector<96x64xf32>
    %2 = tpu.matmul %0, %1, %cst {dimension_numbers = #tpu.dot_dimension_numbers<[1], [0], [0], [1], [0, 0, 1, 1], [], []>} : vector<96x576xbf16>, vector<576x64xbf16>, vector<96x64xf32> -> vector<96x64xf32>
    %c0_3 = arith.constant 0 : index
    %c0_4 = arith.constant 0 : index
    %3 = vector.load %arg3[%c0_3, %c0_4] : memref<1x64xf32, #tpu.memory_space<vmem>>, vector<1x64xf32>
    %4 = vector.broadcast %3 : vector<1x64xf32> to vector<96x64xf32>
    %5 = arith.addf %2, %4 : vector<96x64xf32>
    %cst_5 = arith.constant 0.000000e+00 : f32
    %6 = vector.broadcast %cst_5 : f32 to vector<96x64xf32>
    %7 = arith.maximumf %5, %6 : vector<96x64xf32>
    %c0_6 = arith.constant 0 : index
    %c0_7 = arith.constant 0 : index
    %8 = vector.load %arg4[%c0_6, %c0_7] : memref<96x64xf32, #tpu.memory_space<vmem>>, vector<96x64xf32>
    tpu.vector_store %arg4[%c0_6, %c0_7], %7 {strides = array<i32>} : memref<96x64xf32, #tpu.memory_space<vmem>>, vector<96x64xf32>,
    return
  }
  func.func @transform_0(%arg0: i32) -> (i32, i32) {
    %c0_i32 = arith.constant 0 : i32
    %c0_i32_0 = arith.constant 0 : i32
    return %arg0, %c0_i32 : i32, i32
  }
  func.func @transform_1(%arg0: i32) -> (i32, i32) {
    %c0_i32 = arith.constant 0 : i32
    %c0_i32_0 = arith.constant 0 : i32
    %c0_i32_1 = arith.constant 0 : i32
    return %c0_i32, %c0_i32_0 : i32, i32
  }
  func.func @transform_2(%arg0: i32) -> (i32, i32) {
    %c0_i32 = arith.constant 0 : i32
    %c0_i32_0 = arith.constant 0 : i32
    %c0_i32_1 = arith.constant 0 : i32
    return %c0_i32, %c0_i32_0 : i32, i32
  }
  func.func @transform_3(%arg0: i32) -> (i32, i32) {
    %c0_i32 = arith.constant 0 : i32
    %c0_i32_0 = arith.constant 0 : i32
    return %arg0, %c0_i32 : i32, i32
  }
}

module attributes {stable_mosaic.version = 11 : i64} {
  func.func @_matmul_kernel(%arg0: i32, %arg1: memref<96x64xbf16, #tpu.memory_space<vmem>>, %arg2: memref<64x259xbf16, #tpu.memory_space<vmem>>, %arg3: memref<1x259xf32, #tpu.memory_space<vmem>>, %arg4: memref<96x259xf32, #tpu.memory_space<vmem>>) attributes {dimension_semantics = [#tpu.dimension_semantics<parallel>], iteration_bounds = array<i64: 1>, scalar_prefetch = 0 : i64, scratch_operands = 0 : i64, tpu.core_type = #tpu.core_type<tc>, window_params = [{transform_indices = @transform_0, window_bounds = array<i64: 96, 64>}, {pipeline_mode = #tpu.pipeline_mode<synchronous>, transform_indices = @transform_1, window_bounds = array<i64: 64, 259>}, {pipeline_mode = #tpu.pipeline_mode<synchronous>, transform_indices = @transform_2, window_bounds = array<i64: 1, 259>}, {transform_indices = @transform_3, window_bounds = array<i64: 96, 259>}]} {
    %c0 = arith.constant 0 : index
    %c0_0 = arith.constant 0 : index
    %0 = vector.load %arg1[%c0, %c0_0] : memref<96x64xbf16, #tpu.memory_space<vmem>>, vector<96x64xbf16>
    %c0_1 = arith.constant 0 : index
    %c0_2 = arith.constant 0 : index
    %1 = vector.load %arg2[%c0_1, %c0_2] : memref<64x259xbf16, #tpu.memory_space<vmem>>, vector<64x259xbf16>
    %cst = arith.constant dense<0.000000e+00> : vector<96x259xf32>
    %2 = tpu.matmul %0, %1, %cst {dimension_numbers = #tpu.dot_dimension_numbers<[1], [0], [0], [1], [0, 0, 1, 1], [], []>} : vector<96x64xbf16>, vector<64x259xbf16>, vector<96x259xf32> -> vector<96x259xf32>
    %c0_3 = arith.constant 0 : index
    %c0_4 = arith.constant 0 : index
    %3 = vector.load %arg3[%c0_3, %c0_4] : memref<1x259xf32, #tpu.memory_space<vmem>>, vector<1x259xf32>
    %4 = vector.broadcast %3 : vector<1x259xf32> to vector<96x259xf32>
    %5 = arith.addf %2, %4 : vector<96x259xf32>
    %c0_5 = arith.constant 0 : index
    %c0_6 = arith.constant 0 : index
    %6 = vector.load %arg4[%c0_5, %c0_6] : memref<96x259xf32, #tpu.memory_space<vmem>>, vector<96x259xf32>
    tpu.vector_store %arg4[%c0_5, %c0_6], %5 {strides = array<i32>} : memref<96x259xf32, #tpu.memory_space<vmem>>, vector<96x259xf32>,
    return
  }
  func.func @transform_0(%arg0: i32) -> (i32, i32) {
    %c0_i32 = arith.constant 0 : i32
    %c0_i32_0 = arith.constant 0 : i32
    return %arg0, %c0_i32 : i32, i32
  }
  func.func @transform_1(%arg0: i32) -> (i32, i32) {
    %c0_i32 = arith.constant 0 : i32
    %c0_i32_0 = arith.constant 0 : i32
    %c0_i32_1 = arith.constant 0 : i32
    return %c0_i32, %c0_i32_0 : i32, i32
  }
  func.func @transform_2(%arg0: i32) -> (i32, i32) {
    %c0_i32 = arith.constant 0 : i32
    %c0_i32_0 = arith.constant 0 : i32
    %c0_i32_1 = arith.constant 0 : i32
    return %c0_i32, %c0_i32_0 : i32, i32
  }
  func.func @transform_3(%arg0: i32) -> (i32, i32) {
    %c0_i32 = arith.constant 0 : i32
    %c0_i32_0 = arith.constant 0 : i32
    return %arg0, %c0_i32 : i32, i32
  }
}

module attributes {stable_mosaic.version = 11 : i64} {
  func.func @_sim_kernel(%arg0: i32, %arg1: memref<1x16x256xbf16, #tpu.memory_space<vmem>>, %arg2: memref<1x16x256xbf16, #tpu.memory_space<vmem>>, %arg3: memref<1x16x16xf32, #tpu.memory_space<vmem>>) attributes {dimension_semantics = [#tpu.dimension_semantics<parallel>], iteration_bounds = array<i64: 4>, scalar_prefetch = 0 : i64, scratch_operands = 0 : i64, tpu.core_type = #tpu.core_type<tc>, window_params = [{transform_indices = @transform_0, window_bounds = array<i64: 1, 16, 256>}, {transform_indices = @transform_1, window_bounds = array<i64: 1, 16, 256>}, {transform_indices = @transform_2, window_bounds = array<i64: 1, 16, 16>}]} {
    %c0 = arith.constant 0 : index
    %c0_0 = arith.constant 0 : index
    %c0_1 = arith.constant 0 : index
    %0 = vector.load %arg1[%c0, %c0_0, %c0_1] : memref<1x16x256xbf16, #tpu.memory_space<vmem>>, vector<1x16x256xbf16>
    %1 = vector.shape_cast %0 : vector<1x16x256xbf16> to vector<16x256xbf16>
    %c0_2 = arith.constant 0 : index
    %c0_3 = arith.constant 0 : index
    %c0_4 = arith.constant 0 : index
    %2 = vector.load %arg2[%c0_2, %c0_3, %c0_4] : memref<1x16x256xbf16, #tpu.memory_space<vmem>>, vector<1x16x256xbf16>
    %3 = vector.shape_cast %2 : vector<1x16x256xbf16> to vector<16x256xbf16>
    %cst = arith.constant dense<0.000000e+00> : vector<16x16xf32>
    %4 = tpu.matmul %1, %3, %cst {dimension_numbers = #tpu.dot_dimension_numbers<[1], [1], [0], [0], [0, 0, 1, 0], [], []>} : vector<16x256xbf16>, vector<16x256xbf16>, vector<16x16xf32> -> vector<16x16xf32>
    %c0_5 = arith.constant 0 : index
    %c0_6 = arith.constant 0 : index
    %c0_7 = arith.constant 0 : index
    %5 = vector.load %arg3[%c0_5, %c0_6, %c0_7] : memref<1x16x16xf32, #tpu.memory_space<vmem>>, vector<1x16x16xf32>
    %6 = vector.shape_cast %5 : vector<1x16x16xf32> to vector<16x16xf32>
    %7 = vector.shape_cast %4 : vector<16x16xf32> to vector<1x16x16xf32>
    tpu.vector_store %arg3[%c0_5, %c0_6, %c0_7], %7 {strides = array<i32>} : memref<1x16x16xf32, #tpu.memory_space<vmem>>, vector<1x16x16xf32>,
    return
  }
  func.func @transform_0(%arg0: i32) -> (i32, i32, i32) {
    %c0_i32 = arith.constant 0 : i32
    %c0_i32_0 = arith.constant 0 : i32
    %c0_i32_1 = arith.constant 0 : i32
    return %arg0, %c0_i32, %c0_i32_0 : i32, i32, i32
  }
  func.func @transform_1(%arg0: i32) -> (i32, i32, i32) {
    %c0_i32 = arith.constant 0 : i32
    %c0_i32_0 = arith.constant 0 : i32
    %c0_i32_1 = arith.constant 0 : i32
    return %arg0, %c0_i32, %c0_i32_0 : i32, i32, i32
  }
  func.func @transform_2(%arg0: i32) -> (i32, i32, i32) {
    %c0_i32 = arith.constant 0 : i32
    %c0_i32_0 = arith.constant 0 : i32
    %c0_i32_1 = arith.constant 0 : i32
    return %arg0, %c0_i32, %c0_i32_0 : i32, i32, i32
  }
}

</mosaic_0001>

<llo_original>
// kernel: _forward_impl.12
$region0: #{_forward_impl.12}
  #allocation0 [shape = 'u32[]', space=smem, size = 0x4, offset = 0x4, fixed_abs, tag = 'smem constant byte address 0x4 - core index']
  #allocation1 [shape = 'u32[72,128]{1,0:T(1,128)}', space=vmem, size = 0x9000, scoped, tag = 'internal scratch']
  %s0 = inlined_call_operand.vmem [shape: bf16[512,27], index: 0, kind: input, shape index: {}]
  %s1 = inlined_call_operand.vmem [shape: bf16[27,16], index: 1, kind: input, shape index: {}]
  %s2 = inlined_call_operand.vmem [shape: f32[1,16], index: 2, kind: input, shape index: {}]
  %s3 = inlined_call_operand.vmem [shape: f32[512,16], index: 3, kind: output, shape index: {}]
  %s4 = sld [smem:[#allocation0]]
  $region45: #{_forward_impl.12} parent=0
    _
  %s6 = ssub.s32 1, %s4
  %s7 = scalar_select 0, %s6, %s4
  loop: start=0, step=1, limit=4
  $region2: #{_forward_impl.12} parent=0 // loop_pre_header
    _
  $region3: #{_forward_impl.12} parent=0 // loop_header
    %s9 = sphi 0, %s13
    %p10 = scmp.ge.s32.totalorder %s9, 4
    %s19 = sphi 0, %s21
    %s22 = sphi 0, %s19
    %s23 = sphi 0, %s22
    %s39 = sphi 0, %s23
    %s43 = sphi 0, %s43
    %s45 = sphi 0, %s43
    %s46 = sphi 0, %s45
    %s60 = sphi 0, %s46
    %s64 = sphi 0, %s64
    %s66 = sphi 0, %s64
    %s67 = sphi 0, %s66
    %s81 = sphi 0, %s67
    %s87 = sphi 0, %s89
    %s90 = sphi 0, %s87
    %s91 = sphi 0, %s90
    %s107 = sphi 0, %s91
  $region4: #{_forward_impl.12} parent=0 // loop_header_branch
    %12 = sbr.rel (%p10) target = $region8
  $region5: #{_forward_impl.12} parent=0 // loop_body
    %s14 = ssub.s32 %s9, 1
    %s15 = ssub.s32 %s9, 2
    %s16 = sadd.s32 %s9, 1
    %s17 = ssub.s32 %s9, %s16
    %p18 = scmp.eq.s32.totalorder %s17, 0
    %s20 = sadd.s32 %s19, 1
    %s21 = scalar_select %p18, %s19, %s20
    %p24 = pneg %p18
    %p25 = scmp.eq.s32.totalorder %s9, 1
    %p26 = por %p24, %p25
    %p27 = scmp.ne.s32.totalorder %s19, %s22
    %p28 = scmp.eq.s32.totalorder %s9, 0
    %p29 = por %p27, %p28
    %p30 = scmp.ne.s32.totalorder %s19, %s22
    %p31 = scmp.eq.s32.totalorder %s14, 1
    %p32 = por %p30, %p31
    %p33 = scmp.ne.s32.totalorder %s22, %s23
    %p34 = scmp.eq.s32.totalorder %s14, 0
    %p35 = por %p33, %p34
    %p36 = scmp.ne.s32.totalorder %s22, %s23
    %p37 = scmp.eq.s32.totalorder %s15, 1
    %p38 = por %p36, %p37
    %p40 = scmp.ne.s32.totalorder %s23, %s39
    %p41 = scmp.eq.s32.totalorder %s15, 0
    %p42 = por %p40, %p41
    %s44 = sadd.s32 %s43, 1
    %p47 = scmp.eq.s32.totalorder %s9, 1
    %p48 = scmp.ne.s32.totalorder %s43, %s45
    %p49 = scmp.eq.s32.totalorder %s9, 0
    %p50 = por %p48, %p49
    %p51 = scmp.ne.s32.totalorder %s43, %s45
    %p52 = scmp.eq.s32.totalorder %s14, 1
    %p53 = por %p51, %p52
    %p54 = scmp.ne.s32.totalorder %s45, %s46
    %p55 = scmp.eq.s32.totalorder %s14, 0
    %p56 = por %p54, %p55
    %p57 = scmp.ne.s32.totalorder %s45, %s46
    %p58 = scmp.eq.s32.totalorder %s15, 1
    %p59 = por %p57, %p58
    %p61 = scmp.ne.s32.totalorder %s46, %s60
    %p62 = scmp.eq.s32.totalorder %s15, 0
    %p63 = por %p61, %p62
    %s65 = sadd.s32 %s64, 1
    %p68 = scmp.eq.s32.totalorder %s9, 1
    %p69 = scmp.ne.s32.totalorder %s64, %s66
    %p70 = scmp.eq.s32.totalorder %s9, 0
    %p71 = por %p69, %p70
    %p72 = scmp.ne.s32.totalorder %s64, %s66
    %p73 = scmp.eq.s32.totalorder %s14, 1
    %p74 = por %p72, %p73
    %p75 = scmp.ne.s32.totalorder %s66, %s67
    %p76 = scmp.eq.s32.totalorder %s14, 0
    %p77 = por %p75, %p76
    %p78 = scmp.ne.s32.totalorder %s66, %s67
    %p79 = scmp.eq.s32.totalorder %s15, 1
    %p80 = por %p78, %p79
    %p82 = scmp.ne.s32.totalorder %s67, %s81
    %p83 = scmp.eq.s32.totalorder %s15, 0
    %p84 = por %p82, %p83
    %s85 = ssub.s32 %s9, %s16
    %p86 = scmp.eq.s32.totalorder %s85, 0
    %s88 = sadd.s32 %s87, 1
    %s89 = scalar_select %p86, %s87, %s88
    %p92 = pneg %p86
    %p93 = scmp.eq.s32.totalorder %s9, 1
    %p94 = por %p92, %p93
    %p95 = scmp.ne.s32.totalorder %s87, %s90
    %p96 = scmp.eq.s32.totalorder %s9, 0
    %p97 = por %p95, %p96
    %p98 = scmp.ne.s32.totalorder %s87, %s90
    %p99 = scmp.eq.s32.totalorder %s14, 1
    %p100 = por %p98, %p99
    %p101 = scmp.ne.s32.totalorder %s90, %s91
    %p102 = scmp.eq.s32.totalorder %s14, 0
    %p103 = por %p101, %p102
    %p104 = scmp.ne.s32.totalorder %s90, %s91
    %p105 = scmp.eq.s32.totalorder %s15, 1
    %p106 = por %p104, %p105
    %p108 = scmp.ne.s32.totalorder %s91, %s107
    %p109 = scmp.eq.s32.totalorder %s15, 0
    %p110 = por %p108, %p109
    %p111 = scmp.le.s32.totalorder 1, %s9
    %p112 = scmp.lt.s32.totalorder %s9, 3
    %p113 = pnand %p111, %p112
    %p114 = pneg %p113
    // Predicated region
    $region9: #{_forward_impl.12} parent=5 // pred_check
      _
    $region10: #{_forward_impl.12} parent=5 // pred_check_branch
      %116 = sbr.rel (%p113) target = $region12
    $region11: #{_forward_impl.12} parent=5 // pred_region
      %s117 = ssub.s32 %s9, 1
      // Predicated region
      $region13: #{_forward_impl.12} parent=11 // pred_check
        %p118 = pneg %p56
      $region14: #{_forward_impl.12} parent=11 // pred_check_branch
        %120 = sbr.rel (%p118) target = $region16
      $region15: #{_forward_impl.12} parent=11 // pred_region
        _
      $region16: #{_forward_impl.12} parent=11 // pred_fallthru
        _
      // Predicated region
      $region17: #{_forward_impl.12} parent=11 // pred_check
        %p121 = pneg %p77
      $region18: #{_forward_impl.12} parent=11 // pred_check_branch
        %123 = sbr.rel (%p121) target = $region20
      $region19: #{_forward_impl.12} parent=11 // pred_region
        _
      $region20: #{_forward_impl.12} parent=11 // pred_fallthru
        _
    $region12: #{_forward_impl.12} parent=5 // pred_fallthru
      _
    %p124 = scmp.lt.s32.totalorder %s9, 2
    // Predicated region
    $region21: #{_forward_impl.12} parent=5 // pred_check
      %p125 = pneg %p124
    $region22: #{_forward_impl.12} parent=5 // pred_check_branch
      %127 = sbr.rel (%p125) target = $region24
    $region23: #{_forward_impl.12} parent=5 // pred_region
      // Predicated region
      $region25: #{_forward_impl.12} parent=23 // pred_check
        %p128 = pneg %p29
      $region26: #{_forward_impl.12} parent=23 // pred_check_branch
        %130 = sbr.rel (%p128) target = $region28
      $region27: #{_forward_impl.12} parent=23 // pred_region
        %s131 = smul.u32 32, %s9
        %p132 = scmp.lt.s32.totalorder %s131, 63
        %s133 = scalar_select %p132, %s131, 63
        %s134 = smul.addr %s133, 4
        %s135 = scalar_lea.vmem %s0, %s134
        %s136 = smul.u32 32, %s9
      $region28: #{_forward_impl.12} parent=23 // pred_fallthru
        _
    $region24: #{_forward_impl.12} parent=5 // pred_fallthru
      _
    %p137 = scmp.le.s32.totalorder 1, %s9
    %p138 = scmp.lt.s32.totalorder %s9, 3
    %p139 = pnand %p137, %p138
    %p140 = pneg %p139
    // Predicated region
    $region29: #{_forward_impl.12} parent=5 // pred_check
      _
    $region30: #{_forward_impl.12} parent=5 // pred_check_branch
      %142 = sbr.rel (%p139) target = $region32
    $region31: #{_forward_impl.12} parent=5 // pred_region
      %s143 = ssub.s32 %s9, 1
      %s144 = smul.u32 32, %s14
      %p145 = scmp.lt.s32.totalorder %s144, 63
      %s146 = scalar_select %p145, %s144, 63
      %s147 = smul.addr %s146, 4
      %s148 = scalar_lea.vmem %s0, %s147
      %p149 = pneg %p35
      %p150 = pneg %p32
      %p151 = pneg %p56
      %p152 = pneg %p53
      %p153 = pneg %p77
      %p154 = pneg %p74
      %p155 = pneg %p103
      %p156 = pneg %p100
      %s157 = smul.u32 32, %s14
      %p158 = scmp.lt.s32.totalorder %s157, 63
      %s159 = scalar_select %p158, %s157, 63
      %s160 = smul.addr %s159, 8
      %s161 = scalar_lea.vmem %s3, %s160
      %s162 = smul.u32 32, %s14
      %p163 = scmp.lt.s32.totalorder %s162, 63
      %s164 = scalar_select %p163, %s162, 63
      %s165 = smul.addr %s164, 4
      %s166 = scalar_lea.vmem %s0, %s165
      %s167 = smul.u32 32, %s14
      %s168 = smul.u32 32, %s14
      %p169 = scmp.lt.s32.totalorder %s168, 63
      %s170 = scalar_select %p169, %s168, 63
      %s171 = smul.addr %s170, 8
      %s172 = scalar_lea.vmem %s3, %s171
      %s173 = smul.u32 32, %s14
      %v175 = vld [vmem:[%s166] sm:$0xf]
      %v176 = vld [vmem:[%s166 + $0x4] sm:$0xf]
      %v177 = vld [vmem:[%s166 + $0x8] sm:$0xf]
      %v178 = vld [vmem:[%s166 + $0xc] sm:$0xf]
      %v179 = vld [vmem:[%s166 + $0x10] sm:$0xf]
      %v180 = vld [vmem:[%s166 + $0x14] sm:$0xf]
      %v181 = vld [vmem:[%s166 + $0x18] sm:$0xf]
      %v182 = vld [vmem:[%s166 + $0x1c] sm:$0xf]
      %v183 = vld [vmem:[%s166 + $0x20] sm:$0xf]
      %v184 = vld [vmem:[%s166 + $0x24] sm:$0xf]
      %v185 = vld [vmem:[%s166 + $0x28] sm:$0xf]
      %v186 = vld [vmem:[%s166 + $0x2c] sm:$0xf]
      %v187 = vld [vmem:[%s166 + $0x30] sm:$0xf]
      %v188 = vld [vmem:[%s166 + $0x34] sm:$0xf]
      %v189 = vld [vmem:[%s166 + $0x38] sm:$0xf]
      %v190 = vld [vmem:[%s166 + $0x3c] sm:$0xf]
      %v191 = vld [vmem:[%s166 + $0x40] sm:$0xf]
      %v192 = vld [vmem:[%s166 + $0x44] sm:$0xf]
      %v193 = vld [vmem:[%s166 + $0x48] sm:$0xf]
      %v194 = vld [vmem:[%s166 + $0x4c] sm:$0xf]
      %v195 = vld [vmem:[%s166 + $0x50] sm:$0xf]
      %v196 = vld [vmem:[%s166 + $0x54] sm:$0xf]
      %v197 = vld [vmem:[%s166 + $0x58] sm:$0xf]
      %v198 = vld [vmem:[%s166 + $0x5c] sm:$0xf]
      %v199 = vld [vmem:[%s166 + $0x60] sm:$0xf]
      %v200 = vld [vmem:[%s166 + $0x64] sm:$0xf]
      %v201 = vld [vmem:[%s166 + $0x68] sm:$0xf]
      %v202 = vld [vmem:[%s166 + $0x6c] sm:$0xf]
      %v203 = vld [vmem:[%s166 + $0x70] sm:$0xf]
      %v204 = vld [vmem:[%s166 + $0x74] sm:$0xf]
      %v205 = vld [vmem:[%s166 + $0x78] sm:$0xf]
      %v206 = vld [vmem:[%s166 + $0x7c] sm:$0xf]
      %v207 = vld [vmem:[%s1] sm:$0xf]
      %v208 = vld [vmem:[%s1 + $0x4] sm:$0xf]
      %v209 = vld [vmem:[%s1 + $0x8] sm:$0xf]
      %v210 = vld [vmem:[%s1 + $0xc] sm:$0x3]
      %v211 = vld [vmem:[%s2] sm:$0x1]
      %v213 = vperm.slane %v211, 0
      %v247 = vunpack.c.l.b16 %v175
      %v248 = vunpack.c.l.b16 %v176
      %v249 = vunpack.c.l.b16 %v177
      %v250 = vunpack.c.l.b16 %v178
      %v251 = vunpack.c.l.b16 %v179
      %v252 = vunpack.c.l.b16 %v180
      %v253 = vunpack.c.l.b16 %v181
      %v254 = vunpack.c.l.b16 %v182
      %v255 = vunpack.c.l.b16 %v183
      %v256 = vunpack.c.l.b16 %v184
      %v257 = vunpack.c.l.b16 %v185
      %v258 = vunpack.c.l.b16 %v186
      %v259 = vunpack.c.l.b16 %v187
      %v260 = vunpack.c.l.b16 %v188
      %v261 = vunpack.c.l.b16 %v189
      %v262 = vunpack.c.l.b16 %v190
      %v263 = vunpack.c.l.b16 %v191
      %v264 = vunpack.c.l.b16 %v192
      %v265 = vunpack.c.l.b16 %v193
      %v266 = vunpack.c.l.b16 %v194
      %v267 = vunpack.c.l.b16 %v195
      %v268 = vunpack.c.l.b16 %v196
      %v269 = vunpack.c.l.b16 %v197
      %v270 = vunpack.c.l.b16 %v198
      %v271 = vunpack.c.l.b16 %v199
      %v272 = vunpack.c.l.b16 %v200
      %v273 = vunpack.c.l.b16 %v201
      %v274 = vunpack.c.l.b16 %v202
      %v275 = vunpack.c.l.b16 %v203
      %v276 = vunpack.c.l.b16 %v204
      %v277 = vunpack.c.l.b16 %v205
      %v278 = vunpack.c.l.b16 %v206
      %v279 = vpack.c.b16 %v248, %v247
      %v280 = vpack.c.b16 %v250, %v249
      %v281 = vpack.c.b16 %v252, %v251
      %v282 = vpack.c.b16 %v254, %v253
      %v283 = vpack.c.b16 %v256, %v255
      %v284 = vpack.c.b16 %v258, %v257
      %v285 = vpack.c.b16 %v260, %v259
      %v286 = vpack.c.b16 %v262, %v261
      %v287 = vpack.c.b16 %v264, %v263
      %v288 = vpack.c.b16 %v266, %v265
      %v289 = vpack.c.b16 %v268, %v267
      %v290 = vpack.c.b16 %v270, %v269
      %v291 = vpack.c.b16 %v272, %v271
      %v292 = vpack.c.b16 %v274, %v273
      %v293 = vpack.c.b16 %v276, %v275
      %v294 = vpack.c.b16 %v278, %v277
      %v299 = vunpack.c.l.b16 %v207
      %v300 = vunpack.c.l.b16 %v208
      %v301 = vunpack.c.l.b16 %v209
      %v302 = vunpack.c.l.b16 %v210
      %v303 = vpack.c.b16 %v300, %v299
      %v304 = vpack.c.b16 %v302, %v301
      %vm306 = vcmask 220160
      %v308 = vsel %vm306, %v279, 0
      %v311 = vsel %vm306, %v280, 0
      %v314 = vsel %vm306, %v281, 0
      %v317 = vsel %vm306, %v282, 0
      %v320 = vsel %vm306, %v283, 0
      %v323 = vsel %vm306, %v284, 0
      %v326 = vsel %vm306, %v285, 0
      %v329 = vsel %vm306, %v286, 0
      %v332 = vsel %vm306, %v287, 0
      %v335 = vsel %vm306, %v288, 0
      %v338 = vsel %vm306, %v289, 0
      %v341 = vsel %vm306, %v290, 0
      %v344 = vsel %vm306, %v291, 0
      %v347 = vsel %vm306, %v292, 0
      %v350 = vsel %vm306, %v293, 0
      %v353 = vsel %vm306, %v294, 0
      %vm355 = vcmask 1044480
      %vm356 = vcmask 1045504
      %v357 = vsel %vm355, 4294967295, 65535
      %v358 = vsel %vm356, %v357, 0
      %v360 = vand.u32 %v304, %v358
      %362 = vmatpush.bf16.msra.mxu0 0
      %363 = vmatpush.bf16.msra.mxu0 0
      %364 = vmatpush.bf16.msra.mxu0 0
      %365 = vmatpush.bf16.msra.mxu0 0
      %366 = vmatpush.bf16.msra.mxu0 0
      %367 = vmatpush.bf16.msra.mxu0 0
      %368 = vmatpush.bf16.msra.mxu0 %v360
      %369 = vmatpush.bf16.msra.mxu0 %v303
      %370 = vmatmul.bf16.gmra.mxu0 %v308
      %v371 = vpop.f32.mrf.mxu0
      %v372 = vadd.f32 %v213, %v371
      %v373 = vpop.f32.mrf.mxu0
      %v374 = vadd.f32 %v213, %v373
      %375 = vmatmul.bf16.gmra.mxu0 %v311
      %v376 = vpop.f32.mrf.mxu0
      %v377 = vadd.f32 %v213, %v376
      %v378 = vpop.f32.mrf.mxu0
      %v379 = vadd.f32 %v213, %v378
      %380 = vmatmul.bf16.gmra.mxu0 %v314
      %v381 = vpop.f32.mrf.mxu0
      %v382 = vadd.f32 %v213, %v381
      %v383 = vpop.f32.mrf.mxu0
      %v384 = vadd.f32 %v213, %v383
      %385 = vmatmul.bf16.gmra.mxu0 %v317
      %v386 = vpop.f32.mrf.mxu0
      %v387 = vadd.f32 %v213, %v386
      %v388 = vpop.f32.mrf.mxu0
      %v389 = vadd.f32 %v213, %v388
      %390 = vmatmul.bf16.gmra.mxu0 %v320
      %v391 = vpop.f32.mrf.mxu0
      %v392 = vadd.f32 %v213, %v391
      %v393 = vpop.f32.mrf.mxu0
      %v394 = vadd.f32 %v213, %v393
      %395 = vmatmul.bf16.gmra.mxu0 %v323
      %v396 = vpop.f32.mrf.mxu0
      %v397 = vadd.f32 %v213, %v396
      %v398 = vpop.f32.mrf.mxu0
      %v399 = vadd.f32 %v213, %v398
      %400 = vmatmul.bf16.gmra.mxu0 %v326
      %v401 = vpop.f32.mrf.mxu0
      %v402 = vadd.f32 %v213, %v401
      %v403 = vpop.f32.mrf.mxu0
      %v404 = vadd.f32 %v213, %v403
      %405 = vmatmul.bf16.gmra.mxu0 %v329
      %v406 = vpop.f32.mrf.mxu0
      %v407 = vadd.f32 %v213, %v406
      %v408 = vpop.f32.mrf.mxu0
      %v409 = vadd.f32 %v213, %v408
      %410 = vmatmul.bf16.gmra.mxu0 %v332
      %v411 = vpop.f32.mrf.mxu0
      %v412 = vadd.f32 %v213, %v411
      %v413 = vpop.f32.mrf.mxu0
      %v414 = vadd.f32 %v213, %v413
      %415 = vmatmul.bf16.gmra.mxu0 %v335
      %v416 = vpop.f32.mrf.mxu0
      %v417 = vadd.f32 %v213, %v416
      %v418 = vpop.f32.mrf.mxu0
      %v419 = vadd.f32 %v213, %v418
      %420 = vmatmul.bf16.gmra.mxu0 %v338
      %v421 = vpop.f32.mrf.mxu0
      %v422 = vadd.f32 %v213, %v421
      %v423 = vpop.f32.mrf.mxu0
      %v424 = vadd.f32 %v213, %v423
      %425 = vmatmul.bf16.gmra.mxu0 %v341
      %v426 = vpop.f32.mrf.mxu0
      %v427 = vadd.f32 %v213, %v426
      %v428 = vpop.f32.mrf.mxu0
      %v429 = vadd.f32 %v213, %v428
      %430 = vmatmul.bf16.gmra.mxu0 %v344
      %v431 = vpop.f32.mrf.mxu0
      %v432 = vadd.f32 %v213, %v431
      %v433 = vpop.f32.mrf.mxu0
      %v434 = vadd.f32 %v213, %v433
      %435 = vmatmul.bf16.gmra.mxu0 %v347
      %v436 = vpop.f32.mrf.mxu0
      %v437 = vadd.f32 %v213, %v436
      %v438 = vpop.f32.mrf.mxu0
      %v439 = vadd.f32 %v213, %v438
      %440 = vmatmul.bf16.gmra.mxu0 %v350
      %v441 = vpop.f32.mrf.mxu0
      %v442 = vadd.f32 %v213, %v441
      %v443 = vpop.f32.mrf.mxu0
      %v444 = vadd.f32 %v213, %v443
      %445 = vmatmul.bf16.gmra.mxu0 %v353
      %v446 = vpop.f32.mrf.mxu0
      %v447 = vadd.f32 %v213, %v446
      %v448 = vpop.f32.mrf.mxu0
      %v449 = vadd.f32 %v213, %v448
      %450 = vdwg.mxu0
      %v451 = vmax.f32 %v372, 0.0
      %v452 = vmax.f32 %v374, 0.0
      %v453 = vmax.f32 %v377, 0.0
      %v454 = vmax.f32 %v379, 0.0
      %v455 = vmax.f32 %v382, 0.0
      %v456 = vmax.f32 %v384, 0.0
      %v457 = vmax.f32 %v387, 0.0
      %v458 = vmax.f32 %v389, 0.0
      %v459 = vmax.f32 %v392, 0.0
      %v460 = vmax.f32 %v394, 0.0
      %v461 = vmax.f32 %v397, 0.0
      %v462 = vmax.f32 %v399, 0.0
      %v463 = vmax.f32 %v402, 0.0
      %v464 = vmax.f32 %v404, 0.0
      %v465 = vmax.f32 %v407, 0.0
      %v466 = vmax.f32 %v409, 0.0
      %v467 = vmax.f32 %v412, 0.0
      %v468 = vmax.f32 %v414, 0.0
      %v469 = vmax.f32 %v417, 0.0
      %v470 = vmax.f32 %v419, 0.0
      %v471 = vmax.f32 %v422, 0.0
      %v472 = vmax.f32 %v424, 0.0
      %v473 = vmax.f32 %v427, 0.0
      %v474 = vmax.f32 %v429, 0.0
      %v475 = vmax.f32 %v432, 0.0
      %v476 = vmax.f32 %v434, 0.0
      %v477 = vmax.f32 %v437, 0.0
      %v478 = vmax.f32 %v439, 0.0
      %v479 = vmax.f32 %v442, 0.0
      %v480 = vmax.f32 %v444, 0.0
      %v481 = vmax.f32 %v447, 0.0
      %v482 = vmax.f32 %v449, 0.0
      %vm483 = vcmask 130048
      %484 = vst.msk [vmem:[%s172] sm:$0xff] %vm483, %v451
      %485 = vst.msk [vmem:[%s172 + $0x8] sm:$0xff] %vm483, %v452
      %486 = vst.msk [vmem:[%s172 + $0x10] sm:$0xff] %vm483, %v453
      %487 = vst.msk [vmem:[%s172 + $0x18] sm:$0xff] %vm483, %v454
      %488 = vst.msk [vmem:[%s172 + $0x20] sm:$0xff] %vm483, %v455
      %489 = vst.msk [vmem:[%s172 + $0x28] sm:$0xff] %vm483, %v456
      %490 = vst.msk [vmem:[%s172 + $0x30] sm:$0xff] %vm483, %v457
      %491 = vst.msk [vmem:[%s172 + $0x38] sm:$0xff] %vm483, %v458
      %492 = vst.msk [vmem:[%s172 + $0x40] sm:$0xff] %vm483, %v459
      %493 = vst.msk [vmem:[%s172 + $0x48] sm:$0xff] %vm483, %v460
      %494 = vst.msk [vmem:[%s172 + $0x50] sm:$0xff] %vm483, %v461
      %495 = vst.msk [vmem:[%s172 + $0x58] sm:$0xff] %vm483, %v462
      %496 = vst.msk [vmem:[%s172 + $0x60] sm:$0xff] %vm483, %v463
      %497 = vst.msk [vmem:[%s172 + $0x68] sm:$0xff] %vm483, %v464
      %498 = vst.msk [vmem:[%s172 + $0x70] sm:$0xff] %vm483, %v465
      %499 = vst.msk [vmem:[%s172 + $0x78] sm:$0xff] %vm483, %v466
      %500 = vst.msk [vmem:[%s172 + $0x80] sm:$0xff] %vm483, %v467
      %501 = vst.msk [vmem:[%s172 + $0x88] sm:$0xff] %vm483, %v468
      %502 = vst.msk [vmem:[%s172 + $0x90] sm:$0xff] %vm483, %v469
      %503 = vst.msk [vmem:[%s172 + $0x98] sm:$0xff] %vm483, %v470
      %504 = vst.msk [vmem:[%s172 + $0xa0] sm:$0xff] %vm483, %v471
      %505 = vst.msk [vmem:[%s172 + $0xa8] sm:$0xff] %vm483, %v472
      %506 = vst.msk [vmem:[%s172 + $0xb0] sm:$0xff] %vm483, %v473
      %507 = vst.msk [vmem:[%s172 + $0xb8] sm:$0xff] %vm483, %v474
      %508 = vst.msk [vmem:[%s172 + $0xc0] sm:$0xff] %vm483, %v475
      %509 = vst.msk [vmem:[%s172 + $0xc8] sm:$0xff] %vm483, %v476
      %510 = vst.msk [vmem:[%s172 + $0xd0] sm:$0xff] %vm483, %v477
      %511 = vst.msk [vmem:[%s172 + $0xd8] sm:$0xff] %vm483, %v478
      %512 = vst.msk [vmem:[%s172 + $0xe0] sm:$0xff] %vm483, %v479
      %513 = vst.msk [vmem:[%s172 + $0xe8] sm:$0xff] %vm483, %v480
      %514 = vst.msk [vmem:[%s172 + $0xf0] sm:$0xff] %vm483, %v481
      %515 = vst.msk [vmem:[%s172 + $0xf8] sm:$0xff] %vm483, %v482
      %s516 = smul.u32 32, %s14
      %p517 = scmp.lt.s32.totalorder %s516, 63
      %s518 = scalar_select %p517, %s516, 63
      %s519 = smul.addr %s518, 8
      %s520 = scalar_lea.vmem %s3, %s519
      // Predicated region
      $region33: #{_forward_impl.12} parent=31 // pred_check
        %p521 = pneg %p100
      $region34: #{_forward_impl.12} parent=31 // pred_check_branch
        %523 = sbr.rel (%p521) target = $region36
      $region35: #{_forward_impl.12} parent=31 // pred_region
        %s524 = smul.u32 32, %s14
      $region36: #{_forward_impl.12} parent=31 // pred_fallthru
        _
    $region32: #{_forward_impl.12} parent=5 // pred_fallthru
      _
    %p525 = scmp.le.s32.totalorder 2, %s9
    // Predicated region
    $region37: #{_forward_impl.12} parent=5 // pred_check
      %p526 = pneg %p525
    $region38: #{_forward_impl.12} parent=5 // pred_check_branch
      %528 = sbr.rel (%p526) target = $region40
    $region39: #{_forward_impl.12} parent=5 // pred_region
      %s529 = ssub.s32 %s9, 2
      // Predicated region
      $region41: #{_forward_impl.12} parent=39 // pred_check
        %p530 = pneg %p106
      $region42: #{_forward_impl.12} parent=39 // pred_check_branch
        %532 = sbr.rel (%p530) target = $region44
      $region43: #{_forward_impl.12} parent=39 // pred_region
        %s533 = smul.u32 32, %s15
        %p534 = scmp.lt.s32.totalorder %s533, 63
        %s535 = scalar_select %p534, %s533, 63
        %s536 = smul.addr %s535, 8
        %s537 = scalar_lea.vmem %s3, %s536
      $region44: #{_forward_impl.12} parent=39 // pred_fallthru
        _
    $region40: #{_forward_impl.12} parent=5 // pred_fallthru
      _
  $region6: #{_forward_impl.12} parent=0 // loop_footer
    %s13 = sadd.s32 1, %s9
  $region7: #{_forward_impl.12} parent=0 // loop_footer_branch
    %8 = sbr.rel target = $region3
  $region8: #{_forward_impl.12} parent=0 // loop_exit
    _

// kernel: _forward_impl.13
$region0: #{_forward_impl.13}
  #allocation0 [shape = 'u32[]', space=smem, size = 0x4, offset = 0x4, fixed_abs, tag = 'smem constant byte address 0x4 - core index']
  #allocation1 [shape = 'u32[72,128]{1,0:T(1,128)}', space=vmem, size = 0x9000, scoped, tag = 'internal scratch']
  %s0 = inlined_call_operand.vmem [shape: bf16[128,144], index: 0, kind: input, shape index: {}]
  %s1 = inlined_call_operand.vmem [shape: bf16[144,32], index: 1, kind: input, shape index: {}]
  %s2 = inlined_call_operand.vmem [shape: f32[1,32], index: 2, kind: input, shape index: {}]
  %s3 = inlined_call_operand.vmem [shape: f32[128,32], index: 3, kind: output, shape index: {}]
  %s4 = sld [smem:[#allocation0]]
  $region22: #{_forward_impl.13} parent=0
    _
  %s6 = ssub.s32 1, %s4
  %s7 = scalar_select 0, %s6, %s4
  // Predicated region
  $region2: #{_forward_impl.13} parent=0 // pred_check
    _
  $region3: #{_forward_impl.13} parent=0 // pred_check_branch
    %9 = sbr.rel (0) target = $region5
  $region4: #{_forward_impl.13} parent=0 // pred_region
    _
  $region5: #{_forward_impl.13} parent=0 // pred_fallthru
    _
  // Predicated region
  $region6: #{_forward_impl.13} parent=0 // pred_check
    _
  $region7: #{_forward_impl.13} parent=0 // pred_check_branch
    %11 = sbr.rel (0) target = $region9
  $region8: #{_forward_impl.13} parent=0 // pred_region
    _
  $region9: #{_forward_impl.13} parent=0 // pred_fallthru
    _
  // Predicated region
  $region10: #{_forward_impl.13} parent=0 // pred_check
    _
  $region11: #{_forward_impl.13} parent=0 // pred_check_branch
    %13 = sbr.rel (0) target = $region13
  $region12: #{_forward_impl.13} parent=0 // pred_region
    _
  $region13: #{_forward_impl.13} parent=0 // pred_fallthru
    _
  %v15 = vld [vmem:[%s0] sm:$0xff]
  %v16 = vld [vmem:[%s0 + $0x8] sm:$0xff]
  %v17 = vld [vmem:[%s0 + $0x10] sm:$0xff]
  %v18 = vld [vmem:[%s0 + $0x18] sm:$0xff]
  %v19 = vld [vmem:[%s0 + $0x20] sm:$0xff]
  %v20 = vld [vmem:[%s0 + $0x28] sm:$0xff]
  %v21 = vld [vmem:[%s0 + $0x30] sm:$0xff]
  %v22 = vld [vmem:[%s0 + $0x38] sm:$0xff]
  %v23 = vld [vmem:[%s0 + $0x40] sm:$0xff]
  %v24 = vld [vmem:[%s0 + $0x48] sm:$0xff]
  %v25 = vld [vmem:[%s0 + $0x50] sm:$0xff]
  %v26 = vld [vmem:[%s0 + $0x58] sm:$0xff]
  %v27 = vld [vmem:[%s0 + $0x60] sm:$0xff]
  %v28 = vld [vmem:[%s0 + $0x68] sm:$0xff]
  %v29 = vld [vmem:[%s0 + $0x70] sm:$0xff]
  %v30 = vld [vmem:[%s0 + $0x78] sm:$0xff]
  %v31 = vld [vmem:[%s1] sm:$0xf]
  %v32 = vld [vmem:[%s1 + $0x4] sm:$0xf]
  %v33 = vld [vmem:[%s1 + $0x8] sm:$0xf]
  %v34 = vld [vmem:[%s1 + $0xc] sm:$0xf]
  %v35 = vld [vmem:[%s1 + $0x10] sm:$0xf]
  %v36 = vld [vmem:[%s1 + $0x14] sm:$0xf]
  %v37 = vld [vmem:[%s1 + $0x18] sm:$0xf]
  %v38 = vld [vmem:[%s1 + $0x1c] sm:$0xf]
  %v39 = vld [vmem:[%s1 + $0x20] sm:$0xf]
  %v40 = vld [vmem:[%s1 + $0x24] sm:$0xf]
  %v41 = vld [vmem:[%s1 + $0x28] sm:$0xf]
  %v42 = vld [vmem:[%s1 + $0x2c] sm:$0xf]
  %v43 = vld [vmem:[%s1 + $0x30] sm:$0xf]
  %v44 = vld [vmem:[%s1 + $0x34] sm:$0xf]
  %v45 = vld [vmem:[%s1 + $0x38] sm:$0xf]
  %v46 = vld [vmem:[%s1 + $0x3c] sm:$0xf]
  %v47 = vld [vmem:[%s1 + $0x40] sm:$0xf]
  %v48 = vld [vmem:[%s1 + $0x44] sm:$0xf]
  %v49 = vld [vmem:[%s2] sm:$0x1]
  %v51 = vperm.slane %v49, 0
  %v69 = vunpack.c.l.b16 %v15
  %v70 = vunpack.c.h.b16 %v15
  %v71 = vunpack.c.l.b16 %v16
  %v72 = vunpack.c.h.b16 %v16
  %v73 = vunpack.c.l.b16 %v17
  %v74 = vunpack.c.h.b16 %v17
  %v75 = vunpack.c.l.b16 %v18
  %v76 = vunpack.c.h.b16 %v18
  %v77 = vunpack.c.l.b16 %v19
  %v78 = vunpack.c.h.b16 %v19
  %v79 = vunpack.c.l.b16 %v20
  %v80 = vunpack.c.h.b16 %v20
  %v81 = vunpack.c.l.b16 %v21
  %v82 = vunpack.c.h.b16 %v21
  %v83 = vunpack.c.l.b16 %v22
  %v84 = vunpack.c.h.b16 %v22
  %v85 = vunpack.c.l.b16 %v23
  %v86 = vunpack.c.h.b16 %v23
  %v87 = vunpack.c.l.b16 %v24
  %v88 = vunpack.c.h.b16 %v24
  %v89 = vunpack.c.l.b16 %v25
  %v90 = vunpack.c.h.b16 %v25
  %v91 = vunpack.c.l.b16 %v26
  %v92 = vunpack.c.h.b16 %v26
  %v93 = vunpack.c.l.b16 %v27
  %v94 = vunpack.c.h.b16 %v27
  %v95 = vunpack.c.l.b16 %v28
  %v96 = vunpack.c.h.b16 %v28
  %v97 = vunpack.c.l.b16 %v29
  %v98 = vunpack.c.h.b16 %v29
  %v99 = vunpack.c.l.b16 %v30
  %v100 = vunpack.c.h.b16 %v30
  %v101 = vpack.c.b16 %v71, %v69
  %v102 = vpack.c.b16 %v72, %v70
  %v103 = vpack.c.b16 %v75, %v73
  %v104 = vpack.c.b16 %v76, %v74
  %v105 = vpack.c.b16 %v79, %v77
  %v106 = vpack.c.b16 %v80, %v78
  %v107 = vpack.c.b16 %v83, %v81
  %v108 = vpack.c.b16 %v84, %v82
  %v109 = vpack.c.b16 %v87, %v85
  %v110 = vpack.c.b16 %v88, %v86
  %v111 = vpack.c.b16 %v91, %v89
  %v112 = vpack.c.b16 %v92, %v90
  %v113 = vpack.c.b16 %v95, %v93
  %v114 = vpack.c.b16 %v96, %v94
  %v115 = vpack.c.b16 %v99, %v97
  %v116 = vpack.c.b16 %v100, %v98
  %v143 = vunpack.c.l.b16 %v31
  %v144 = vunpack.c.l.b16 %v32
  %v145 = vunpack.c.l.b16 %v33
  %v146 = vunpack.c.l.b16 %v34
  %v147 = vunpack.c.l.b16 %v35
  %v148 = vunpack.c.l.b16 %v36
  %v149 = vunpack.c.l.b16 %v37
  %v150 = vunpack.c.l.b16 %v38
  %v151 = vunpack.c.l.b16 %v39
  %v152 = vunpack.c.l.b16 %v40
  %v153 = vunpack.c.l.b16 %v41
  %v154 = vunpack.c.l.b16 %v42
  %v155 = vunpack.c.l.b16 %v43
  %v156 = vunpack.c.l.b16 %v44
  %v157 = vunpack.c.l.b16 %v45
  %v158 = vunpack.c.l.b16 %v46
  %v159 = vunpack.c.l.b16 %v47
  %v160 = vunpack.c.l.b16 %v48
  %v161 = vpack.c.b16 %v144, %v143
  %v162 = vpack.c.b16 %v146, %v145
  %v163 = vpack.c.b16 %v148, %v147
  %v164 = vpack.c.b16 %v150, %v149
  %v165 = vpack.c.b16 %v152, %v151
  %v166 = vpack.c.b16 %v154, %v153
  %v167 = vpack.c.b16 %v156, %v155
  %v168 = vpack.c.b16 %v158, %v157
  %v169 = vpack.c.b16 %v160, %v159
  %vm179 = vcmask 130048
  %v181 = vsel %vm179, %v102, 0
  %v184 = vsel %vm179, %v104, 0
  %v187 = vsel %vm179, %v106, 0
  %v190 = vsel %vm179, %v108, 0
  %v193 = vsel %vm179, %v110, 0
  %v196 = vsel %vm179, %v112, 0
  %v199 = vsel %vm179, %v114, 0
  %v202 = vsel %vm179, %v116, 0
  %204 = vmatpush.bf16.msra.mxu0 %v168
  %205 = vmatpush.bf16.msra.mxu0 %v167
  %206 = vmatpush.bf16.msra.mxu0 %v166
  %207 = vmatpush.bf16.msra.mxu0 %v165
  %208 = vmatpush.bf16.msra.mxu0 %v164
  %209 = vmatpush.bf16.msra.mxu0 %v163
  %210 = vmatpush.bf16.msra.mxu0 %v162
  %211 = vmatpush.bf16.msra.mxu0 %v161
  %212 = vmatmul.bf16.gmra.mxu0 %v101
  %v213 = vpop.f32.mrf.mxu0
  %v214 = vadd.f32 %v51, %v213
  %v215 = vpop.f32.mrf.mxu0
  %v216 = vadd.f32 %v51, %v215
  %217 = vmatmul.bf16.gmra.mxu0 %v103
  %v218 = vpop.f32.mrf.mxu0
  %v219 = vadd.f32 %v51, %v218
  %v220 = vpop.f32.mrf.mxu0
  %v221 = vadd.f32 %v51, %v220
  %222 = vmatmul.bf16.gmra.mxu0 %v105
  %v223 = vpop.f32.mrf.mxu0
  %v224 = vadd.f32 %v51, %v223
  %v225 = vpop.f32.mrf.mxu0
  %v226 = vadd.f32 %v51, %v225
  %227 = vmatmul.bf16.gmra.mxu0 %v107
  %v228 = vpop.f32.mrf.mxu0
  %v229 = vadd.f32 %v51, %v228
  %v230 = vpop.f32.mrf.mxu0
  %v231 = vadd.f32 %v51, %v230
  %232 = vmatmul.bf16.gmra.mxu0 %v109
  %v233 = vpop.f32.mrf.mxu0
  %v234 = vadd.f32 %v51, %v233
  %v235 = vpop.f32.mrf.mxu0
  %v236 = vadd.f32 %v51, %v235
  %237 = vmatmul.bf16.gmra.mxu0 %v111
  %v238 = vpop.f32.mrf.mxu0
  %v239 = vadd.f32 %v51, %v238
  %v240 = vpop.f32.mrf.mxu0
  %v241 = vadd.f32 %v51, %v240
  %242 = vmatmul.bf16.gmra.mxu0 %v113
  %v243 = vpop.f32.mrf.mxu0
  %v244 = vadd.f32 %v51, %v243
  %v245 = vpop.f32.mrf.mxu0
  %v246 = vadd.f32 %v51, %v245
  %247 = vmatmul.bf16.gmra.mxu0 %v115
  %v248 = vpop.f32.mrf.mxu0
  %v249 = vadd.f32 %v51, %v248
  %v250 = vpop.f32.mrf.mxu0
  %v251 = vadd.f32 %v51, %v250
  %252 = vdwg.mxu0
  %253 = vmatpush.bf16.msra.mxu0 0
  %254 = vmatpush.bf16.msra.mxu0 0
  %255 = vmatpush.bf16.msra.mxu0 0
  %256 = vmatpush.bf16.msra.mxu0 0
  %257 = vmatpush.bf16.msra.mxu0 0
  %258 = vmatpush.bf16.msra.mxu0 0
  %259 = vmatpush.bf16.msra.mxu0 0
  %260 = vmatpush.bf16.msra.mxu0 %v169
  %261 = vmatmul.bf16.gmra.mxu0 %v181
  %v262 = vpop.f32.mrf.mxu0
  %v263 = vadd.f32 %v214, %v262
  %v264 = vpop.f32.mrf.mxu0
  %v265 = vadd.f32 %v216, %v264
  %266 = vmatmul.bf16.gmra.mxu0 %v184
  %v267 = vpop.f32.mrf.mxu0
  %v268 = vadd.f32 %v219, %v267
  %v269 = vpop.f32.mrf.mxu0
  %v270 = vadd.f32 %v221, %v269
  %271 = vmatmul.bf16.gmra.mxu0 %v187
  %v272 = vpop.f32.mrf.mxu0
  %v273 = vadd.f32 %v224, %v272
  %v274 = vpop.f32.mrf.mxu0
  %v275 = vadd.f32 %v226, %v274
  %276 = vmatmul.bf16.gmra.mxu0 %v190
  %v277 = vpop.f32.mrf.mxu0
  %v278 = vadd.f32 %v229, %v277
  %v279 = vpop.f32.mrf.mxu0
  %v280 = vadd.f32 %v231, %v279
  %281 = vmatmul.bf16.gmra.mxu0 %v193
  %v282 = vpop.f32.mrf.mxu0
  %v283 = vadd.f32 %v234, %v282
  %v284 = vpop.f32.mrf.mxu0
  %v285 = vadd.f32 %v236, %v284
  %286 = vmatmul.bf16.gmra.mxu0 %v196
  %v287 = vpop.f32.mrf.mxu0
  %v288 = vadd.f32 %v239, %v287
  %v289 = vpop.f32.mrf.mxu0
  %v290 = vadd.f32 %v241, %v289
  %291 = vmatmul.bf16.gmra.mxu0 %v199
  %v292 = vpop.f32.mrf.mxu0
  %v293 = vadd.f32 %v244, %v292
  %v294 = vpop.f32.mrf.mxu0
  %v295 = vadd.f32 %v246, %v294
  %296 = vmatmul.bf16.gmra.mxu0 %v202
  %v297 = vpop.f32.mrf.mxu0
  %v298 = vadd.f32 %v249, %v297
  %v299 = vpop.f32.mrf.mxu0
  %v300 = vadd.f32 %v251, %v299
  %301 = vdwg.mxu0
  %v302 = vmax.f32 %v263, 0.0
  %v303 = vmax.f32 %v265, 0.0
  %v304 = vmax.f32 %v268, 0.0
  %v305 = vmax.f32 %v270, 0.0
  %v306 = vmax.f32 %v273, 0.0
  %v307 = vmax.f32 %v275, 0.0
  %v308 = vmax.f32 %v278, 0.0
  %v309 = vmax.f32 %v280, 0.0
  %v310 = vmax.f32 %v283, 0.0
  %v311 = vmax.f32 %v285, 0.0
  %v312 = vmax.f32 %v288, 0.0
  %v313 = vmax.f32 %v290, 0.0
  %v314 = vmax.f32 %v293, 0.0
  %v315 = vmax.f32 %v295, 0.0
  %v316 = vmax.f32 %v298, 0.0
  %v317 = vmax.f32 %v300, 0.0
  %vm318 = vcmask 261120
  %319 = vst.msk [vmem:[%s3] sm:$0xff] %vm318, %v302
  %320 = vst.msk [vmem:[%s3 + $0x8] sm:$0xff] %vm318, %v303
  %321 = vst.msk [vmem:[%s3 + $0x10] sm:$0xff] %vm318, %v304
  %322 = vst.msk [vmem:[%s3 + $0x18] sm:$0xff] %vm318, %v305
  %323 = vst.msk [vmem:[%s3 + $0x20] sm:$0xff] %vm318, %v306
  %324 = vst.msk [vmem:[%s3 + $0x28] sm:$0xff] %vm318, %v307
  %325 = vst.msk [vmem:[%s3 + $0x30] sm:$0xff] %vm318, %v308
  %326 = vst.msk [vmem:[%s3 + $0x38] sm:$0xff] %vm318, %v309
  %327 = vst.msk [vmem:[%s3 + $0x40] sm:$0xff] %vm318, %v310
  %328 = vst.msk [vmem:[%s3 + $0x48] sm:$0xff] %vm318, %v311
  %329 = vst.msk [vmem:[%s3 + $0x50] sm:$0xff] %vm318, %v312
  %330 = vst.msk [vmem:[%s3 + $0x58] sm:$0xff] %vm318, %v313
  %331 = vst.msk [vmem:[%s3 + $0x60] sm:$0xff] %vm318, %v314
  %332 = vst.msk [vmem:[%s3 + $0x68] sm:$0xff] %vm318, %v315
  %333 = vst.msk [vmem:[%s3 + $0x70] sm:$0xff] %vm318, %v316
  %334 = vst.msk [vmem:[%s3 + $0x78] sm:$0xff] %vm318, %v317
  // Predicated region
  $region14: #{_forward_impl.13} parent=0 // pred_check
    _
  $region15: #{_forward_impl.13} parent=0 // pred_check_branch
    %336 = sbr.rel (0) target = $region17
  $region16: #{_forward_impl.13} parent=0 // pred_region
    _
  $region17: #{_forward_impl.13} parent=0 // pred_fallthru
    _
  // Predicated region
  $region18: #{_forward_impl.13} parent=0 // pred_check
    _
  $region19: #{_forward_impl.13} parent=0 // pred_check_branch
    %338 = sbr.rel (0) target = $region21
  $region20: #{_forward_impl.13} parent=0 // pred_region
    _
  $region21: #{_forward_impl.13} parent=0 // pred_fallthru
    _

// kernel: _forward_impl.14
$region0: #{_forward_impl.14}
  #allocation0 [shape = 'u32[]', space=smem, size = 0x4, offset = 0x4, fixed_abs, tag = 'smem constant byte address 0x4 - core index']
  #allocation1 [shape = 'u32[72,128]{1,0:T(1,128)}', space=vmem, size = 0x9000, scoped, tag = 'internal scratch']
  %s0 = inlined_call_operand.vmem [shape: bf16[32,288], index: 0, kind: input, shape index: {}]
  %s1 = inlined_call_operand.vmem [shape: bf16[288,64], index: 1, kind: input, shape index: {}]
  %s2 = inlined_call_operand.vmem [shape: f32[1,64], index: 2, kind: input, shape index: {}]
  %s3 = inlined_call_operand.vmem [shape: f32[32,64], index: 3, kind: output, shape index: {}]
  %s4 = sld [smem:[#allocation0]]
  $region22: #{_forward_impl.14} parent=0
    _
  %s6 = ssub.s32 1, %s4
  %s7 = scalar_select 0, %s6, %s4
  // Predicated region
  $region2: #{_forward_impl.14} parent=0 // pred_check
    _
  $region3: #{_forward_impl.14} parent=0 // pred_check_branch
    %9 = sbr.rel (0) target = $region5
  $region4: #{_forward_impl.14} parent=0 // pred_region
    _
  $region5: #{_forward_impl.14} parent=0 // pred_fallthru
    _
  // Predicated region
  $region6: #{_forward_impl.14} parent=0 // pred_check
    _
  $region7: #{_forward_impl.14} parent=0 // pred_check_branch
    %11 = sbr.rel (0) target = $region9
  $region8: #{_forward_impl.14} parent=0 // pred_region
    _
  $region9: #{_forward_impl.14} parent=0 // pred_fallthru
    _
  // Predicated region
  $region10: #{_forward_impl.14} parent=0 // pred_check
    _
  $region11: #{_forward_impl.14} parent=0 // pred_check_branch
    %13 = sbr.rel (0) target = $region13
  $region12: #{_forward_impl.14} parent=0 // pred_region
    _
  $region13: #{_forward_impl.14} parent=0 // pred_fallthru
    _
  %v15 = vld [vmem:[%s0] sm:$0xff]
  %v16 = vld [vmem:[%s0 + $0x8] sm:$0xf]
  %v17 = vld [vmem:[%s0 + $0xc] sm:$0xff]
  %v18 = vld [vmem:[%s0 + $0x14] sm:$0xf]
  %v19 = vld [vmem:[%s0 + $0x18] sm:$0xff]
  %v20 = vld [vmem:[%s0 + $0x20] sm:$0xf]
  %v21 = vld [vmem:[%s0 + $0x24] sm:$0xff]
  %v22 = vld [vmem:[%s0 + $0x2c] sm:$0xf]
  %v23 = vld [vmem:[%s1] sm:$0xf]
  %v24 = vld [vmem:[%s1 + $0x4] sm:$0xf]
  %v25 = vld [vmem:[%s1 + $0x8] sm:$0xf]
  %v26 = vld [vmem:[%s1 + $0xc] sm:$0xf]
  %v27 = vld [vmem:[%s1 + $0x10] sm:$0xf]
  %v28 = vld [vmem:[%s1 + $0x14] sm:$0xf]
  %v29 = vld [vmem:[%s1 + $0x18] sm:$0xf]
  %v30 = vld [vmem:[%s1 + $0x1c] sm:$0xf]
  %v31 = vld [vmem:[%s1 + $0x20] sm:$0xf]
  %v32 = vld [vmem:[%s1 + $0x24] sm:$0xf]
  %v33 = vld [vmem:[%s1 + $0x28] sm:$0xf]
  %v34 = vld [vmem:[%s1 + $0x2c] sm:$0xf]
  %v35 = vld [vmem:[%s1 + $0x30] sm:$0xf]
  %v36 = vld [vmem:[%s1 + $0x34] sm:$0xf]
  %v37 = vld [vmem:[%s1 + $0x38] sm:$0xf]
  %v38 = vld [vmem:[%s1 + $0x3c] sm:$0xf]
  %v39 = vld [vmem:[%s1 + $0x40] sm:$0xf]
  %v40 = vld [vmem:[%s1 + $0x44] sm:$0xf]
  %v41 = vld [vmem:[%s1 + $0x48] sm:$0xf]
  %v42 = vld [vmem:[%s1 + $0x4c] sm:$0xf]
  %v43 = vld [vmem:[%s1 + $0x50] sm:$0xf]
  %v44 = vld [vmem:[%s1 + $0x54] sm:$0xf]
  %v45 = vld [vmem:[%s1 + $0x58] sm:$0xf]
  %v46 = vld [vmem:[%s1 + $0x5c] sm:$0xf]
  %v47 = vld [vmem:[%s1 + $0x60] sm:$0xf]
  %v48 = vld [vmem:[%s1 + $0x64] sm:$0xf]
  %v49 = vld [vmem:[%s1 + $0x68] sm:$0xf]
  %v50 = vld [vmem:[%s1 + $0x6c] sm:$0xf]
  %v51 = vld [vmem:[%s1 + $0x70] sm:$0xf]
  %v52 = vld [vmem:[%s1 + $0x74] sm:$0xf]
  %v53 = vld [vmem:[%s1 + $0x78] sm:$0xf]
  %v54 = vld [vmem:[%s1 + $0x7c] sm:$0xf]
  %v55 = vld [vmem:[%s1 + $0x80] sm:$0xf]
  %v56 = vld [vmem:[%s1 + $0x84] sm:$0xf]
  %v57 = vld [vmem:[%s1 + $0x88] sm:$0xf]
  %v58 = vld [vmem:[%s1 + $0x8c] sm:$0xf]
  %v59 = vld [vmem:[%s2] sm:$0x1]
  %v61 = vperm.slane %v59, 0
  %v71 = vunpack.c.l.b16 %v15
  %v72 = vunpack.c.h.b16 %v15
  %v73 = vunpack.c.l.b16 %v16
  %v74 = vunpack.c.l.b16 %v17
  %v75 = vunpack.c.h.b16 %v17
  %v76 = vunpack.c.l.b16 %v18
  %v77 = vunpack.c.l.b16 %v19
  %v78 = vunpack.c.h.b16 %v19
  %v79 = vunpack.c.l.b16 %v20
  %v80 = vunpack.c.l.b16 %v21
  %v81 = vunpack.c.h.b16 %v21
  %v82 = vunpack.c.l.b16 %v22
  %v83 = vpack.c.b16 %v74, %v71
  %v84 = vpack.c.b16 %v75, %v72
  %v85 = vpack.c.b16 %v76, %v73
  %v86 = vpack.c.b16 %v80, %v77
  %v87 = vpack.c.b16 %v81, %v78
  %v88 = vpack.c.b16 %v82, %v79
  %v129 = vunpack.c.l.b16 %v23
  %v130 = vunpack.c.l.b16 %v24
  %v131 = vunpack.c.l.b16 %v25
  %v132 = vunpack.c.l.b16 %v26
  %v133 = vunpack.c.l.b16 %v27
  %v134 = vunpack.c.l.b16 %v28
  %v135 = vunpack.c.l.b16 %v29
  %v136 = vunpack.c.l.b16 %v30
  %v137 = vunpack.c.l.b16 %v31
  %v138 = vunpack.c.l.b16 %v32
  %v139 = vunpack.c.l.b16 %v33
  %v140 = vunpack.c.l.b16 %v34
  %v141 = vunpack.c.l.b16 %v35
  %v142 = vunpack.c.l.b16 %v36
  %v143 = vunpack.c.l.b16 %v37
  %v144 = vunpack.c.l.b16 %v38
  %v145 = vunpack.c.l.b16 %v39
  %v146 = vunpack.c.l.b16 %v40
  %v147 = vunpack.c.l.b16 %v41
  %v148 = vunpack.c.l.b16 %v42
  %v149 = vunpack.c.l.b16 %v43
  %v150 = vunpack.c.l.b16 %v44
  %v151 = vunpack.c.l.b16 %v45
  %v152 = vunpack.c.l.b16 %v46
  %v153 = vunpack.c.l.b16 %v47
  %v154 = vunpack.c.l.b16 %v48
  %v155 = vunpack.c.l.b16 %v49
  %v156 = vunpack.c.l.b16 %v50
  %v157 = vunpack.c.l.b16 %v51
  %v158 = vunpack.c.l.b16 %v52
  %v159 = vunpack.c.l.b16 %v53
  %v160 = vunpack.c.l.b16 %v54
  %v161 = vunpack.c.l.b16 %v55
  %v162 = vunpack.c.l.b16 %v56
  %v163 = vunpack.c.l.b16 %v57
  %v164 = vunpack.c.l.b16 %v58
  %v165 = vpack.c.b16 %v130, %v129
  %v166 = vpack.c.b16 %v132, %v131
  %v167 = vpack.c.b16 %v134, %v133
  %v168 = vpack.c.b16 %v136, %v135
  %v169 = vpack.c.b16 %v138, %v137
  %v170 = vpack.c.b16 %v140, %v139
  %v171 = vpack.c.b16 %v142, %v141
  %v172 = vpack.c.b16 %v144, %v143
  %v173 = vpack.c.b16 %v146, %v145
  %v174 = vpack.c.b16 %v148, %v147
  %v175 = vpack.c.b16 %v150, %v149
  %v176 = vpack.c.b16 %v152, %v151
  %v177 = vpack.c.b16 %v154, %v153
  %v178 = vpack.c.b16 %v156, %v155
  %v179 = vpack.c.b16 %v158, %v157
  %v180 = vpack.c.b16 %v160, %v159
  %v181 = vpack.c.b16 %v162, %v161
  %v182 = vpack.c.b16 %v164, %v163
  %vm201 = vcmask 261120
  %v203 = vsel %vm201, %v85, 0
  %v206 = vsel %vm201, %v88, 0
  %208 = vmatpush.bf16.msra.mxu0 %v172
  %209 = vmatpush.bf16.msra.mxu0 %v171
  %210 = vmatpush.bf16.msra.mxu0 %v170
  %211 = vmatpush.bf16.msra.mxu0 %v169
  %212 = vmatpush.bf16.msra.mxu0 %v168
  %213 = vmatpush.bf16.msra.mxu0 %v167
  %214 = vmatpush.bf16.msra.mxu0 %v166
  %215 = vmatpush.bf16.msra.mxu0 %v165
  %216 = vmatmul.bf16.gmra.mxu0 %v83
  %v217 = vpop.f32.mrf.mxu0
  %v218 = vadd.f32 %v61, %v217
  %v219 = vpop.f32.mrf.mxu0
  %v220 = vadd.f32 %v61, %v219
  %221 = vmatmul.bf16.gmra.mxu0 %v86
  %v222 = vpop.f32.mrf.mxu0
  %v223 = vadd.f32 %v61, %v222
  %v224 = vpop.f32.mrf.mxu0
  %v225 = vadd.f32 %v61, %v224
  %226 = vdwg.mxu0
  %227 = vmatpush.bf16.msra.mxu0 %v180
  %228 = vmatpush.bf16.msra.mxu0 %v179
  %229 = vmatpush.bf16.msra.mxu0 %v178
  %230 = vmatpush.bf16.msra.mxu0 %v177
  %231 = vmatpush.bf16.msra.mxu0 %v176
  %232 = vmatpush.bf16.msra.mxu0 %v175
  %233 = vmatpush.bf16.msra.mxu0 %v174
  %234 = vmatpush.bf16.msra.mxu0 %v173
  %235 = vmatmul.bf16.gmra.mxu0 %v84
  %v236 = vpop.f32.mrf.mxu0
  %v237 = vadd.f32 %v218, %v236
  %v238 = vpop.f32.mrf.mxu0
  %v239 = vadd.f32 %v220, %v238
  %240 = vmatmul.bf16.gmra.mxu0 %v87
  %v241 = vpop.f32.mrf.mxu0
  %v242 = vadd.f32 %v223, %v241
  %v243 = vpop.f32.mrf.mxu0
  %v244 = vadd.f32 %v225, %v243
  %245 = vdwg.mxu0
  %246 = vmatpush.bf16.msra.mxu0 0
  %247 = vmatpush.bf16.msra.mxu0 0
  %248 = vmatpush.bf16.msra.mxu0 0
  %249 = vmatpush.bf16.msra.mxu0 0
  %250 = vmatpush.bf16.msra.mxu0 0
  %251 = vmatpush.bf16.msra.mxu0 0
  %252 = vmatpush.bf16.msra.mxu0 %v182
  %253 = vmatpush.bf16.msra.mxu0 %v181
  %254 = vmatmul.bf16.gmra.mxu0 %v203
  %v255 = vpop.f32.mrf.mxu0
  %v256 = vadd.f32 %v237, %v255
  %v257 = vpop.f32.mrf.mxu0
  %v258 = vadd.f32 %v239, %v257
  %259 = vmatmul.bf16.gmra.mxu0 %v206
  %v260 = vpop.f32.mrf.mxu0
  %v261 = vadd.f32 %v242, %v260
  %v262 = vpop.f32.mrf.mxu0
  %v263 = vadd.f32 %v244, %v262
  %264 = vdwg.mxu0
  %v265 = vmax.f32 %v256, 0.0
  %v266 = vmax.f32 %v258, 0.0
  %v267 = vmax.f32 %v261, 0.0
  %v268 = vmax.f32 %v263, 0.0
  %vm269 = vcmask 523264
  %270 = vst.msk [vmem:[%s3] sm:$0xff] %vm269, %v265
  %271 = vst.msk [vmem:[%s3 + $0x8] sm:$0xff] %vm269, %v266
  %272 = vst.msk [vmem:[%s3 + $0x10] sm:$0xff] %vm269, %v267
  %273 = vst.msk [vmem:[%s3 + $0x18] sm:$0xff] %vm269, %v268
  // Predicated region
  $region14: #{_forward_impl.14} parent=0 // pred_check
    _
  $region15: #{_forward_impl.14} parent=0 // pred_check_branch
    %275 = sbr.rel (0) target = $region17
  $region16: #{_forward_impl.14} parent=0 // pred_region
    _
  $region17: #{_forward_impl.14} parent=0 // pred_fallthru
    _
  // Predicated region
  $region18: #{_forward_impl.14} parent=0 // pred_check
    _
  $region19: #{_forward_impl.14} parent=0 // pred_check_branch
    %277 = sbr.rel (0) target = $region21
  $region20: #{_forward_impl.14} parent=0 // pred_region
    _
  $region21: #{_forward_impl.14} parent=0 // pred_fallthru
    _

// kernel: _forward_impl.15
$region0: #{_forward_impl.15}
  #allocation0 [shape = 'u32[]', space=smem, size = 0x4, offset = 0x4, fixed_abs, tag = 'smem constant byte address 0x4 - core index']
  #allocation1 [shape = 'u32[72,128]{1,0:T(1,128)}', space=vmem, size = 0x9000, scoped, tag = 'internal scratch']
  %s0 = inlined_call_operand.vmem [shape: bf16[32,576], index: 0, kind: input, shape index: {}]
  %s1 = inlined_call_operand.vmem [shape: bf16[576,32], index: 1, kind: input, shape index: {}]
  %s2 = inlined_call_operand.vmem [shape: f32[1,32], index: 2, kind: input, shape index: {}]
  %s3 = inlined_call_operand.vmem [shape: f32[32,32], index: 3, kind: output, shape index: {}]
  %s4 = sld [smem:[#allocation0]]
  $region22: #{_forward_impl.15} parent=0
    _
  %s6 = ssub.s32 1, %s4
  %s7 = scalar_select 0, %s6, %s4
  // Predicated region
  $region2: #{_forward_impl.15} parent=0 // pred_check
    _
  $region3: #{_forward_impl.15} parent=0 // pred_check_branch
    %9 = sbr.rel (0) target = $region5
  $region4: #{_forward_impl.15} parent=0 // pred_region
    _
  $region5: #{_forward_impl.15} parent=0 // pred_fallthru
    _
  // Predicated region
  $region6: #{_forward_impl.15} parent=0 // pred_check
    _
  $region7: #{_forward_impl.15} parent=0 // pred_check_branch
    %11 = sbr.rel (0) target = $region9
  $region8: #{_forward_impl.15} parent=0 // pred_region
    _
  $region9: #{_forward_impl.15} parent=0 // pred_fallthru
    _
  // Predicated region
  $region10: #{_forward_impl.15} parent=0 // pred_check
    _
  $region11: #{_forward_impl.15} parent=0 // pred_check_branch
    %13 = sbr.rel (0) target = $region13
  $region12: #{_forward_impl.15} parent=0 // pred_region
    _
  $region13: #{_forward_impl.15} parent=0 // pred_fallthru
    _
  %v15 = vld [vmem:[%s0] sm:$0xff]
  %v16 = vld [vmem:[%s0 + $0x8] sm:$0xff]
  %v17 = vld [vmem:[%s0 + $0x10] sm:$0xf]
  %v18 = vld [vmem:[%s0 + $0x14] sm:$0xff]
  %v19 = vld [vmem:[%s0 + $0x1c] sm:$0xff]
  %v20 = vld [vmem:[%s0 + $0x24] sm:$0xf]
  %v21 = vld [vmem:[%s0 + $0x28] sm:$0xff]
  %v22 = vld [vmem:[%s0 + $0x30] sm:$0xff]
  %v23 = vld [vmem:[%s0 + $0x38] sm:$0xf]
  %v24 = vld [vmem:[%s0 + $0x3c] sm:$0xff]
  %v25 = vld [vmem:[%s0 + $0x44] sm:$0xff]
  %v26 = vld [vmem:[%s0 + $0x4c] sm:$0xf]
  %v27 = vld [vmem:[%s1] sm:$0xf]
  %v28 = vld [vmem:[%s1 + $0x4] sm:$0xf]
  %v29 = vld [vmem:[%s1 + $0x8] sm:$0xf]
  %v30 = vld [vmem:[%s1 + $0xc] sm:$0xf]
  %v31 = vld [vmem:[%s1 + $0x10] sm:$0xf]
  %v32 = vld [vmem:[%s1 + $0x14] sm:$0xf]
  %v33 = vld [vmem:[%s1 + $0x18] sm:$0xf]
  %v34 = vld [vmem:[%s1 + $0x1c] sm:$0xf]
  %v35 = vld [vmem:[%s1 + $0x20] sm:$0xf]
  %v36 = vld [vmem:[%s1 + $0x24] sm:$0xf]
  %v37 = vld [vmem:[%s1 + $0x28] sm:$0xf]
  %v38 = vld [vmem:[%s1 + $0x2c] sm:$0xf]
  %v39 = vld [vmem:[%s1 + $0x30] sm:$0xf]
  %v40 = vld [vmem:[%s1 + $0x34] sm:$0xf]
  %v41 = vld [vmem:[%s1 + $0x38] sm:$0xf]
  %v42 = vld [vmem:[%s1 + $0x3c] sm:$0xf]
  %v43 = vld [vmem:[%s1 + $0x40] sm:$0xf]
  %v44 = vld [vmem:[%s1 + $0x44] sm:$0xf]
  %v45 = vld [vmem:[%s1 + $0x48] sm:$0xf]
  %v46 = vld [vmem:[%s1 + $0x4c] sm:$0xf]
  %v47 = vld [vmem:[%s1 + $0x50] sm:$0xf]
  %v48 = vld [vmem:[%s1 + $0x54] sm:$0xf]
  %v49 = vld [vmem:[%s1 + $0x58] sm:$0xf]
  %v50 = vld [vmem:[%s1 + $0x5c] sm:$0xf]
  %v51 = vld [vmem:[%s1 + $0x60] sm:$0xf]
  %v52 = vld [vmem:[%s1 + $0x64] sm:$0xf]
  %v53 = vld [vmem:[%s1 + $0x68] sm:$0xf]
  %v54 = vld [vmem:[%s1 + $0x6c] sm:$0xf]
  %v55 = vld [vmem:[%s1 + $0x70] sm:$0xf]
  %v56 = vld [vmem:[%s1 + $0x74] sm:$0xf]
  %v57 = vld [vmem:[%s1 + $0x78] sm:$0xf]
  %v58 = vld [vmem:[%s1 + $0x7c] sm:$0xf]
  %v59 = vld [vmem:[%s1 + $0x80] sm:$0xf]
  %v60 = vld [vmem:[%s1 + $0x84] sm:$0xf]
  %v61 = vld [vmem:[%s1 + $0x88] sm:$0xf]
  %v62 = vld [vmem:[%s1 + $0x8c] sm:$0xf]
  %v63 = vld [vmem:[%s1 + $0x90] sm:$0xf]
  %v64 = vld [vmem:[%s1 + $0x94] sm:$0xf]
  %v65 = vld [vmem:[%s1 + $0x98] sm:$0xf]
  %v66 = vld [vmem:[%s1 + $0x9c] sm:$0xf]
  %v67 = vld [vmem:[%s1 + $0xa0] sm:$0xf]
  %v68 = vld [vmem:[%s1 + $0xa4] sm:$0xf]
  %v69 = vld [vmem:[%s1 + $0xa8] sm:$0xf]
  %v70 = vld [vmem:[%s1 + $0xac] sm:$0xf]
  %v71 = vld [vmem:[%s1 + $0xb0] sm:$0xf]
  %v72 = vld [vmem:[%s1 + $0xb4] sm:$0xf]
  %v73 = vld [vmem:[%s1 + $0xb8] sm:$0xf]
  %v74 = vld [vmem:[%s1 + $0xbc] sm:$0xf]
  %v75 = vld [vmem:[%s1 + $0xc0] sm:$0xf]
  %v76 = vld [vmem:[%s1 + $0xc4] sm:$0xf]
  %v77 = vld [vmem:[%s1 + $0xc8] sm:$0xf]
  %v78 = vld [vmem:[%s1 + $0xcc] sm:$0xf]
  %v79 = vld [vmem:[%s1 + $0xd0] sm:$0xf]
  %v80 = vld [vmem:[%s1 + $0xd4] sm:$0xf]
  %v81 = vld [vmem:[%s1 + $0xd8] sm:$0xf]
  %v82 = vld [vmem:[%s1 + $0xdc] sm:$0xf]
  %v83 = vld [vmem:[%s1 + $0xe0] sm:$0xf]
  %v84 = vld [vmem:[%s1 + $0xe4] sm:$0xf]
  %v85 = vld [vmem:[%s1 + $0xe8] sm:$0xf]
  %v86 = vld [vmem:[%s1 + $0xec] sm:$0xf]
  %v87 = vld [vmem:[%s1 + $0xf0] sm:$0xf]
  %v88 = vld [vmem:[%s1 + $0xf4] sm:$0xf]
  %v89 = vld [vmem:[%s1 + $0xf8] sm:$0xf]
  %v90 = vld [vmem:[%s1 + $0xfc] sm:$0xf]
  %v91 = vld [vmem:[%s1 + $0x100] sm:$0xf]
  %v92 = vld [vmem:[%s1 + $0x104] sm:$0xf]
  %v93 = vld [vmem:[%s1 + $0x108] sm:$0xf]
  %v94 = vld [vmem:[%s1 + $0x10c] sm:$0xf]
  %v95 = vld [vmem:[%s1 + $0x110] sm:$0xf]
  %v96 = vld [vmem:[%s1 + $0x114] sm:$0xf]
  %v97 = vld [vmem:[%s1 + $0x118] sm:$0xf]
  %v98 = vld [vmem:[%s1 + $0x11c] sm:$0xf]
  %v99 = vld [vmem:[%s2] sm:$0x1]
  %v101 = vperm.slane %v99, 0
  %v115 = vunpack.c.l.b16 %v15
  %v116 = vunpack.c.h.b16 %v15
  %v117 = vunpack.c.l.b16 %v16
  %v118 = vunpack.c.h.b16 %v16
  %v119 = vunpack.c.l.b16 %v17
  %v120 = vunpack.c.l.b16 %v18
  %v121 = vunpack.c.h.b16 %v18
  %v122 = vunpack.c.l.b16 %v19
  %v123 = vunpack.c.h.b16 %v19
  %v124 = vunpack.c.l.b16 %v20
  %v125 = vunpack.c.l.b16 %v21
  %v126 = vunpack.c.h.b16 %v21
  %v127 = vunpack.c.l.b16 %v22
  %v128 = vunpack.c.h.b16 %v22
  %v129 = vunpack.c.l.b16 %v23
  %v130 = vunpack.c.l.b16 %v24
  %v131 = vunpack.c.h.b16 %v24
  %v132 = vunpack.c.l.b16 %v25
  %v133 = vunpack.c.h.b16 %v25
  %v134 = vunpack.c.l.b16 %v26
  %v135 = vpack.c.b16 %v120, %v115
  %v136 = vpack.c.b16 %v121, %v116
  %v137 = vpack.c.b16 %v122, %v117
  %v138 = vpack.c.b16 %v123, %v118
  %v139 = vpack.c.b16 %v124, %v119
  %v140 = vpack.c.b16 %v130, %v125
  %v141 = vpack.c.b16 %v131, %v126
  %v142 = vpack.c.b16 %v132, %v127
  %v143 = vpack.c.b16 %v133, %v128
  %v144 = vpack.c.b16 %v134, %v129
  %v225 = vunpack.c.l.b16 %v27
  %v226 = vunpack.c.l.b16 %v28
  %v227 = vunpack.c.l.b16 %v29
  %v228 = vunpack.c.l.b16 %v30
  %v229 = vunpack.c.l.b16 %v31
  %v230 = vunpack.c.l.b16 %v32
  %v231 = vunpack.c.l.b16 %v33
  %v232 = vunpack.c.l.b16 %v34
  %v233 = vunpack.c.l.b16 %v35
  %v234 = vunpack.c.l.b16 %v36
  %v235 = vunpack.c.l.b16 %v37
  %v236 = vunpack.c.l.b16 %v38
  %v237 = vunpack.c.l.b16 %v39
  %v238 = vunpack.c.l.b16 %v40
  %v239 = vunpack.c.l.b16 %v41
  %v240 = vunpack.c.l.b16 %v42
  %v241 = vunpack.c.l.b16 %v43
  %v242 = vunpack.c.l.b16 %v44
  %v243 = vunpack.c.l.b16 %v45
  %v244 = vunpack.c.l.b16 %v46
  %v245 = vunpack.c.l.b16 %v47
  %v246 = vunpack.c.l.b16 %v48
  %v247 = vunpack.c.l.b16 %v49
  %v248 = vunpack.c.l.b16 %v50
  %v249 = vunpack.c.l.b16 %v51
  %v250 = vunpack.c.l.b16 %v52
  %v251 = vunpack.c.l.b16 %v53
  %v252 = vunpack.c.l.b16 %v54
  %v253 = vunpack.c.l.b16 %v55
  %v254 = vunpack.c.l.b16 %v56
  %v255 = vunpack.c.l.b16 %v57
  %v256 = vunpack.c.l.b16 %v58
  %v257 = vunpack.c.l.b16 %v59
  %v258 = vunpack.c.l.b16 %v60
  %v259 = vunpack.c.l.b16 %v61
  %v260 = vunpack.c.l.b16 %v62
  %v261 = vunpack.c.l.b16 %v63
  %v262 = vunpack.c.l.b16 %v64
  %v263 = vunpack.c.l.b16 %v65
  %v264 = vunpack.c.l.b16 %v66
  %v265 = vunpack.c.l.b16 %v67
  %v266 = vunpack.c.l.b16 %v68
  %v267 = vunpack.c.l.b16 %v69
  %v268 = vunpack.c.l.b16 %v70
  %v269 = vunpack.c.l.b16 %v71
  %v270 = vunpack.c.l.b16 %v72
  %v271 = vunpack.c.l.b16 %v73
  %v272 = vunpack.c.l.b16 %v74
  %v273 = vunpack.c.l.b16 %v75
  %v274 = vunpack.c.l.b16 %v76
  %v275 = vunpack.c.l.b16 %v77
  %v276 = vunpack.c.l.b16 %v78
  %v277 = vunpack.c.l.b16 %v79
  %v278 = vunpack.c.l.b16 %v80
  %v279 = vunpack.c.l.b16 %v81
  %v280 = vunpack.c.l.b16 %v82
  %v281 = vunpack.c.l.b16 %v83
  %v282 = vunpack.c.l.b16 %v84
  %v283 = vunpack.c.l.b16 %v85
  %v284 = vunpack.c.l.b16 %v86
  %v285 = vunpack.c.l.b16 %v87
  %v286 = vunpack.c.l.b16 %v88
  %v287 = vunpack.c.l.b16 %v89
  %v288 = vunpack.c.l.b16 %v90
  %v289 = vunpack.c.l.b16 %v91
  %v290 = vunpack.c.l.b16 %v92
  %v291 = vunpack.c.l.b16 %v93
  %v292 = vunpack.c.l.b16 %v94
  %v293 = vunpack.c.l.b16 %v95
  %v294 = vunpack.c.l.b16 %v96
  %v295 = vunpack.c.l.b16 %v97
  %v296 = vunpack.c.l.b16 %v98
  %v297 = vpack.c.b16 %v226, %v225
  %v298 = vpack.c.b16 %v228, %v227
  %v299 = vpack.c.b16 %v230, %v229
  %v300 = vpack.c.b16 %v232, %v231
  %v301 = vpack.c.b16 %v234, %v233
  %v302 = vpack.c.b16 %v236, %v235
  %v303 = vpack.c.b16 %v238, %v237
  %v304 = vpack.c.b16 %v240, %v239
  %v305 = vpack.c.b16 %v242, %v241
  %v306 = vpack.c.b16 %v244, %v243
  %v307 = vpack.c.b16 %v246, %v245
  %v308 = vpack.c.b16 %v248, %v247
  %v309 = vpack.c.b16 %v250, %v249
  %v310 = vpack.c.b16 %v252, %v251
  %v311 = vpack.c.b16 %v254, %v253
  %v312 = vpack.c.b16 %v256, %v255
  %v313 = vpack.c.b16 %v258, %v257
  %v314 = vpack.c.b16 %v260, %v259
  %v315 = vpack.c.b16 %v262, %v261
  %v316 = vpack.c.b16 %v264, %v263
  %v317 = vpack.c.b16 %v266, %v265
  %v318 = vpack.c.b16 %v268, %v267
  %v319 = vpack.c.b16 %v270, %v269
  %v320 = vpack.c.b16 %v272, %v271
  %v321 = vpack.c.b16 %v274, %v273
  %v322 = vpack.c.b16 %v276, %v275
  %v323 = vpack.c.b16 %v278, %v277
  %v324 = vpack.c.b16 %v280, %v279
  %v325 = vpack.c.b16 %v282, %v281
  %v326 = vpack.c.b16 %v284, %v283
  %v327 = vpack.c.b16 %v286, %v285
  %v328 = vpack.c.b16 %v288, %v287
  %v329 = vpack.c.b16 %v290, %v289
  %v330 = vpack.c.b16 %v292, %v291
  %v331 = vpack.c.b16 %v294, %v293
  %v332 = vpack.c.b16 %v296, %v295
  %vm369 = vcmask 523264
  %v371 = vsel %vm369, %v139, 0
  %v374 = vsel %vm369, %v144, 0
  %376 = vmatpush.bf16.msra.mxu0 %v304
  %377 = vmatpush.bf16.msra.mxu0 %v303
  %378 = vmatpush.bf16.msra.mxu0 %v302
  %379 = vmatpush.bf16.msra.mxu0 %v301
  %380 = vmatpush.bf16.msra.mxu0 %v300
  %381 = vmatpush.bf16.msra.mxu0 %v299
  %382 = vmatpush.bf16.msra.mxu0 %v298
  %383 = vmatpush.bf16.msra.mxu0 %v297
  %384 = vmatmul.bf16.gmra.mxu0 %v135
  %v385 = vpop.f32.mrf.mxu0
  %v386 = vadd.f32 %v101, %v385
  %v387 = vpop.f32.mrf.mxu0
  %v388 = vadd.f32 %v101, %v387
  %389 = vmatmul.bf16.gmra.mxu0 %v140
  %v390 = vpop.f32.mrf.mxu0
  %v391 = vadd.f32 %v101, %v390
  %v392 = vpop.f32.mrf.mxu0
  %v393 = vadd.f32 %v101, %v392
  %394 = vdwg.mxu0
  %395 = vmatpush.bf16.msra.mxu0 %v312
  %396 = vmatpush.bf16.msra.mxu0 %v311
  %397 = vmatpush.bf16.msra.mxu0 %v310
  %398 = vmatpush.bf16.msra.mxu0 %v309
  %399 = vmatpush.bf16.msra.mxu0 %v308
  %400 = vmatpush.bf16.msra.mxu0 %v307
  %401 = vmatpush.bf16.msra.mxu0 %v306
  %402 = vmatpush.bf16.msra.mxu0 %v305
  %403 = vmatmul.bf16.gmra.mxu0 %v136
  %v404 = vpop.f32.mrf.mxu0
  %v405 = vadd.f32 %v386, %v404
  %v406 = vpop.f32.mrf.mxu0
  %v407 = vadd.f32 %v388, %v406
  %408 = vmatmul.bf16.gmra.mxu0 %v141
  %v409 = vpop.f32.mrf.mxu0
  %v410 = vadd.f32 %v391, %v409
  %v411 = vpop.f32.mrf.mxu0
  %v412 = vadd.f32 %v393, %v411
  %413 = vdwg.mxu0
  %414 = vmatpush.bf16.msra.mxu0 %v320
  %415 = vmatpush.bf16.msra.mxu0 %v319
  %416 = vmatpush.bf16.msra.mxu0 %v318
  %417 = vmatpush.bf16.msra.mxu0 %v317
  %418 = vmatpush.bf16.msra.mxu0 %v316
  %419 = vmatpush.bf16.msra.mxu0 %v315
  %420 = vmatpush.bf16.msra.mxu0 %v314
  %421 = vmatpush.bf16.msra.mxu0 %v313
  %422 = vmatmul.bf16.gmra.mxu0 %v137
  %v423 = vpop.f32.mrf.mxu0
  %v424 = vadd.f32 %v405, %v423
  %v425 = vpop.f32.mrf.mxu0
  %v426 = vadd.f32 %v407, %v425
  %427 = vmatmul.bf16.gmra.mxu0 %v142
  %v428 = vpop.f32.mrf.mxu0
  %v429 = vadd.f32 %v410, %v428
  %v430 = vpop.f32.mrf.mxu0
  %v431 = vadd.f32 %v412, %v430
  %432 = vdwg.mxu0
  %433 = vmatpush.bf16.msra.mxu0 %v328
  %434 = vmatpush.bf16.msra.mxu0 %v327
  %435 = vmatpush.bf16.msra.mxu0 %v326
  %436 = vmatpush.bf16.msra.mxu0 %v325
  %437 = vmatpush.bf16.msra.mxu0 %v324
  %438 = vmatpush.bf16.msra.mxu0 %v323
  %439 = vmatpush.bf16.msra.mxu0 %v322
  %440 = vmatpush.bf16.msra.mxu0 %v321
  %441 = vmatmul.bf16.gmra.mxu0 %v138
  %v442 = vpop.f32.mrf.mxu0
  %v443 = vadd.f32 %v424, %v442
  %v444 = vpop.f32.mrf.mxu0
  %v445 = vadd.f32 %v426, %v444
  %446 = vmatmul.bf16.gmra.mxu0 %v143
  %v447 = vpop.f32.mrf.mxu0
  %v448 = vadd.f32 %v429, %v447
  %v449 = vpop.f32.mrf.mxu0
  %v450 = vadd.f32 %v431, %v449
  %451 = vdwg.mxu0
  %452 = vmatpush.bf16.msra.mxu0 0
  %453 = vmatpush.bf16.msra.mxu0 0
  %454 = vmatpush.bf16.msra.mxu0 0
  %455 = vmatpush.bf16.msra.mxu0 0
  %456 = vmatpush.bf16.msra.mxu0 %v332
  %457 = vmatpush.bf16.msra.mxu0 %v331
  %458 = vmatpush.bf16.msra.mxu0 %v330
  %459 = vmatpush.bf16.msra.mxu0 %v329
  %460 = vmatmul.bf16.gmra.mxu0 %v371
  %v461 = vpop.f32.mrf.mxu0
  %v462 = vadd.f32 %v443, %v461
  %v463 = vpop.f32.mrf.mxu0
  %v464 = vadd.f32 %v445, %v463
  %465 = vmatmul.bf16.gmra.mxu0 %v374
  %v466 = vpop.f32.mrf.mxu0
  %v467 = vadd.f32 %v448, %v466
  %v468 = vpop.f32.mrf.mxu0
  %v469 = vadd.f32 %v450, %v468
  %470 = vdwg.mxu0
  %v471 = vmax.f32 %v462, 0.0
  %v472 = vmax.f32 %v464, 0.0
  %v473 = vmax.f32 %v467, 0.0
  %v474 = vmax.f32 %v469, 0.0
  %vm475 = vcmask 261120
  %476 = vst.msk [vmem:[%s3] sm:$0xff] %vm475, %v471
  %477 = vst.msk [vmem:[%s3 + $0x8] sm:$0xff] %vm475, %v472
  %478 = vst.msk [vmem:[%s3 + $0x10] sm:$0xff] %vm475, %v473
  %479 = vst.msk [vmem:[%s3 + $0x18] sm:$0xff] %vm475, %v474
  // Predicated region
  $region14: #{_forward_impl.15} parent=0 // pred_check
    _
  $region15: #{_forward_impl.15} parent=0 // pred_check_branch
    %481 = sbr.rel (0) target = $region17
  $region16: #{_forward_impl.15} parent=0 // pred_region
    _
  $region17: #{_forward_impl.15} parent=0 // pred_fallthru
    _
  // Predicated region
  $region18: #{_forward_impl.15} parent=0 // pred_check
    _
  $region19: #{_forward_impl.15} parent=0 // pred_check_branch
    %483 = sbr.rel (0) target = $region21
  $region20: #{_forward_impl.15} parent=0 // pred_region
    _
  $region21: #{_forward_impl.15} parent=0 // pred_fallthru
    _

// kernel: _forward_impl.16
$region0: #{_forward_impl.16}
  #allocation0 [shape = 'u32[]', space=smem, size = 0x4, offset = 0x4, fixed_abs, tag = 'smem constant byte address 0x4 - core index']
  #allocation1 [shape = 'u32[72,128]{1,0:T(1,128)}', space=vmem, size = 0x9000, scoped, tag = 'internal scratch']
  %s0 = inlined_call_operand.vmem [shape: bf16[128,288], index: 0, kind: input, shape index: {}]
  %s1 = inlined_call_operand.vmem [shape: bf16[288,16], index: 1, kind: input, shape index: {}]
  %s2 = inlined_call_operand.vmem [shape: f32[1,16], index: 2, kind: input, shape index: {}]
  %s3 = inlined_call_operand.vmem [shape: f32[128,16], index: 3, kind: output, shape index: {}]
  %s4 = sld [smem:[#allocation0]]
  $region22: #{_forward_impl.16} parent=0
    _
  %s6 = ssub.s32 1, %s4
  %s7 = scalar_select 0, %s6, %s4
  // Predicated region
  $region2: #{_forward_impl.16} parent=0 // pred_check
    _
  $region3: #{_forward_impl.16} parent=0 // pred_check_branch
    %9 = sbr.rel (0) target = $region5
  $region4: #{_forward_impl.16} parent=0 // pred_region
    _
  $region5: #{_forward_impl.16} parent=0 // pred_fallthru
    _
  // Predicated region
  $region6: #{_forward_impl.16} parent=0 // pred_check
    _
  $region7: #{_forward_impl.16} parent=0 // pred_check_branch
    %11 = sbr.rel (0) target = $region9
  $region8: #{_forward_impl.16} parent=0 // pred_region
    _
  $region9: #{_forward_impl.16} parent=0 // pred_fallthru
    _
  // Predicated region
  $region10: #{_forward_impl.16} parent=0 // pred_check
    _
  $region11: #{_forward_impl.16} parent=0 // pred_check_branch
    %13 = sbr.rel (0) target = $region13
  $region12: #{_forward_impl.16} parent=0 // pred_region
    _
  $region13: #{_forward_impl.16} parent=0 // pred_fallthru
    _
  %v15 = vld [vmem:[%s0] sm:$0xff]
  %v16 = vld [vmem:[%s0 + $0x8] sm:$0xf]
  %v17 = vld [vmem:[%s0 + $0xc] sm:$0xff]
  %v18 = vld [vmem:[%s0 + $0x14] sm:$0xf]
  %v19 = vld [vmem:[%s0 + $0x18] sm:$0xff]
  %v20 = vld [vmem:[%s0 + $0x20] sm:$0xf]
  %v21 = vld [vmem:[%s0 + $0x24] sm:$0xff]
  %v22 = vld [vmem:[%s0 + $0x2c] sm:$0xf]
  %v23 = vld [vmem:[%s0 + $0x30] sm:$0xff]
  %v24 = vld [vmem:[%s0 + $0x38] sm:$0xf]
  %v25 = vld [vmem:[%s0 + $0x3c] sm:$0xff]
  %v26 = vld [vmem:[%s0 + $0x44] sm:$0xf]
  %v27 = vld [vmem:[%s0 + $0x48] sm:$0xff]
  %v28 = vld [vmem:[%s0 + $0x50] sm:$0xf]
  %v29 = vld [vmem:[%s0 + $0x54] sm:$0xff]
  %v30 = vld [vmem:[%s0 + $0x5c] sm:$0xf]
  %v31 = vld [vmem:[%s0 + $0x60] sm:$0xff]
  %v32 = vld [vmem:[%s0 + $0x68] sm:$0xf]
  %v33 = vld [vmem:[%s0 + $0x6c] sm:$0xff]
  %v34 = vld [vmem:[%s0 + $0x74] sm:$0xf]
  %v35 = vld [vmem:[%s0 + $0x78] sm:$0xff]
  %v36 = vld [vmem:[%s0 + $0x80] sm:$0xf]
  %v37 = vld [vmem:[%s0 + $0x84] sm:$0xff]
  %v38 = vld [vmem:[%s0 + $0x8c] sm:$0xf]
  %v39 = vld [vmem:[%s0 + $0x90] sm:$0xff]
  %v40 = vld [vmem:[%s0 + $0x98] sm:$0xf]
  %v41 = vld [vmem:[%s0 + $0x9c] sm:$0xff]
  %v42 = vld [vmem:[%s0 + $0xa4] sm:$0xf]
  %v43 = vld [vmem:[%s0 + $0xa8] sm:$0xff]
  %v44 = vld [vmem:[%s0 + $0xb0] sm:$0xf]
  %v45 = vld [vmem:[%s0 + $0xb4] sm:$0xff]
  %v46 = vld [vmem:[%s0 + $0xbc] sm:$0xf]
  %v47 = vld [vmem:[%s1] sm:$0xf]
  %v48 = vld [vmem:[%s1 + $0x4] sm:$0xf]
  %v49 = vld [vmem:[%s1 + $0x8] sm:$0xf]
  %v50 = vld [vmem:[%s1 + $0xc] sm:$0xf]
  %v51 = vld [vmem:[%s1 + $0x10] sm:$0xf]
  %v52 = vld [vmem:[%s1 + $0x14] sm:$0xf]
  %v53 = vld [vmem:[%s1 + $0x18] sm:$0xf]
  %v54 = vld [vmem:[%s1 + $0x1c] sm:$0xf]
  %v55 = vld [vmem:[%s1 + $0x20] sm:$0xf]
  %v56 = vld [vmem:[%s1 + $0x24] sm:$0xf]
  %v57 = vld [vmem:[%s1 + $0x28] sm:$0xf]
  %v58 = vld [vmem:[%s1 + $0x2c] sm:$0xf]
  %v59 = vld [vmem:[%s1 + $0x30] sm:$0xf]
  %v60 = vld [vmem:[%s1 + $0x34] sm:$0xf]
  %v61 = vld [vmem:[%s1 + $0x38] sm:$0xf]
  %v62 = vld [vmem:[%s1 + $0x3c] sm:$0xf]
  %v63 = vld [vmem:[%s1 + $0x40] sm:$0xf]
  %v64 = vld [vmem:[%s1 + $0x44] sm:$0xf]
  %v65 = vld [vmem:[%s1 + $0x48] sm:$0xf]
  %v66 = vld [vmem:[%s1 + $0x4c] sm:$0xf]
  %v67 = vld [vmem:[%s1 + $0x50] sm:$0xf]
  %v68 = vld [vmem:[%s1 + $0x54] sm:$0xf]
  %v69 = vld [vmem:[%s1 + $0x58] sm:$0xf]
  %v70 = vld [vmem:[%s1 + $0x5c] sm:$0xf]
  %v71 = vld [vmem:[%s1 + $0x60] sm:$0xf]
  %v72 = vld [vmem:[%s1 + $0x64] sm:$0xf]
  %v73 = vld [vmem:[%s1 + $0x68] sm:$0xf]
  %v74 = vld [vmem:[%s1 + $0x6c] sm:$0xf]
  %v75 = vld [vmem:[%s1 + $0x70] sm:$0xf]
  %v76 = vld [vmem:[%s1 + $0x74] sm:$0xf]
  %v77 = vld [vmem:[%s1 + $0x78] sm:$0xf]
  %v78 = vld [vmem:[%s1 + $0x7c] sm:$0xf]
  %v79 = vld [vmem:[%s1 + $0x80] sm:$0xf]
  %v80 = vld [vmem:[%s1 + $0x84] sm:$0xf]
  %v81 = vld [vmem:[%s1 + $0x88] sm:$0xf]
  %v82 = vld [vmem:[%s1 + $0x8c] sm:$0xf]
  %v83 = vld [vmem:[%s2] sm:$0x1]
  %v85 = vperm.slane %v83, 0
  %v119 = vunpack.c.l.b16 %v15
  %v120 = vunpack.c.h.b16 %v15
  %v121 = vunpack.c.l.b16 %v16
  %v122 = vunpack.c.l.b16 %v17
  %v123 = vunpack.c.h.b16 %v17
  %v124 = vunpack.c.l.b16 %v18
  %v125 = vunpack.c.l.b16 %v19
  %v126 = vunpack.c.h.b16 %v19
  %v127 = vunpack.c.l.b16 %v20
  %v128 = vunpack.c.l.b16 %v21
  %v129 = vunpack.c.h.b16 %v21
  %v130 = vunpack.c.l.b16 %v22
  %v131 = vunpack.c.l.b16 %v23
  %v132 = vunpack.c.h.b16 %v23
  %v133 = vunpack.c.l.b16 %v24
  %v134 = vunpack.c.l.b16 %v25
  %v135 = vunpack.c.h.b16 %v25
  %v136 = vunpack.c.l.b16 %v26
  %v137 = vunpack.c.l.b16 %v27
  %v138 = vunpack.c.h.b16 %v27
  %v139 = vunpack.c.l.b16 %v28
  %v140 = vunpack.c.l.b16 %v29
  %v141 = vunpack.c.h.b16 %v29
  %v142 = vunpack.c.l.b16 %v30
  %v143 = vunpack.c.l.b16 %v31
  %v144 = vunpack.c.h.b16 %v31
  %v145 = vunpack.c.l.b16 %v32
  %v146 = vunpack.c.l.b16 %v33
  %v147 = vunpack.c.h.b16 %v33
  %v148 = vunpack.c.l.b16 %v34
  %v149 = vunpack.c.l.b16 %v35
  %v150 = vunpack.c.h.b16 %v35
  %v151 = vunpack.c.l.b16 %v36
  %v152 = vunpack.c.l.b16 %v37
  %v153 = vunpack.c.h.b16 %v37
  %v154 = vunpack.c.l.b16 %v38
  %v155 = vunpack.c.l.b16 %v39
  %v156 = vunpack.c.h.b16 %v39
  %v157 = vunpack.c.l.b16 %v40
  %v158 = vunpack.c.l.b16 %v41
  %v159 = vunpack.c.h.b16 %v41
  %v160 = vunpack.c.l.b16 %v42
  %v161 = vunpack.c.l.b16 %v43
  %v162 = vunpack.c.h.b16 %v43
  %v163 = vunpack.c.l.b16 %v44
  %v164 = vunpack.c.l.b16 %v45
  %v165 = vunpack.c.h.b16 %v45
  %v166 = vunpack.c.l.b16 %v46
  %v167 = vpack.c.b16 %v122, %v119
  %v168 = vpack.c.b16 %v123, %v120
  %v169 = vpack.c.b16 %v124, %v121
  %v170 = vpack.c.b16 %v128, %v125
  %v171 = vpack.c.b16 %v129, %v126
  %v172 = vpack.c.b16 %v130, %v127
  %v173 = vpack.c.b16 %v134, %v131
  %v174 = vpack.c.b16 %v135, %v132
  %v175 = vpack.c.b16 %v136, %v133
  %v176 = vpack.c.b16 %v140, %v137
  %v177 = vpack.c.b16 %v141, %v138
  %v178 = vpack.c.b16 %v142, %v139
  %v179 = vpack.c.b16 %v146, %v143
  %v180 = vpack.c.b16 %v147, %v144
  %v181 = vpack.c.b16 %v148, %v145
  %v182 = vpack.c.b16 %v152, %v149
  %v183 = vpack.c.b16 %v153, %v150
  %v184 = vpack.c.b16 %v154, %v151
  %v185 = vpack.c.b16 %v158, %v155
  %v186 = vpack.c.b16 %v159, %v156
  %v187 = vpack.c.b16 %v160, %v157
  %v188 = vpack.c.b16 %v164, %v161
  %v189 = vpack.c.b16 %v165, %v162
  %v190 = vpack.c.b16 %v166, %v163
  %v243 = vunpack.c.l.b16 %v47
  %v244 = vunpack.c.l.b16 %v48
  %v245 = vunpack.c.l.b16 %v49
  %v246 = vunpack.c.l.b16 %v50
  %v247 = vunpack.c.l.b16 %v51
  %v248 = vunpack.c.l.b16 %v52
  %v249 = vunpack.c.l.b16 %v53
  %v250 = vunpack.c.l.b16 %v54
  %v251 = vunpack.c.l.b16 %v55
  %v252 = vunpack.c.l.b16 %v56
  %v253 = vunpack.c.l.b16 %v57
  %v254 = vunpack.c.l.b16 %v58
  %v255 = vunpack.c.l.b16 %v59
  %v256 = vunpack.c.l.b16 %v60
  %v257 = vunpack.c.l.b16 %v61
  %v258 = vunpack.c.l.b16 %v62
  %v259 = vunpack.c.l.b16 %v63
  %v260 = vunpack.c.l.b16 %v64
  %v261 = vunpack.c.l.b16 %v65
  %v262 = vunpack.c.l.b16 %v66
  %v263 = vunpack.c.l.b16 %v67
  %v264 = vunpack.c.l.b16 %v68
  %v265 = vunpack.c.l.b16 %v69
  %v266 = vunpack.c.l.b16 %v70
  %v267 = vunpack.c.l.b16 %v71
  %v268 = vunpack.c.l.b16 %v72
  %v269 = vunpack.c.l.b16 %v73
  %v270 = vunpack.c.l.b16 %v74
  %v271 = vunpack.c.l.b16 %v75
  %v272 = vunpack.c.l.b16 %v76
  %v273 = vunpack.c.l.b16 %v77
  %v274 = vunpack.c.l.b16 %v78
  %v275 = vunpack.c.l.b16 %v79
  %v276 = vunpack.c.l.b16 %v80
  %v277 = vunpack.c.l.b16 %v81
  %v278 = vunpack.c.l.b16 %v82
  %v279 = vpack.c.b16 %v244, %v243
  %v280 = vpack.c.b16 %v246, %v245
  %v281 = vpack.c.b16 %v248, %v247
  %v282 = vpack.c.b16 %v250, %v249
  %v283 = vpack.c.b16 %v252, %v251
  %v284 = vpack.c.b16 %v254, %v253
  %v285 = vpack.c.b16 %v256, %v255
  %v286 = vpack.c.b16 %v258, %v257
  %v287 = vpack.c.b16 %v260, %v259
  %v288 = vpack.c.b16 %v262, %v261
  %v289 = vpack.c.b16 %v264, %v263
  %v290 = vpack.c.b16 %v266, %v265
  %v291 = vpack.c.b16 %v268, %v267
  %v292 = vpack.c.b16 %v270, %v269
  %v293 = vpack.c.b16 %v272, %v271
  %v294 = vpack.c.b16 %v274, %v273
  %v295 = vpack.c.b16 %v276, %v275
  %v296 = vpack.c.b16 %v278, %v277
  %vm315 = vcmask 261120
  %v317 = vsel %vm315, %v169, 0
  %v320 = vsel %vm315, %v172, 0
  %v323 = vsel %vm315, %v175, 0
  %v326 = vsel %vm315, %v178, 0
  %v329 = vsel %vm315, %v181, 0
  %v332 = vsel %vm315, %v184, 0
  %v335 = vsel %vm315, %v187, 0
  %v338 = vsel %vm315, %v190, 0
  %340 = vmatpush.bf16.msra.mxu0 %v286
  %341 = vmatpush.bf16.msra.mxu0 %v285
  %342 = vmatpush.bf16.msra.mxu0 %v284
  %343 = vmatpush.bf16.msra.mxu0 %v283
  %344 = vmatpush.bf16.msra.mxu0 %v282
  %345 = vmatpush.bf16.msra.mxu0 %v281
  %346 = vmatpush.bf16.msra.mxu0 %v280
  %347 = vmatpush.bf16.msra.mxu0 %v279
  %348 = vmatmul.bf16.gmra.mxu0 %v167
  %v349 = vpop.f32.mrf.mxu0
  %v350 = vadd.f32 %v85, %v349
  %v351 = vpop.f32.mrf.mxu0
  %v352 = vadd.f32 %v85, %v351
  %353 = vmatmul.bf16.gmra.mxu0 %v170
  %v354 = vpop.f32.mrf.mxu0
  %v355 = vadd.f32 %v85, %v354
  %v356 = vpop.f32.mrf.mxu0
  %v357 = vadd.f32 %v85, %v356
  %358 = vmatmul.bf16.gmra.mxu0 %v173
  %v359 = vpop.f32.mrf.mxu0
  %v360 = vadd.f32 %v85, %v359
  %v361 = vpop.f32.mrf.mxu0
  %v362 = vadd.f32 %v85, %v361
  %363 = vmatmul.bf16.gmra.mxu0 %v176
  %v364 = vpop.f32.mrf.mxu0
  %v365 = vadd.f32 %v85, %v364
  %v366 = vpop.f32.mrf.mxu0
  %v367 = vadd.f32 %v85, %v366
  %368 = vmatmul.bf16.gmra.mxu0 %v179
  %v369 = vpop.f32.mrf.mxu0
  %v370 = vadd.f32 %v85, %v369
  %v371 = vpop.f32.mrf.mxu0
  %v372 = vadd.f32 %v85, %v371
  %373 = vmatmul.bf16.gmra.mxu0 %v182
  %v374 = vpop.f32.mrf.mxu0
  %v375 = vadd.f32 %v85, %v374
  %v376 = vpop.f32.mrf.mxu0
  %v377 = vadd.f32 %v85, %v376
  %378 = vmatmul.bf16.gmra.mxu0 %v185
  %v379 = vpop.f32.mrf.mxu0
  %v380 = vadd.f32 %v85, %v379
  %v381 = vpop.f32.mrf.mxu0
  %v382 = vadd.f32 %v85, %v381
  %383 = vmatmul.bf16.gmra.mxu0 %v188
  %v384 = vpop.f32.mrf.mxu0
  %v385 = vadd.f32 %v85, %v384
  %v386 = vpop.f32.mrf.mxu0
  %v387 = vadd.f32 %v85, %v386
  %388 = vdwg.mxu0
  %389 = vmatpush.bf16.msra.mxu0 %v294
  %390 = vmatpush.bf16.msra.mxu0 %v293
  %391 = vmatpush.bf16.msra.mxu0 %v292
  %392 = vmatpush.bf16.msra.mxu0 %v291
  %393 = vmatpush.bf16.msra.mxu0 %v290
  %394 = vmatpush.bf16.msra.mxu0 %v289
  %395 = vmatpush.bf16.msra.mxu0 %v288
  %396 = vmatpush.bf16.msra.mxu0 %v287
  %397 = vmatmul.bf16.gmra.mxu0 %v168
  %v398 = vpop.f32.mrf.mxu0
  %v399 = vadd.f32 %v350, %v398
  %v400 = vpop.f32.mrf.mxu0
  %v401 = vadd.f32 %v352, %v400
  %402 = vmatmul.bf16.gmra.mxu0 %v171
  %v403 = vpop.f32.mrf.mxu0
  %v404 = vadd.f32 %v355, %v403
  %v405 = vpop.f32.mrf.mxu0
  %v406 = vadd.f32 %v357, %v405
  %407 = vmatmul.bf16.gmra.mxu0 %v174
  %v408 = vpop.f32.mrf.mxu0
  %v409 = vadd.f32 %v360, %v408
  %v410 = vpop.f32.mrf.mxu0
  %v411 = vadd.f32 %v362, %v410
  %412 = vmatmul.bf16.gmra.mxu0 %v177
  %v413 = vpop.f32.mrf.mxu0
  %v414 = vadd.f32 %v365, %v413
  %v415 = vpop.f32.mrf.mxu0
  %v416 = vadd.f32 %v367, %v415
  %417 = vmatmul.bf16.gmra.mxu0 %v180
  %v418 = vpop.f32.mrf.mxu0
  %v419 = vadd.f32 %v370, %v418
  %v420 = vpop.f32.mrf.mxu0
  %v421 = vadd.f32 %v372, %v420
  %422 = vmatmul.bf16.gmra.mxu0 %v183
  %v423 = vpop.f32.mrf.mxu0
  %v424 = vadd.f32 %v375, %v423
  %v425 = vpop.f32.mrf.mxu0
  %v426 = vadd.f32 %v377, %v425
  %427 = vmatmul.bf16.gmra.mxu0 %v186
  %v428 = vpop.f32.mrf.mxu0
  %v429 = vadd.f32 %v380, %v428
  %v430 = vpop.f32.mrf.mxu0
  %v431 = vadd.f32 %v382, %v430
  %432 = vmatmul.bf16.gmra.mxu0 %v189
  %v433 = vpop.f32.mrf.mxu0
  %v434 = vadd.f32 %v385, %v433
  %v435 = vpop.f32.mrf.mxu0
  %v436 = vadd.f32 %v387, %v435
  %437 = vdwg.mxu0
  %438 = vmatpush.bf16.msra.mxu0 0
  %439 = vmatpush.bf16.msra.mxu0 0
  %440 = vmatpush.bf16.msra.mxu0 0
  %441 = vmatpush.bf16.msra.mxu0 0
  %442 = vmatpush.bf16.msra.mxu0 0
  %443 = vmatpush.bf16.msra.mxu0 0
  %444 = vmatpush.bf16.msra.mxu0 %v296
  %445 = vmatpush.bf16.msra.mxu0 %v295
  %446 = vmatmul.bf16.gmra.mxu0 %v317
  %v447 = vpop.f32.mrf.mxu0
  %v448 = vadd.f32 %v399, %v447
  %v449 = vpop.f32.mrf.mxu0
  %v450 = vadd.f32 %v401, %v449
  %451 = vmatmul.bf16.gmra.mxu0 %v320
  %v452 = vpop.f32.mrf.mxu0
  %v453 = vadd.f32 %v404, %v452
  %v454 = vpop.f32.mrf.mxu0
  %v455 = vadd.f32 %v406, %v454
  %456 = vmatmul.bf16.gmra.mxu0 %v323
  %v457 = vpop.f32.mrf.mxu0
  %v458 = vadd.f32 %v409, %v457
  %v459 = vpop.f32.mrf.mxu0
  %v460 = vadd.f32 %v411, %v459
  %461 = vmatmul.bf16.gmra.mxu0 %v326
  %v462 = vpop.f32.mrf.mxu0
  %v463 = vadd.f32 %v414, %v462
  %v464 = vpop.f32.mrf.mxu0
  %v465 = vadd.f32 %v416, %v464
  %466 = vmatmul.bf16.gmra.mxu0 %v329
  %v467 = vpop.f32.mrf.mxu0
  %v468 = vadd.f32 %v419, %v467
  %v469 = vpop.f32.mrf.mxu0
  %v470 = vadd.f32 %v421, %v469
  %471 = vmatmul.bf16.gmra.mxu0 %v332
  %v472 = vpop.f32.mrf.mxu0
  %v473 = vadd.f32 %v424, %v472
  %v474 = vpop.f32.mrf.mxu0
  %v475 = vadd.f32 %v426, %v474
  %476 = vmatmul.bf16.gmra.mxu0 %v335
  %v477 = vpop.f32.mrf.mxu0
  %v478 = vadd.f32 %v429, %v477
  %v479 = vpop.f32.mrf.mxu0
  %v480 = vadd.f32 %v431, %v479
  %481 = vmatmul.bf16.gmra.mxu0 %v338
  %v482 = vpop.f32.mrf.mxu0
  %v483 = vadd.f32 %v434, %v482
  %v484 = vpop.f32.mrf.mxu0
  %v485 = vadd.f32 %v436, %v484
  %486 = vdwg.mxu0
  %v487 = vmax.f32 %v448, 0.0
  %v488 = vmax.f32 %v450, 0.0
  %v489 = vmax.f32 %v453, 0.0
  %v490 = vmax.f32 %v455, 0.0
  %v491 = vmax.f32 %v458, 0.0
  %v492 = vmax.f32 %v460, 0.0
  %v493 = vmax.f32 %v463, 0.0
  %v494 = vmax.f32 %v465, 0.0
  %v495 = vmax.f32 %v468, 0.0
  %v496 = vmax.f32 %v470, 0.0
  %v497 = vmax.f32 %v473, 0.0
  %v498 = vmax.f32 %v475, 0.0
  %v499 = vmax.f32 %v478, 0.0
  %v500 = vmax.f32 %v480, 0.0
  %v501 = vmax.f32 %v483, 0.0
  %v502 = vmax.f32 %v485, 0.0
  %vm503 = vcmask 130048
  %504 = vst.msk [vmem:[%s3] sm:$0xff] %vm503, %v487
  %505 = vst.msk [vmem:[%s3 + $0x8] sm:$0xff] %vm503, %v488
  %506 = vst.msk [vmem:[%s3 + $0x10] sm:$0xff] %vm503, %v489
  %507 = vst.msk [vmem:[%s3 + $0x18] sm:$0xff] %vm503, %v490
  %508 = vst.msk [vmem:[%s3 + $0x20] sm:$0xff] %vm503, %v491
  %509 = vst.msk [vmem:[%s3 + $0x28] sm:$0xff] %vm503, %v492
  %510 = vst.msk [vmem:[%s3 + $0x30] sm:$0xff] %vm503, %v493
  %511 = vst.msk [vmem:[%s3 + $0x38] sm:$0xff] %vm503, %v494
  %512 = vst.msk [vmem:[%s3 + $0x40] sm:$0xff] %vm503, %v495
  %513 = vst.msk [vmem:[%s3 + $0x48] sm:$0xff] %vm503, %v496
  %514 = vst.msk [vmem:[%s3 + $0x50] sm:$0xff] %vm503, %v497
  %515 = vst.msk [vmem:[%s3 + $0x58] sm:$0xff] %vm503, %v498
  %516 = vst.msk [vmem:[%s3 + $0x60] sm:$0xff] %vm503, %v499
  %517 = vst.msk [vmem:[%s3 + $0x68] sm:$0xff] %vm503, %v500
  %518 = vst.msk [vmem:[%s3 + $0x70] sm:$0xff] %vm503, %v501
  %519 = vst.msk [vmem:[%s3 + $0x78] sm:$0xff] %vm503, %v502
  // Predicated region
  $region14: #{_forward_impl.16} parent=0 // pred_check
    _
  $region15: #{_forward_impl.16} parent=0 // pred_check_branch
    %521 = sbr.rel (0) target = $region17
  $region16: #{_forward_impl.16} parent=0 // pred_region
    _
  $region17: #{_forward_impl.16} parent=0 // pred_fallthru
    _
  // Predicated region
  $region18: #{_forward_impl.16} parent=0 // pred_check
    _
  $region19: #{_forward_impl.16} parent=0 // pred_check_branch
    %523 = sbr.rel (0) target = $region21
  $region20: #{_forward_impl.16} parent=0 // pred_region
    _
  $region21: #{_forward_impl.16} parent=0 // pred_fallthru
    _

// kernel: _forward_impl.17
$region0: #{_forward_impl.17}
  #allocation0 [shape = 'u32[]', space=smem, size = 0x4, offset = 0x4, fixed_abs, tag = 'smem constant byte address 0x4 - core index']
  #allocation1 [shape = 'u32[72,128]{1,0:T(1,128)}', space=vmem, size = 0x9000, scoped, tag = 'internal scratch']
  %s0 = inlined_call_operand.vmem [shape: bf16[512,144], index: 0, kind: input, shape index: {}]
  %s1 = inlined_call_operand.vmem [shape: bf16[144,16], index: 1, kind: input, shape index: {}]
  %s2 = inlined_call_operand.vmem [shape: f32[1,16], index: 2, kind: input, shape index: {}]
  %s3 = inlined_call_operand.vmem [shape: f32[512,16], index: 3, kind: output, shape index: {}]
  %s4 = sld [smem:[#allocation0]]
  $region45: #{_forward_impl.17} parent=0
    _
  %s6 = ssub.s32 1, %s4
  %s7 = scalar_select 0, %s6, %s4
  loop: start=0, step=1, limit=4
  $region2: #{_forward_impl.17} parent=0 // loop_pre_header
    _
  $region3: #{_forward_impl.17} parent=0 // loop_header
    %s9 = sphi 0, %s13
    %p10 = scmp.ge.s32.totalorder %s9, 4
    %s19 = sphi 0, %s21
    %s22 = sphi 0, %s19
    %s23 = sphi 0, %s22
    %s39 = sphi 0, %s23
    %s43 = sphi 0, %s43
    %s45 = sphi 0, %s43
    %s46 = sphi 0, %s45
    %s60 = sphi 0, %s46
    %s64 = sphi 0, %s64
    %s66 = sphi 0, %s64
    %s67 = sphi 0, %s66
    %s81 = sphi 0, %s67
    %s87 = sphi 0, %s89
    %s90 = sphi 0, %s87
    %s91 = sphi 0, %s90
    %s107 = sphi 0, %s91
  $region4: #{_forward_impl.17} parent=0 // loop_header_branch
    %12 = sbr.rel (%p10) target = $region8
  $region5: #{_forward_impl.17} parent=0 // loop_body
    %s14 = ssub.s32 %s9, 1
    %s15 = ssub.s32 %s9, 2
    %s16 = sadd.s32 %s9, 1
    %s17 = ssub.s32 %s9, %s16
    %p18 = scmp.eq.s32.totalorder %s17, 0
    %s20 = sadd.s32 %s19, 1
    %s21 = scalar_select %p18, %s19, %s20
    %p24 = pneg %p18
    %p25 = scmp.eq.s32.totalorder %s9, 1
    %p26 = por %p24, %p25
    %p27 = scmp.ne.s32.totalorder %s19, %s22
    %p28 = scmp.eq.s32.totalorder %s9, 0
    %p29 = por %p27, %p28
    %p30 = scmp.ne.s32.totalorder %s19, %s22
    %p31 = scmp.eq.s32.totalorder %s14, 1
    %p32 = por %p30, %p31
    %p33 = scmp.ne.s32.totalorder %s22, %s23
    %p34 = scmp.eq.s32.totalorder %s14, 0
    %p35 = por %p33, %p34
    %p36 = scmp.ne.s32.totalorder %s22, %s23
    %p37 = scmp.eq.s32.totalorder %s15, 1
    %p38 = por %p36, %p37
    %p40 = scmp.ne.s32.totalorder %s23, %s39
    %p41 = scmp.eq.s32.totalorder %s15, 0
    %p42 = por %p40, %p41
    %s44 = sadd.s32 %s43, 1
    %p47 = scmp.eq.s32.totalorder %s9, 1
    %p48 = scmp.ne.s32.totalorder %s43, %s45
    %p49 = scmp.eq.s32.totalorder %s9, 0
    %p50 = por %p48, %p49
    %p51 = scmp.ne.s32.totalorder %s43, %s45
    %p52 = scmp.eq.s32.totalorder %s14, 1
    %p53 = por %p51, %p52
    %p54 = scmp.ne.s32.totalorder %s45, %s46
    %p55 = scmp.eq.s32.totalorder %s14, 0
    %p56 = por %p54, %p55
    %p57 = scmp.ne.s32.totalorder %s45, %s46
    %p58 = scmp.eq.s32.totalorder %s15, 1
    %p59 = por %p57, %p58
    %p61 = scmp.ne.s32.totalorder %s46, %s60
    %p62 = scmp.eq.s32.totalorder %s15, 0
    %p63 = por %p61, %p62
    %s65 = sadd.s32 %s64, 1
    %p68 = scmp.eq.s32.totalorder %s9, 1
    %p69 = scmp.ne.s32.totalorder %s64, %s66
    %p70 = scmp.eq.s32.totalorder %s9, 0
    %p71 = por %p69, %p70
    %p72 = scmp.ne.s32.totalorder %s64, %s66
    %p73 = scmp.eq.s32.totalorder %s14, 1
    %p74 = por %p72, %p73
    %p75 = scmp.ne.s32.totalorder %s66, %s67
    %p76 = scmp.eq.s32.totalorder %s14, 0
    %p77 = por %p75, %p76
    %p78 = scmp.ne.s32.totalorder %s66, %s67
    %p79 = scmp.eq.s32.totalorder %s15, 1
    %p80 = por %p78, %p79
    %p82 = scmp.ne.s32.totalorder %s67, %s81
    %p83 = scmp.eq.s32.totalorder %s15, 0
    %p84 = por %p82, %p83
    %s85 = ssub.s32 %s9, %s16
    %p86 = scmp.eq.s32.totalorder %s85, 0
    %s88 = sadd.s32 %s87, 1
    %s89 = scalar_select %p86, %s87, %s88
    %p92 = pneg %p86
    %p93 = scmp.eq.s32.totalorder %s9, 1
    %p94 = por %p92, %p93
    %p95 = scmp.ne.s32.totalorder %s87, %s90
    %p96 = scmp.eq.s32.totalorder %s9, 0
    %p97 = por %p95, %p96
    %p98 = scmp.ne.s32.totalorder %s87, %s90
    %p99 = scmp.eq.s32.totalorder %s14, 1
    %p100 = por %p98, %p99
    %p101 = scmp.ne.s32.totalorder %s90, %s91
    %p102 = scmp.eq.s32.totalorder %s14, 0
    %p103 = por %p101, %p102
    %p104 = scmp.ne.s32.totalorder %s90, %s91
    %p105 = scmp.eq.s32.totalorder %s15, 1
    %p106 = por %p104, %p105
    %p108 = scmp.ne.s32.totalorder %s91, %s107
    %p109 = scmp.eq.s32.totalorder %s15, 0
    %p110 = por %p108, %p109
    %p111 = scmp.le.s32.totalorder 1, %s9
    %p112 = scmp.lt.s32.totalorder %s9, 3
    %p113 = pnand %p111, %p112
    %p114 = pneg %p113
    // Predicated region
    $region9: #{_forward_impl.17} parent=5 // pred_check
      _
    $region10: #{_forward_impl.17} parent=5 // pred_check_branch
      %116 = sbr.rel (%p113) target = $region12
    $region11: #{_forward_impl.17} parent=5 // pred_region
      %s117 = ssub.s32 %s9, 1
      // Predicated region
      $region13: #{_forward_impl.17} parent=11 // pred_check
        %p118 = pneg %p56
      $region14: #{_forward_impl.17} parent=11 // pred_check_branch
        %120 = sbr.rel (%p118) target = $region16
      $region15: #{_forward_impl.17} parent=11 // pred_region
        _
      $region16: #{_forward_impl.17} parent=11 // pred_fallthru
        _
      // Predicated region
      $region17: #{_forward_impl.17} parent=11 // pred_check
        %p121 = pneg %p77
      $region18: #{_forward_impl.17} parent=11 // pred_check_branch
        %123 = sbr.rel (%p121) target = $region20
      $region19: #{_forward_impl.17} parent=11 // pred_region
        _
      $region20: #{_forward_impl.17} parent=11 // pred_fallthru
        _
    $region12: #{_forward_impl.17} parent=5 // pred_fallthru
      _
    %p124 = scmp.lt.s32.totalorder %s9, 2
    // Predicated region
    $region21: #{_forward_impl.17} parent=5 // pred_check
      %p125 = pneg %p124
    $region22: #{_forward_impl.17} parent=5 // pred_check_branch
      %127 = sbr.rel (%p125) target = $region24
    $region23: #{_forward_impl.17} parent=5 // pred_region
      // Predicated region
      $region25: #{_forward_impl.17} parent=23 // pred_check
        %p128 = pneg %p29
      $region26: #{_forward_impl.17} parent=23 // pred_check_branch
        %130 = sbr.rel (%p128) target = $region28
      $region27: #{_forward_impl.17} parent=23 // pred_region
        %s131 = smul.u32 32, %s9
        %p132 = scmp.lt.s32.totalorder %s131, 63
        %s133 = scalar_select %p132, %s131, 63
        %s134 = smul.addr %s133, 2
        %s135 = smul.addr %s134, 4
        %s136 = scalar_lea.vmem %s0, %s135
        %s137 = smul.u32 32, %s9
      $region28: #{_forward_impl.17} parent=23 // pred_fallthru
        _
    $region24: #{_forward_impl.17} parent=5 // pred_fallthru
      _
    %p138 = scmp.le.s32.totalorder 1, %s9
    %p139 = scmp.lt.s32.totalorder %s9, 3
    %p140 = pnand %p138, %p139
    %p141 = pneg %p140
    // Predicated region
    $region29: #{_forward_impl.17} parent=5 // pred_check
      _
    $region30: #{_forward_impl.17} parent=5 // pred_check_branch
      %143 = sbr.rel (%p140) target = $region32
    $region31: #{_forward_impl.17} parent=5 // pred_region
      %s144 = ssub.s32 %s9, 1
      %s145 = smul.u32 32, %s14
      %p146 = scmp.lt.s32.totalorder %s145, 63
      %s147 = scalar_select %p146, %s145, 63
      %s148 = smul.addr %s147, 2
      %s149 = smul.addr %s148, 4
      %s150 = scalar_lea.vmem %s0, %s149
      %p151 = pneg %p35
      %p152 = pneg %p32
      %p153 = pneg %p56
      %p154 = pneg %p53
      %p155 = pneg %p77
      %p156 = pneg %p74
      %p157 = pneg %p103
      %p158 = pneg %p100
      %s159 = smul.u32 32, %s14
      %p160 = scmp.lt.s32.totalorder %s159, 63
      %s161 = scalar_select %p160, %s159, 63
      %s162 = smul.addr %s161, 8
      %s163 = scalar_lea.vmem %s3, %s162
      %s164 = smul.u32 32, %s14
      %p165 = scmp.lt.s32.totalorder %s164, 63
      %s166 = scalar_select %p165, %s164, 63
      %s167 = smul.addr %s166, 2
      %s168 = smul.addr %s167, 4
      %s169 = scalar_lea.vmem %s0, %s168
      %s170 = smul.u32 32, %s14
      %s171 = smul.u32 32, %s14
      %p172 = scmp.lt.s32.totalorder %s171, 63
      %s173 = scalar_select %p172, %s171, 63
      %s174 = smul.addr %s173, 8
      %s175 = scalar_lea.vmem %s3, %s174
      %s176 = smul.u32 32, %s14
      %v178 = vld [vmem:[%s169] sm:$0xff]
      %v179 = vld [vmem:[%s169 + $0x8] sm:$0xff]
      %v180 = vld [vmem:[%s169 + $0x10] sm:$0xff]
      %v181 = vld [vmem:[%s169 + $0x18] sm:$0xff]
      %v182 = vld [vmem:[%s169 + $0x20] sm:$0xff]
      %v183 = vld [vmem:[%s169 + $0x28] sm:$0xff]
      %v184 = vld [vmem:[%s169 + $0x30] sm:$0xff]
      %v185 = vld [vmem:[%s169 + $0x38] sm:$0xff]
      %v186 = vld [vmem:[%s169 + $0x40] sm:$0xff]
      %v187 = vld [vmem:[%s169 + $0x48] sm:$0xff]
      %v188 = vld [vmem:[%s169 + $0x50] sm:$0xff]
      %v189 = vld [vmem:[%s169 + $0x58] sm:$0xff]
      %v190 = vld [vmem:[%s169 + $0x60] sm:$0xff]
      %v191 = vld [vmem:[%s169 + $0x68] sm:$0xff]
      %v192 = vld [vmem:[%s169 + $0x70] sm:$0xff]
      %v193 = vld [vmem:[%s169 + $0x78] sm:$0xff]
      %v194 = vld [vmem:[%s169 + $0x80] sm:$0xff]
      %v195 = vld [vmem:[%s169 + $0x88] sm:$0xff]
      %v196 = vld [vmem:[%s169 + $0x90] sm:$0xff]
      %v197 = vld [vmem:[%s169 + $0x98] sm:$0xff]
      %v198 = vld [vmem:[%s169 + $0xa0] sm:$0xff]
      %v199 = vld [vmem:[%s169 + $0xa8] sm:$0xff]
      %v200 = vld [vmem:[%s169 + $0xb0] sm:$0xff]
      %v201 = vld [vmem:[%s169 + $0xb8] sm:$0xff]
      %v202 = vld [vmem:[%s169 + $0xc0] sm:$0xff]
      %v203 = vld [vmem:[%s169 + $0xc8] sm:$0xff]
      %v204 = vld [vmem:[%s169 + $0xd0] sm:$0xff]
      %v205 = vld [vmem:[%s169 + $0xd8] sm:$0xff]
      %v206 = vld [vmem:[%s169 + $0xe0] sm:$0xff]
      %v207 = vld [vmem:[%s169 + $0xe8] sm:$0xff]
      %v208 = vld [vmem:[%s169 + $0xf0] sm:$0xff]
      %v209 = vld [vmem:[%s169 + $0xf8] sm:$0xff]
      %v210 = vld [vmem:[%s1] sm:$0xf]
      %v211 = vld [vmem:[%s1 + $0x4] sm:$0xf]
      %v212 = vld [vmem:[%s1 + $0x8] sm:$0xf]
      %v213 = vld [vmem:[%s1 + $0xc] sm:$0xf]
      %v214 = vld [vmem:[%s1 + $0x10] sm:$0xf]
      %v215 = vld [vmem:[%s1 + $0x14] sm:$0xf]
      %v216 = vld [vmem:[%s1 + $0x18] sm:$0xf]
      %v217 = vld [vmem:[%s1 + $0x1c] sm:$0xf]
      %v218 = vld [vmem:[%s1 + $0x20] sm:$0xf]
      %v219 = vld [vmem:[%s1 + $0x24] sm:$0xf]
      %v220 = vld [vmem:[%s1 + $0x28] sm:$0xf]
      %v221 = vld [vmem:[%s1 + $0x2c] sm:$0xf]
      %v222 = vld [vmem:[%s1 + $0x30] sm:$0xf]
      %v223 = vld [vmem:[%s1 + $0x34] sm:$0xf]
      %v224 = vld [vmem:[%s1 + $0x38] sm:$0xf]
      %v225 = vld [vmem:[%s1 + $0x3c] sm:$0xf]
      %v226 = vld [vmem:[%s1 + $0x40] sm:$0xf]
      %v227 = vld [vmem:[%s1 + $0x44] sm:$0xf]
      %v228 = vld [vmem:[%s2] sm:$0x1]
      %v230 = vperm.slane %v228, 0
      %v264 = vunpack.c.l.b16 %v178
      %v265 = vunpack.c.h.b16 %v178
      %v266 = vunpack.c.l.b16 %v179
      %v267 = vunpack.c.h.b16 %v179
      %v268 = vunpack.c.l.b16 %v180
      %v269 = vunpack.c.h.b16 %v180
      %v270 = vunpack.c.l.b16 %v181
      %v271 = vunpack.c.h.b16 %v181
      %v272 = vunpack.c.l.b16 %v182
      %v273 = vunpack.c.h.b16 %v182
      %v274 = vunpack.c.l.b16 %v183
      %v275 = vunpack.c.h.b16 %v183
      %v276 = vunpack.c.l.b16 %v184
      %v277 = vunpack.c.h.b16 %v184
      %v278 = vunpack.c.l.b16 %v185
      %v279 = vunpack.c.h.b16 %v185
      %v280 = vunpack.c.l.b16 %v186
      %v281 = vunpack.c.h.b16 %v186
      %v282 = vunpack.c.l.b16 %v187
      %v283 = vunpack.c.h.b16 %v187
      %v284 = vunpack.c.l.b16 %v188
      %v285 = vunpack.c.h.b16 %v188
      %v286 = vunpack.c.l.b16 %v189
      %v287 = vunpack.c.h.b16 %v189
      %v288 = vunpack.c.l.b16 %v190
      %v289 = vunpack.c.h.b16 %v190
      %v290 = vunpack.c.l.b16 %v191
      %v291 = vunpack.c.h.b16 %v191
      %v292 = vunpack.c.l.b16 %v192
      %v293 = vunpack.c.h.b16 %v192
      %v294 = vunpack.c.l.b16 %v193
      %v295 = vunpack.c.h.b16 %v193
      %v296 = vunpack.c.l.b16 %v194
      %v297 = vunpack.c.h.b16 %v194
      %v298 = vunpack.c.l.b16 %v195
      %v299 = vunpack.c.h.b16 %v195
      %v300 = vunpack.c.l.b16 %v196
      %v301 = vunpack.c.h.b16 %v196
      %v302 = vunpack.c.l.b16 %v197
      %v303 = vunpack.c.h.b16 %v197
      %v304 = vunpack.c.l.b16 %v198
      %v305 = vunpack.c.h.b16 %v198
      %v306 = vunpack.c.l.b16 %v199
      %v307 = vunpack.c.h.b16 %v199
      %v308 = vunpack.c.l.b16 %v200
      %v309 = vunpack.c.h.b16 %v200
      %v310 = vunpack.c.l.b16 %v201
      %v311 = vunpack.c.h.b16 %v201
      %v312 = vunpack.c.l.b16 %v202
      %v313 = vunpack.c.h.b16 %v202
      %v314 = vunpack.c.l.b16 %v203
      %v315 = vunpack.c.h.b16 %v203
      %v316 = vunpack.c.l.b16 %v204
      %v317 = vunpack.c.h.b16 %v204
      %v318 = vunpack.c.l.b16 %v205
      %v319 = vunpack.c.h.b16 %v205
      %v320 = vunpack.c.l.b16 %v206
      %v321 = vunpack.c.h.b16 %v206
      %v322 = vunpack.c.l.b16 %v207
      %v323 = vunpack.c.h.b16 %v207
      %v324 = vunpack.c.l.b16 %v208
      %v325 = vunpack.c.h.b16 %v208
      %v326 = vunpack.c.l.b16 %v209
      %v327 = vunpack.c.h.b16 %v209
      %v328 = vpack.c.b16 %v266, %v264
      %v329 = vpack.c.b16 %v267, %v265
      %v330 = vpack.c.b16 %v270, %v268
      %v331 = vpack.c.b16 %v271, %v269
      %v332 = vpack.c.b16 %v274, %v272
      %v333 = vpack.c.b16 %v275, %v273
      %v334 = vpack.c.b16 %v278, %v276
      %v335 = vpack.c.b16 %v279, %v277
      %v336 = vpack.c.b16 %v282, %v280
      %v337 = vpack.c.b16 %v283, %v281
      %v338 = vpack.c.b16 %v286, %v284
      %v339 = vpack.c.b16 %v287, %v285
      %v340 = vpack.c.b16 %v290, %v288
      %v341 = vpack.c.b16 %v291, %v289
      %v342 = vpack.c.b16 %v294, %v292
      %v343 = vpack.c.b16 %v295, %v293
      %v344 = vpack.c.b16 %v298, %v296
      %v345 = vpack.c.b16 %v299, %v297
      %v346 = vpack.c.b16 %v302, %v300
      %v347 = vpack.c.b16 %v303, %v301
      %v348 = vpack.c.b16 %v306, %v304
      %v349 = vpack.c.b16 %v307, %v305
      %v350 = vpack.c.b16 %v310, %v308
      %v351 = vpack.c.b16 %v311, %v309
      %v352 = vpack.c.b16 %v314, %v312
      %v353 = vpack.c.b16 %v315, %v313
      %v354 = vpack.c.b16 %v318, %v316
      %v355 = vpack.c.b16 %v319, %v317
      %v356 = vpack.c.b16 %v322, %v320
      %v357 = vpack.c.b16 %v323, %v321
      %v358 = vpack.c.b16 %v326, %v324
      %v359 = vpack.c.b16 %v327, %v325
      %v394 = vunpack.c.l.b16 %v210
      %v395 = vunpack.c.l.b16 %v211
      %v396 = vunpack.c.l.b16 %v212
      %v397 = vunpack.c.l.b16 %v213
      %v398 = vunpack.c.l.b16 %v214
      %v399 = vunpack.c.l.b16 %v215
      %v400 = vunpack.c.l.b16 %v216
      %v401 = vunpack.c.l.b16 %v217
      %v402 = vunpack.c.l.b16 %v218
      %v403 = vunpack.c.l.b16 %v219
      %v404 = vunpack.c.l.b16 %v220
      %v405 = vunpack.c.l.b16 %v221
      %v406 = vunpack.c.l.b16 %v222
      %v407 = vunpack.c.l.b16 %v223
      %v408 = vunpack.c.l.b16 %v224
      %v409 = vunpack.c.l.b16 %v225
      %v410 = vunpack.c.l.b16 %v226
      %v411 = vunpack.c.l.b16 %v227
      %v412 = vpack.c.b16 %v395, %v394
      %v413 = vpack.c.b16 %v397, %v396
      %v414 = vpack.c.b16 %v399, %v398
      %v415 = vpack.c.b16 %v401, %v400
      %v416 = vpack.c.b16 %v403, %v402
      %v417 = vpack.c.b16 %v405, %v404
      %v418 = vpack.c.b16 %v407, %v406
      %v419 = vpack.c.b16 %v409, %v408
      %v420 = vpack.c.b16 %v411, %v410
      %vm430 = vcmask 130048
      %v432 = vsel %vm430, %v329, 0
      %v435 = vsel %vm430, %v331, 0
      %v438 = vsel %vm430, %v333, 0
      %v441 = vsel %vm430, %v335, 0
      %v444 = vsel %vm430, %v337, 0
      %v447 = vsel %vm430, %v339, 0
      %v450 = vsel %vm430, %v341, 0
      %v453 = vsel %vm430, %v343, 0
      %v456 = vsel %vm430, %v345, 0
      %v459 = vsel %vm430, %v347, 0
      %v462 = vsel %vm430, %v349, 0
      %v465 = vsel %vm430, %v351, 0
      %v468 = vsel %vm430, %v353, 0
      %v471 = vsel %vm430, %v355, 0
      %v474 = vsel %vm430, %v357, 0
      %v477 = vsel %vm430, %v359, 0
      %479 = vmatpush.bf16.msra.mxu0 %v419
      %480 = vmatpush.bf16.msra.mxu0 %v418
      %481 = vmatpush.bf16.msra.mxu0 %v417
      %482 = vmatpush.bf16.msra.mxu0 %v416
      %483 = vmatpush.bf16.msra.mxu0 %v415
      %484 = vmatpush.bf16.msra.mxu0 %v414
      %485 = vmatpush.bf16.msra.mxu0 %v413
      %486 = vmatpush.bf16.msra.mxu0 %v412
      %487 = vmatmul.bf16.gmra.mxu0 %v328
      %v488 = vpop.f32.mrf.mxu0
      %v489 = vadd.f32 %v230, %v488
      %v490 = vpop.f32.mrf.mxu0
      %v491 = vadd.f32 %v230, %v490
      %492 = vmatmul.bf16.gmra.mxu0 %v330
      %v493 = vpop.f32.mrf.mxu0
      %v494 = vadd.f32 %v230, %v493
      %v495 = vpop.f32.mrf.mxu0
      %v496 = vadd.f32 %v230, %v495
      %497 = vmatmul.bf16.gmra.mxu0 %v332
      %v498 = vpop.f32.mrf.mxu0
      %v499 = vadd.f32 %v230, %v498
      %v500 = vpop.f32.mrf.mxu0
      %v501 = vadd.f32 %v230, %v500
      %502 = vmatmul.bf16.gmra.mxu0 %v334
      %v503 = vpop.f32.mrf.mxu0
      %v504 = vadd.f32 %v230, %v503
      %v505 = vpop.f32.mrf.mxu0
      %v506 = vadd.f32 %v230, %v505
      %507 = vmatmul.bf16.gmra.mxu0 %v336
      %v508 = vpop.f32.mrf.mxu0
      %v509 = vadd.f32 %v230, %v508
      %v510 = vpop.f32.mrf.mxu0
      %v511 = vadd.f32 %v230, %v510
      %512 = vmatmul.bf16.gmra.mxu0 %v338
      %v513 = vpop.f32.mrf.mxu0
      %v514 = vadd.f32 %v230, %v513
      %v515 = vpop.f32.mrf.mxu0
      %v516 = vadd.f32 %v230, %v515
      %517 = vmatmul.bf16.gmra.mxu0 %v340
      %v518 = vpop.f32.mrf.mxu0
      %v519 = vadd.f32 %v230, %v518
      %v520 = vpop.f32.mrf.mxu0
      %v521 = vadd.f32 %v230, %v520
      %522 = vmatmul.bf16.gmra.mxu0 %v342
      %v523 = vpop.f32.mrf.mxu0
      %v524 = vadd.f32 %v230, %v523
      %v525 = vpop.f32.mrf.mxu0
      %v526 = vadd.f32 %v230, %v525
      %527 = vmatmul.bf16.gmra.mxu0 %v344
      %v528 = vpop.f32.mrf.mxu0
      %v529 = vadd.f32 %v230, %v528
      %v530 = vpop.f32.mrf.mxu0
      %v531 = vadd.f32 %v230, %v530
      %532 = vmatmul.bf16.gmra.mxu0 %v346
      %v533 = vpop.f32.mrf.mxu0
      %v534 = vadd.f32 %v230, %v533
      %v535 = vpop.f32.mrf.mxu0
      %v536 = vadd.f32 %v230, %v535
      %537 = vmatmul.bf16.gmra.mxu0 %v348
      %v538 = vpop.f32.mrf.mxu0
      %v539 = vadd.f32 %v230, %v538
      %v540 = vpop.f32.mrf.mxu0
      %v541 = vadd.f32 %v230, %v540
      %542 = vmatmul.bf16.gmra.mxu0 %v350
      %v543 = vpop.f32.mrf.mxu0
      %v544 = vadd.f32 %v230, %v543
      %v545 = vpop.f32.mrf.mxu0
      %v546 = vadd.f32 %v230, %v545
      %547 = vmatmul.bf16.gmra.mxu0 %v352
      %v548 = vpop.f32.mrf.mxu0
      %v549 = vadd.f32 %v230, %v548
      %v550 = vpop.f32.mrf.mxu0
      %v551 = vadd.f32 %v230, %v550
      %552 = vmatmul.bf16.gmra.mxu0 %v354
      %v553 = vpop.f32.mrf.mxu0
      %v554 = vadd.f32 %v230, %v553
      %v555 = vpop.f32.mrf.mxu0
      %v556 = vadd.f32 %v230, %v555
      %557 = vmatmul.bf16.gmra.mxu0 %v356
      %v558 = vpop.f32.mrf.mxu0
      %v559 = vadd.f32 %v230, %v558
      %v560 = vpop.f32.mrf.mxu0
      %v561 = vadd.f32 %v230, %v560
      %562 = vmatmul.bf16.gmra.mxu0 %v358
      %v563 = vpop.f32.mrf.mxu0
      %v564 = vadd.f32 %v230, %v563
      %v565 = vpop.f32.mrf.mxu0
      %v566 = vadd.f32 %v230, %v565
      %567 = vdwg.mxu0
      %568 = vmatpush.bf16.msra.mxu0 0
      %569 = vmatpush.bf16.msra.mxu0 0
      %570 = vmatpush.bf16.msra.mxu0 0
      %571 = vmatpush.bf16.msra.mxu0 0
      %572 = vmatpush.bf16.msra.mxu0 0
      %573 = vmatpush.bf16.msra.mxu0 0
      %574 = vmatpush.bf16.msra.mxu0 0
      %575 = vmatpush.bf16.msra.mxu0 %v420
      %576 = vmatmul.bf16.gmra.mxu0 %v432
      %v577 = vpop.f32.mrf.mxu0
      %v578 = vadd.f32 %v489, %v577
      %v579 = vpop.f32.mrf.mxu0
      %v580 = vadd.f32 %v491, %v579
      %581 = vmatmul.bf16.gmra.mxu0 %v435
      %v582 = vpop.f32.mrf.mxu0
      %v583 = vadd.f32 %v494, %v582
      %v584 = vpop.f32.mrf.mxu0
      %v585 = vadd.f32 %v496, %v584
      %586 = vmatmul.bf16.gmra.mxu0 %v438
      %v587 = vpop.f32.mrf.mxu0
      %v588 = vadd.f32 %v499, %v587
      %v589 = vpop.f32.mrf.mxu0
      %v590 = vadd.f32 %v501, %v589
      %591 = vmatmul.bf16.gmra.mxu0 %v441
      %v592 = vpop.f32.mrf.mxu0
      %v593 = vadd.f32 %v504, %v592
      %v594 = vpop.f32.mrf.mxu0
      %v595 = vadd.f32 %v506, %v594
      %596 = vmatmul.bf16.gmra.mxu0 %v444
      %v597 = vpop.f32.mrf.mxu0
      %v598 = vadd.f32 %v509, %v597
      %v599 = vpop.f32.mrf.mxu0
      %v600 = vadd.f32 %v511, %v599
      %601 = vmatmul.bf16.gmra.mxu0 %v447
      %v602 = vpop.f32.mrf.mxu0
      %v603 = vadd.f32 %v514, %v602
      %v604 = vpop.f32.mrf.mxu0
      %v605 = vadd.f32 %v516, %v604
      %606 = vmatmul.bf16.gmra.mxu0 %v450
      %v607 = vpop.f32.mrf.mxu0
      %v608 = vadd.f32 %v519, %v607
      %v609 = vpop.f32.mrf.mxu0
      %v610 = vadd.f32 %v521, %v609
      %611 = vmatmul.bf16.gmra.mxu0 %v453
      %v612 = vpop.f32.mrf.mxu0
      %v613 = vadd.f32 %v524, %v612
      %v614 = vpop.f32.mrf.mxu0
      %v615 = vadd.f32 %v526, %v614
      %616 = vmatmul.bf16.gmra.mxu0 %v456
      %v617 = vpop.f32.mrf.mxu0
      %v618 = vadd.f32 %v529, %v617
      %v619 = vpop.f32.mrf.mxu0
      %v620 = vadd.f32 %v531, %v619
      %621 = vmatmul.bf16.gmra.mxu0 %v459
      %v622 = vpop.f32.mrf.mxu0
      %v623 = vadd.f32 %v534, %v622
      %v624 = vpop.f32.mrf.mxu0
      %v625 = vadd.f32 %v536, %v624
      %626 = vmatmul.bf16.gmra.mxu0 %v462
      %v627 = vpop.f32.mrf.mxu0
      %v628 = vadd.f32 %v539, %v627
      %v629 = vpop.f32.mrf.mxu0
      %v630 = vadd.f32 %v541, %v629
      %631 = vmatmul.bf16.gmra.mxu0 %v465
      %v632 = vpop.f32.mrf.mxu0
      %v633 = vadd.f32 %v544, %v632
      %v634 = vpop.f32.mrf.mxu0
      %v635 = vadd.f32 %v546, %v634
      %636 = vmatmul.bf16.gmra.mxu0 %v468
      %v637 = vpop.f32.mrf.mxu0
      %v638 = vadd.f32 %v549, %v637
      %v639 = vpop.f32.mrf.mxu0
      %v640 = vadd.f32 %v551, %v639
      %641 = vmatmul.bf16.gmra.mxu0 %v471
      %v642 = vpop.f32.mrf.mxu0
      %v643 = vadd.f32 %v554, %v642
      %v644 = vpop.f32.mrf.mxu0
      %v645 = vadd.f32 %v556, %v644
      %646 = vmatmul.bf16.gmra.mxu0 %v474
      %v647 = vpop.f32.mrf.mxu0
      %v648 = vadd.f32 %v559, %v647
      %v649 = vpop.f32.mrf.mxu0
      %v650 = vadd.f32 %v561, %v649
      %651 = vmatmul.bf16.gmra.mxu0 %v477
      %v652 = vpop.f32.mrf.mxu0
      %v653 = vadd.f32 %v564, %v652
      %v654 = vpop.f32.mrf.mxu0
      %v655 = vadd.f32 %v566, %v654
      %656 = vdwg.mxu0
      %v657 = vmax.f32 %v578, 0.0
      %v658 = vmax.f32 %v580, 0.0
      %v659 = vmax.f32 %v583, 0.0
      %v660 = vmax.f32 %v585, 0.0
      %v661 = vmax.f32 %v588, 0.0
      %v662 = vmax.f32 %v590, 0.0
      %v663 = vmax.f32 %v593, 0.0
      %v664 = vmax.f32 %v595, 0.0
      %v665 = vmax.f32 %v598, 0.0
      %v666 = vmax.f32 %v600, 0.0
      %v667 = vmax.f32 %v603, 0.0
      %v668 = vmax.f32 %v605, 0.0
      %v669 = vmax.f32 %v608, 0.0
      %v670 = vmax.f32 %v610, 0.0
      %v671 = vmax.f32 %v613, 0.0
      %v672 = vmax.f32 %v615, 0.0
      %v673 = vmax.f32 %v618, 0.0
      %v674 = vmax.f32 %v620, 0.0
      %v675 = vmax.f32 %v623, 0.0
      %v676 = vmax.f32 %v625, 0.0
      %v677 = vmax.f32 %v628, 0.0
      %v678 = vmax.f32 %v630, 0.0
      %v679 = vmax.f32 %v633, 0.0
      %v680 = vmax.f32 %v635, 0.0
      %v681 = vmax.f32 %v638, 0.0
      %v682 = vmax.f32 %v640, 0.0
      %v683 = vmax.f32 %v643, 0.0
      %v684 = vmax.f32 %v645, 0.0
      %v685 = vmax.f32 %v648, 0.0
      %v686 = vmax.f32 %v650, 0.0
      %v687 = vmax.f32 %v653, 0.0
      %v688 = vmax.f32 %v655, 0.0
      %689 = vst.msk [vmem:[%s175] sm:$0xff] %vm430, %v657
      %690 = vst.msk [vmem:[%s175 + $0x8] sm:$0xff] %vm430, %v658
      %691 = vst.msk [vmem:[%s175 + $0x10] sm:$0xff] %vm430, %v659
      %692 = vst.msk [vmem:[%s175 + $0x18] sm:$0xff] %vm430, %v660
      %693 = vst.msk [vmem:[%s175 + $0x20] sm:$0xff] %vm430, %v661
      %694 = vst.msk [vmem:[%s175 + $0x28] sm:$0xff] %vm430, %v662
      %695 = vst.msk [vmem:[%s175 + $0x30] sm:$0xff] %vm430, %v663
      %696 = vst.msk [vmem:[%s175 + $0x38] sm:$0xff] %vm430, %v664
      %697 = vst.msk [vmem:[%s175 + $0x40] sm:$0xff] %vm430, %v665
      %698 = vst.msk [vmem:[%s175 + $0x48] sm:$0xff] %vm430, %v666
      %699 = vst.msk [vmem:[%s175 + $0x50] sm:$0xff] %vm430, %v667
      %700 = vst.msk [vmem:[%s175 + $0x58] sm:$0xff] %vm430, %v668
      %701 = vst.msk [vmem:[%s175 + $0x60] sm:$0xff] %vm430, %v669
      %702 = vst.msk [vmem:[%s175 + $0x68] sm:$0xff] %vm430, %v670
      %703 = vst.msk [vmem:[%s175 + $0x70] sm:$0xff] %vm430, %v671
      %704 = vst.msk [vmem:[%s175 + $0x78] sm:$0xff] %vm430, %v672
      %705 = vst.msk [vmem:[%s175 + $0x80] sm:$0xff] %vm430, %v673
      %706 = vst.msk [vmem:[%s175 + $0x88] sm:$0xff] %vm430, %v674
      %707 = vst.msk [vmem:[%s175 + $0x90] sm:$0xff] %vm430, %v675
      %708 = vst.msk [vmem:[%s175 + $0x98] sm:$0xff] %vm430, %v676
      %709 = vst.msk [vmem:[%s175 + $0xa0] sm:$0xff] %vm430, %v677
      %710 = vst.msk [vmem:[%s175 + $0xa8] sm:$0xff] %vm430, %v678
      %711 = vst.msk [vmem:[%s175 + $0xb0] sm:$0xff] %vm430, %v679
      %712 = vst.msk [vmem:[%s175 + $0xb8] sm:$0xff] %vm430, %v680
      %713 = vst.msk [vmem:[%s175 + $0xc0] sm:$0xff] %vm430, %v681
      %714 = vst.msk [vmem:[%s175 + $0xc8] sm:$0xff] %vm430, %v682
      %715 = vst.msk [vmem:[%s175 + $0xd0] sm:$0xff] %vm430, %v683
      %716 = vst.msk [vmem:[%s175 + $0xd8] sm:$0xff] %vm430, %v684
      %717 = vst.msk [vmem:[%s175 + $0xe0] sm:$0xff] %vm430, %v685
      %718 = vst.msk [vmem:[%s175 + $0xe8] sm:$0xff] %vm430, %v686
      %719 = vst.msk [vmem:[%s175 + $0xf0] sm:$0xff] %vm430, %v687
      %720 = vst.msk [vmem:[%s175 + $0xf8] sm:$0xff] %vm430, %v688
      %s721 = smul.u32 32, %s14
      %p722 = scmp.lt.s32.totalorder %s721, 63
      %s723 = scalar_select %p722, %s721, 63
      %s724 = smul.addr %s723, 8
      %s725 = scalar_lea.vmem %s3, %s724
      // Predicated region
      $region33: #{_forward_impl.17} parent=31 // pred_check
        %p726 = pneg %p100
      $region34: #{_forward_impl.17} parent=31 // pred_check_branch
        %728 = sbr.rel (%p726) target = $region36
      $region35: #{_forward_impl.17} parent=31 // pred_region
        %s729 = smul.u32 32, %s14
      $region36: #{_forward_impl.17} parent=31 // pred_fallthru
        _
    $region32: #{_forward_impl.17} parent=5 // pred_fallthru
      _
    %p730 = scmp.le.s32.totalorder 2, %s9
    // Predicated region
    $region37: #{_forward_impl.17} parent=5 // pred_check
      %p731 = pneg %p730
    $region38: #{_forward_impl.17} parent=5 // pred_check_branch
      %733 = sbr.rel (%p731) target = $region40
    $region39: #{_forward_impl.17} parent=5 // pred_region
      %s734 = ssub.s32 %s9, 2
      // Predicated region
      $region41: #{_forward_impl.17} parent=39 // pred_check
        %p735 = pneg %p106
      $region42: #{_forward_impl.17} parent=39 // pred_check_branch
        %737 = sbr.rel (%p735) target = $region44
      $region43: #{_forward_impl.17} parent=39 // pred_region
        %s738 = smul.u32 32, %s15
        %p739 = scmp.lt.s32.totalorder %s738, 63
        %s740 = scalar_select %p739, %s738, 63
        %s741 = smul.addr %s740, 8
        %s742 = scalar_lea.vmem %s3, %s741
      $region44: #{_forward_impl.17} parent=39 // pred_fallthru
        _
    $region40: #{_forward_impl.17} parent=5 // pred_fallthru
      _
  $region6: #{_forward_impl.17} parent=0 // loop_footer
    %s13 = sadd.s32 1, %s9
  $region7: #{_forward_impl.17} parent=0 // loop_footer_branch
    %8 = sbr.rel target = $region3
  $region8: #{_forward_impl.17} parent=0 // loop_exit
    _

// kernel: _forward_impl.18
$region0: #{_forward_impl.18}
  #allocation0 [shape = 'u32[]', space=smem, size = 0x4, offset = 0x4, fixed_abs, tag = 'smem constant byte address 0x4 - core index']
  #allocation1 [shape = 'u32[72,128]{1,0:T(1,128)}', space=vmem, size = 0x9000, scoped, tag = 'internal scratch']
  #allocation2 [shape = 'f32[1,1]{1,0:T(1,128)S(1)}', space=vmem, size = 0x200, scoped, tag = 'scoped memory for _forward_impl.18']
  %s0 = inlined_call_operand.vmem [shape: bf16[2048,144], index: 0, kind: input, shape index: {}]
  %s1 = inlined_call_operand.vmem [shape: bf16[144,1], index: 1, kind: input, shape index: {}]
  %s2 = inlined_call_operand.<no memory space> [shape: f32[1,1], index: 2, kind: input, shape index: {}]
  %s3 = inlined_call_operand.vmem [shape: f32[2048,1], index: 3, kind: output, shape index: {}]
  %s4 = sld [smem:[#allocation0]]
  $region45: #{_forward_impl.18} parent=0
    _
  %s6 = ssub.s32 1, %s4
  %s7 = scalar_select 0, %s6, %s4
  %v8 = vstv %s2
  %9 = vst [vmem:[#allocation2] sm:$0x1] %v8
  loop: start=0, step=1, limit=10
  $region2: #{_forward_impl.18} parent=0 // loop_pre_header
    _
  $region3: #{_forward_impl.18} parent=0 // loop_header
    %s11 = sphi 0, %s15
    %p12 = scmp.ge.s32.totalorder %s11, 10
    %s21 = sphi 0, %s23
    %s24 = sphi 0, %s21
    %s25 = sphi 0, %s24
    %s41 = sphi 0, %s25
    %s45 = sphi 0, %s45
    %s47 = sphi 0, %s45
    %s48 = sphi 0, %s47
    %s62 = sphi 0, %s48
    %s66 = sphi 0, %s66
    %s68 = sphi 0, %s66
    %s69 = sphi 0, %s68
    %s83 = sphi 0, %s69
    %s89 = sphi 0, %s91
    %s92 = sphi 0, %s89
    %s93 = sphi 0, %s92
    %s109 = sphi 0, %s93
  $region4: #{_forward_impl.18} parent=0 // loop_header_branch
    %14 = sbr.rel (%p12) target = $region8
  $region5: #{_forward_impl.18} parent=0 // loop_body
    %s16 = ssub.s32 %s11, 1
    %s17 = ssub.s32 %s11, 2
    %s18 = sadd.s32 %s11, 1
    %s19 = ssub.s32 %s11, %s18
    %p20 = scmp.eq.s32.totalorder %s19, 0
    %s22 = sadd.s32 %s21, 1
    %s23 = scalar_select %p20, %s21, %s22
    %p26 = pneg %p20
    %p27 = scmp.eq.s32.totalorder %s11, 7
    %p28 = por %p26, %p27
    %p29 = scmp.ne.s32.totalorder %s21, %s24
    %p30 = scmp.eq.s32.totalorder %s11, 0
    %p31 = por %p29, %p30
    %p32 = scmp.ne.s32.totalorder %s21, %s24
    %p33 = scmp.eq.s32.totalorder %s16, 7
    %p34 = por %p32, %p33
    %p35 = scmp.ne.s32.totalorder %s24, %s25
    %p36 = scmp.eq.s32.totalorder %s16, 0
    %p37 = por %p35, %p36
    %p38 = scmp.ne.s32.totalorder %s24, %s25
    %p39 = scmp.eq.s32.totalorder %s17, 7
    %p40 = por %p38, %p39
    %p42 = scmp.ne.s32.totalorder %s25, %s41
    %p43 = scmp.eq.s32.totalorder %s17, 0
    %p44 = por %p42, %p43
    %s46 = sadd.s32 %s45, 1
    %p49 = scmp.eq.s32.totalorder %s11, 7
    %p50 = scmp.ne.s32.totalorder %s45, %s47
    %p51 = scmp.eq.s32.totalorder %s11, 0
    %p52 = por %p50, %p51
    %p53 = scmp.ne.s32.totalorder %s45, %s47
    %p54 = scmp.eq.s32.totalorder %s16, 7
    %p55 = por %p53, %p54
    %p56 = scmp.ne.s32.totalorder %s47, %s48
    %p57 = scmp.eq.s32.totalorder %s16, 0
    %p58 = por %p56, %p57
    %p59 = scmp.ne.s32.totalorder %s47, %s48
    %p60 = scmp.eq.s32.totalorder %s17, 7
    %p61 = por %p59, %p60
    %p63 = scmp.ne.s32.totalorder %s48, %s62
    %p64 = scmp.eq.s32.totalorder %s17, 0
    %p65 = por %p63, %p64
    %s67 = sadd.s32 %s66, 1
    %p70 = scmp.eq.s32.totalorder %s11, 7
    %p71 = scmp.ne.s32.totalorder %s66, %s68
    %p72 = scmp.eq.s32.totalorder %s11, 0
    %p73 = por %p71, %p72
    %p74 = scmp.ne.s32.totalorder %s66, %s68
    %p75 = scmp.eq.s32.totalorder %s16, 7
    %p76 = por %p74, %p75
    %p77 = scmp.ne.s32.totalorder %s68, %s69
    %p78 = scmp.eq.s32.totalorder %s16, 0
    %p79 = por %p77, %p78
    %p80 = scmp.ne.s32.totalorder %s68, %s69
    %p81 = scmp.eq.s32.totalorder %s17, 7
    %p82 = por %p80, %p81
    %p84 = scmp.ne.s32.totalorder %s69, %s83
    %p85 = scmp.eq.s32.totalorder %s17, 0
    %p86 = por %p84, %p85
    %s87 = ssub.s32 %s11, %s18
    %p88 = scmp.eq.s32.totalorder %s87, 0
    %s90 = sadd.s32 %s89, 1
    %s91 = scalar_select %p88, %s89, %s90
    %p94 = pneg %p88
    %p95 = scmp.eq.s32.totalorder %s11, 7
    %p96 = por %p94, %p95
    %p97 = scmp.ne.s32.totalorder %s89, %s92
    %p98 = scmp.eq.s32.totalorder %s11, 0
    %p99 = por %p97, %p98
    %p100 = scmp.ne.s32.totalorder %s89, %s92
    %p101 = scmp.eq.s32.totalorder %s16, 7
    %p102 = por %p100, %p101
    %p103 = scmp.ne.s32.totalorder %s92, %s93
    %p104 = scmp.eq.s32.totalorder %s16, 0
    %p105 = por %p103, %p104
    %p106 = scmp.ne.s32.totalorder %s92, %s93
    %p107 = scmp.eq.s32.totalorder %s17, 7
    %p108 = por %p106, %p107
    %p110 = scmp.ne.s32.totalorder %s93, %s109
    %p111 = scmp.eq.s32.totalorder %s17, 0
    %p112 = por %p110, %p111
    %p113 = scmp.le.s32.totalorder 1, %s11
    %p114 = scmp.lt.s32.totalorder %s11, 9
    %p115 = pnand %p113, %p114
    %p116 = pneg %p115
    // Predicated region
    $region9: #{_forward_impl.18} parent=5 // pred_check
      _
    $region10: #{_forward_impl.18} parent=5 // pred_check_branch
      %118 = sbr.rel (%p115) target = $region12
    $region11: #{_forward_impl.18} parent=5 // pred_region
      %s119 = ssub.s32 %s11, 1
      // Predicated region
      $region13: #{_forward_impl.18} parent=11 // pred_check
        %p120 = pneg %p58
      $region14: #{_forward_impl.18} parent=11 // pred_check_branch
        %122 = sbr.rel (%p120) target = $region16
      $region15: #{_forward_impl.18} parent=11 // pred_region
        _
      $region16: #{_forward_impl.18} parent=11 // pred_fallthru
        _
      // Predicated region
      $region17: #{_forward_impl.18} parent=11 // pred_check
        %p123 = pneg %p79
      $region18: #{_forward_impl.18} parent=11 // pred_check_branch
        %125 = sbr.rel (%p123) target = $region20
      $region19: #{_forward_impl.18} parent=11 // pred_region
        _
      $region20: #{_forward_impl.18} parent=11 // pred_fallthru
        _
    $region12: #{_forward_impl.18} parent=5 // pred_fallthru
      _
    %p126 = scmp.lt.s32.totalorder %s11, 8
    // Predicated region
    $region21: #{_forward_impl.18} parent=5 // pred_check
      %p127 = pneg %p126
    $region22: #{_forward_impl.18} parent=5 // pred_check_branch
      %129 = sbr.rel (%p127) target = $region24
    $region23: #{_forward_impl.18} parent=5 // pred_region
      // Predicated region
      $region25: #{_forward_impl.18} parent=23 // pred_check
        %p130 = pneg %p31
      $region26: #{_forward_impl.18} parent=23 // pred_check_branch
        %132 = sbr.rel (%p130) target = $region28
      $region27: #{_forward_impl.18} parent=23 // pred_region
        %s133 = smul.u32 32, %s11
        %p134 = scmp.lt.s32.totalorder %s133, 255
        %s135 = scalar_select %p134, %s133, 255
        %s136 = smul.addr %s135, 2
        %s137 = smul.addr %s136, 4
        %s138 = scalar_lea.vmem %s0, %s137
        %s139 = smul.u32 32, %s11
      $region28: #{_forward_impl.18} parent=23 // pred_fallthru
        _
    $region24: #{_forward_impl.18} parent=5 // pred_fallthru
      _
    %p140 = scmp.le.s32.totalorder 1, %s11
    %p141 = scmp.lt.s32.totalorder %s11, 9
    %p142 = pnand %p140, %p141
    %p143 = pneg %p142
    // Predicated region
    $region29: #{_forward_impl.18} parent=5 // pred_check
      _
    $region30: #{_forward_impl.18} parent=5 // pred_check_branch
      %145 = sbr.rel (%p142) target = $region32
    $region31: #{_forward_impl.18} parent=5 // pred_region
      %s146 = ssub.s32 %s11, 1
      %s147 = smul.u32 32, %s16
      %p148 = scmp.lt.s32.totalorder %s147, 255
      %s149 = scalar_select %p148, %s147, 255
      %s150 = smul.addr %s149, 2
      %s151 = smul.addr %s150, 4
      %s152 = scalar_lea.vmem %s0, %s151
      %p153 = pneg %p37
      %p154 = pneg %p34
      %p155 = pneg %p58
      %p156 = pneg %p55
      %p157 = pneg %p79
      %p158 = pneg %p76
      %p159 = pneg %p105
      %p160 = pneg %p102
      %s161 = smul.u32 32, %s16
      %p162 = scmp.lt.s32.totalorder %s161, 255
      %s163 = scalar_select %p162, %s161, 255
      %s164 = smul.addr %s163, 8
      %s165 = scalar_lea.vmem %s3, %s164
      %s166 = smul.u32 32, %s16
      %p167 = scmp.lt.s32.totalorder %s166, 255
      %s168 = scalar_select %p167, %s166, 255
      %s169 = smul.addr %s168, 2
      %s170 = smul.addr %s169, 4
      %s171 = scalar_lea.vmem %s0, %s170
      %s172 = smul.u32 32, %s16
      %s173 = smul.u32 32, %s16
      %p174 = scmp.lt.s32.totalorder %s173, 255
      %s175 = scalar_select %p174, %s173, 255
      %s176 = smul.addr %s175, 8
      %s177 = scalar_lea.vmem %s3, %s176
      %s178 = smul.u32 32, %s16
      %v180 = vld [vmem:[%s171] sm:$0xff]
      %v181 = vld [vmem:[%s171 + $0x8] sm:$0xff]
      %v182 = vld [vmem:[%s171 + $0x10] sm:$0xff]
      %v183 = vld [vmem:[%s171 + $0x18] sm:$0xff]
      %v184 = vld [vmem:[%s171 + $0x20] sm:$0xff]
      %v185 = vld [vmem:[%s171 + $0x28] sm:$0xff]
      %v186 = vld [vmem:[%s171 + $0x30] sm:$0xff]
      %v187 = vld [vmem:[%s171 + $0x38] sm:$0xff]
      %v188 = vld [vmem:[%s171 + $0x40] sm:$0xff]
      %v189 = vld [vmem:[%s171 + $0x48] sm:$0xff]
      %v190 = vld [vmem:[%s171 + $0x50] sm:$0xff]
      %v191 = vld [vmem:[%s171 + $0x58] sm:$0xff]
      %v192 = vld [vmem:[%s171 + $0x60] sm:$0xff]
      %v193 = vld [vmem:[%s171 + $0x68] sm:$0xff]
      %v194 = vld [vmem:[%s171 + $0x70] sm:$0xff]
      %v195 = vld [vmem:[%s171 + $0x78] sm:$0xff]
      %v196 = vld [vmem:[%s171 + $0x80] sm:$0xff]
      %v197 = vld [vmem:[%s171 + $0x88] sm:$0xff]
      %v198 = vld [vmem:[%s171 + $0x90] sm:$0xff]
      %v199 = vld [vmem:[%s171 + $0x98] sm:$0xff]
      %v200 = vld [vmem:[%s171 + $0xa0] sm:$0xff]
      %v201 = vld [vmem:[%s171 + $0xa8] sm:$0xff]
      %v202 = vld [vmem:[%s171 + $0xb0] sm:$0xff]
      %v203 = vld [vmem:[%s171 + $0xb8] sm:$0xff]
      %v204 = vld [vmem:[%s171 + $0xc0] sm:$0xff]
      %v205 = vld [vmem:[%s171 + $0xc8] sm:$0xff]
      %v206 = vld [vmem:[%s171 + $0xd0] sm:$0xff]
      %v207 = vld [vmem:[%s171 + $0xd8] sm:$0xff]
      %v208 = vld [vmem:[%s171 + $0xe0] sm:$0xff]
      %v209 = vld [vmem:[%s171 + $0xe8] sm:$0xff]
      %v210 = vld [vmem:[%s171 + $0xf0] sm:$0xff]
      %v211 = vld [vmem:[%s171 + $0xf8] sm:$0xff]
      %v212 = vld [vmem:[%s1] sm:$0xf]
      %v213 = vld [vmem:[%s1 + $0x4] sm:$0xf]
      %v214 = vld [vmem:[%s1 + $0x8] sm:$0xf]
      %v215 = vld [vmem:[%s1 + $0xc] sm:$0xf]
      %v216 = vld [vmem:[%s1 + $0x10] sm:$0xf]
      %v217 = vld [vmem:[%s1 + $0x14] sm:$0xf]
      %v218 = vld [vmem:[%s1 + $0x18] sm:$0xf]
      %v219 = vld [vmem:[%s1 + $0x1c] sm:$0xf]
      %v220 = vld [vmem:[%s1 + $0x20] sm:$0xf]
      %v221 = vld [vmem:[%s1 + $0x24] sm:$0xf]
      %v222 = vld [vmem:[%s1 + $0x28] sm:$0xf]
      %v223 = vld [vmem:[%s1 + $0x2c] sm:$0xf]
      %v224 = vld [vmem:[%s1 + $0x30] sm:$0xf]
      %v225 = vld [vmem:[%s1 + $0x34] sm:$0xf]
      %v226 = vld [vmem:[%s1 + $0x38] sm:$0xf]
      %v227 = vld [vmem:[%s1 + $0x3c] sm:$0xf]
      %v228 = vld [vmem:[%s1 + $0x40] sm:$0xf]
      %v229 = vld [vmem:[%s1 + $0x44] sm:$0xf]
      %v230 = vld [vmem:[#allocation2] sm:$0x1]
      %v232 = vperm.slane %v230, 0
      %v266 = vunpack.c.l.b16 %v180
      %v267 = vunpack.c.h.b16 %v180
      %v268 = vunpack.c.l.b16 %v181
      %v269 = vunpack.c.h.b16 %v181
      %v270 = vunpack.c.l.b16 %v182
      %v271 = vunpack.c.h.b16 %v182
      %v272 = vunpack.c.l.b16 %v183
      %v273 = vunpack.c.h.b16 %v183
      %v274 = vunpack.c.l.b16 %v184
      %v275 = vunpack.c.h.b16 %v184
      %v276 = vunpack.c.l.b16 %v185
      %v277 = vunpack.c.h.b16 %v185
      %v278 = vunpack.c.l.b16 %v186
      %v279 = vunpack.c.h.b16 %v186
      %v280 = vunpack.c.l.b16 %v187
      %v281 = vunpack.c.h.b16 %v187
      %v282 = vunpack.c.l.b16 %v188
      %v283 = vunpack.c.h.b16 %v188
      %v284 = vunpack.c.l.b16 %v189
      %v285 = vunpack.c.h.b16 %v189
      %v286 = vunpack.c.l.b16 %v190
      %v287 = vunpack.c.h.b16 %v190
      %v288 = vunpack.c.l.b16 %v191
      %v289 = vunpack.c.h.b16 %v191
      %v290 = vunpack.c.l.b16 %v192
      %v291 = vunpack.c.h.b16 %v192
      %v292 = vunpack.c.l.b16 %v193
      %v293 = vunpack.c.h.b16 %v193
      %v294 = vunpack.c.l.b16 %v194
      %v295 = vunpack.c.h.b16 %v194
      %v296 = vunpack.c.l.b16 %v195
      %v297 = vunpack.c.h.b16 %v195
      %v298 = vunpack.c.l.b16 %v196
      %v299 = vunpack.c.h.b16 %v196
      %v300 = vunpack.c.l.b16 %v197
      %v301 = vunpack.c.h.b16 %v197
      %v302 = vunpack.c.l.b16 %v198
      %v303 = vunpack.c.h.b16 %v198
      %v304 = vunpack.c.l.b16 %v199
      %v305 = vunpack.c.h.b16 %v199
      %v306 = vunpack.c.l.b16 %v200
      %v307 = vunpack.c.h.b16 %v200
      %v308 = vunpack.c.l.b16 %v201
      %v309 = vunpack.c.h.b16 %v201
      %v310 = vunpack.c.l.b16 %v202
      %v311 = vunpack.c.h.b16 %v202
      %v312 = vunpack.c.l.b16 %v203
      %v313 = vunpack.c.h.b16 %v203
      %v314 = vunpack.c.l.b16 %v204
      %v315 = vunpack.c.h.b16 %v204
      %v316 = vunpack.c.l.b16 %v205
      %v317 = vunpack.c.h.b16 %v205
      %v318 = vunpack.c.l.b16 %v206
      %v319 = vunpack.c.h.b16 %v206
      %v320 = vunpack.c.l.b16 %v207
      %v321 = vunpack.c.h.b16 %v207
      %v322 = vunpack.c.l.b16 %v208
      %v323 = vunpack.c.h.b16 %v208
      %v324 = vunpack.c.l.b16 %v209
      %v325 = vunpack.c.h.b16 %v209
      %v326 = vunpack.c.l.b16 %v210
      %v327 = vunpack.c.h.b16 %v210
      %v328 = vunpack.c.l.b16 %v211
      %v329 = vunpack.c.h.b16 %v211
      %v330 = vpack.c.b16 %v268, %v266
      %v331 = vpack.c.b16 %v269, %v267
      %v332 = vpack.c.b16 %v272, %v270
      %v333 = vpack.c.b16 %v273, %v271
      %v334 = vpack.c.b16 %v276, %v274
      %v335 = vpack.c.b16 %v277, %v275
      %v336 = vpack.c.b16 %v280, %v278
      %v337 = vpack.c.b16 %v281, %v279
      %v338 = vpack.c.b16 %v284, %v282
      %v339 = vpack.c.b16 %v285, %v283
      %v340 = vpack.c.b16 %v288, %v286
      %v341 = vpack.c.b16 %v289, %v287
      %v342 = vpack.c.b16 %v292, %v290
      %v343 = vpack.c.b16 %v293, %v291
      %v344 = vpack.c.b16 %v296, %v294
      %v345 = vpack.c.b16 %v297, %v295
      %v346 = vpack.c.b16 %v300, %v298
      %v347 = vpack.c.b16 %v301, %v299
      %v348 = vpack.c.b16 %v304, %v302
      %v349 = vpack.c.b16 %v305, %v303
      %v350 = vpack.c.b16 %v308, %v306
      %v351 = vpack.c.b16 %v309, %v307
      %v352 = vpack.c.b16 %v312, %v310
      %v353 = vpack.c.b16 %v313, %v311
      %v354 = vpack.c.b16 %v316, %v314
      %v355 = vpack.c.b16 %v317, %v315
      %v356 = vpack.c.b16 %v320, %v318
      %v357 = vpack.c.b16 %v321, %v319
      %v358 = vpack.c.b16 %v324, %v322
      %v359 = vpack.c.b16 %v325, %v323
      %v360 = vpack.c.b16 %v328, %v326
      %v361 = vpack.c.b16 %v329, %v327
      %v396 = vunpack.c.l.b16 %v212
      %v397 = vunpack.c.l.b16 %v213
      %v398 = vunpack.c.l.b16 %v214
      %v399 = vunpack.c.l.b16 %v215
      %v400 = vunpack.c.l.b16 %v216
      %v401 = vunpack.c.l.b16 %v217
      %v402 = vunpack.c.l.b16 %v218
      %v403 = vunpack.c.l.b16 %v219
      %v404 = vunpack.c.l.b16 %v220
      %v405 = vunpack.c.l.b16 %v221
      %v406 = vunpack.c.l.b16 %v222
      %v407 = vunpack.c.l.b16 %v223
      %v408 = vunpack.c.l.b16 %v224
      %v409 = vunpack.c.l.b16 %v225
      %v410 = vunpack.c.l.b16 %v226
      %v411 = vunpack.c.l.b16 %v227
      %v412 = vunpack.c.l.b16 %v228
      %v413 = vunpack.c.l.b16 %v229
      %v414 = vpack.c.b16 %v397, %v396
      %v415 = vpack.c.b16 %v399, %v398
      %v416 = vpack.c.b16 %v401, %v400
      %v417 = vpack.c.b16 %v403, %v402
      %v418 = vpack.c.b16 %v405, %v404
      %v419 = vpack.c.b16 %v407, %v406
      %v420 = vpack.c.b16 %v409, %v408
      %v421 = vpack.c.b16 %v411, %v410
      %v422 = vpack.c.b16 %v413, %v412
      %vm432 = vcmask 130048
      %v434 = vsel %vm432, %v331, 0
      %v437 = vsel %vm432, %v333, 0
      %v440 = vsel %vm432, %v335, 0
      %v443 = vsel %vm432, %v337, 0
      %v446 = vsel %vm432, %v339, 0
      %v449 = vsel %vm432, %v341, 0
      %v452 = vsel %vm432, %v343, 0
      %v455 = vsel %vm432, %v345, 0
      %v458 = vsel %vm432, %v347, 0
      %v461 = vsel %vm432, %v349, 0
      %v464 = vsel %vm432, %v351, 0
      %v467 = vsel %vm432, %v353, 0
      %v470 = vsel %vm432, %v355, 0
      %v473 = vsel %vm432, %v357, 0
      %v476 = vsel %vm432, %v359, 0
      %v479 = vsel %vm432, %v361, 0
      %481 = vmatpush.bf16.msra.mxu0 %v421
      %482 = vmatpush.bf16.msra.mxu0 %v420
      %483 = vmatpush.bf16.msra.mxu0 %v419
      %484 = vmatpush.bf16.msra.mxu0 %v418
      %485 = vmatpush.bf16.msra.mxu0 %v417
      %486 = vmatpush.bf16.msra.mxu0 %v416
      %487 = vmatpush.bf16.msra.mxu0 %v415
      %488 = vmatpush.bf16.msra.mxu0 %v414
      %489 = vmatmul.bf16.gmra.mxu0 %v330
      %v490 = vpop.f32.mrf.mxu0
      %v491 = vadd.f32 %v232, %v490
      %v492 = vpop.f32.mrf.mxu0
      %v493 = vadd.f32 %v232, %v492
      %494 = vmatmul.bf16.gmra.mxu0 %v332
      %v495 = vpop.f32.mrf.mxu0
      %v496 = vadd.f32 %v232, %v495
      %v497 = vpop.f32.mrf.mxu0
      %v498 = vadd.f32 %v232, %v497
      %499 = vmatmul.bf16.gmra.mxu0 %v334
      %v500 = vpop.f32.mrf.mxu0
      %v501 = vadd.f32 %v232, %v500
      %v502 = vpop.f32.mrf.mxu0
      %v503 = vadd.f32 %v232, %v502
      %504 = vmatmul.bf16.gmra.mxu0 %v336
      %v505 = vpop.f32.mrf.mxu0
      %v506 = vadd.f32 %v232, %v505
      %v507 = vpop.f32.mrf.mxu0
      %v508 = vadd.f32 %v232, %v507
      %509 = vmatmul.bf16.gmra.mxu0 %v338
      %v510 = vpop.f32.mrf.mxu0
      %v511 = vadd.f32 %v232, %v510
      %v512 = vpop.f32.mrf.mxu0
      %v513 = vadd.f32 %v232, %v512
      %514 = vmatmul.bf16.gmra.mxu0 %v340
      %v515 = vpop.f32.mrf.mxu0
      %v516 = vadd.f32 %v232, %v515
      %v517 = vpop.f32.mrf.mxu0
      %v518 = vadd.f32 %v232, %v517
      %519 = vmatmul.bf16.gmra.mxu0 %v342
      %v520 = vpop.f32.mrf.mxu0
      %v521 = vadd.f32 %v232, %v520
      %v522 = vpop.f32.mrf.mxu0
      %v523 = vadd.f32 %v232, %v522
      %524 = vmatmul.bf16.gmra.mxu0 %v344
      %v525 = vpop.f32.mrf.mxu0
      %v526 = vadd.f32 %v232, %v525
      %v527 = vpop.f32.mrf.mxu0
      %v528 = vadd.f32 %v232, %v527
      %529 = vmatmul.bf16.gmra.mxu0 %v346
      %v530 = vpop.f32.mrf.mxu0
      %v531 = vadd.f32 %v232, %v530
      %v532 = vpop.f32.mrf.mxu0
      %v533 = vadd.f32 %v232, %v532
      %534 = vmatmul.bf16.gmra.mxu0 %v348
      %v535 = vpop.f32.mrf.mxu0
      %v536 = vadd.f32 %v232, %v535
      %v537 = vpop.f32.mrf.mxu0
      %v538 = vadd.f32 %v232, %v537
      %539 = vmatmul.bf16.gmra.mxu0 %v350
      %v540 = vpop.f32.mrf.mxu0
      %v541 = vadd.f32 %v232, %v540
      %v542 = vpop.f32.mrf.mxu0
      %v543 = vadd.f32 %v232, %v542
      %544 = vmatmul.bf16.gmra.mxu0 %v352
      %v545 = vpop.f32.mrf.mxu0
      %v546 = vadd.f32 %v232, %v545
      %v547 = vpop.f32.mrf.mxu0
      %v548 = vadd.f32 %v232, %v547
      %549 = vmatmul.bf16.gmra.mxu0 %v354
      %v550 = vpop.f32.mrf.mxu0
      %v551 = vadd.f32 %v232, %v550
      %v552 = vpop.f32.mrf.mxu0
      %v553 = vadd.f32 %v232, %v552
      %554 = vmatmul.bf16.gmra.mxu0 %v356
      %v555 = vpop.f32.mrf.mxu0
      %v556 = vadd.f32 %v232, %v555
      %v557 = vpop.f32.mrf.mxu0
      %v558 = vadd.f32 %v232, %v557
      %559 = vmatmul.bf16.gmra.mxu0 %v358
      %v560 = vpop.f32.mrf.mxu0
      %v561 = vadd.f32 %v232, %v560
      %v562 = vpop.f32.mrf.mxu0
      %v563 = vadd.f32 %v232, %v562
      %564 = vmatmul.bf16.gmra.mxu0 %v360
      %v565 = vpop.f32.mrf.mxu0
      %v566 = vadd.f32 %v232, %v565
      %v567 = vpop.f32.mrf.mxu0
      %v568 = vadd.f32 %v232, %v567
      %569 = vdwg.mxu0
      %570 = vmatpush.bf16.msra.mxu0 0
      %571 = vmatpush.bf16.msra.mxu0 0
      %572 = vmatpush.bf16.msra.mxu0 0
      %573 = vmatpush.bf16.msra.mxu0 0
      %574 = vmatpush.bf16.msra.mxu0 0
      %575 = vmatpush.bf16.msra.mxu0 0
      %576 = vmatpush.bf16.msra.mxu0 0
      %577 = vmatpush.bf16.msra.mxu0 %v422
      %578 = vmatmul.bf16.gmra.mxu0 %v434
      %v579 = vpop.f32.mrf.mxu0
      %v580 = vadd.f32 %v491, %v579
      %v581 = vpop.f32.mrf.mxu0
      %v582 = vadd.f32 %v493, %v581
      %583 = vmatmul.bf16.gmra.mxu0 %v437
      %v584 = vpop.f32.mrf.mxu0
      %v585 = vadd.f32 %v496, %v584
      %v586 = vpop.f32.mrf.mxu0
      %v587 = vadd.f32 %v498, %v586
      %588 = vmatmul.bf16.gmra.mxu0 %v440
      %v589 = vpop.f32.mrf.mxu0
      %v590 = vadd.f32 %v501, %v589
      %v591 = vpop.f32.mrf.mxu0
      %v592 = vadd.f32 %v503, %v591
      %593 = vmatmul.bf16.gmra.mxu0 %v443
      %v594 = vpop.f32.mrf.mxu0
      %v595 = vadd.f32 %v506, %v594
      %v596 = vpop.f32.mrf.mxu0
      %v597 = vadd.f32 %v508, %v596
      %598 = vmatmul.bf16.gmra.mxu0 %v446
      %v599 = vpop.f32.mrf.mxu0
      %v600 = vadd.f32 %v511, %v599
      %v601 = vpop.f32.mrf.mxu0
      %v602 = vadd.f32 %v513, %v601
      %603 = vmatmul.bf16.gmra.mxu0 %v449
      %v604 = vpop.f32.mrf.mxu0
      %v605 = vadd.f32 %v516, %v604
      %v606 = vpop.f32.mrf.mxu0
      %v607 = vadd.f32 %v518, %v606
      %608 = vmatmul.bf16.gmra.mxu0 %v452
      %v609 = vpop.f32.mrf.mxu0
      %v610 = vadd.f32 %v521, %v609
      %v611 = vpop.f32.mrf.mxu0
      %v612 = vadd.f32 %v523, %v611
      %613 = vmatmul.bf16.gmra.mxu0 %v455
      %v614 = vpop.f32.mrf.mxu0
      %v615 = vadd.f32 %v526, %v614
      %v616 = vpop.f32.mrf.mxu0
      %v617 = vadd.f32 %v528, %v616
      %618 = vmatmul.bf16.gmra.mxu0 %v458
      %v619 = vpop.f32.mrf.mxu0
      %v620 = vadd.f32 %v531, %v619
      %v621 = vpop.f32.mrf.mxu0
      %v622 = vadd.f32 %v533, %v621
      %623 = vmatmul.bf16.gmra.mxu0 %v461
      %v624 = vpop.f32.mrf.mxu0
      %v625 = vadd.f32 %v536, %v624
      %v626 = vpop.f32.mrf.mxu0
      %v627 = vadd.f32 %v538, %v626
      %628 = vmatmul.bf16.gmra.mxu0 %v464
      %v629 = vpop.f32.mrf.mxu0
      %v630 = vadd.f32 %v541, %v629
      %v631 = vpop.f32.mrf.mxu0
      %v632 = vadd.f32 %v543, %v631
      %633 = vmatmul.bf16.gmra.mxu0 %v467
      %v634 = vpop.f32.mrf.mxu0
      %v635 = vadd.f32 %v546, %v634
      %v636 = vpop.f32.mrf.mxu0
      %v637 = vadd.f32 %v548, %v636
      %638 = vmatmul.bf16.gmra.mxu0 %v470
      %v639 = vpop.f32.mrf.mxu0
      %v640 = vadd.f32 %v551, %v639
      %v641 = vpop.f32.mrf.mxu0
      %v642 = vadd.f32 %v553, %v641
      %643 = vmatmul.bf16.gmra.mxu0 %v473
      %v644 = vpop.f32.mrf.mxu0
      %v645 = vadd.f32 %v556, %v644
      %v646 = vpop.f32.mrf.mxu0
      %v647 = vadd.f32 %v558, %v646
      %648 = vmatmul.bf16.gmra.mxu0 %v476
      %v649 = vpop.f32.mrf.mxu0
      %v650 = vadd.f32 %v561, %v649
      %v651 = vpop.f32.mrf.mxu0
      %v652 = vadd.f32 %v563, %v651
      %653 = vmatmul.bf16.gmra.mxu0 %v479
      %v654 = vpop.f32.mrf.mxu0
      %v655 = vadd.f32 %v566, %v654
      %v656 = vpop.f32.mrf.mxu0
      %v657 = vadd.f32 %v568, %v656
      %658 = vdwg.mxu0
      %v659 = vxor.u32 %v580, 2147483648
      %v660 = vxor.u32 %v582, 2147483648
      %v661 = vxor.u32 %v585, 2147483648
      %v662 = vxor.u32 %v587, 2147483648
      %v663 = vxor.u32 %v590, 2147483648
      %v664 = vxor.u32 %v592, 2147483648
      %v665 = vxor.u32 %v595, 2147483648
      %v666 = vxor.u32 %v597, 2147483648
      %v667 = vxor.u32 %v600, 2147483648
      %v668 = vxor.u32 %v602, 2147483648
      %v669 = vxor.u32 %v605, 2147483648
      %v670 = vxor.u32 %v607, 2147483648
      %v671 = vxor.u32 %v610, 2147483648
      %v672 = vxor.u32 %v612, 2147483648
      %v673 = vxor.u32 %v615, 2147483648
      %v674 = vxor.u32 %v617, 2147483648
      %v675 = vxor.u32 %v620, 2147483648
      %v676 = vxor.u32 %v622, 2147483648
      %v677 = vxor.u32 %v625, 2147483648
      %v678 = vxor.u32 %v627, 2147483648
      %v679 = vxor.u32 %v630, 2147483648
      %v680 = vxor.u32 %v632, 2147483648
      %v681 = vxor.u32 %v635, 2147483648
      %v682 = vxor.u32 %v637, 2147483648
      %v683 = vxor.u32 %v640, 2147483648
      %v684 = vxor.u32 %v642, 2147483648
      %v685 = vxor.u32 %v645, 2147483648
      %v686 = vxor.u32 %v647, 2147483648
      %v687 = vxor.u32 %v650, 2147483648
      %v688 = vxor.u32 %v652, 2147483648
      %v689 = vxor.u32 %v655, 2147483648
      %v690 = vxor.u32 %v657, 2147483648
      %v691 = vmul.f32 %v659, 1.442695
      %v692 = vpow.pop %v691
      %v693 = vmul.f32 %v660, 1.442695
      %v694 = vpow.pop %v693
      %v695 = vmul.f32 %v661, 1.442695
      %v696 = vpow.pop %v695
      %v697 = vmul.f32 %v662, 1.442695
      %v698 = vpow.pop %v697
      %v699 = vmul.f32 %v663, 1.442695
      %v700 = vpow.pop %v699
      %v701 = vmul.f32 %v664, 1.442695
      %v702 = vpow.pop %v701
      %v703 = vmul.f32 %v665, 1.442695
      %v704 = vpow.pop %v703
      %v705 = vmul.f32 %v666, 1.442695
      %v706 = vpow.pop %v705
      %v707 = vmul.f32 %v667, 1.442695
      %v708 = vpow.pop %v707
      %v709 = vmul.f32 %v668, 1.442695
      %v710 = vpow.pop %v709
      %v711 = vmul.f32 %v669, 1.442695
      %v712 = vpow.pop %v711
      %v713 = vmul.f32 %v670, 1.442695
      %v714 = vpow.pop %v713
      %v715 = vmul.f32 %v671, 1.442695
      %v716 = vpow.pop %v715
      %v717 = vmul.f32 %v672, 1.442695
      %v718 = vpow.pop %v717
      %v719 = vmul.f32 %v673, 1.442695
      %v720 = vpow.pop %v719
      %v721 = vmul.f32 %v674, 1.442695
      %v722 = vpow.pop %v721
      %v723 = vmul.f32 %v675, 1.442695
      %v724 = vpow.pop %v723
      %v725 = vmul.f32 %v676, 1.442695
      %v726 = vpow.pop %v725
      %v727 = vmul.f32 %v677, 1.442695
      %v728 = vpow.pop %v727
      %v729 = vmul.f32 %v678, 1.442695
      %v730 = vpow.pop %v729
      %v731 = vmul.f32 %v679, 1.442695
      %v732 = vpow.pop %v731
      %v733 = vmul.f32 %v680, 1.442695
      %v734 = vpow.pop %v733
      %v735 = vmul.f32 %v681, 1.442695
      %v736 = vpow.pop %v735
      %v737 = vmul.f32 %v682, 1.442695
      %v738 = vpow.pop %v737
      %v739 = vmul.f32 %v683, 1.442695
      %v740 = vpow.pop %v739
      %v741 = vmul.f32 %v684, 1.442695
      %v742 = vpow.pop %v741
      %v743 = vmul.f32 %v685, 1.442695
      %v744 = vpow.pop %v743
      %v745 = vmul.f32 %v686, 1.442695
      %v746 = vpow.pop %v745
      %v747 = vmul.f32 %v687, 1.442695
      %v748 = vpow.pop %v747
      %v749 = vmul.f32 %v688, 1.442695
      %v750 = vpow.pop %v749
      %v751 = vmul.f32 %v689, 1.442695
      %v752 = vpow.pop %v751
      %v753 = vmul.f32 %v690, 1.442695
      %v754 = vpow.pop %v753
      %v755 = vadd.f32 %v692, 1.0
      %v756 = vadd.f32 %v694, 1.0
      %v757 = vadd.f32 %v696, 1.0
      %v758 = vadd.f32 %v698, 1.0
      %v759 = vadd.f32 %v700, 1.0
      %v760 = vadd.f32 %v702, 1.0
      %v761 = vadd.f32 %v704, 1.0
      %v762 = vadd.f32 %v706, 1.0
      %v763 = vadd.f32 %v708, 1.0
      %v764 = vadd.f32 %v710, 1.0
      %v765 = vadd.f32 %v712, 1.0
      %v766 = vadd.f32 %v714, 1.0
      %v767 = vadd.f32 %v716, 1.0
      %v768 = vadd.f32 %v718, 1.0
      %v769 = vadd.f32 %v720, 1.0
      %v770 = vadd.f32 %v722, 1.0
      %v771 = vadd.f32 %v724, 1.0
      %v772 = vadd.f32 %v726, 1.0
      %v773 = vadd.f32 %v728, 1.0
      %v774 = vadd.f32 %v730, 1.0
      %v775 = vadd.f32 %v732, 1.0
      %v776 = vadd.f32 %v734, 1.0
      %v777 = vadd.f32 %v736, 1.0
      %v778 = vadd.f32 %v738, 1.0
      %v779 = vadd.f32 %v740, 1.0
      %v780 = vadd.f32 %v742, 1.0
      %v781 = vadd.f32 %v744, 1.0
      %v782 = vadd.f32 %v746, 1.0
      %v783 = vadd.f32 %v748, 1.0
      %v784 = vadd.f32 %v750, 1.0
      %v785 = vadd.f32 %v752, 1.0
      %v786 = vadd.f32 %v754, 1.0
      %v787 = vrcp.pop %v755
      %v788 = vmul.f32 %v755, %v787
      %v789 = vsub.f32 1.0, %v788
      %v790 = vmul.f32 %v787, %v789
      %v791 = vadd.f32 %v787, %v790
      %vm792 = vweird.f32 %v755
      %vm793 = vweird.f32 %v787
      %vm794 = vmor %vm792, %vm793
      %v795 = vsel %vm794, %v787, %v791
      %v796 = vand.u32 2147483647, %v755
      %vm797 = vcmp.eq.f32.partialorder %v796, 8.507059e+37
      %v798 = vand.u32 %v755, 2147483648
      %v799 = vor.u32 1.1754944e-38, %v798
      %v800 = vsel %vm797, %v799, %v795
      %v801 = vmul.f32 1.0, %v800
      %v802 = vrcp.pop %v756
      %v803 = vmul.f32 %v756, %v802
      %v804 = vsub.f32 1.0, %v803
      %v805 = vmul.f32 %v802, %v804
      %v806 = vadd.f32 %v802, %v805
      %vm807 = vweird.f32 %v756
      %vm808 = vweird.f32 %v802
      %vm809 = vmor %vm807, %vm808
      %v810 = vsel %vm809, %v802, %v806
      %v811 = vand.u32 2147483647, %v756
      %vm812 = vcmp.eq.f32.partialorder %v811, 8.507059e+37
      %v813 = vand.u32 %v756, 2147483648
      %v814 = vor.u32 1.1754944e-38, %v813
      %v815 = vsel %vm812, %v814, %v810
      %v816 = vmul.f32 1.0, %v815
      %v817 = vrcp.pop %v757
      %v818 = vmul.f32 %v757, %v817
      %v819 = vsub.f32 1.0, %v818
      %v820 = vmul.f32 %v817, %v819
      %v821 = vadd.f32 %v817, %v820
      %vm822 = vweird.f32 %v757
      %vm823 = vweird.f32 %v817
      %vm824 = vmor %vm822, %vm823
      %v825 = vsel %vm824, %v817, %v821
      %v826 = vand.u32 2147483647, %v757
      %vm827 = vcmp.eq.f32.partialorder %v826, 8.507059e+37
      %v828 = vand.u32 %v757, 2147483648
      %v829 = vor.u32 1.1754944e-38, %v828
      %v830 = vsel %vm827, %v829, %v825
      %v831 = vmul.f32 1.0, %v830
      %v832 = vrcp.pop %v758
      %v833 = vmul.f32 %v758, %v832
      %v834 = vsub.f32 1.0, %v833
      %v835 = vmul.f32 %v832, %v834
      %v836 = vadd.f32 %v832, %v835
      %vm837 = vweird.f32 %v758
      %vm838 = vweird.f32 %v832
      %vm839 = vmor %vm837, %vm838
      %v840 = vsel %vm839, %v832, %v836
      %v841 = vand.u32 2147483647, %v758
      %vm842 = vcmp.eq.f32.partialorder %v841, 8.507059e+37
      %v843 = vand.u32 %v758, 2147483648
      %v844 = vor.u32 1.1754944e-38, %v843
      %v845 = vsel %vm842, %v844, %v840
      %v846 = vmul.f32 1.0, %v845
      %v847 = vrcp.pop %v759
      %v848 = vmul.f32 %v759, %v847
      %v849 = vsub.f32 1.0, %v848
      %v850 = vmul.f32 %v847, %v849
      %v851 = vadd.f32 %v847, %v850
      %vm852 = vweird.f32 %v759
      %vm853 = vweird.f32 %v847
      %vm854 = vmor %vm852, %vm853
      %v855 = vsel %vm854, %v847, %v851
      %v856 = vand.u32 2147483647, %v759
      %vm857 = vcmp.eq.f32.partialorder %v856, 8.507059e+37
      %v858 = vand.u32 %v759, 2147483648
      %v859 = vor.u32 1.1754944e-38, %v858
      %v860 = vsel %vm857, %v859, %v855
      %v861 = vmul.f32 1.0, %v860
      %v862 = vrcp.pop %v760
      %v863 = vmul.f32 %v760, %v862
      %v864 = vsub.f32 1.0, %v863
      %v865 = vmul.f32 %v862, %v864
      %v866 = vadd.f32 %v862, %v865
      %vm867 = vweird.f32 %v760
      %vm868 = vweird.f32 %v862
      %vm869 = vmor %vm867, %vm868
      %v870 = vsel %vm869, %v862, %v866
      %v871 = vand.u32 2147483647, %v760
      %vm872 = vcmp.eq.f32.partialorder %v871, 8.507059e+37
      %v873 = vand.u32 %v760, 2147483648
      %v874 = vor.u32 1.1754944e-38, %v873
      %v875 = vsel %vm872, %v874, %v870
      %v876 = vmul.f32 1.0, %v875
      %v877 = vrcp.pop %v761
      %v878 = vmul.f32 %v761, %v877
      %v879 = vsub.f32 1.0, %v878
      %v880 = vmul.f32 %v877, %v879
      %v881 = vadd.f32 %v877, %v880
      %vm882 = vweird.f32 %v761
      %vm883 = vweird.f32 %v877
      %vm884 = vmor %vm882, %vm883
      %v885 = vsel %vm884, %v877, %v881
      %v886 = vand.u32 2147483647, %v761
      %vm887 = vcmp.eq.f32.partialorder %v886, 8.507059e+37
      %v888 = vand.u32 %v761, 2147483648
      %v889 = vor.u32 1.1754944e-38, %v888
      %v890 = vsel %vm887, %v889, %v885
      %v891 = vmul.f32 1.0, %v890
      %v892 = vrcp.pop %v762
      %v893 = vmul.f32 %v762, %v892
      %v894 = vsub.f32 1.0, %v893
      %v895 = vmul.f32 %v892, %v894
      %v896 = vadd.f32 %v892, %v895
      %vm897 = vweird.f32 %v762
      %vm898 = vweird.f32 %v892
      %vm899 = vmor %vm897, %vm898
      %v900 = vsel %vm899, %v892, %v896
      %v901 = vand.u32 2147483647, %v762
      %vm902 = vcmp.eq.f32.partialorder %v901, 8.507059e+37
      %v903 = vand.u32 %v762, 2147483648
      %v904 = vor.u32 1.1754944e-38, %v903
      %v905 = vsel %vm902, %v904, %v900
      %v906 = vmul.f32 1.0, %v905
      %v907 = vrcp.pop %v763
      %v908 = vmul.f32 %v763, %v907
      %v909 = vsub.f32 1.0, %v908
      %v910 = vmul.f32 %v907, %v909
      %v911 = vadd.f32 %v907, %v910
      %vm912 = vweird.f32 %v763
      %vm913 = vweird.f32 %v907
      %vm914 = vmor %vm912, %vm913
      %v915 = vsel %vm914, %v907, %v911
      %v916 = vand.u32 2147483647, %v763
      %vm917 = vcmp.eq.f32.partialorder %v916, 8.507059e+37
      %v918 = vand.u32 %v763, 2147483648
      %v919 = vor.u32 1.1754944e-38, %v918
      %v920 = vsel %vm917, %v919, %v915
      %v921 = vmul.f32 1.0, %v920
      %v922 = vrcp.pop %v764
      %v923 = vmul.f32 %v764, %v922
      %v924 = vsub.f32 1.0, %v923
      %v925 = vmul.f32 %v922, %v924
      %v926 = vadd.f32 %v922, %v925
      %vm927 = vweird.f32 %v764
      %vm928 = vweird.f32 %v922
      %vm929 = vmor %vm927, %vm928
      %v930 = vsel %vm929, %v922, %v926
      %v931 = vand.u32 2147483647, %v764
      %vm932 = vcmp.eq.f32.partialorder %v931, 8.507059e+37
      %v933 = vand.u32 %v764, 2147483648
      %v934 = vor.u32 1.1754944e-38, %v933
      %v935 = vsel %vm932, %v934, %v930
      %v936 = vmul.f32 1.0, %v935
      %v937 = vrcp.pop %v765
      %v938 = vmul.f32 %v765, %v937
      %v939 = vsub.f32 1.0, %v938
      %v940 = vmul.f32 %v937, %v939
      %v941 = vadd.f32 %v937, %v940
      %vm942 = vweird.f32 %v765
      %vm943 = vweird.f32 %v937
      %vm944 = vmor %vm942, %vm943
      %v945 = vsel %vm944, %v937, %v941
      %v946 = vand.u32 2147483647, %v765
      %vm947 = vcmp.eq.f32.partialorder %v946, 8.507059e+37
      %v948 = vand.u32 %v765, 2147483648
      %v949 = vor.u32 1.1754944e-38, %v948
      %v950 = vsel %vm947, %v949, %v945
      %v951 = vmul.f32 1.0, %v950
      %v952 = vrcp.pop %v766
      %v953 = vmul.f32 %v766, %v952
      %v954 = vsub.f32 1.0, %v953
      %v955 = vmul.f32 %v952, %v954
      %v956 = vadd.f32 %v952, %v955
      %vm957 = vweird.f32 %v766
      %vm958 = vweird.f32 %v952
      %vm959 = vmor %vm957, %vm958
      %v960 = vsel %vm959, %v952, %v956
      %v961 = vand.u32 2147483647, %v766
      %vm962 = vcmp.eq.f32.partialorder %v961, 8.507059e+37
      %v963 = vand.u32 %v766, 2147483648
      %v964 = vor.u32 1.1754944e-38, %v963
      %v965 = vsel %vm962, %v964, %v960
      %v966 = vmul.f32 1.0, %v965
      %v967 = vrcp.pop %v767
      %v968 = vmul.f32 %v767, %v967
      %v969 = vsub.f32 1.0, %v968
      %v970 = vmul.f32 %v967, %v969
      %v971 = vadd.f32 %v967, %v970
      %vm972 = vweird.f32 %v767
      %vm973 = vweird.f32 %v967
      %vm974 = vmor %vm972, %vm973
      %v975 = vsel %vm974, %v967, %v971
      %v976 = vand.u32 2147483647, %v767
      %vm977 = vcmp.eq.f32.partialorder %v976, 8.507059e+37
      %v978 = vand.u32 %v767, 2147483648
      %v979 = vor.u32 1.1754944e-38, %v978
      %v980 = vsel %vm977, %v979, %v975
      %v981 = vmul.f32 1.0, %v980
      %v982 = vrcp.pop %v768
      %v983 = vmul.f32 %v768, %v982
      %v984 = vsub.f32 1.0, %v983
      %v985 = vmul.f32 %v982, %v984
      %v986 = vadd.f32 %v982, %v985
      %vm987 = vweird.f32 %v768
      %vm988 = vweird.f32 %v982
      %vm989 = vmor %vm987, %vm988
      %v990 = vsel %vm989, %v982, %v986
      %v991 = vand.u32 2147483647, %v768
      %vm992 = vcmp.eq.f32.partialorder %v991, 8.507059e+37
      %v993 = vand.u32 %v768, 2147483648
      %v994 = vor.u32 1.1754944e-38, %v993
      %v995 = vsel %vm992, %v994, %v990
      %v996 = vmul.f32 1.0, %v995
      %v997 = vrcp.pop %v769
      %v998 = vmul.f32 %v769, %v997
      %v999 = vsub.f32 1.0, %v998
      %v1000 = vmul.f32 %v997, %v999
      %v1001 = vadd.f32 %v997, %v1000
      %vm1002 = vweird.f32 %v769
      %vm1003 = vweird.f32 %v997
      %vm1004 = vmor %vm1002, %vm1003
      %v1005 = vsel %vm1004, %v997, %v1001
      %v1006 = vand.u32 2147483647, %v769
      %vm1007 = vcmp.eq.f32.partialorder %v1006, 8.507059e+37
      %v1008 = vand.u32 %v769, 2147483648
      %v1009 = vor.u32 1.1754944e-38, %v1008
      %v1010 = vsel %vm1007, %v1009, %v1005
      %v1011 = vmul.f32 1.0, %v1010
      %v1012 = vrcp.pop %v770
      %v1013 = vmul.f32 %v770, %v1012
      %v1014 = vsub.f32 1.0, %v1013
      %v1015 = vmul.f32 %v1012, %v1014
      %v1016 = vadd.f32 %v1012, %v1015
      %vm1017 = vweird.f32 %v770
      %vm1018 = vweird.f32 %v1012
      %vm1019 = vmor %vm1017, %vm1018
      %v1020 = vsel %vm1019, %v1012, %v1016
      %v1021 = vand.u32 2147483647, %v770
      %vm1022 = vcmp.eq.f32.partialorder %v1021, 8.507059e+37
      %v1023 = vand.u32 %v770, 2147483648
      %v1024 = vor.u32 1.1754944e-38, %v1023
      %v1025 = vsel %vm1022, %v1024, %v1020
      %v1026 = vmul.f32 1.0, %v1025
      %v1027 = vrcp.pop %v771
      %v1028 = vmul.f32 %v771, %v1027
      %v1029 = vsub.f32 1.0, %v1028
      %v1030 = vmul.f32 %v1027, %v1029
      %v1031 = vadd.f32 %v1027, %v1030
      %vm1032 = vweird.f32 %v771
      %vm1033 = vweird.f32 %v1027
      %vm1034 = vmor %vm1032, %vm1033
      %v1035 = vsel %vm1034, %v1027, %v1031
      %v1036 = vand.u32 2147483647, %v771
      %vm1037 = vcmp.eq.f32.partialorder %v1036, 8.507059e+37
      %v1038 = vand.u32 %v771, 2147483648
      %v1039 = vor.u32 1.1754944e-38, %v1038
      %v1040 = vsel %vm1037, %v1039, %v1035
      %v1041 = vmul.f32 1.0, %v1040
      %v1042 = vrcp.pop %v772
      %v1043 = vmul.f32 %v772, %v1042
      %v1044 = vsub.f32 1.0, %v1043
      %v1045 = vmul.f32 %v1042, %v1044
      %v1046 = vadd.f32 %v1042, %v1045
      %vm1047 = vweird.f32 %v772
      %vm1048 = vweird.f32 %v1042
      %vm1049 = vmor %vm1047, %vm1048
      %v1050 = vsel %vm1049, %v1042, %v1046
      %v1051 = vand.u32 2147483647, %v772
      %vm1052 = vcmp.eq.f32.partialorder %v1051, 8.507059e+37
      %v1053 = vand.u32 %v772, 2147483648
      %v1054 = vor.u32 1.1754944e-38, %v1053
      %v1055 = vsel %vm1052, %v1054, %v1050
      %v1056 = vmul.f32 1.0, %v1055
      %v1057 = vrcp.pop %v773
      %v1058 = vmul.f32 %v773, %v1057
      %v1059 = vsub.f32 1.0, %v1058
      %v1060 = vmul.f32 %v1057, %v1059
      %v1061 = vadd.f32 %v1057, %v1060
      %vm1062 = vweird.f32 %v773
      %vm1063 = vweird.f32 %v1057
      %vm1064 = vmor %vm1062, %vm1063
      %v1065 = vsel %vm1064, %v1057, %v1061
      %v1066 = vand.u32 2147483647, %v773
      %vm1067 = vcmp.eq.f32.partialorder %v1066, 8.507059e+37
      %v1068 = vand.u32 %v773, 2147483648
      %v1069 = vor.u32 1.1754944e-38, %v1068
      %v1070 = vsel %vm1067, %v1069, %v1065
      %v1071 = vmul.f32 1.0, %v1070
      %v1072 = vrcp.pop %v774
      %v1073 = vmul.f32 %v774, %v1072
      %v1074 = vsub.f32 1.0, %v1073
      %v1075 = vmul.f32 %v1072, %v1074
      %v1076 = vadd.f32 %v1072, %v1075
      %vm1077 = vweird.f32 %v774
      %vm1078 = vweird.f32 %v1072
      %vm1079 = vmor %vm1077, %vm1078
      %v1080 = vsel %vm1079, %v1072, %v1076
      %v1081 = vand.u32 2147483647, %v774
      %vm1082 = vcmp.eq.f32.partialorder %v1081, 8.507059e+37
      %v1083 = vand.u32 %v774, 2147483648
      %v1084 = vor.u32 1.1754944e-38, %v1083
      %v1085 = vsel %vm1082, %v1084, %v1080
      %v1086 = vmul.f32 1.0, %v1085
      %v1087 = vrcp.pop %v775
      %v1088 = vmul.f32 %v775, %v1087
      %v1089 = vsub.f32 1.0, %v1088
      %v1090 = vmul.f32 %v1087, %v1089
      %v1091 = vadd.f32 %v1087, %v1090
      %vm1092 = vweird.f32 %v775
      %vm1093 = vweird.f32 %v1087
      %vm1094 = vmor %vm1092, %vm1093
      %v1095 = vsel %vm1094, %v1087, %v1091
      %v1096 = vand.u32 2147483647, %v775
      %vm1097 = vcmp.eq.f32.partialorder %v1096, 8.507059e+37
      %v1098 = vand.u32 %v775, 2147483648
      %v1099 = vor.u32 1.1754944e-38, %v1098
      %v1100 = vsel %vm1097, %v1099, %v1095
      %v1101 = vmul.f32 1.0, %v1100
      %v1102 = vrcp.pop %v776
      %v1103 = vmul.f32 %v776, %v1102
      %v1104 = vsub.f32 1.0, %v1103
      %v1105 = vmul.f32 %v1102, %v1104
      %v1106 = vadd.f32 %v1102, %v1105
      %vm1107 = vweird.f32 %v776
      %vm1108 = vweird.f32 %v1102
      %vm1109 = vmor %vm1107, %vm1108
      %v1110 = vsel %vm1109, %v1102, %v1106
      %v1111 = vand.u32 2147483647, %v776
      %vm1112 = vcmp.eq.f32.partialorder %v1111, 8.507059e+37
      %v1113 = vand.u32 %v776, 2147483648
      %v1114 = vor.u32 1.1754944e-38, %v1113
      %v1115 = vsel %vm1112, %v1114, %v1110
      %v1116 = vmul.f32 1.0, %v1115
      %v1117 = vrcp.pop %v777
      %v1118 = vmul.f32 %v777, %v1117
      %v1119 = vsub.f32 1.0, %v1118
      %v1120 = vmul.f32 %v1117, %v1119
      %v1121 = vadd.f32 %v1117, %v1120
      %vm1122 = vweird.f32 %v777
      %vm1123 = vweird.f32 %v1117
      %vm1124 = vmor %vm1122, %vm1123
      %v1125 = vsel %vm1124, %v1117, %v1121
      %v1126 = vand.u32 2147483647, %v777
      %vm1127 = vcmp.eq.f32.partialorder %v1126, 8.507059e+37
      %v1128 = vand.u32 %v777, 2147483648
      %v1129 = vor.u32 1.1754944e-38, %v1128
      %v1130 = vsel %vm1127, %v1129, %v1125
      %v1131 = vmul.f32 1.0, %v1130
      %v1132 = vrcp.pop %v778
      %v1133 = vmul.f32 %v778, %v1132
      %v1134 = vsub.f32 1.0, %v1133
      %v1135 = vmul.f32 %v1132, %v1134
      %v1136 = vadd.f32 %v1132, %v1135
      %vm1137 = vweird.f32 %v778
      %vm1138 = vweird.f32 %v1132
      %vm1139 = vmor %vm1137, %vm1138
      %v1140 = vsel %vm1139, %v1132, %v1136
      %v1141 = vand.u32 2147483647, %v778
      %vm1142 = vcmp.eq.f32.partialorder %v1141, 8.507059e+37
      %v1143 = vand.u32 %v778, 2147483648
      %v1144 = vor.u32 1.1754944e-38, %v1143
      %v1145 = vsel %vm1142, %v1144, %v1140
      %v1146 = vmul.f32 1.0, %v1145
      %v1147 = vrcp.pop %v779
      %v1148 = vmul.f32 %v779, %v1147
      %v1149 = vsub.f32 1.0, %v1148
      %v1150 = vmul.f32 %v1147, %v1149
      %v1151 = vadd.f32 %v1147, %v1150
      %vm1152 = vweird.f32 %v779
      %vm1153 = vweird.f32 %v1147
      %vm1154 = vmor %vm1152, %vm1153
      %v1155 = vsel %vm1154, %v1147, %v1151
      %v1156 = vand.u32 2147483647, %v779
      %vm1157 = vcmp.eq.f32.partialorder %v1156, 8.507059e+37
      %v1158 = vand.u32 %v779, 2147483648
      %v1159 = vor.u32 1.1754944e-38, %v1158
      %v1160 = vsel %vm1157, %v1159, %v1155
      %v1161 = vmul.f32 1.0, %v1160
      %v1162 = vrcp.pop %v780
      %v1163 = vmul.f32 %v780, %v1162
      %v1164 = vsub.f32 1.0, %v1163
      %v1165 = vmul.f32 %v1162, %v1164
      %v1166 = vadd.f32 %v1162, %v1165
      %vm1167 = vweird.f32 %v780
      %vm1168 = vweird.f32 %v1162
      %vm1169 = vmor %vm1167, %vm1168
      %v1170 = vsel %vm1169, %v1162, %v1166
      %v1171 = vand.u32 2147483647, %v780
      %vm1172 = vcmp.eq.f32.partialorder %v1171, 8.507059e+37
      %v1173 = vand.u32 %v780, 2147483648
      %v1174 = vor.u32 1.1754944e-38, %v1173
      %v1175 = vsel %vm1172, %v1174, %v1170
      %v1176 = vmul.f32 1.0, %v1175
      %v1177 = vrcp.pop %v781
      %v1178 = vmul.f32 %v781, %v1177
      %v1179 = vsub.f32 1.0, %v1178
      %v1180 = vmul.f32 %v1177, %v1179
      %v1181 = vadd.f32 %v1177, %v1180
      %vm1182 = vweird.f32 %v781
      %vm1183 = vweird.f32 %v1177
      %vm1184 = vmor %vm1182, %vm1183
      %v1185 = vsel %vm1184, %v1177, %v1181
      %v1186 = vand.u32 2147483647, %v781
      %vm1187 = vcmp.eq.f32.partialorder %v1186, 8.507059e+37
      %v1188 = vand.u32 %v781, 2147483648
      %v1189 = vor.u32 1.1754944e-38, %v1188
      %v1190 = vsel %vm1187, %v1189, %v1185
      %v1191 = vmul.f32 1.0, %v1190
      %v1192 = vrcp.pop %v782
      %v1193 = vmul.f32 %v782, %v1192
      %v1194 = vsub.f32 1.0, %v1193
      %v1195 = vmul.f32 %v1192, %v1194
      %v1196 = vadd.f32 %v1192, %v1195
      %vm1197 = vweird.f32 %v782
      %vm1198 = vweird.f32 %v1192
      %vm1199 = vmor %vm1197, %vm1198
      %v1200 = vsel %vm1199, %v1192, %v1196
      %v1201 = vand.u32 2147483647, %v782
      %vm1202 = vcmp.eq.f32.partialorder %v1201, 8.507059e+37
      %v1203 = vand.u32 %v782, 2147483648
      %v1204 = vor.u32 1.1754944e-38, %v1203
      %v1205 = vsel %vm1202, %v1204, %v1200
      %v1206 = vmul.f32 1.0, %v1205
      %v1207 = vrcp.pop %v783
      %v1208 = vmul.f32 %v783, %v1207
      %v1209 = vsub.f32 1.0, %v1208
      %v1210 = vmul.f32 %v1207, %v1209
      %v1211 = vadd.f32 %v1207, %v1210
      %vm1212 = vweird.f32 %v783
      %vm1213 = vweird.f32 %v1207
      %vm1214 = vmor %vm1212, %vm1213
      %v1215 = vsel %vm1214, %v1207, %v1211
      %v1216 = vand.u32 2147483647, %v783
      %vm1217 = vcmp.eq.f32.partialorder %v1216, 8.507059e+37
      %v1218 = vand.u32 %v783, 2147483648
      %v1219 = vor.u32 1.1754944e-38, %v1218
      %v1220 = vsel %vm1217, %v1219, %v1215
      %v1221 = vmul.f32 1.0, %v1220
      %v1222 = vrcp.pop %v784
      %v1223 = vmul.f32 %v784, %v1222
      %v1224 = vsub.f32 1.0, %v1223
      %v1225 = vmul.f32 %v1222, %v1224
      %v1226 = vadd.f32 %v1222, %v1225
      %vm1227 = vweird.f32 %v784
      %vm1228 = vweird.f32 %v1222
      %vm1229 = vmor %vm1227, %vm1228
      %v1230 = vsel %vm1229, %v1222, %v1226
      %v1231 = vand.u32 2147483647, %v784
      %vm1232 = vcmp.eq.f32.partialorder %v1231, 8.507059e+37
      %v1233 = vand.u32 %v784, 2147483648
      %v1234 = vor.u32 1.1754944e-38, %v1233
      %v1235 = vsel %vm1232, %v1234, %v1230
      %v1236 = vmul.f32 1.0, %v1235
      %v1237 = vrcp.pop %v785
      %v1238 = vmul.f32 %v785, %v1237
      %v1239 = vsub.f32 1.0, %v1238
      %v1240 = vmul.f32 %v1237, %v1239
      %v1241 = vadd.f32 %v1237, %v1240
      %vm1242 = vweird.f32 %v785
      %vm1243 = vweird.f32 %v1237
      %vm1244 = vmor %vm1242, %vm1243
      %v1245 = vsel %vm1244, %v1237, %v1241
      %v1246 = vand.u32 2147483647, %v785
      %vm1247 = vcmp.eq.f32.partialorder %v1246, 8.507059e+37
      %v1248 = vand.u32 %v785, 2147483648
      %v1249 = vor.u32 1.1754944e-38, %v1248
      %v1250 = vsel %vm1247, %v1249, %v1245
      %v1251 = vmul.f32 1.0, %v1250
      %v1252 = vrcp.pop %v786
      %v1253 = vmul.f32 %v786, %v1252
      %v1254 = vsub.f32 1.0, %v1253
      %v1255 = vmul.f32 %v1252, %v1254
      %v1256 = vadd.f32 %v1252, %v1255
      %vm1257 = vweird.f32 %v786
      %vm1258 = vweird.f32 %v1252
      %vm1259 = vmor %vm1257, %vm1258
      %v1260 = vsel %vm1259, %v1252, %v1256
      %v1261 = vand.u32 2147483647, %v786
      %vm1262 = vcmp.eq.f32.partialorder %v1261, 8.507059e+37
      %v1263 = vand.u32 %v786, 2147483648
      %v1264 = vor.u32 1.1754944e-38, %v1263
      %v1265 = vsel %vm1262, %v1264, %v1260
      %v1266 = vmul.f32 1.0, %v1265
      %vm1267 = vcmask 7168
      %1268 = vst.msk [vmem:[%s177] sm:$0xff] %vm1267, %v801
      %1269 = vst.msk [vmem:[%s177 + $0x8] sm:$0xff] %vm1267, %v816
      %1270 = vst.msk [vmem:[%s177 + $0x10] sm:$0xff] %vm1267, %v831
      %1271 = vst.msk [vmem:[%s177 + $0x18] sm:$0xff] %vm1267, %v846
      %1272 = vst.msk [vmem:[%s177 + $0x20] sm:$0xff] %vm1267, %v861
      %1273 = vst.msk [vmem:[%s177 + $0x28] sm:$0xff] %vm1267, %v876
      %1274 = vst.msk [vmem:[%s177 + $0x30] sm:$0xff] %vm1267, %v891
      %1275 = vst.msk [vmem:[%s177 + $0x38] sm:$0xff] %vm1267, %v906
      %1276 = vst.msk [vmem:[%s177 + $0x40] sm:$0xff] %vm1267, %v921
      %1277 = vst.msk [vmem:[%s177 + $0x48] sm:$0xff] %vm1267, %v936
      %1278 = vst.msk [vmem:[%s177 + $0x50] sm:$0xff] %vm1267, %v951
      %1279 = vst.msk [vmem:[%s177 + $0x58] sm:$0xff] %vm1267, %v966
      %1280 = vst.msk [vmem:[%s177 + $0x60] sm:$0xff] %vm1267, %v981
      %1281 = vst.msk [vmem:[%s177 + $0x68] sm:$0xff] %vm1267, %v996
      %1282 = vst.msk [vmem:[%s177 + $0x70] sm:$0xff] %vm1267, %v1011
      %1283 = vst.msk [vmem:[%s177 + $0x78] sm:$0xff] %vm1267, %v1026
      %1284 = vst.msk [vmem:[%s177 + $0x80] sm:$0xff] %vm1267, %v1041
      %1285 = vst.msk [vmem:[%s177 + $0x88] sm:$0xff] %vm1267, %v1056
      %1286 = vst.msk [vmem:[%s177 + $0x90] sm:$0xff] %vm1267, %v1071
      %1287 = vst.msk [vmem:[%s177 + $0x98] sm:$0xff] %vm1267, %v1086
      %1288 = vst.msk [vmem:[%s177 + $0xa0] sm:$0xff] %vm1267, %v1101
      %1289 = vst.msk [vmem:[%s177 + $0xa8] sm:$0xff] %vm1267, %v1116
      %1290 = vst.msk [vmem:[%s177 + $0xb0] sm:$0xff] %vm1267, %v1131
      %1291 = vst.msk [vmem:[%s177 + $0xb8] sm:$0xff] %vm1267, %v1146
      %1292 = vst.msk [vmem:[%s177 + $0xc0] sm:$0xff] %vm1267, %v1161
      %1293 = vst.msk [vmem:[%s177 + $0xc8] sm:$0xff] %vm1267, %v1176
      %1294 = vst.msk [vmem:[%s177 + $0xd0] sm:$0xff] %vm1267, %v1191
      %1295 = vst.msk [vmem:[%s177 + $0xd8] sm:$0xff] %vm1267, %v1206
      %1296 = vst.msk [vmem:[%s177 + $0xe0] sm:$0xff] %vm1267, %v1221
      %1297 = vst.msk [vmem:[%s177 + $0xe8] sm:$0xff] %vm1267, %v1236
      %1298 = vst.msk [vmem:[%s177 + $0xf0] sm:$0xff] %vm1267, %v1251
      %1299 = vst.msk [vmem:[%s177 + $0xf8] sm:$0xff] %vm1267, %v1266
      %s1300 = smul.u32 32, %s16
      %p1301 = scmp.lt.s32.totalorder %s1300, 255
      %s1302 = scalar_select %p1301, %s1300, 255
      %s1303 = smul.addr %s1302, 8
      %s1304 = scalar_lea.vmem %s3, %s1303
      // Predicated region
      $region33: #{_forward_impl.18} parent=31 // pred_check
        %p1305 = pneg %p102
      $region34: #{_forward_impl.18} parent=31 // pred_check_branch
        %1307 = sbr.rel (%p1305) target = $region36
      $region35: #{_forward_impl.18} parent=31 // pred_region
        %s1308 = smul.u32 32, %s16
      $region36: #{_forward_impl.18} parent=31 // pred_fallthru
        _
    $region32: #{_forward_impl.18} parent=5 // pred_fallthru
      _
    %p1309 = scmp.le.s32.totalorder 2, %s11
    // Predicated region
    $region37: #{_forward_impl.18} parent=5 // pred_check
      %p1310 = pneg %p1309
    $region38: #{_forward_impl.18} parent=5 // pred_check_branch
      %1312 = sbr.rel (%p1310) target = $region40
    $region39: #{_forward_impl.18} parent=5 // pred_region
      %s1313 = ssub.s32 %s11, 2
      // Predicated region
      $region41: #{_forward_impl.18} parent=39 // pred_check
        %p1314 = pneg %p108
      $region42: #{_forward_impl.18} parent=39 // pred_check_branch
        %1316 = sbr.rel (%p1314) target = $region44
      $region43: #{_forward_impl.18} parent=39 // pred_region
        %s1317 = smul.u32 32, %s17
        %p1318 = scmp.lt.s32.totalorder %s1317, 255
        %s1319 = scalar_select %p1318, %s1317, 255
        %s1320 = smul.addr %s1319, 8
        %s1321 = scalar_lea.vmem %s3, %s1320
      $region44: #{_forward_impl.18} parent=39 // pred_fallthru
        _
    $region40: #{_forward_impl.18} parent=5 // pred_fallthru
      _
  $region6: #{_forward_impl.18} parent=0 // loop_footer
    %s15 = sadd.s32 1, %s11
  $region7: #{_forward_impl.18} parent=0 // loop_footer_branch
    %10 = sbr.rel target = $region3
  $region8: #{_forward_impl.18} parent=0 // loop_exit
    _

// kernel: _forward_impl.19
$region0: #{_forward_impl.19}
  #allocation0 [shape = 'u32[]', space=smem, size = 0x4, offset = 0x4, fixed_abs, tag = 'smem constant byte address 0x4 - core index']
  #allocation1 [shape = 'u32[72,128]{1,0:T(1,128)}', space=vmem, size = 0x9000, scoped, tag = 'internal scratch']
  %s0 = inlined_call_operand.vmem [shape: bf16[1536,27], index: 0, kind: input, shape index: {}]
  %s1 = inlined_call_operand.vmem [shape: bf16[27,32], index: 1, kind: input, shape index: {}]
  %s2 = inlined_call_operand.vmem [shape: f32[1,32], index: 2, kind: input, shape index: {}]
  %s3 = inlined_call_operand.vmem [shape: f32[1536,32], index: 3, kind: output, shape index: {}]
  %s4 = sld [smem:[#allocation0]]
  $region45: #{_forward_impl.19} parent=0
    _
  %s6 = ssub.s32 1, %s4
  %s7 = scalar_select 0, %s6, %s4
  loop: start=0, step=1, limit=8
  $region2: #{_forward_impl.19} parent=0 // loop_pre_header
    _
  $region3: #{_forward_impl.19} parent=0 // loop_header
    %s9 = sphi 0, %s13
    %p10 = scmp.ge.s32.totalorder %s9, 8
    %s19 = sphi 0, %s21
    %s22 = sphi 0, %s19
    %s23 = sphi 0, %s22
    %s39 = sphi 0, %s23
    %s43 = sphi 0, %s43
    %s45 = sphi 0, %s43
    %s46 = sphi 0, %s45
    %s60 = sphi 0, %s46
    %s64 = sphi 0, %s64
    %s66 = sphi 0, %s64
    %s67 = sphi 0, %s66
    %s81 = sphi 0, %s67
    %s87 = sphi 0, %s89
    %s90 = sphi 0, %s87
    %s91 = sphi 0, %s90
    %s107 = sphi 0, %s91
  $region4: #{_forward_impl.19} parent=0 // loop_header_branch
    %12 = sbr.rel (%p10) target = $region8
  $region5: #{_forward_impl.19} parent=0 // loop_body
    %s14 = ssub.s32 %s9, 1
    %s15 = ssub.s32 %s9, 2
    %s16 = sadd.s32 %s9, 1
    %s17 = ssub.s32 %s9, %s16
    %p18 = scmp.eq.s32.totalorder %s17, 0
    %s20 = sadd.s32 %s19, 1
    %s21 = scalar_select %p18, %s19, %s20
    %p24 = pneg %p18
    %p25 = scmp.eq.s32.totalorder %s9, 5
    %p26 = por %p24, %p25
    %p27 = scmp.ne.s32.totalorder %s19, %s22
    %p28 = scmp.eq.s32.totalorder %s9, 0
    %p29 = por %p27, %p28
    %p30 = scmp.ne.s32.totalorder %s19, %s22
    %p31 = scmp.eq.s32.totalorder %s14, 5
    %p32 = por %p30, %p31
    %p33 = scmp.ne.s32.totalorder %s22, %s23
    %p34 = scmp.eq.s32.totalorder %s14, 0
    %p35 = por %p33, %p34
    %p36 = scmp.ne.s32.totalorder %s22, %s23
    %p37 = scmp.eq.s32.totalorder %s15, 5
    %p38 = por %p36, %p37
    %p40 = scmp.ne.s32.totalorder %s23, %s39
    %p41 = scmp.eq.s32.totalorder %s15, 0
    %p42 = por %p40, %p41
    %s44 = sadd.s32 %s43, 1
    %p47 = scmp.eq.s32.totalorder %s9, 5
    %p48 = scmp.ne.s32.totalorder %s43, %s45
    %p49 = scmp.eq.s32.totalorder %s9, 0
    %p50 = por %p48, %p49
    %p51 = scmp.ne.s32.totalorder %s43, %s45
    %p52 = scmp.eq.s32.totalorder %s14, 5
    %p53 = por %p51, %p52
    %p54 = scmp.ne.s32.totalorder %s45, %s46
    %p55 = scmp.eq.s32.totalorder %s14, 0
    %p56 = por %p54, %p55
    %p57 = scmp.ne.s32.totalorder %s45, %s46
    %p58 = scmp.eq.s32.totalorder %s15, 5
    %p59 = por %p57, %p58
    %p61 = scmp.ne.s32.totalorder %s46, %s60
    %p62 = scmp.eq.s32.totalorder %s15, 0
    %p63 = por %p61, %p62
    %s65 = sadd.s32 %s64, 1
    %p68 = scmp.eq.s32.totalorder %s9, 5
    %p69 = scmp.ne.s32.totalorder %s64, %s66
    %p70 = scmp.eq.s32.totalorder %s9, 0
    %p71 = por %p69, %p70
    %p72 = scmp.ne.s32.totalorder %s64, %s66
    %p73 = scmp.eq.s32.totalorder %s14, 5
    %p74 = por %p72, %p73
    %p75 = scmp.ne.s32.totalorder %s66, %s67
    %p76 = scmp.eq.s32.totalorder %s14, 0
    %p77 = por %p75, %p76
    %p78 = scmp.ne.s32.totalorder %s66, %s67
    %p79 = scmp.eq.s32.totalorder %s15, 5
    %p80 = por %p78, %p79
    %p82 = scmp.ne.s32.totalorder %s67, %s81
    %p83 = scmp.eq.s32.totalorder %s15, 0
    %p84 = por %p82, %p83
    %s85 = ssub.s32 %s9, %s16
    %p86 = scmp.eq.s32.totalorder %s85, 0
    %s88 = sadd.s32 %s87, 1
    %s89 = scalar_select %p86, %s87, %s88
    %p92 = pneg %p86
    %p93 = scmp.eq.s32.totalorder %s9, 5
    %p94 = por %p92, %p93
    %p95 = scmp.ne.s32.totalorder %s87, %s90
    %p96 = scmp.eq.s32.totalorder %s9, 0
    %p97 = por %p95, %p96
    %p98 = scmp.ne.s32.totalorder %s87, %s90
    %p99 = scmp.eq.s32.totalorder %s14, 5
    %p100 = por %p98, %p99
    %p101 = scmp.ne.s32.totalorder %s90, %s91
    %p102 = scmp.eq.s32.totalorder %s14, 0
    %p103 = por %p101, %p102
    %p104 = scmp.ne.s32.totalorder %s90, %s91
    %p105 = scmp.eq.s32.totalorder %s15, 5
    %p106 = por %p104, %p105
    %p108 = scmp.ne.s32.totalorder %s91, %s107
    %p109 = scmp.eq.s32.totalorder %s15, 0
    %p110 = por %p108, %p109
    %p111 = scmp.le.s32.totalorder 1, %s9
    %p112 = scmp.lt.s32.totalorder %s9, 7
    %p113 = pnand %p111, %p112
    %p114 = pneg %p113
    // Predicated region
    $region9: #{_forward_impl.19} parent=5 // pred_check
      _
    $region10: #{_forward_impl.19} parent=5 // pred_check_branch
      %116 = sbr.rel (%p113) target = $region12
    $region11: #{_forward_impl.19} parent=5 // pred_region
      %s117 = ssub.s32 %s9, 1
      // Predicated region
      $region13: #{_forward_impl.19} parent=11 // pred_check
        %p118 = pneg %p56
      $region14: #{_forward_impl.19} parent=11 // pred_check_branch
        %120 = sbr.rel (%p118) target = $region16
      $region15: #{_forward_impl.19} parent=11 // pred_region
        _
      $region16: #{_forward_impl.19} parent=11 // pred_fallthru
        _
      // Predicated region
      $region17: #{_forward_impl.19} parent=11 // pred_check
        %p121 = pneg %p77
      $region18: #{_forward_impl.19} parent=11 // pred_check_branch
        %123 = sbr.rel (%p121) target = $region20
      $region19: #{_forward_impl.19} parent=11 // pred_region
        _
      $region20: #{_forward_impl.19} parent=11 // pred_fallthru
        _
    $region12: #{_forward_impl.19} parent=5 // pred_fallthru
      _
    %p124 = scmp.lt.s32.totalorder %s9, 6
    // Predicated region
    $region21: #{_forward_impl.19} parent=5 // pred_check
      %p125 = pneg %p124
    $region22: #{_forward_impl.19} parent=5 // pred_check_branch
      %127 = sbr.rel (%p125) target = $region24
    $region23: #{_forward_impl.19} parent=5 // pred_region
      // Predicated region
      $region25: #{_forward_impl.19} parent=23 // pred_check
        %p128 = pneg %p29
      $region26: #{_forward_impl.19} parent=23 // pred_check_branch
        %130 = sbr.rel (%p128) target = $region28
      $region27: #{_forward_impl.19} parent=23 // pred_region
        %s131 = smul.u32 32, %s9
        %p132 = scmp.lt.s32.totalorder %s131, 191
        %s133 = scalar_select %p132, %s131, 191
        %s134 = smul.addr %s133, 4
        %s135 = scalar_lea.vmem %s0, %s134
        %s136 = smul.u32 32, %s9
      $region28: #{_forward_impl.19} parent=23 // pred_fallthru
        _
    $region24: #{_forward_impl.19} parent=5 // pred_fallthru
      _
    %p137 = scmp.le.s32.totalorder 1, %s9
    %p138 = scmp.lt.s32.totalorder %s9, 7
    %p139 = pnand %p137, %p138
    %p140 = pneg %p139
    // Predicated region
    $region29: #{_forward_impl.19} parent=5 // pred_check
      _
    $region30: #{_forward_impl.19} parent=5 // pred_check_branch
      %142 = sbr.rel (%p139) target = $region32
    $region31: #{_forward_impl.19} parent=5 // pred_region
      %s143 = ssub.s32 %s9, 1
      %s144 = smul.u32 32, %s14
      %p145 = scmp.lt.s32.totalorder %s144, 191
      %s146 = scalar_select %p145, %s144, 191
      %s147 = smul.addr %s146, 4
      %s148 = scalar_lea.vmem %s0, %s147
      %p149 = pneg %p35
      %p150 = pneg %p32
      %p151 = pneg %p56
      %p152 = pneg %p53
      %p153 = pneg %p77
      %p154 = pneg %p74
      %p155 = pneg %p103
      %p156 = pneg %p100
      %s157 = smul.u32 32, %s14
      %p158 = scmp.lt.s32.totalorder %s157, 191
      %s159 = scalar_select %p158, %s157, 191
      %s160 = smul.addr %s159, 8
      %s161 = scalar_lea.vmem %s3, %s160
      %s162 = smul.u32 32, %s14
      %p163 = scmp.lt.s32.totalorder %s162, 191
      %s164 = scalar_select %p163, %s162, 191
      %s165 = smul.addr %s164, 4
      %s166 = scalar_lea.vmem %s0, %s165
      %s167 = smul.u32 32, %s14
      %s168 = smul.u32 32, %s14
      %p169 = scmp.lt.s32.totalorder %s168, 191
      %s170 = scalar_select %p169, %s168, 191
      %s171 = smul.addr %s170, 8
      %s172 = scalar_lea.vmem %s3, %s171
      %s173 = smul.u32 32, %s14
      %v175 = vld [vmem:[%s166] sm:$0xf]
      %v176 = vld [vmem:[%s166 + $0x4] sm:$0xf]
      %v177 = vld [vmem:[%s166 + $0x8] sm:$0xf]
      %v178 = vld [vmem:[%s166 + $0xc] sm:$0xf]
      %v179 = vld [vmem:[%s166 + $0x10] sm:$0xf]
      %v180 = vld [vmem:[%s166 + $0x14] sm:$0xf]
      %v181 = vld [vmem:[%s166 + $0x18] sm:$0xf]
      %v182 = vld [vmem:[%s166 + $0x1c] sm:$0xf]
      %v183 = vld [vmem:[%s166 + $0x20] sm:$0xf]
      %v184 = vld [vmem:[%s166 + $0x24] sm:$0xf]
      %v185 = vld [vmem:[%s166 + $0x28] sm:$0xf]
      %v186 = vld [vmem:[%s166 + $0x2c] sm:$0xf]
      %v187 = vld [vmem:[%s166 + $0x30] sm:$0xf]
      %v188 = vld [vmem:[%s166 + $0x34] sm:$0xf]
      %v189 = vld [vmem:[%s166 + $0x38] sm:$0xf]
      %v190 = vld [vmem:[%s166 + $0x3c] sm:$0xf]
      %v191 = vld [vmem:[%s166 + $0x40] sm:$0xf]
      %v192 = vld [vmem:[%s166 + $0x44] sm:$0xf]
      %v193 = vld [vmem:[%s166 + $0x48] sm:$0xf]
      %v194 = vld [vmem:[%s166 + $0x4c] sm:$0xf]
      %v195 = vld [vmem:[%s166 + $0x50] sm:$0xf]
      %v196 = vld [vmem:[%s166 + $0x54] sm:$0xf]
      %v197 = vld [vmem:[%s166 + $0x58] sm:$0xf]
      %v198 = vld [vmem:[%s166 + $0x5c] sm:$0xf]
      %v199 = vld [vmem:[%s166 + $0x60] sm:$0xf]
      %v200 = vld [vmem:[%s166 + $0x64] sm:$0xf]
      %v201 = vld [vmem:[%s166 + $0x68] sm:$0xf]
      %v202 = vld [vmem:[%s166 + $0x6c] sm:$0xf]
      %v203 = vld [vmem:[%s166 + $0x70] sm:$0xf]
      %v204 = vld [vmem:[%s166 + $0x74] sm:$0xf]
      %v205 = vld [vmem:[%s166 + $0x78] sm:$0xf]
      %v206 = vld [vmem:[%s166 + $0x7c] sm:$0xf]
      %v207 = vld [vmem:[%s1] sm:$0xf]
      %v208 = vld [vmem:[%s1 + $0x4] sm:$0xf]
      %v209 = vld [vmem:[%s1 + $0x8] sm:$0xf]
      %v210 = vld [vmem:[%s1 + $0xc] sm:$0x3]
      %v211 = vld [vmem:[%s2] sm:$0x1]
      %v213 = vperm.slane %v211, 0
      %v247 = vunpack.c.l.b16 %v175
      %v248 = vunpack.c.l.b16 %v176
      %v249 = vunpack.c.l.b16 %v177
      %v250 = vunpack.c.l.b16 %v178
      %v251 = vunpack.c.l.b16 %v179
      %v252 = vunpack.c.l.b16 %v180
      %v253 = vunpack.c.l.b16 %v181
      %v254 = vunpack.c.l.b16 %v182
      %v255 = vunpack.c.l.b16 %v183
      %v256 = vunpack.c.l.b16 %v184
      %v257 = vunpack.c.l.b16 %v185
      %v258 = vunpack.c.l.b16 %v186
      %v259 = vunpack.c.l.b16 %v187
      %v260 = vunpack.c.l.b16 %v188
      %v261 = vunpack.c.l.b16 %v189
      %v262 = vunpack.c.l.b16 %v190
      %v263 = vunpack.c.l.b16 %v191
      %v264 = vunpack.c.l.b16 %v192
      %v265 = vunpack.c.l.b16 %v193
      %v266 = vunpack.c.l.b16 %v194
      %v267 = vunpack.c.l.b16 %v195
      %v268 = vunpack.c.l.b16 %v196
      %v269 = vunpack.c.l.b16 %v197
      %v270 = vunpack.c.l.b16 %v198
      %v271 = vunpack.c.l.b16 %v199
      %v272 = vunpack.c.l.b16 %v200
      %v273 = vunpack.c.l.b16 %v201
      %v274 = vunpack.c.l.b16 %v202
      %v275 = vunpack.c.l.b16 %v203
      %v276 = vunpack.c.l.b16 %v204
      %v277 = vunpack.c.l.b16 %v205
      %v278 = vunpack.c.l.b16 %v206
      %v279 = vpack.c.b16 %v248, %v247
      %v280 = vpack.c.b16 %v250, %v249
      %v281 = vpack.c.b16 %v252, %v251
      %v282 = vpack.c.b16 %v254, %v253
      %v283 = vpack.c.b16 %v256, %v255
      %v284 = vpack.c.b16 %v258, %v257
      %v285 = vpack.c.b16 %v260, %v259
      %v286 = vpack.c.b16 %v262, %v261
      %v287 = vpack.c.b16 %v264, %v263
      %v288 = vpack.c.b16 %v266, %v265
      %v289 = vpack.c.b16 %v268, %v267
      %v290 = vpack.c.b16 %v270, %v269
      %v291 = vpack.c.b16 %v272, %v271
      %v292 = vpack.c.b16 %v274, %v273
      %v293 = vpack.c.b16 %v276, %v275
      %v294 = vpack.c.b16 %v278, %v277
      %v299 = vunpack.c.l.b16 %v207
      %v300 = vunpack.c.l.b16 %v208
      %v301 = vunpack.c.l.b16 %v209
      %v302 = vunpack.c.l.b16 %v210
      %v303 = vpack.c.b16 %v300, %v299
      %v304 = vpack.c.b16 %v302, %v301
      %vm306 = vcmask 220160
      %v308 = vsel %vm306, %v279, 0
      %v311 = vsel %vm306, %v280, 0
      %v314 = vsel %vm306, %v281, 0
      %v317 = vsel %vm306, %v282, 0
      %v320 = vsel %vm306, %v283, 0
      %v323 = vsel %vm306, %v284, 0
      %v326 = vsel %vm306, %v285, 0
      %v329 = vsel %vm306, %v286, 0
      %v332 = vsel %vm306, %v287, 0
      %v335 = vsel %vm306, %v288, 0
      %v338 = vsel %vm306, %v289, 0
      %v341 = vsel %vm306, %v290, 0
      %v344 = vsel %vm306, %v291, 0
      %v347 = vsel %vm306, %v292, 0
      %v350 = vsel %vm306, %v293, 0
      %v353 = vsel %vm306, %v294, 0
      %vm355 = vcmask 1044480
      %vm356 = vcmask 1045504
      %v357 = vsel %vm355, 4294967295, 65535
      %v358 = vsel %vm356, %v357, 0
      %v360 = vand.u32 %v304, %v358
      %362 = vmatpush.bf16.msra.mxu0 0
      %363 = vmatpush.bf16.msra.mxu0 0
      %364 = vmatpush.bf16.msra.mxu0 0
      %365 = vmatpush.bf16.msra.mxu0 0
      %366 = vmatpush.bf16.msra.mxu0 0
      %367 = vmatpush.bf16.msra.mxu0 0
      %368 = vmatpush.bf16.msra.mxu0 %v360
      %369 = vmatpush.bf16.msra.mxu0 %v303
      %370 = vmatmul.bf16.gmra.mxu0 %v308
      %v371 = vpop.f32.mrf.mxu0
      %v372 = vadd.f32 %v213, %v371
      %v373 = vpop.f32.mrf.mxu0
      %v374 = vadd.f32 %v213, %v373
      %375 = vmatmul.bf16.gmra.mxu0 %v311
      %v376 = vpop.f32.mrf.mxu0
      %v377 = vadd.f32 %v213, %v376
      %v378 = vpop.f32.mrf.mxu0
      %v379 = vadd.f32 %v213, %v378
      %380 = vmatmul.bf16.gmra.mxu0 %v314
      %v381 = vpop.f32.mrf.mxu0
      %v382 = vadd.f32 %v213, %v381
      %v383 = vpop.f32.mrf.mxu0
      %v384 = vadd.f32 %v213, %v383
      %385 = vmatmul.bf16.gmra.mxu0 %v317
      %v386 = vpop.f32.mrf.mxu0
      %v387 = vadd.f32 %v213, %v386
      %v388 = vpop.f32.mrf.mxu0
      %v389 = vadd.f32 %v213, %v388
      %390 = vmatmul.bf16.gmra.mxu0 %v320
      %v391 = vpop.f32.mrf.mxu0
      %v392 = vadd.f32 %v213, %v391
      %v393 = vpop.f32.mrf.mxu0
      %v394 = vadd.f32 %v213, %v393
      %395 = vmatmul.bf16.gmra.mxu0 %v323
      %v396 = vpop.f32.mrf.mxu0
      %v397 = vadd.f32 %v213, %v396
      %v398 = vpop.f32.mrf.mxu0
      %v399 = vadd.f32 %v213, %v398
      %400 = vmatmul.bf16.gmra.mxu0 %v326
      %v401 = vpop.f32.mrf.mxu0
      %v402 = vadd.f32 %v213, %v401
      %v403 = vpop.f32.mrf.mxu0
      %v404 = vadd.f32 %v213, %v403
      %405 = vmatmul.bf16.gmra.mxu0 %v329
      %v406 = vpop.f32.mrf.mxu0
      %v407 = vadd.f32 %v213, %v406
      %v408 = vpop.f32.mrf.mxu0
      %v409 = vadd.f32 %v213, %v408
      %410 = vmatmul.bf16.gmra.mxu0 %v332
      %v411 = vpop.f32.mrf.mxu0
      %v412 = vadd.f32 %v213, %v411
      %v413 = vpop.f32.mrf.mxu0
      %v414 = vadd.f32 %v213, %v413
      %415 = vmatmul.bf16.gmra.mxu0 %v335
      %v416 = vpop.f32.mrf.mxu0
      %v417 = vadd.f32 %v213, %v416
      %v418 = vpop.f32.mrf.mxu0
      %v419 = vadd.f32 %v213, %v418
      %420 = vmatmul.bf16.gmra.mxu0 %v338
      %v421 = vpop.f32.mrf.mxu0
      %v422 = vadd.f32 %v213, %v421
      %v423 = vpop.f32.mrf.mxu0
      %v424 = vadd.f32 %v213, %v423
      %425 = vmatmul.bf16.gmra.mxu0 %v341
      %v426 = vpop.f32.mrf.mxu0
      %v427 = vadd.f32 %v213, %v426
      %v428 = vpop.f32.mrf.mxu0
      %v429 = vadd.f32 %v213, %v428
      %430 = vmatmul.bf16.gmra.mxu0 %v344
      %v431 = vpop.f32.mrf.mxu0
      %v432 = vadd.f32 %v213, %v431
      %v433 = vpop.f32.mrf.mxu0
      %v434 = vadd.f32 %v213, %v433
      %435 = vmatmul.bf16.gmra.mxu0 %v347
      %v436 = vpop.f32.mrf.mxu0
      %v437 = vadd.f32 %v213, %v436
      %v438 = vpop.f32.mrf.mxu0
      %v439 = vadd.f32 %v213, %v438
      %440 = vmatmul.bf16.gmra.mxu0 %v350
      %v441 = vpop.f32.mrf.mxu0
      %v442 = vadd.f32 %v213, %v441
      %v443 = vpop.f32.mrf.mxu0
      %v444 = vadd.f32 %v213, %v443
      %445 = vmatmul.bf16.gmra.mxu0 %v353
      %v446 = vpop.f32.mrf.mxu0
      %v447 = vadd.f32 %v213, %v446
      %v448 = vpop.f32.mrf.mxu0
      %v449 = vadd.f32 %v213, %v448
      %450 = vdwg.mxu0
      %v451 = vmax.f32 %v372, 0.0
      %v452 = vmax.f32 %v374, 0.0
      %v453 = vmax.f32 %v377, 0.0
      %v454 = vmax.f32 %v379, 0.0
      %v455 = vmax.f32 %v382, 0.0
      %v456 = vmax.f32 %v384, 0.0
      %v457 = vmax.f32 %v387, 0.0
      %v458 = vmax.f32 %v389, 0.0
      %v459 = vmax.f32 %v392, 0.0
      %v460 = vmax.f32 %v394, 0.0
      %v461 = vmax.f32 %v397, 0.0
      %v462 = vmax.f32 %v399, 0.0
      %v463 = vmax.f32 %v402, 0.0
      %v464 = vmax.f32 %v404, 0.0
      %v465 = vmax.f32 %v407, 0.0
      %v466 = vmax.f32 %v409, 0.0
      %v467 = vmax.f32 %v412, 0.0
      %v468 = vmax.f32 %v414, 0.0
      %v469 = vmax.f32 %v417, 0.0
      %v470 = vmax.f32 %v419, 0.0
      %v471 = vmax.f32 %v422, 0.0
      %v472 = vmax.f32 %v424, 0.0
      %v473 = vmax.f32 %v427, 0.0
      %v474 = vmax.f32 %v429, 0.0
      %v475 = vmax.f32 %v432, 0.0
      %v476 = vmax.f32 %v434, 0.0
      %v477 = vmax.f32 %v437, 0.0
      %v478 = vmax.f32 %v439, 0.0
      %v479 = vmax.f32 %v442, 0.0
      %v480 = vmax.f32 %v444, 0.0
      %v481 = vmax.f32 %v447, 0.0
      %v482 = vmax.f32 %v449, 0.0
      %vm483 = vcmask 261120
      %484 = vst.msk [vmem:[%s172] sm:$0xff] %vm483, %v451
      %485 = vst.msk [vmem:[%s172 + $0x8] sm:$0xff] %vm483, %v452
      %486 = vst.msk [vmem:[%s172 + $0x10] sm:$0xff] %vm483, %v453
      %487 = vst.msk [vmem:[%s172 + $0x18] sm:$0xff] %vm483, %v454
      %488 = vst.msk [vmem:[%s172 + $0x20] sm:$0xff] %vm483, %v455
      %489 = vst.msk [vmem:[%s172 + $0x28] sm:$0xff] %vm483, %v456
      %490 = vst.msk [vmem:[%s172 + $0x30] sm:$0xff] %vm483, %v457
      %491 = vst.msk [vmem:[%s172 + $0x38] sm:$0xff] %vm483, %v458
      %492 = vst.msk [vmem:[%s172 + $0x40] sm:$0xff] %vm483, %v459
      %493 = vst.msk [vmem:[%s172 + $0x48] sm:$0xff] %vm483, %v460
      %494 = vst.msk [vmem:[%s172 + $0x50] sm:$0xff] %vm483, %v461
      %495 = vst.msk [vmem:[%s172 + $0x58] sm:$0xff] %vm483, %v462
      %496 = vst.msk [vmem:[%s172 + $0x60] sm:$0xff] %vm483, %v463
      %497 = vst.msk [vmem:[%s172 + $0x68] sm:$0xff] %vm483, %v464
      %498 = vst.msk [vmem:[%s172 + $0x70] sm:$0xff] %vm483, %v465
      %499 = vst.msk [vmem:[%s172 + $0x78] sm:$0xff] %vm483, %v466
      %500 = vst.msk [vmem:[%s172 + $0x80] sm:$0xff] %vm483, %v467
      %501 = vst.msk [vmem:[%s172 + $0x88] sm:$0xff] %vm483, %v468
      %502 = vst.msk [vmem:[%s172 + $0x90] sm:$0xff] %vm483, %v469
      %503 = vst.msk [vmem:[%s172 + $0x98] sm:$0xff] %vm483, %v470
      %504 = vst.msk [vmem:[%s172 + $0xa0] sm:$0xff] %vm483, %v471
      %505 = vst.msk [vmem:[%s172 + $0xa8] sm:$0xff] %vm483, %v472
      %506 = vst.msk [vmem:[%s172 + $0xb0] sm:$0xff] %vm483, %v473
      %507 = vst.msk [vmem:[%s172 + $0xb8] sm:$0xff] %vm483, %v474
      %508 = vst.msk [vmem:[%s172 + $0xc0] sm:$0xff] %vm483, %v475
      %509 = vst.msk [vmem:[%s172 + $0xc8] sm:$0xff] %vm483, %v476
      %510 = vst.msk [vmem:[%s172 + $0xd0] sm:$0xff] %vm483, %v477
      %511 = vst.msk [vmem:[%s172 + $0xd8] sm:$0xff] %vm483, %v478
      %512 = vst.msk [vmem:[%s172 + $0xe0] sm:$0xff] %vm483, %v479
      %513 = vst.msk [vmem:[%s172 + $0xe8] sm:$0xff] %vm483, %v480
      %514 = vst.msk [vmem:[%s172 + $0xf0] sm:$0xff] %vm483, %v481
      %515 = vst.msk [vmem:[%s172 + $0xf8] sm:$0xff] %vm483, %v482
      %s516 = smul.u32 32, %s14
      %p517 = scmp.lt.s32.totalorder %s516, 191
      %s518 = scalar_select %p517, %s516, 191
      %s519 = smul.addr %s518, 8
      %s520 = scalar_lea.vmem %s3, %s519
      // Predicated region
      $region33: #{_forward_impl.19} parent=31 // pred_check
        %p521 = pneg %p100
      $region34: #{_forward_impl.19} parent=31 // pred_check_branch
        %523 = sbr.rel (%p521) target = $region36
      $region35: #{_forward_impl.19} parent=31 // pred_region
        %s524 = smul.u32 32, %s14
      $region36: #{_forward_impl.19} parent=31 // pred_fallthru
        _
    $region32: #{_forward_impl.19} parent=5 // pred_fallthru
      _
    %p525 = scmp.le.s32.totalorder 2, %s9
    // Predicated region
    $region37: #{_forward_impl.19} parent=5 // pred_check
      %p526 = pneg %p525
    $region38: #{_forward_impl.19} parent=5 // pred_check_branch
      %528 = sbr.rel (%p526) target = $region40
    $region39: #{_forward_impl.19} parent=5 // pred_region
      %s529 = ssub.s32 %s9, 2
      // Predicated region
      $region41: #{_forward_impl.19} parent=39 // pred_check
        %p530 = pneg %p106
      $region42: #{_forward_impl.19} parent=39 // pred_check_branch
        %532 = sbr.rel (%p530) target = $region44
      $region43: #{_forward_impl.19} parent=39 // pred_region
        %s533 = smul.u32 32, %s15
        %p534 = scmp.lt.s32.totalorder %s533, 191
        %s535 = scalar_select %p534, %s533, 191
        %s536 = smul.addr %s535, 8
        %s537 = scalar_lea.vmem %s3, %s536
      $region44: #{_forward_impl.19} parent=39 // pred_fallthru
        _
    $region40: #{_forward_impl.19} parent=5 // pred_fallthru
      _
  $region6: #{_forward_impl.19} parent=0 // loop_footer
    %s13 = sadd.s32 1, %s9
  $region7: #{_forward_impl.19} parent=0 // loop_footer_branch
    %8 = sbr.rel target = $region3
  $region8: #{_forward_impl.19} parent=0 // loop_exit
    _

// kernel: _forward_impl.20
$region0: #{_forward_impl.20}
  #allocation0 [shape = 'u32[]', space=smem, size = 0x4, offset = 0x4, fixed_abs, tag = 'smem constant byte address 0x4 - core index']
  #allocation1 [shape = 'u32[72,128]{1,0:T(1,128)}', space=vmem, size = 0x9000, scoped, tag = 'internal scratch']
  %s0 = inlined_call_operand.vmem [shape: bf16[512,288], index: 0, kind: input, shape index: {}]
  %s1 = inlined_call_operand.vmem [shape: bf16[288,64], index: 1, kind: input, shape index: {}]
  %s2 = inlined_call_operand.vmem [shape: f32[1,64], index: 2, kind: input, shape index: {}]
  %s3 = inlined_call_operand.vmem [shape: f32[512,64], index: 3, kind: output, shape index: {}]
  %s4 = sld [smem:[#allocation0]]
  $region45: #{_forward_impl.20} parent=0
    _
  %s6 = ssub.s32 1, %s4
  %s7 = scalar_select 0, %s6, %s4
  loop: start=0, step=1, limit=4
  $region2: #{_forward_impl.20} parent=0 // loop_pre_header
    _
  $region3: #{_forward_impl.20} parent=0 // loop_header
    %s9 = sphi 0, %s13
    %p10 = scmp.ge.s32.totalorder %s9, 4
    %s19 = sphi 0, %s21
    %s22 = sphi 0, %s19
    %s23 = sphi 0, %s22
    %s39 = sphi 0, %s23
    %s43 = sphi 0, %s43
    %s45 = sphi 0, %s43
    %s46 = sphi 0, %s45
    %s60 = sphi 0, %s46
    %s64 = sphi 0, %s64
    %s66 = sphi 0, %s64
    %s67 = sphi 0, %s66
    %s81 = sphi 0, %s67
    %s87 = sphi 0, %s89
    %s90 = sphi 0, %s87
    %s91 = sphi 0, %s90
    %s107 = sphi 0, %s91
  $region4: #{_forward_impl.20} parent=0 // loop_header_branch
    %12 = sbr.rel (%p10) target = $region8
  $region5: #{_forward_impl.20} parent=0 // loop_body
    %s14 = ssub.s32 %s9, 1
    %s15 = ssub.s32 %s9, 2
    %s16 = sadd.s32 %s9, 1
    %s17 = ssub.s32 %s9, %s16
    %p18 = scmp.eq.s32.totalorder %s17, 0
    %s20 = sadd.s32 %s19, 1
    %s21 = scalar_select %p18, %s19, %s20
    %p24 = pneg %p18
    %p25 = scmp.eq.s32.totalorder %s9, 1
    %p26 = por %p24, %p25
    %p27 = scmp.ne.s32.totalorder %s19, %s22
    %p28 = scmp.eq.s32.totalorder %s9, 0
    %p29 = por %p27, %p28
    %p30 = scmp.ne.s32.totalorder %s19, %s22
    %p31 = scmp.eq.s32.totalorder %s14, 1
    %p32 = por %p30, %p31
    %p33 = scmp.ne.s32.totalorder %s22, %s23
    %p34 = scmp.eq.s32.totalorder %s14, 0
    %p35 = por %p33, %p34
    %p36 = scmp.ne.s32.totalorder %s22, %s23
    %p37 = scmp.eq.s32.totalorder %s15, 1
    %p38 = por %p36, %p37
    %p40 = scmp.ne.s32.totalorder %s23, %s39
    %p41 = scmp.eq.s32.totalorder %s15, 0
    %p42 = por %p40, %p41
    %s44 = sadd.s32 %s43, 1
    %p47 = scmp.eq.s32.totalorder %s9, 1
    %p48 = scmp.ne.s32.totalorder %s43, %s45
    %p49 = scmp.eq.s32.totalorder %s9, 0
    %p50 = por %p48, %p49
    %p51 = scmp.ne.s32.totalorder %s43, %s45
    %p52 = scmp.eq.s32.totalorder %s14, 1
    %p53 = por %p51, %p52
    %p54 = scmp.ne.s32.totalorder %s45, %s46
    %p55 = scmp.eq.s32.totalorder %s14, 0
    %p56 = por %p54, %p55
    %p57 = scmp.ne.s32.totalorder %s45, %s46
    %p58 = scmp.eq.s32.totalorder %s15, 1
    %p59 = por %p57, %p58
    %p61 = scmp.ne.s32.totalorder %s46, %s60
    %p62 = scmp.eq.s32.totalorder %s15, 0
    %p63 = por %p61, %p62
    %s65 = sadd.s32 %s64, 1
    %p68 = scmp.eq.s32.totalorder %s9, 1
    %p69 = scmp.ne.s32.totalorder %s64, %s66
    %p70 = scmp.eq.s32.totalorder %s9, 0
    %p71 = por %p69, %p70
    %p72 = scmp.ne.s32.totalorder %s64, %s66
    %p73 = scmp.eq.s32.totalorder %s14, 1
    %p74 = por %p72, %p73
    %p75 = scmp.ne.s32.totalorder %s66, %s67
    %p76 = scmp.eq.s32.totalorder %s14, 0
    %p77 = por %p75, %p76
    %p78 = scmp.ne.s32.totalorder %s66, %s67
    %p79 = scmp.eq.s32.totalorder %s15, 1
    %p80 = por %p78, %p79
    %p82 = scmp.ne.s32.totalorder %s67, %s81
    %p83 = scmp.eq.s32.totalorder %s15, 0
    %p84 = por %p82, %p83
    %s85 = ssub.s32 %s9, %s16
    %p86 = scmp.eq.s32.totalorder %s85, 0
    %s88 = sadd.s32 %s87, 1
    %s89 = scalar_select %p86, %s87, %s88
    %p92 = pneg %p86
    %p93 = scmp.eq.s32.totalorder %s9, 1
    %p94 = por %p92, %p93
    %p95 = scmp.ne.s32.totalorder %s87, %s90
    %p96 = scmp.eq.s32.totalorder %s9, 0
    %p97 = por %p95, %p96
    %p98 = scmp.ne.s32.totalorder %s87, %s90
    %p99 = scmp.eq.s32.totalorder %s14, 1
    %p100 = por %p98, %p99
    %p101 = scmp.ne.s32.totalorder %s90, %s91
    %p102 = scmp.eq.s32.totalorder %s14, 0
    %p103 = por %p101, %p102
    %p104 = scmp.ne.s32.totalorder %s90, %s91
    %p105 = scmp.eq.s32.totalorder %s15, 1
    %p106 = por %p104, %p105
    %p108 = scmp.ne.s32.totalorder %s91, %s107
    %p109 = scmp.eq.s32.totalorder %s15, 0
    %p110 = por %p108, %p109
    %p111 = scmp.le.s32.totalorder 1, %s9
    %p112 = scmp.lt.s32.totalorder %s9, 3
    %p113 = pnand %p111, %p112
    %p114 = pneg %p113
    // Predicated region
    $region9: #{_forward_impl.20} parent=5 // pred_check
      _
    $region10: #{_forward_impl.20} parent=5 // pred_check_branch
      %116 = sbr.rel (%p113) target = $region12
    $region11: #{_forward_impl.20} parent=5 // pred_region
      %s117 = ssub.s32 %s9, 1
      // Predicated region
      $region13: #{_forward_impl.20} parent=11 // pred_check
        %p118 = pneg %p56
      $region14: #{_forward_impl.20} parent=11 // pred_check_branch
        %120 = sbr.rel (%p118) target = $region16
      $region15: #{_forward_impl.20} parent=11 // pred_region
        _
      $region16: #{_forward_impl.20} parent=11 // pred_fallthru
        _
      // Predicated region
      $region17: #{_forward_impl.20} parent=11 // pred_check
        %p121 = pneg %p77
      $region18: #{_forward_impl.20} parent=11 // pred_check_branch
        %123 = sbr.rel (%p121) target = $region20
      $region19: #{_forward_impl.20} parent=11 // pred_region
        _
      $region20: #{_forward_impl.20} parent=11 // pred_fallthru
        _
    $region12: #{_forward_impl.20} parent=5 // pred_fallthru
      _
    %p124 = scmp.lt.s32.totalorder %s9, 2
    // Predicated region
    $region21: #{_forward_impl.20} parent=5 // pred_check
      %p125 = pneg %p124
    $region22: #{_forward_impl.20} parent=5 // pred_check_branch
      %127 = sbr.rel (%p125) target = $region24
    $region23: #{_forward_impl.20} parent=5 // pred_region
      // Predicated region
      $region25: #{_forward_impl.20} parent=23 // pred_check
        %p128 = pneg %p29
      $region26: #{_forward_impl.20} parent=23 // pred_check_branch
        %130 = sbr.rel (%p128) target = $region28
      $region27: #{_forward_impl.20} parent=23 // pred_region
        %s131 = smul.u32 32, %s9
        %p132 = scmp.lt.s32.totalorder %s131, 63
        %s133 = scalar_select %p132, %s131, 63
        %s134 = smul.addr %s133, 3
        %s135 = smul.addr %s134, 4
        %s136 = scalar_lea.vmem %s0, %s135
        %s137 = smul.u32 32, %s9
      $region28: #{_forward_impl.20} parent=23 // pred_fallthru
        _
    $region24: #{_forward_impl.20} parent=5 // pred_fallthru
      _
    %p138 = scmp.le.s32.totalorder 1, %s9
    %p139 = scmp.lt.s32.totalorder %s9, 3
    %p140 = pnand %p138, %p139
    %p141 = pneg %p140
    // Predicated region
    $region29: #{_forward_impl.20} parent=5 // pred_check
      _
    $region30: #{_forward_impl.20} parent=5 // pred_check_branch
      %143 = sbr.rel (%p140) target = $region32
    $region31: #{_forward_impl.20} parent=5 // pred_region
      %s144 = ssub.s32 %s9, 1
      %s145 = smul.u32 32, %s14
      %p146 = scmp.lt.s32.totalorder %s145, 63
      %s147 = scalar_select %p146, %s145, 63
      %s148 = smul.addr %s147, 3
      %s149 = smul.addr %s148, 4
      %s150 = scalar_lea.vmem %s0, %s149
      %p151 = pneg %p35
      %p152 = pneg %p32
      %p153 = pneg %p56
      %p154 = pneg %p53
      %p155 = pneg %p77
      %p156 = pneg %p74
      %p157 = pneg %p103
      %p158 = pneg %p100
      %s159 = smul.u32 32, %s14
      %p160 = scmp.lt.s32.totalorder %s159, 63
      %s161 = scalar_select %p160, %s159, 63
      %s162 = smul.addr %s161, 8
      %s163 = scalar_lea.vmem %s3, %s162
      %s164 = smul.u32 32, %s14
      %p165 = scmp.lt.s32.totalorder %s164, 63
      %s166 = scalar_select %p165, %s164, 63
      %s167 = smul.addr %s166, 3
      %s168 = smul.addr %s167, 4
      %s169 = scalar_lea.vmem %s0, %s168
      %s170 = smul.u32 32, %s14
      %s171 = smul.u32 32, %s14
      %p172 = scmp.lt.s32.totalorder %s171, 63
      %s173 = scalar_select %p172, %s171, 63
      %s174 = smul.addr %s173, 8
      %s175 = scalar_lea.vmem %s3, %s174
      %s176 = smul.u32 32, %s14
      %v178 = vld [vmem:[%s169] sm:$0xff]
      %v179 = vld [vmem:[%s169 + $0x8] sm:$0xf]
      %v180 = vld [vmem:[%s169 + $0xc] sm:$0xff]
      %v181 = vld [vmem:[%s169 + $0x14] sm:$0xf]
      %v182 = vld [vmem:[%s169 + $0x18] sm:$0xff]
      %v183 = vld [vmem:[%s169 + $0x20] sm:$0xf]
      %v184 = vld [vmem:[%s169 + $0x24] sm:$0xff]
      %v185 = vld [vmem:[%s169 + $0x2c] sm:$0xf]
      %v186 = vld [vmem:[%s169 + $0x30] sm:$0xff]
      %v187 = vld [vmem:[%s169 + $0x38] sm:$0xf]
      %v188 = vld [vmem:[%s169 + $0x3c] sm:$0xff]
      %v189 = vld [vmem:[%s169 + $0x44] sm:$0xf]
      %v190 = vld [vmem:[%s169 + $0x48] sm:$0xff]
      %v191 = vld [vmem:[%s169 + $0x50] sm:$0xf]
      %v192 = vld [vmem:[%s169 + $0x54] sm:$0xff]
      %v193 = vld [vmem:[%s169 + $0x5c] sm:$0xf]
      %v194 = vld [vmem:[%s169 + $0x60] sm:$0xff]
      %v195 = vld [vmem:[%s169 + $0x68] sm:$0xf]
      %v196 = vld [vmem:[%s169 + $0x6c] sm:$0xff]
      %v197 = vld [vmem:[%s169 + $0x74] sm:$0xf]
      %v198 = vld [vmem:[%s169 + $0x78] sm:$0xff]
      %v199 = vld [vmem:[%s169 + $0x80] sm:$0xf]
      %v200 = vld [vmem:[%s169 + $0x84] sm:$0xff]
      %v201 = vld [vmem:[%s169 + $0x8c] sm:$0xf]
      %v202 = vld [vmem:[%s169 + $0x90] sm:$0xff]
      %v203 = vld [vmem:[%s169 + $0x98] sm:$0xf]
      %v204 = vld [vmem:[%s169 + $0x9c] sm:$0xff]
      %v205 = vld [vmem:[%s169 + $0xa4] sm:$0xf]
      %v206 = vld [vmem:[%s169 + $0xa8] sm:$0xff]
      %v207 = vld [vmem:[%s169 + $0xb0] sm:$0xf]
      %v208 = vld [vmem:[%s169 + $0xb4] sm:$0xff]
      %v209 = vld [vmem:[%s169 + $0xbc] sm:$0xf]
      %v210 = vld [vmem:[%s169 + $0xc0] sm:$0xff]
      %v211 = vld [vmem:[%s169 + $0xc8] sm:$0xf]
      %v212 = vld [vmem:[%s169 + $0xcc] sm:$0xff]
      %v213 = vld [vmem:[%s169 + $0xd4] sm:$0xf]
      %v214 = vld [vmem:[%s169 + $0xd8] sm:$0xff]
      %v215 = vld [vmem:[%s169 + $0xe0] sm:$0xf]
      %v216 = vld [vmem:[%s169 + $0xe4] sm:$0xff]
      %v217 = vld [vmem:[%s169 + $0xec] sm:$0xf]
      %v218 = vld [vmem:[%s169 + $0xf0] sm:$0xff]
      %v219 = vld [vmem:[%s169 + $0xf8] sm:$0xf]
      %v220 = vld [vmem:[%s169 + $0xfc] sm:$0xff]
      %v221 = vld [vmem:[%s169 + $0x104] sm:$0xf]
      %v222 = vld [vmem:[%s169 + $0x108] sm:$0xff]
      %v223 = vld [vmem:[%s169 + $0x110] sm:$0xf]
      %v224 = vld [vmem:[%s169 + $0x114] sm:$0xff]
      %v225 = vld [vmem:[%s169 + $0x11c] sm:$0xf]
      %v226 = vld [vmem:[%s169 + $0x120] sm:$0xff]
      %v227 = vld [vmem:[%s169 + $0x128] sm:$0xf]
      %v228 = vld [vmem:[%s169 + $0x12c] sm:$0xff]
      %v229 = vld [vmem:[%s169 + $0x134] sm:$0xf]
      %v230 = vld [vmem:[%s169 + $0x138] sm:$0xff]
      %v231 = vld [vmem:[%s169 + $0x140] sm:$0xf]
      %v232 = vld [vmem:[%s169 + $0x144] sm:$0xff]
      %v233 = vld [vmem:[%s169 + $0x14c] sm:$0xf]
      %v234 = vld [vmem:[%s169 + $0x150] sm:$0xff]
      %v235 = vld [vmem:[%s169 + $0x158] sm:$0xf]
      %v236 = vld [vmem:[%s169 + $0x15c] sm:$0xff]
      %v237 = vld [vmem:[%s169 + $0x164] sm:$0xf]
      %v238 = vld [vmem:[%s169 + $0x168] sm:$0xff]
      %v239 = vld [vmem:[%s169 + $0x170] sm:$0xf]
      %v240 = vld [vmem:[%s169 + $0x174] sm:$0xff]
      %v241 = vld [vmem:[%s169 + $0x17c] sm:$0xf]
      %v242 = vld [vmem:[%s1] sm:$0xf]
      %v243 = vld [vmem:[%s1 + $0x4] sm:$0xf]
      %v244 = vld [vmem:[%s1 + $0x8] sm:$0xf]
      %v245 = vld [vmem:[%s1 + $0xc] sm:$0xf]
      %v246 = vld [vmem:[%s1 + $0x10] sm:$0xf]
      %v247 = vld [vmem:[%s1 + $0x14] sm:$0xf]
      %v248 = vld [vmem:[%s1 + $0x18] sm:$0xf]
      %v249 = vld [vmem:[%s1 + $0x1c] sm:$0xf]
      %v250 = vld [vmem:[%s1 + $0x20] sm:$0xf]
      %v251 = vld [vmem:[%s1 + $0x24] sm:$0xf]
      %v252 = vld [vmem:[%s1 + $0x28] sm:$0xf]
      %v253 = vld [vmem:[%s1 + $0x2c] sm:$0xf]
      %v254 = vld [vmem:[%s1 + $0x30] sm:$0xf]
      %v255 = vld [vmem:[%s1 + $0x34] sm:$0xf]
      %v256 = vld [vmem:[%s1 + $0x38] sm:$0xf]
      %v257 = vld [vmem:[%s1 + $0x3c] sm:$0xf]
      %v258 = vld [vmem:[%s1 + $0x40] sm:$0xf]
      %v259 = vld [vmem:[%s1 + $0x44] sm:$0xf]
      %v260 = vld [vmem:[%s1 + $0x48] sm:$0xf]
      %v261 = vld [vmem:[%s1 + $0x4c] sm:$0xf]
      %v262 = vld [vmem:[%s1 + $0x50] sm:$0xf]
      %v263 = vld [vmem:[%s1 + $0x54] sm:$0xf]
      %v264 = vld [vmem:[%s1 + $0x58] sm:$0xf]
      %v265 = vld [vmem:[%s1 + $0x5c] sm:$0xf]
      %v266 = vld [vmem:[%s1 + $0x60] sm:$0xf]
      %v267 = vld [vmem:[%s1 + $0x64] sm:$0xf]
      %v268 = vld [vmem:[%s1 + $0x68] sm:$0xf]
      %v269 = vld [vmem:[%s1 + $0x6c] sm:$0xf]
      %v270 = vld [vmem:[%s1 + $0x70] sm:$0xf]
      %v271 = vld [vmem:[%s1 + $0x74] sm:$0xf]
      %v272 = vld [vmem:[%s1 + $0x78] sm:$0xf]
      %v273 = vld [vmem:[%s1 + $0x7c] sm:$0xf]
      %v274 = vld [vmem:[%s1 + $0x80] sm:$0xf]
      %v275 = vld [vmem:[%s1 + $0x84] sm:$0xf]
      %v276 = vld [vmem:[%s1 + $0x88] sm:$0xf]
      %v277 = vld [vmem:[%s1 + $0x8c] sm:$0xf]
      %v278 = vld [vmem:[%s2] sm:$0x1]
      %v280 = vperm.slane %v278, 0
      %v346 = vunpack.c.l.b16 %v178
      %v347 = vunpack.c.h.b16 %v178
      %v348 = vunpack.c.l.b16 %v179
      %v349 = vunpack.c.l.b16 %v180
      %v350 = vunpack.c.h.b16 %v180
      %v351 = vunpack.c.l.b16 %v181
      %v352 = vunpack.c.l.b16 %v182
      %v353 = vunpack.c.h.b16 %v182
      %v354 = vunpack.c.l.b16 %v183
      %v355 = vunpack.c.l.b16 %v184
      %v356 = vunpack.c.h.b16 %v184
      %v357 = vunpack.c.l.b16 %v185
      %v358 = vunpack.c.l.b16 %v186
      %v359 = vunpack.c.h.b16 %v186
      %v360 = vunpack.c.l.b16 %v187
      %v361 = vunpack.c.l.b16 %v188
      %v362 = vunpack.c.h.b16 %v188
      %v363 = vunpack.c.l.b16 %v189
      %v364 = vunpack.c.l.b16 %v190
      %v365 = vunpack.c.h.b16 %v190
      %v366 = vunpack.c.l.b16 %v191
      %v367 = vunpack.c.l.b16 %v192
      %v368 = vunpack.c.h.b16 %v192
      %v369 = vunpack.c.l.b16 %v193
      %v370 = vunpack.c.l.b16 %v194
      %v371 = vunpack.c.h.b16 %v194
      %v372 = vunpack.c.l.b16 %v195
      %v373 = vunpack.c.l.b16 %v196
      %v374 = vunpack.c.h.b16 %v196
      %v375 = vunpack.c.l.b16 %v197
      %v376 = vunpack.c.l.b16 %v198
      %v377 = vunpack.c.h.b16 %v198
      %v378 = vunpack.c.l.b16 %v199
      %v379 = vunpack.c.l.b16 %v200
      %v380 = vunpack.c.h.b16 %v200
      %v381 = vunpack.c.l.b16 %v201
      %v382 = vunpack.c.l.b16 %v202
      %v383 = vunpack.c.h.b16 %v202
      %v384 = vunpack.c.l.b16 %v203
      %v385 = vunpack.c.l.b16 %v204
      %v386 = vunpack.c.h.b16 %v204
      %v387 = vunpack.c.l.b16 %v205
      %v388 = vunpack.c.l.b16 %v206
      %v389 = vunpack.c.h.b16 %v206
      %v390 = vunpack.c.l.b16 %v207
      %v391 = vunpack.c.l.b16 %v208
      %v392 = vunpack.c.h.b16 %v208
      %v393 = vunpack.c.l.b16 %v209
      %v394 = vunpack.c.l.b16 %v210
      %v395 = vunpack.c.h.b16 %v210
      %v396 = vunpack.c.l.b16 %v211
      %v397 = vunpack.c.l.b16 %v212
      %v398 = vunpack.c.h.b16 %v212
      %v399 = vunpack.c.l.b16 %v213
      %v400 = vunpack.c.l.b16 %v214
      %v401 = vunpack.c.h.b16 %v214
      %v402 = vunpack.c.l.b16 %v215
      %v403 = vunpack.c.l.b16 %v216
      %v404 = vunpack.c.h.b16 %v216
      %v405 = vunpack.c.l.b16 %v217
      %v406 = vunpack.c.l.b16 %v218
      %v407 = vunpack.c.h.b16 %v218
      %v408 = vunpack.c.l.b16 %v219
      %v409 = vunpack.c.l.b16 %v220
      %v410 = vunpack.c.h.b16 %v220
      %v411 = vunpack.c.l.b16 %v221
      %v412 = vunpack.c.l.b16 %v222
      %v413 = vunpack.c.h.b16 %v222
      %v414 = vunpack.c.l.b16 %v223
      %v415 = vunpack.c.l.b16 %v224
      %v416 = vunpack.c.h.b16 %v224
      %v417 = vunpack.c.l.b16 %v225
      %v418 = vunpack.c.l.b16 %v226
      %v419 = vunpack.c.h.b16 %v226
      %v420 = vunpack.c.l.b16 %v227
      %v421 = vunpack.c.l.b16 %v228
      %v422 = vunpack.c.h.b16 %v228
      %v423 = vunpack.c.l.b16 %v229
      %v424 = vunpack.c.l.b16 %v230
      %v425 = vunpack.c.h.b16 %v230
      %v426 = vunpack.c.l.b16 %v231
      %v427 = vunpack.c.l.b16 %v232
      %v428 = vunpack.c.h.b16 %v232
      %v429 = vunpack.c.l.b16 %v233
      %v430 = vunpack.c.l.b16 %v234
      %v431 = vunpack.c.h.b16 %v234
      %v432 = vunpack.c.l.b16 %v235
      %v433 = vunpack.c.l.b16 %v236
      %v434 = vunpack.c.h.b16 %v236
      %v435 = vunpack.c.l.b16 %v237
      %v436 = vunpack.c.l.b16 %v238
      %v437 = vunpack.c.h.b16 %v238
      %v438 = vunpack.c.l.b16 %v239
      %v439 = vunpack.c.l.b16 %v240
      %v440 = vunpack.c.h.b16 %v240
      %v441 = vunpack.c.l.b16 %v241
      %v442 = vpack.c.b16 %v349, %v346
      %v443 = vpack.c.b16 %v350, %v347
      %v444 = vpack.c.b16 %v351, %v348
      %v445 = vpack.c.b16 %v355, %v352
      %v446 = vpack.c.b16 %v356, %v353
      %v447 = vpack.c.b16 %v357, %v354
      %v448 = vpack.c.b16 %v361, %v358
      %v449 = vpack.c.b16 %v362, %v359
      %v450 = vpack.c.b16 %v363, %v360
      %v451 = vpack.c.b16 %v367, %v364
      %v452 = vpack.c.b16 %v368, %v365
      %v453 = vpack.c.b16 %v369, %v366
      %v454 = vpack.c.b16 %v373, %v370
      %v455 = vpack.c.b16 %v374, %v371
      %v456 = vpack.c.b16 %v375, %v372
      %v457 = vpack.c.b16 %v379, %v376
      %v458 = vpack.c.b16 %v380, %v377
      %v459 = vpack.c.b16 %v381, %v378
      %v460 = vpack.c.b16 %v385, %v382
      %v461 = vpack.c.b16 %v386, %v383
      %v462 = vpack.c.b16 %v387, %v384
      %v463 = vpack.c.b16 %v391, %v388
      %v464 = vpack.c.b16 %v392, %v389
      %v465 = vpack.c.b16 %v393, %v390
      %v466 = vpack.c.b16 %v397, %v394
      %v467 = vpack.c.b16 %v398, %v395
      %v468 = vpack.c.b16 %v399, %v396
      %v469 = vpack.c.b16 %v403, %v400
      %v470 = vpack.c.b16 %v404, %v401
      %v471 = vpack.c.b16 %v405, %v402
      %v472 = vpack.c.b16 %v409, %v406
      %v473 = vpack.c.b16 %v410, %v407
      %v474 = vpack.c.b16 %v411, %v408
      %v475 = vpack.c.b16 %v415, %v412
      %v476 = vpack.c.b16 %v416, %v413
      %v477 = vpack.c.b16 %v417, %v414
      %v478 = vpack.c.b16 %v421, %v418
      %v479 = vpack.c.b16 %v422, %v419
      %v480 = vpack.c.b16 %v423, %v420
      %v481 = vpack.c.b16 %v427, %v424
      %v482 = vpack.c.b16 %v428, %v425
      %v483 = vpack.c.b16 %v429, %v426
      %v484 = vpack.c.b16 %v433, %v430
      %v485 = vpack.c.b16 %v434, %v431
      %v486 = vpack.c.b16 %v435, %v432
      %v487 = vpack.c.b16 %v439, %v436
      %v488 = vpack.c.b16 %v440, %v437
      %v489 = vpack.c.b16 %v441, %v438
      %v558 = vunpack.c.l.b16 %v242
      %v559 = vunpack.c.l.b16 %v243
      %v560 = vunpack.c.l.b16 %v244
      %v561 = vunpack.c.l.b16 %v245
      %v562 = vunpack.c.l.b16 %v246
      %v563 = vunpack.c.l.b16 %v247
      %v564 = vunpack.c.l.b16 %v248
      %v565 = vunpack.c.l.b16 %v249
      %v566 = vunpack.c.l.b16 %v250
      %v567 = vunpack.c.l.b16 %v251
      %v568 = vunpack.c.l.b16 %v252
      %v569 = vunpack.c.l.b16 %v253
      %v570 = vunpack.c.l.b16 %v254
      %v571 = vunpack.c.l.b16 %v255
      %v572 = vunpack.c.l.b16 %v256
      %v573 = vunpack.c.l.b16 %v257
      %v574 = vunpack.c.l.b16 %v258
      %v575 = vunpack.c.l.b16 %v259
      %v576 = vunpack.c.l.b16 %v260
      %v577 = vunpack.c.l.b16 %v261
      %v578 = vunpack.c.l.b16 %v262
      %v579 = vunpack.c.l.b16 %v263
      %v580 = vunpack.c.l.b16 %v264
      %v581 = vunpack.c.l.b16 %v265
      %v582 = vunpack.c.l.b16 %v266
      %v583 = vunpack.c.l.b16 %v267
      %v584 = vunpack.c.l.b16 %v268
      %v585 = vunpack.c.l.b16 %v269
      %v586 = vunpack.c.l.b16 %v270
      %v587 = vunpack.c.l.b16 %v271
      %v588 = vunpack.c.l.b16 %v272
      %v589 = vunpack.c.l.b16 %v273
      %v590 = vunpack.c.l.b16 %v274
      %v591 = vunpack.c.l.b16 %v275
      %v592 = vunpack.c.l.b16 %v276
      %v593 = vunpack.c.l.b16 %v277
      %v594 = vpack.c.b16 %v559, %v558
      %v595 = vpack.c.b16 %v561, %v560
      %v596 = vpack.c.b16 %v563, %v562
      %v597 = vpack.c.b16 %v565, %v564
      %v598 = vpack.c.b16 %v567, %v566
      %v599 = vpack.c.b16 %v569, %v568
      %v600 = vpack.c.b16 %v571, %v570
      %v601 = vpack.c.b16 %v573, %v572
      %v602 = vpack.c.b16 %v575, %v574
      %v603 = vpack.c.b16 %v577, %v576
      %v604 = vpack.c.b16 %v579, %v578
      %v605 = vpack.c.b16 %v581, %v580
      %v606 = vpack.c.b16 %v583, %v582
      %v607 = vpack.c.b16 %v585, %v584
      %v608 = vpack.c.b16 %v587, %v586
      %v609 = vpack.c.b16 %v589, %v588
      %v610 = vpack.c.b16 %v591, %v590
      %v611 = vpack.c.b16 %v593, %v592
      %vm630 = vcmask 261120
      %v632 = vsel %vm630, %v444, 0
      %v635 = vsel %vm630, %v447, 0
      %v638 = vsel %vm630, %v450, 0
      %v641 = vsel %vm630, %v453, 0
      %v644 = vsel %vm630, %v456, 0
      %v647 = vsel %vm630, %v459, 0
      %v650 = vsel %vm630, %v462, 0
      %v653 = vsel %vm630, %v465, 0
      %v656 = vsel %vm630, %v468, 0
      %v659 = vsel %vm630, %v471, 0
      %v662 = vsel %vm630, %v474, 0
      %v665 = vsel %vm630, %v477, 0
      %v668 = vsel %vm630, %v480, 0
      %v671 = vsel %vm630, %v483, 0
      %v674 = vsel %vm630, %v486, 0
      %v677 = vsel %vm630, %v489, 0
      %679 = vmatpush.bf16.msra.mxu0 %v601
      %680 = vmatpush.bf16.msra.mxu0 %v600
      %681 = vmatpush.bf16.msra.mxu0 %v599
      %682 = vmatpush.bf16.msra.mxu0 %v598
      %683 = vmatpush.bf16.msra.mxu0 %v597
      %684 = vmatpush.bf16.msra.mxu0 %v596
      %685 = vmatpush.bf16.msra.mxu0 %v595
      %686 = vmatpush.bf16.msra.mxu0 %v594
      %687 = vmatmul.bf16.gmra.mxu0 %v442
      %v688 = vpop.f32.mrf.mxu0
      %v689 = vadd.f32 %v280, %v688
      %v690 = vpop.f32.mrf.mxu0
      %v691 = vadd.f32 %v280, %v690
      %692 = vmatmul.bf16.gmra.mxu0 %v445
      %v693 = vpop.f32.mrf.mxu0
      %v694 = vadd.f32 %v280, %v693
      %v695 = vpop.f32.mrf.mxu0
      %v696 = vadd.f32 %v280, %v695
      %697 = vmatmul.bf16.gmra.mxu0 %v448
      %v698 = vpop.f32.mrf.mxu0
      %v699 = vadd.f32 %v280, %v698
      %v700 = vpop.f32.mrf.mxu0
      %v701 = vadd.f32 %v280, %v700
      %702 = vmatmul.bf16.gmra.mxu0 %v451
      %v703 = vpop.f32.mrf.mxu0
      %v704 = vadd.f32 %v280, %v703
      %v705 = vpop.f32.mrf.mxu0
      %v706 = vadd.f32 %v280, %v705
      %707 = vmatmul.bf16.gmra.mxu0 %v454
      %v708 = vpop.f32.mrf.mxu0
      %v709 = vadd.f32 %v280, %v708
      %v710 = vpop.f32.mrf.mxu0
      %v711 = vadd.f32 %v280, %v710
      %712 = vmatmul.bf16.gmra.mxu0 %v457
      %v713 = vpop.f32.mrf.mxu0
      %v714 = vadd.f32 %v280, %v713
      %v715 = vpop.f32.mrf.mxu0
      %v716 = vadd.f32 %v280, %v715
      %717 = vmatmul.bf16.gmra.mxu0 %v460
      %v718 = vpop.f32.mrf.mxu0
      %v719 = vadd.f32 %v280, %v718
      %v720 = vpop.f32.mrf.mxu0
      %v721 = vadd.f32 %v280, %v720
      %722 = vmatmul.bf16.gmra.mxu0 %v463
      %v723 = vpop.f32.mrf.mxu0
      %v724 = vadd.f32 %v280, %v723
      %v725 = vpop.f32.mrf.mxu0
      %v726 = vadd.f32 %v280, %v725
      %727 = vmatmul.bf16.gmra.mxu0 %v466
      %v728 = vpop.f32.mrf.mxu0
      %v729 = vadd.f32 %v280, %v728
      %v730 = vpop.f32.mrf.mxu0
      %v731 = vadd.f32 %v280, %v730
      %732 = vmatmul.bf16.gmra.mxu0 %v469
      %v733 = vpop.f32.mrf.mxu0
      %v734 = vadd.f32 %v280, %v733
      %v735 = vpop.f32.mrf.mxu0
      %v736 = vadd.f32 %v280, %v735
      %737 = vmatmul.bf16.gmra.mxu0 %v472
      %v738 = vpop.f32.mrf.mxu0
      %v739 = vadd.f32 %v280, %v738
      %v740 = vpop.f32.mrf.mxu0
      %v741 = vadd.f32 %v280, %v740
      %742 = vmatmul.bf16.gmra.mxu0 %v475
      %v743 = vpop.f32.mrf.mxu0
      %v744 = vadd.f32 %v280, %v743
      %v745 = vpop.f32.mrf.mxu0
      %v746 = vadd.f32 %v280, %v745
      %747 = vmatmul.bf16.gmra.mxu0 %v478
      %v748 = vpop.f32.mrf.mxu0
      %v749 = vadd.f32 %v280, %v748
      %v750 = vpop.f32.mrf.mxu0
      %v751 = vadd.f32 %v280, %v750
      %752 = vmatmul.bf16.gmra.mxu0 %v481
      %v753 = vpop.f32.mrf.mxu0
      %v754 = vadd.f32 %v280, %v753
      %v755 = vpop.f32.mrf.mxu0
      %v756 = vadd.f32 %v280, %v755
      %757 = vmatmul.bf16.gmra.mxu0 %v484
      %v758 = vpop.f32.mrf.mxu0
      %v759 = vadd.f32 %v280, %v758
      %v760 = vpop.f32.mrf.mxu0
      %v761 = vadd.f32 %v280, %v760
      %762 = vmatmul.bf16.gmra.mxu0 %v487
      %v763 = vpop.f32.mrf.mxu0
      %v764 = vadd.f32 %v280, %v763
      %v765 = vpop.f32.mrf.mxu0
      %v766 = vadd.f32 %v280, %v765
      %767 = vdwg.mxu0
      %768 = vmatpush.bf16.msra.mxu0 %v609
      %769 = vmatpush.bf16.msra.mxu0 %v608
      %770 = vmatpush.bf16.msra.mxu0 %v607
      %771 = vmatpush.bf16.msra.mxu0 %v606
      %772 = vmatpush.bf16.msra.mxu0 %v605
      %773 = vmatpush.bf16.msra.mxu0 %v604
      %774 = vmatpush.bf16.msra.mxu0 %v603
      %775 = vmatpush.bf16.msra.mxu0 %v602
      %776 = vmatmul.bf16.gmra.mxu0 %v443
      %v777 = vpop.f32.mrf.mxu0
      %v778 = vadd.f32 %v689, %v777
      %v779 = vpop.f32.mrf.mxu0
      %v780 = vadd.f32 %v691, %v779
      %781 = vmatmul.bf16.gmra.mxu0 %v446
      %v782 = vpop.f32.mrf.mxu0
      %v783 = vadd.f32 %v694, %v782
      %v784 = vpop.f32.mrf.mxu0
      %v785 = vadd.f32 %v696, %v784
      %786 = vmatmul.bf16.gmra.mxu0 %v449
      %v787 = vpop.f32.mrf.mxu0
      %v788 = vadd.f32 %v699, %v787
      %v789 = vpop.f32.mrf.mxu0
      %v790 = vadd.f32 %v701, %v789
      %791 = vmatmul.bf16.gmra.mxu0 %v452
      %v792 = vpop.f32.mrf.mxu0
      %v793 = vadd.f32 %v704, %v792
      %v794 = vpop.f32.mrf.mxu0
      %v795 = vadd.f32 %v706, %v794
      %796 = vmatmul.bf16.gmra.mxu0 %v455
      %v797 = vpop.f32.mrf.mxu0
      %v798 = vadd.f32 %v709, %v797
      %v799 = vpop.f32.mrf.mxu0
      %v800 = vadd.f32 %v711, %v799
      %801 = vmatmul.bf16.gmra.mxu0 %v458
      %v802 = vpop.f32.mrf.mxu0
      %v803 = vadd.f32 %v714, %v802
      %v804 = vpop.f32.mrf.mxu0
      %v805 = vadd.f32 %v716, %v804
      %806 = vmatmul.bf16.gmra.mxu0 %v461
      %v807 = vpop.f32.mrf.mxu0
      %v808 = vadd.f32 %v719, %v807
      %v809 = vpop.f32.mrf.mxu0
      %v810 = vadd.f32 %v721, %v809
      %811 = vmatmul.bf16.gmra.mxu0 %v464
      %v812 = vpop.f32.mrf.mxu0
      %v813 = vadd.f32 %v724, %v812
      %v814 = vpop.f32.mrf.mxu0
      %v815 = vadd.f32 %v726, %v814
      %816 = vmatmul.bf16.gmra.mxu0 %v467
      %v817 = vpop.f32.mrf.mxu0
      %v818 = vadd.f32 %v729, %v817
      %v819 = vpop.f32.mrf.mxu0
      %v820 = vadd.f32 %v731, %v819
      %821 = vmatmul.bf16.gmra.mxu0 %v470
      %v822 = vpop.f32.mrf.mxu0
      %v823 = vadd.f32 %v734, %v822
      %v824 = vpop.f32.mrf.mxu0
      %v825 = vadd.f32 %v736, %v824
      %826 = vmatmul.bf16.gmra.mxu0 %v473
      %v827 = vpop.f32.mrf.mxu0
      %v828 = vadd.f32 %v739, %v827
      %v829 = vpop.f32.mrf.mxu0
      %v830 = vadd.f32 %v741, %v829
      %831 = vmatmul.bf16.gmra.mxu0 %v476
      %v832 = vpop.f32.mrf.mxu0
      %v833 = vadd.f32 %v744, %v832
      %v834 = vpop.f32.mrf.mxu0
      %v835 = vadd.f32 %v746, %v834
      %836 = vmatmul.bf16.gmra.mxu0 %v479
      %v837 = vpop.f32.mrf.mxu0
      %v838 = vadd.f32 %v749, %v837
      %v839 = vpop.f32.mrf.mxu0
      %v840 = vadd.f32 %v751, %v839
      %841 = vmatmul.bf16.gmra.mxu0 %v482
      %v842 = vpop.f32.mrf.mxu0
      %v843 = vadd.f32 %v754, %v842
      %v844 = vpop.f32.mrf.mxu0
      %v845 = vadd.f32 %v756, %v844
      %846 = vmatmul.bf16.gmra.mxu0 %v485
      %v847 = vpop.f32.mrf.mxu0
      %v848 = vadd.f32 %v759, %v847
      %v849 = vpop.f32.mrf.mxu0
      %v850 = vadd.f32 %v761, %v849
      %851 = vmatmul.bf16.gmra.mxu0 %v488
      %v852 = vpop.f32.mrf.mxu0
      %v853 = vadd.f32 %v764, %v852
      %v854 = vpop.f32.mrf.mxu0
      %v855 = vadd.f32 %v766, %v854
      %856 = vdwg.mxu0
      %857 = vmatpush.bf16.msra.mxu0 0
      %858 = vmatpush.bf16.msra.mxu0 0
      %859 = vmatpush.bf16.msra.mxu0 0
      %860 = vmatpush.bf16.msra.mxu0 0
      %861 = vmatpush.bf16.msra.mxu0 0
      %862 = vmatpush.bf16.msra.mxu0 0
      %863 = vmatpush.bf16.msra.mxu0 %v611
      %864 = vmatpush.bf16.msra.mxu0 %v610
      %865 = vmatmul.bf16.gmra.mxu0 %v632
      %v866 = vpop.f32.mrf.mxu0
      %v867 = vadd.f32 %v778, %v866
      %v868 = vpop.f32.mrf.mxu0
      %v869 = vadd.f32 %v780, %v868
      %870 = vmatmul.bf16.gmra.mxu0 %v635
      %v871 = vpop.f32.mrf.mxu0
      %v872 = vadd.f32 %v783, %v871
      %v873 = vpop.f32.mrf.mxu0
      %v874 = vadd.f32 %v785, %v873
      %875 = vmatmul.bf16.gmra.mxu0 %v638
      %v876 = vpop.f32.mrf.mxu0
      %v877 = vadd.f32 %v788, %v876
      %v878 = vpop.f32.mrf.mxu0
      %v879 = vadd.f32 %v790, %v878
      %880 = vmatmul.bf16.gmra.mxu0 %v641
      %v881 = vpop.f32.mrf.mxu0
      %v882 = vadd.f32 %v793, %v881
      %v883 = vpop.f32.mrf.mxu0
      %v884 = vadd.f32 %v795, %v883
      %885 = vmatmul.bf16.gmra.mxu0 %v644
      %v886 = vpop.f32.mrf.mxu0
      %v887 = vadd.f32 %v798, %v886
      %v888 = vpop.f32.mrf.mxu0
      %v889 = vadd.f32 %v800, %v888
      %890 = vmatmul.bf16.gmra.mxu0 %v647
      %v891 = vpop.f32.mrf.mxu0
      %v892 = vadd.f32 %v803, %v891
      %v893 = vpop.f32.mrf.mxu0
      %v894 = vadd.f32 %v805, %v893
      %895 = vmatmul.bf16.gmra.mxu0 %v650
      %v896 = vpop.f32.mrf.mxu0
      %v897 = vadd.f32 %v808, %v896
      %v898 = vpop.f32.mrf.mxu0
      %v899 = vadd.f32 %v810, %v898
      %900 = vmatmul.bf16.gmra.mxu0 %v653
      %v901 = vpop.f32.mrf.mxu0
      %v902 = vadd.f32 %v813, %v901
      %v903 = vpop.f32.mrf.mxu0
      %v904 = vadd.f32 %v815, %v903
      %905 = vmatmul.bf16.gmra.mxu0 %v656
      %v906 = vpop.f32.mrf.mxu0
      %v907 = vadd.f32 %v818, %v906
      %v908 = vpop.f32.mrf.mxu0
      %v909 = vadd.f32 %v820, %v908
      %910 = vmatmul.bf16.gmra.mxu0 %v659
      %v911 = vpop.f32.mrf.mxu0
      %v912 = vadd.f32 %v823, %v911
      %v913 = vpop.f32.mrf.mxu0
      %v914 = vadd.f32 %v825, %v913
      %915 = vmatmul.bf16.gmra.mxu0 %v662
      %v916 = vpop.f32.mrf.mxu0
      %v917 = vadd.f32 %v828, %v916
      %v918 = vpop.f32.mrf.mxu0
      %v919 = vadd.f32 %v830, %v918
      %920 = vmatmul.bf16.gmra.mxu0 %v665
      %v921 = vpop.f32.mrf.mxu0
      %v922 = vadd.f32 %v833, %v921
      %v923 = vpop.f32.mrf.mxu0
      %v924 = vadd.f32 %v835, %v923
      %925 = vmatmul.bf16.gmra.mxu0 %v668
      %v926 = vpop.f32.mrf.mxu0
      %v927 = vadd.f32 %v838, %v926
      %v928 = vpop.f32.mrf.mxu0
      %v929 = vadd.f32 %v840, %v928
      %930 = vmatmul.bf16.gmra.mxu0 %v671
      %v931 = vpop.f32.mrf.mxu0
      %v932 = vadd.f32 %v843, %v931
      %v933 = vpop.f32.mrf.mxu0
      %v934 = vadd.f32 %v845, %v933
      %935 = vmatmul.bf16.gmra.mxu0 %v674
      %v936 = vpop.f32.mrf.mxu0
      %v937 = vadd.f32 %v848, %v936
      %v938 = vpop.f32.mrf.mxu0
      %v939 = vadd.f32 %v850, %v938
      %940 = vmatmul.bf16.gmra.mxu0 %v677
      %v941 = vpop.f32.mrf.mxu0
      %v942 = vadd.f32 %v853, %v941
      %v943 = vpop.f32.mrf.mxu0
      %v944 = vadd.f32 %v855, %v943
      %945 = vdwg.mxu0
      %v946 = vmax.f32 %v867, 0.0
      %v947 = vmax.f32 %v869, 0.0
      %v948 = vmax.f32 %v872, 0.0
      %v949 = vmax.f32 %v874, 0.0
      %v950 = vmax.f32 %v877, 0.0
      %v951 = vmax.f32 %v879, 0.0
      %v952 = vmax.f32 %v882, 0.0
      %v953 = vmax.f32 %v884, 0.0
      %v954 = vmax.f32 %v887, 0.0
      %v955 = vmax.f32 %v889, 0.0
      %v956 = vmax.f32 %v892, 0.0
      %v957 = vmax.f32 %v894, 0.0
      %v958 = vmax.f32 %v897, 0.0
      %v959 = vmax.f32 %v899, 0.0
      %v960 = vmax.f32 %v902, 0.0
      %v961 = vmax.f32 %v904, 0.0
      %v962 = vmax.f32 %v907, 0.0
      %v963 = vmax.f32 %v909, 0.0
      %v964 = vmax.f32 %v912, 0.0
      %v965 = vmax.f32 %v914, 0.0
      %v966 = vmax.f32 %v917, 0.0
      %v967 = vmax.f32 %v919, 0.0
      %v968 = vmax.f32 %v922, 0.0
      %v969 = vmax.f32 %v924, 0.0
      %v970 = vmax.f32 %v927, 0.0
      %v971 = vmax.f32 %v929, 0.0
      %v972 = vmax.f32 %v932, 0.0
      %v973 = vmax.f32 %v934, 0.0
      %v974 = vmax.f32 %v937, 0.0
      %v975 = vmax.f32 %v939, 0.0
      %v976 = vmax.f32 %v942, 0.0
      %v977 = vmax.f32 %v944, 0.0
      %vm978 = vcmask 523264
      %979 = vst.msk [vmem:[%s175] sm:$0xff] %vm978, %v946
      %980 = vst.msk [vmem:[%s175 + $0x8] sm:$0xff] %vm978, %v947
      %981 = vst.msk [vmem:[%s175 + $0x10] sm:$0xff] %vm978, %v948
      %982 = vst.msk [vmem:[%s175 + $0x18] sm:$0xff] %vm978, %v949
      %983 = vst.msk [vmem:[%s175 + $0x20] sm:$0xff] %vm978, %v950
      %984 = vst.msk [vmem:[%s175 + $0x28] sm:$0xff] %vm978, %v951
      %985 = vst.msk [vmem:[%s175 + $0x30] sm:$0xff] %vm978, %v952
      %986 = vst.msk [vmem:[%s175 + $0x38] sm:$0xff] %vm978, %v953
      %987 = vst.msk [vmem:[%s175 + $0x40] sm:$0xff] %vm978, %v954
      %988 = vst.msk [vmem:[%s175 + $0x48] sm:$0xff] %vm978, %v955
      %989 = vst.msk [vmem:[%s175 + $0x50] sm:$0xff] %vm978, %v956
      %990 = vst.msk [vmem:[%s175 + $0x58] sm:$0xff] %vm978, %v957
      %991 = vst.msk [vmem:[%s175 + $0x60] sm:$0xff] %vm978, %v958
      %992 = vst.msk [vmem:[%s175 + $0x68] sm:$0xff] %vm978, %v959
      %993 = vst.msk [vmem:[%s175 + $0x70] sm:$0xff] %vm978, %v960
      %994 = vst.msk [vmem:[%s175 + $0x78] sm:$0xff] %vm978, %v961
      %995 = vst.msk [vmem:[%s175 + $0x80] sm:$0xff] %vm978, %v962
      %996 = vst.msk [vmem:[%s175 + $0x88] sm:$0xff] %vm978, %v963
      %997 = vst.msk [vmem:[%s175 + $0x90] sm:$0xff] %vm978, %v964
      %998 = vst.msk [vmem:[%s175 + $0x98] sm:$0xff] %vm978, %v965
      %999 = vst.msk [vmem:[%s175 + $0xa0] sm:$0xff] %vm978, %v966
      %1000 = vst.msk [vmem:[%s175 + $0xa8] sm:$0xff] %vm978, %v967
      %1001 = vst.msk [vmem:[%s175 + $0xb0] sm:$0xff] %vm978, %v968
      %1002 = vst.msk [vmem:[%s175 + $0xb8] sm:$0xff] %vm978, %v969
      %1003 = vst.msk [vmem:[%s175 + $0xc0] sm:$0xff] %vm978, %v970
      %1004 = vst.msk [vmem:[%s175 + $0xc8] sm:$0xff] %vm978, %v971
      %1005 = vst.msk [vmem:[%s175 + $0xd0] sm:$0xff] %vm978, %v972
      %1006 = vst.msk [vmem:[%s175 + $0xd8] sm:$0xff] %vm978, %v973
      %1007 = vst.msk [vmem:[%s175 + $0xe0] sm:$0xff] %vm978, %v974
      %1008 = vst.msk [vmem:[%s175 + $0xe8] sm:$0xff] %vm978, %v975
      %1009 = vst.msk [vmem:[%s175 + $0xf0] sm:$0xff] %vm978, %v976
      %1010 = vst.msk [vmem:[%s175 + $0xf8] sm:$0xff] %vm978, %v977
      %s1011 = smul.u32 32, %s14
      %p1012 = scmp.lt.s32.totalorder %s1011, 63
      %s1013 = scalar_select %p1012, %s1011, 63
      %s1014 = smul.addr %s1013, 8
      %s1015 = scalar_lea.vmem %s3, %s1014
      // Predicated region
      $region33: #{_forward_impl.20} parent=31 // pred_check
        %p1016 = pneg %p100
      $region34: #{_forward_impl.20} parent=31 // pred_check_branch
        %1018 = sbr.rel (%p1016) target = $region36
      $region35: #{_forward_impl.20} parent=31 // pred_region
        %s1019 = smul.u32 32, %s14
      $region36: #{_forward_impl.20} parent=31 // pred_fallthru
        _
    $region32: #{_forward_impl.20} parent=5 // pred_fallthru
      _
    %p1020 = scmp.le.s32.totalorder 2, %s9
    // Predicated region
    $region37: #{_forward_impl.20} parent=5 // pred_check
      %p1021 = pneg %p1020
    $region38: #{_forward_impl.20} parent=5 // pred_check_branch
      %1023 = sbr.rel (%p1021) target = $region40
    $region39: #{_forward_impl.20} parent=5 // pred_region
      %s1024 = ssub.s32 %s9, 2
      // Predicated region
      $region41: #{_forward_impl.20} parent=39 // pred_check
        %p1025 = pneg %p106
      $region42: #{_forward_impl.20} parent=39 // pred_check_branch
        %1027 = sbr.rel (%p1025) target = $region44
      $region43: #{_forward_impl.20} parent=39 // pred_region
        %s1028 = smul.u32 32, %s15
        %p1029 = scmp.lt.s32.totalorder %s1028, 63
        %s1030 = scalar_select %p1029, %s1028, 63
        %s1031 = smul.addr %s1030, 8
        %s1032 = scalar_lea.vmem %s3, %s1031
      $region44: #{_forward_impl.20} parent=39 // pred_fallthru
        _
    $region40: #{_forward_impl.20} parent=5 // pred_fallthru
      _
  $region6: #{_forward_impl.20} parent=0 // loop_footer
    %s13 = sadd.s32 1, %s9
  $region7: #{_forward_impl.20} parent=0 // loop_footer_branch
    %8 = sbr.rel target = $region3
  $region8: #{_forward_impl.20} parent=0 // loop_exit
    _

// kernel: _forward_impl.21
$region0: #{_forward_impl.21}
  #allocation0 [shape = 'u32[]', space=smem, size = 0x4, offset = 0x4, fixed_abs, tag = 'smem constant byte address 0x4 - core index']
  #allocation1 [shape = 'u32[72,128]{1,0:T(1,128)}', space=vmem, size = 0x9000, scoped, tag = 'internal scratch']
  %s0 = inlined_call_operand.vmem [shape: bf16[96,576], index: 0, kind: input, shape index: {}]
  %s1 = inlined_call_operand.vmem [shape: bf16[576,64], index: 1, kind: input, shape index: {}]
  %s2 = inlined_call_operand.vmem [shape: f32[1,64], index: 2, kind: input, shape index: {}]
  %s3 = inlined_call_operand.vmem [shape: f32[96,64], index: 3, kind: output, shape index: {}]
  %s4 = sld [smem:[#allocation0]]
  $region22: #{_forward_impl.21} parent=0
    _
  %s6 = ssub.s32 1, %s4
  %s7 = scalar_select 0, %s6, %s4
  // Predicated region
  $region2: #{_forward_impl.21} parent=0 // pred_check
    _
  $region3: #{_forward_impl.21} parent=0 // pred_check_branch
    %9 = sbr.rel (0) target = $region5
  $region4: #{_forward_impl.21} parent=0 // pred_region
    _
  $region5: #{_forward_impl.21} parent=0 // pred_fallthru
    _
  // Predicated region
  $region6: #{_forward_impl.21} parent=0 // pred_check
    _
  $region7: #{_forward_impl.21} parent=0 // pred_check_branch
    %11 = sbr.rel (0) target = $region9
  $region8: #{_forward_impl.21} parent=0 // pred_region
    _
  $region9: #{_forward_impl.21} parent=0 // pred_fallthru
    _
  // Predicated region
  $region10: #{_forward_impl.21} parent=0 // pred_check
    _
  $region11: #{_forward_impl.21} parent=0 // pred_check_branch
    %13 = sbr.rel (0) target = $region13
  $region12: #{_forward_impl.21} parent=0 // pred_region
    _
  $region13: #{_forward_impl.21} parent=0 // pred_fallthru
    _
  %v15 = vld [vmem:[%s0] sm:$0xff]
  %v16 = vld [vmem:[%s0 + $0x8] sm:$0xff]
  %v17 = vld [vmem:[%s0 + $0x10] sm:$0xf]
  %v18 = vld [vmem:[%s0 + $0x14] sm:$0xff]
  %v19 = vld [vmem:[%s0 + $0x1c] sm:$0xff]
  %v20 = vld [vmem:[%s0 + $0x24] sm:$0xf]
  %v21 = vld [vmem:[%s0 + $0x28] sm:$0xff]
  %v22 = vld [vmem:[%s0 + $0x30] sm:$0xff]
  %v23 = vld [vmem:[%s0 + $0x38] sm:$0xf]
  %v24 = vld [vmem:[%s0 + $0x3c] sm:$0xff]
  %v25 = vld [vmem:[%s0 + $0x44] sm:$0xff]
  %v26 = vld [vmem:[%s0 + $0x4c] sm:$0xf]
  %v27 = vld [vmem:[%s0 + $0x50] sm:$0xff]
  %v28 = vld [vmem:[%s0 + $0x58] sm:$0xff]
  %v29 = vld [vmem:[%s0 + $0x60] sm:$0xf]
  %v30 = vld [vmem:[%s0 + $0x64] sm:$0xff]
  %v31 = vld [vmem:[%s0 + $0x6c] sm:$0xff]
  %v32 = vld [vmem:[%s0 + $0x74] sm:$0xf]
  %v33 = vld [vmem:[%s0 + $0x78] sm:$0xff]
  %v34 = vld [vmem:[%s0 + $0x80] sm:$0xff]
  %v35 = vld [vmem:[%s0 + $0x88] sm:$0xf]
  %v36 = vld [vmem:[%s0 + $0x8c] sm:$0xff]
  %v37 = vld [vmem:[%s0 + $0x94] sm:$0xff]
  %v38 = vld [vmem:[%s0 + $0x9c] sm:$0xf]
  %v39 = vld [vmem:[%s0 + $0xa0] sm:$0xff]
  %v40 = vld [vmem:[%s0 + $0xa8] sm:$0xff]
  %v41 = vld [vmem:[%s0 + $0xb0] sm:$0xf]
  %v42 = vld [vmem:[%s0 + $0xb4] sm:$0xff]
  %v43 = vld [vmem:[%s0 + $0xbc] sm:$0xff]
  %v44 = vld [vmem:[%s0 + $0xc4] sm:$0xf]
  %v45 = vld [vmem:[%s0 + $0xc8] sm:$0xff]
  %v46 = vld [vmem:[%s0 + $0xd0] sm:$0xff]
  %v47 = vld [vmem:[%s0 + $0xd8] sm:$0xf]
  %v48 = vld [vmem:[%s0 + $0xdc] sm:$0xff]
  %v49 = vld [vmem:[%s0 + $0xe4] sm:$0xff]
  %v50 = vld [vmem:[%s0 + $0xec] sm:$0xf]
  %v51 = vld [vmem:[%s1] sm:$0xf]
  %v52 = vld [vmem:[%s1 + $0x4] sm:$0xf]
  %v53 = vld [vmem:[%s1 + $0x8] sm:$0xf]
  %v54 = vld [vmem:[%s1 + $0xc] sm:$0xf]
  %v55 = vld [vmem:[%s1 + $0x10] sm:$0xf]
  %v56 = vld [vmem:[%s1 + $0x14] sm:$0xf]
  %v57 = vld [vmem:[%s1 + $0x18] sm:$0xf]
  %v58 = vld [vmem:[%s1 + $0x1c] sm:$0xf]
  %v59 = vld [vmem:[%s1 + $0x20] sm:$0xf]
  %v60 = vld [vmem:[%s1 + $0x24] sm:$0xf]
  %v61 = vld [vmem:[%s1 + $0x28] sm:$0xf]
  %v62 = vld [vmem:[%s1 + $0x2c] sm:$0xf]
  %v63 = vld [vmem:[%s1 + $0x30] sm:$0xf]
  %v64 = vld [vmem:[%s1 + $0x34] sm:$0xf]
  %v65 = vld [vmem:[%s1 + $0x38] sm:$0xf]
  %v66 = vld [vmem:[%s1 + $0x3c] sm:$0xf]
  %v67 = vld [vmem:[%s1 + $0x40] sm:$0xf]
  %v68 = vld [vmem:[%s1 + $0x44] sm:$0xf]
  %v69 = vld [vmem:[%s1 + $0x48] sm:$0xf]
  %v70 = vld [vmem:[%s1 + $0x4c] sm:$0xf]
  %v71 = vld [vmem:[%s1 + $0x50] sm:$0xf]
  %v72 = vld [vmem:[%s1 + $0x54] sm:$0xf]
  %v73 = vld [vmem:[%s1 + $0x58] sm:$0xf]
  %v74 = vld [vmem:[%s1 + $0x5c] sm:$0xf]
  %v75 = vld [vmem:[%s1 + $0x60] sm:$0xf]
  %v76 = vld [vmem:[%s1 + $0x64] sm:$0xf]
  %v77 = vld [vmem:[%s1 + $0x68] sm:$0xf]
  %v78 = vld [vmem:[%s1 + $0x6c] sm:$0xf]
  %v79 = vld [vmem:[%s1 + $0x70] sm:$0xf]
  %v80 = vld [vmem:[%s1 + $0x74] sm:$0xf]
  %v81 = vld [vmem:[%s1 + $0x78] sm:$0xf]
  %v82 = vld [vmem:[%s1 + $0x7c] sm:$0xf]
  %v83 = vld [vmem:[%s1 + $0x80] sm:$0xf]
  %v84 = vld [vmem:[%s1 + $0x84] sm:$0xf]
  %v85 = vld [vmem:[%s1 + $0x88] sm:$0xf]
  %v86 = vld [vmem:[%s1 + $0x8c] sm:$0xf]
  %v87 = vld [vmem:[%s1 + $0x90] sm:$0xf]
  %v88 = vld [vmem:[%s1 + $0x94] sm:$0xf]
  %v89 = vld [vmem:[%s1 + $0x98] sm:$0xf]
  %v90 = vld [vmem:[%s1 + $0x9c] sm:$0xf]
  %v91 = vld [vmem:[%s1 + $0xa0] sm:$0xf]
  %v92 = vld [vmem:[%s1 + $0xa4] sm:$0xf]
  %v93 = vld [vmem:[%s1 + $0xa8] sm:$0xf]
  %v94 = vld [vmem:[%s1 + $0xac] sm:$0xf]
  %v95 = vld [vmem:[%s1 + $0xb0] sm:$0xf]
  %v96 = vld [vmem:[%s1 + $0xb4] sm:$0xf]
  %v97 = vld [vmem:[%s1 + $0xb8] sm:$0xf]
  %v98 = vld [vmem:[%s1 + $0xbc] sm:$0xf]
  %v99 = vld [vmem:[%s1 + $0xc0] sm:$0xf]
  %v100 = vld [vmem:[%s1 + $0xc4] sm:$0xf]
  %v101 = vld [vmem:[%s1 + $0xc8] sm:$0xf]
  %v102 = vld [vmem:[%s1 + $0xcc] sm:$0xf]
  %v103 = vld [vmem:[%s1 + $0xd0] sm:$0xf]
  %v104 = vld [vmem:[%s1 + $0xd4] sm:$0xf]
  %v105 = vld [vmem:[%s1 + $0xd8] sm:$0xf]
  %v106 = vld [vmem:[%s1 + $0xdc] sm:$0xf]
  %v107 = vld [vmem:[%s1 + $0xe0] sm:$0xf]
  %v108 = vld [vmem:[%s1 + $0xe4] sm:$0xf]
  %v109 = vld [vmem:[%s1 + $0xe8] sm:$0xf]
  %v110 = vld [vmem:[%s1 + $0xec] sm:$0xf]
  %v111 = vld [vmem:[%s1 + $0xf0] sm:$0xf]
  %v112 = vld [vmem:[%s1 + $0xf4] sm:$0xf]
  %v113 = vld [vmem:[%s1 + $0xf8] sm:$0xf]
  %v114 = vld [vmem:[%s1 + $0xfc] sm:$0xf]
  %v115 = vld [vmem:[%s1 + $0x100] sm:$0xf]
  %v116 = vld [vmem:[%s1 + $0x104] sm:$0xf]
  %v117 = vld [vmem:[%s1 + $0x108] sm:$0xf]
  %v118 = vld [vmem:[%s1 + $0x10c] sm:$0xf]
  %v119 = vld [vmem:[%s1 + $0x110] sm:$0xf]
  %v120 = vld [vmem:[%s1 + $0x114] sm:$0xf]
  %v121 = vld [vmem:[%s1 + $0x118] sm:$0xf]
  %v122 = vld [vmem:[%s1 + $0x11c] sm:$0xf]
  %v123 = vld [vmem:[%s2] sm:$0x1]
  %v125 = vperm.slane %v123, 0
  %v163 = vunpack.c.l.b16 %v15
  %v164 = vunpack.c.h.b16 %v15
  %v165 = vunpack.c.l.b16 %v16
  %v166 = vunpack.c.h.b16 %v16
  %v167 = vunpack.c.l.b16 %v17
  %v168 = vunpack.c.l.b16 %v18
  %v169 = vunpack.c.h.b16 %v18
  %v170 = vunpack.c.l.b16 %v19
  %v171 = vunpack.c.h.b16 %v19
  %v172 = vunpack.c.l.b16 %v20
  %v173 = vunpack.c.l.b16 %v21
  %v174 = vunpack.c.h.b16 %v21
  %v175 = vunpack.c.l.b16 %v22
  %v176 = vunpack.c.h.b16 %v22
  %v177 = vunpack.c.l.b16 %v23
  %v178 = vunpack.c.l.b16 %v24
  %v179 = vunpack.c.h.b16 %v24
  %v180 = vunpack.c.l.b16 %v25
  %v181 = vunpack.c.h.b16 %v25
  %v182 = vunpack.c.l.b16 %v26
  %v183 = vunpack.c.l.b16 %v27
  %v184 = vunpack.c.h.b16 %v27
  %v185 = vunpack.c.l.b16 %v28
  %v186 = vunpack.c.h.b16 %v28
  %v187 = vunpack.c.l.b16 %v29
  %v188 = vunpack.c.l.b16 %v30
  %v189 = vunpack.c.h.b16 %v30
  %v190 = vunpack.c.l.b16 %v31
  %v191 = vunpack.c.h.b16 %v31
  %v192 = vunpack.c.l.b16 %v32
  %v193 = vunpack.c.l.b16 %v33
  %v194 = vunpack.c.h.b16 %v33
  %v195 = vunpack.c.l.b16 %v34
  %v196 = vunpack.c.h.b16 %v34
  %v197 = vunpack.c.l.b16 %v35
  %v198 = vunpack.c.l.b16 %v36
  %v199 = vunpack.c.h.b16 %v36
  %v200 = vunpack.c.l.b16 %v37
  %v201 = vunpack.c.h.b16 %v37
  %v202 = vunpack.c.l.b16 %v38
  %v203 = vunpack.c.l.b16 %v39
  %v204 = vunpack.c.h.b16 %v39
  %v205 = vunpack.c.l.b16 %v40
  %v206 = vunpack.c.h.b16 %v40
  %v207 = vunpack.c.l.b16 %v41
  %v208 = vunpack.c.l.b16 %v42
  %v209 = vunpack.c.h.b16 %v42
  %v210 = vunpack.c.l.b16 %v43
  %v211 = vunpack.c.h.b16 %v43
  %v212 = vunpack.c.l.b16 %v44
  %v213 = vunpack.c.l.b16 %v45
  %v214 = vunpack.c.h.b16 %v45
  %v215 = vunpack.c.l.b16 %v46
  %v216 = vunpack.c.h.b16 %v46
  %v217 = vunpack.c.l.b16 %v47
  %v218 = vunpack.c.l.b16 %v48
  %v219 = vunpack.c.h.b16 %v48
  %v220 = vunpack.c.l.b16 %v49
  %v221 = vunpack.c.h.b16 %v49
  %v222 = vunpack.c.l.b16 %v50
  %v223 = vpack.c.b16 %v168, %v163
  %v224 = vpack.c.b16 %v169, %v164
  %v225 = vpack.c.b16 %v170, %v165
  %v226 = vpack.c.b16 %v171, %v166
  %v227 = vpack.c.b16 %v172, %v167
  %v228 = vpack.c.b16 %v178, %v173
  %v229 = vpack.c.b16 %v179, %v174
  %v230 = vpack.c.b16 %v180, %v175
  %v231 = vpack.c.b16 %v181, %v176
  %v232 = vpack.c.b16 %v182, %v177
  %v233 = vpack.c.b16 %v188, %v183
  %v234 = vpack.c.b16 %v189, %v184
  %v235 = vpack.c.b16 %v190, %v185
  %v236 = vpack.c.b16 %v191, %v186
  %v237 = vpack.c.b16 %v192, %v187
  %v238 = vpack.c.b16 %v198, %v193
  %v239 = vpack.c.b16 %v199, %v194
  %v240 = vpack.c.b16 %v200, %v195
  %v241 = vpack.c.b16 %v201, %v196
  %v242 = vpack.c.b16 %v202, %v197
  %v243 = vpack.c.b16 %v208, %v203
  %v244 = vpack.c.b16 %v209, %v204
  %v245 = vpack.c.b16 %v210, %v205
  %v246 = vpack.c.b16 %v211, %v206
  %v247 = vpack.c.b16 %v212, %v207
  %v248 = vpack.c.b16 %v218, %v213
  %v249 = vpack.c.b16 %v219, %v214
  %v250 = vpack.c.b16 %v220, %v215
  %v251 = vpack.c.b16 %v221, %v216
  %v252 = vpack.c.b16 %v222, %v217
  %v349 = vunpack.c.l.b16 %v51
  %v350 = vunpack.c.l.b16 %v52
  %v351 = vunpack.c.l.b16 %v53
  %v352 = vunpack.c.l.b16 %v54
  %v353 = vunpack.c.l.b16 %v55
  %v354 = vunpack.c.l.b16 %v56
  %v355 = vunpack.c.l.b16 %v57
  %v356 = vunpack.c.l.b16 %v58
  %v357 = vunpack.c.l.b16 %v59
  %v358 = vunpack.c.l.b16 %v60
  %v359 = vunpack.c.l.b16 %v61
  %v360 = vunpack.c.l.b16 %v62
  %v361 = vunpack.c.l.b16 %v63
  %v362 = vunpack.c.l.b16 %v64
  %v363 = vunpack.c.l.b16 %v65
  %v364 = vunpack.c.l.b16 %v66
  %v365 = vunpack.c.l.b16 %v67
  %v366 = vunpack.c.l.b16 %v68
  %v367 = vunpack.c.l.b16 %v69
  %v368 = vunpack.c.l.b16 %v70
  %v369 = vunpack.c.l.b16 %v71
  %v370 = vunpack.c.l.b16 %v72
  %v371 = vunpack.c.l.b16 %v73
  %v372 = vunpack.c.l.b16 %v74
  %v373 = vunpack.c.l.b16 %v75
  %v374 = vunpack.c.l.b16 %v76
  %v375 = vunpack.c.l.b16 %v77
  %v376 = vunpack.c.l.b16 %v78
  %v377 = vunpack.c.l.b16 %v79
  %v378 = vunpack.c.l.b16 %v80
  %v379 = vunpack.c.l.b16 %v81
  %v380 = vunpack.c.l.b16 %v82
  %v381 = vunpack.c.l.b16 %v83
  %v382 = vunpack.c.l.b16 %v84
  %v383 = vunpack.c.l.b16 %v85
  %v384 = vunpack.c.l.b16 %v86
  %v385 = vunpack.c.l.b16 %v87
  %v386 = vunpack.c.l.b16 %v88
  %v387 = vunpack.c.l.b16 %v89
  %v388 = vunpack.c.l.b16 %v90
  %v389 = vunpack.c.l.b16 %v91
  %v390 = vunpack.c.l.b16 %v92
  %v391 = vunpack.c.l.b16 %v93
  %v392 = vunpack.c.l.b16 %v94
  %v393 = vunpack.c.l.b16 %v95
  %v394 = vunpack.c.l.b16 %v96
  %v395 = vunpack.c.l.b16 %v97
  %v396 = vunpack.c.l.b16 %v98
  %v397 = vunpack.c.l.b16 %v99
  %v398 = vunpack.c.l.b16 %v100
  %v399 = vunpack.c.l.b16 %v101
  %v400 = vunpack.c.l.b16 %v102
  %v401 = vunpack.c.l.b16 %v103
  %v402 = vunpack.c.l.b16 %v104
  %v403 = vunpack.c.l.b16 %v105
  %v404 = vunpack.c.l.b16 %v106
  %v405 = vunpack.c.l.b16 %v107
  %v406 = vunpack.c.l.b16 %v108
  %v407 = vunpack.c.l.b16 %v109
  %v408 = vunpack.c.l.b16 %v110
  %v409 = vunpack.c.l.b16 %v111
  %v410 = vunpack.c.l.b16 %v112
  %v411 = vunpack.c.l.b16 %v113
  %v412 = vunpack.c.l.b16 %v114
  %v413 = vunpack.c.l.b16 %v115
  %v414 = vunpack.c.l.b16 %v116
  %v415 = vunpack.c.l.b16 %v117
  %v416 = vunpack.c.l.b16 %v118
  %v417 = vunpack.c.l.b16 %v119
  %v418 = vunpack.c.l.b16 %v120
  %v419 = vunpack.c.l.b16 %v121
  %v420 = vunpack.c.l.b16 %v122
  %v421 = vpack.c.b16 %v350, %v349
  %v422 = vpack.c.b16 %v352, %v351
  %v423 = vpack.c.b16 %v354, %v353
  %v424 = vpack.c.b16 %v356, %v355
  %v425 = vpack.c.b16 %v358, %v357
  %v426 = vpack.c.b16 %v360, %v359
  %v427 = vpack.c.b16 %v362, %v361
  %v428 = vpack.c.b16 %v364, %v363
  %v429 = vpack.c.b16 %v366, %v365
  %v430 = vpack.c.b16 %v368, %v367
  %v431 = vpack.c.b16 %v370, %v369
  %v432 = vpack.c.b16 %v372, %v371
  %v433 = vpack.c.b16 %v374, %v373
  %v434 = vpack.c.b16 %v376, %v375
  %v435 = vpack.c.b16 %v378, %v377
  %v436 = vpack.c.b16 %v380, %v379
  %v437 = vpack.c.b16 %v382, %v381
  %v438 = vpack.c.b16 %v384, %v383
  %v439 = vpack.c.b16 %v386, %v385
  %v440 = vpack.c.b16 %v388, %v387
  %v441 = vpack.c.b16 %v390, %v389
  %v442 = vpack.c.b16 %v392, %v391
  %v443 = vpack.c.b16 %v394, %v393
  %v444 = vpack.c.b16 %v396, %v395
  %v445 = vpack.c.b16 %v398, %v397
  %v446 = vpack.c.b16 %v400, %v399
  %v447 = vpack.c.b16 %v402, %v401
  %v448 = vpack.c.b16 %v404, %v403
  %v449 = vpack.c.b16 %v406, %v405
  %v450 = vpack.c.b16 %v408, %v407
  %v451 = vpack.c.b16 %v410, %v409
  %v452 = vpack.c.b16 %v412, %v411
  %v453 = vpack.c.b16 %v414, %v413
  %v454 = vpack.c.b16 %v416, %v415
  %v455 = vpack.c.b16 %v418, %v417
  %v456 = vpack.c.b16 %v420, %v419
  %vm493 = vcmask 523264
  %v495 = vsel %vm493, %v227, 0
  %v498 = vsel %vm493, %v232, 0
  %v501 = vsel %vm493, %v237, 0
  %v504 = vsel %vm493, %v242, 0
  %v507 = vsel %vm493, %v247, 0
  %v510 = vsel %vm493, %v252, 0
  %512 = vmatpush.bf16.msra.mxu0 %v428
  %513 = vmatpush.bf16.msra.mxu0 %v427
  %514 = vmatpush.bf16.msra.mxu0 %v426
  %515 = vmatpush.bf16.msra.mxu0 %v425
  %516 = vmatpush.bf16.msra.mxu0 %v424
  %517 = vmatpush.bf16.msra.mxu0 %v423
  %518 = vmatpush.bf16.msra.mxu0 %v422
  %519 = vmatpush.bf16.msra.mxu0 %v421
  %520 = vmatmul.bf16.gmra.mxu0 %v223
  %v521 = vpop.f32.mrf.mxu0
  %v522 = vadd.f32 %v125, %v521
  %v523 = vpop.f32.mrf.mxu0
  %v524 = vadd.f32 %v125, %v523
  %525 = vmatmul.bf16.gmra.mxu0 %v228
  %v526 = vpop.f32.mrf.mxu0
  %v527 = vadd.f32 %v125, %v526
  %v528 = vpop.f32.mrf.mxu0
  %v529 = vadd.f32 %v125, %v528
  %530 = vmatmul.bf16.gmra.mxu0 %v233
  %v531 = vpop.f32.mrf.mxu0
  %v532 = vadd.f32 %v125, %v531
  %v533 = vpop.f32.mrf.mxu0
  %v534 = vadd.f32 %v125, %v533
  %535 = vmatmul.bf16.gmra.mxu0 %v238
  %v536 = vpop.f32.mrf.mxu0
  %v537 = vadd.f32 %v125, %v536
  %v538 = vpop.f32.mrf.mxu0
  %v539 = vadd.f32 %v125, %v538
  %540 = vmatmul.bf16.gmra.mxu0 %v243
  %v541 = vpop.f32.mrf.mxu0
  %v542 = vadd.f32 %v125, %v541
  %v543 = vpop.f32.mrf.mxu0
  %v544 = vadd.f32 %v125, %v543
  %545 = vmatmul.bf16.gmra.mxu0 %v248
  %v546 = vpop.f32.mrf.mxu0
  %v547 = vadd.f32 %v125, %v546
  %v548 = vpop.f32.mrf.mxu0
  %v549 = vadd.f32 %v125, %v548
  %550 = vdwg.mxu0
  %551 = vmatpush.bf16.msra.mxu0 %v436
  %552 = vmatpush.bf16.msra.mxu0 %v435
  %553 = vmatpush.bf16.msra.mxu0 %v434
  %554 = vmatpush.bf16.msra.mxu0 %v433
  %555 = vmatpush.bf16.msra.mxu0 %v432
  %556 = vmatpush.bf16.msra.mxu0 %v431
  %557 = vmatpush.bf16.msra.mxu0 %v430
  %558 = vmatpush.bf16.msra.mxu0 %v429
  %559 = vmatmul.bf16.gmra.mxu0 %v224
  %v560 = vpop.f32.mrf.mxu0
  %v561 = vadd.f32 %v522, %v560
  %v562 = vpop.f32.mrf.mxu0
  %v563 = vadd.f32 %v524, %v562
  %564 = vmatmul.bf16.gmra.mxu0 %v229
  %v565 = vpop.f32.mrf.mxu0
  %v566 = vadd.f32 %v527, %v565
  %v567 = vpop.f32.mrf.mxu0
  %v568 = vadd.f32 %v529, %v567
  %569 = vmatmul.bf16.gmra.mxu0 %v234
  %v570 = vpop.f32.mrf.mxu0
  %v571 = vadd.f32 %v532, %v570
  %v572 = vpop.f32.mrf.mxu0
  %v573 = vadd.f32 %v534, %v572
  %574 = vmatmul.bf16.gmra.mxu0 %v239
  %v575 = vpop.f32.mrf.mxu0
  %v576 = vadd.f32 %v537, %v575
  %v577 = vpop.f32.mrf.mxu0
  %v578 = vadd.f32 %v539, %v577
  %579 = vmatmul.bf16.gmra.mxu0 %v244
  %v580 = vpop.f32.mrf.mxu0
  %v581 = vadd.f32 %v542, %v580
  %v582 = vpop.f32.mrf.mxu0
  %v583 = vadd.f32 %v544, %v582
  %584 = vmatmul.bf16.gmra.mxu0 %v249
  %v585 = vpop.f32.mrf.mxu0
  %v586 = vadd.f32 %v547, %v585
  %v587 = vpop.f32.mrf.mxu0
  %v588 = vadd.f32 %v549, %v587
  %589 = vdwg.mxu0
  %590 = vmatpush.bf16.msra.mxu0 %v444
  %591 = vmatpush.bf16.msra.mxu0 %v443
  %592 = vmatpush.bf16.msra.mxu0 %v442
  %593 = vmatpush.bf16.msra.mxu0 %v441
  %594 = vmatpush.bf16.msra.mxu0 %v440
  %595 = vmatpush.bf16.msra.mxu0 %v439
  %596 = vmatpush.bf16.msra.mxu0 %v438
  %597 = vmatpush.bf16.msra.mxu0 %v437
  %598 = vmatmul.bf16.gmra.mxu0 %v225
  %v599 = vpop.f32.mrf.mxu0
  %v600 = vadd.f32 %v561, %v599
  %v601 = vpop.f32.mrf.mxu0
  %v602 = vadd.f32 %v563, %v601
  %603 = vmatmul.bf16.gmra.mxu0 %v230
  %v604 = vpop.f32.mrf.mxu0
  %v605 = vadd.f32 %v566, %v604
  %v606 = vpop.f32.mrf.mxu0
  %v607 = vadd.f32 %v568, %v606
  %608 = vmatmul.bf16.gmra.mxu0 %v235
  %v609 = vpop.f32.mrf.mxu0
  %v610 = vadd.f32 %v571, %v609
  %v611 = vpop.f32.mrf.mxu0
  %v612 = vadd.f32 %v573, %v611
  %613 = vmatmul.bf16.gmra.mxu0 %v240
  %v614 = vpop.f32.mrf.mxu0
  %v615 = vadd.f32 %v576, %v614
  %v616 = vpop.f32.mrf.mxu0
  %v617 = vadd.f32 %v578, %v616
  %618 = vmatmul.bf16.gmra.mxu0 %v245
  %v619 = vpop.f32.mrf.mxu0
  %v620 = vadd.f32 %v581, %v619
  %v621 = vpop.f32.mrf.mxu0
  %v622 = vadd.f32 %v583, %v621
  %623 = vmatmul.bf16.gmra.mxu0 %v250
  %v624 = vpop.f32.mrf.mxu0
  %v625 = vadd.f32 %v586, %v624
  %v626 = vpop.f32.mrf.mxu0
  %v627 = vadd.f32 %v588, %v626
  %628 = vdwg.mxu0
  %629 = vmatpush.bf16.msra.mxu0 %v452
  %630 = vmatpush.bf16.msra.mxu0 %v451
  %631 = vmatpush.bf16.msra.mxu0 %v450
  %632 = vmatpush.bf16.msra.mxu0 %v449
  %633 = vmatpush.bf16.msra.mxu0 %v448
  %634 = vmatpush.bf16.msra.mxu0 %v447
  %635 = vmatpush.bf16.msra.mxu0 %v446
  %636 = vmatpush.bf16.msra.mxu0 %v445
  %637 = vmatmul.bf16.gmra.mxu0 %v226
  %v638 = vpop.f32.mrf.mxu0
  %v639 = vadd.f32 %v600, %v638
  %v640 = vpop.f32.mrf.mxu0
  %v641 = vadd.f32 %v602, %v640
  %642 = vmatmul.bf16.gmra.mxu0 %v231
  %v643 = vpop.f32.mrf.mxu0
  %v644 = vadd.f32 %v605, %v643
  %v645 = vpop.f32.mrf.mxu0
  %v646 = vadd.f32 %v607, %v645
  %647 = vmatmul.bf16.gmra.mxu0 %v236
  %v648 = vpop.f32.mrf.mxu0
  %v649 = vadd.f32 %v610, %v648
  %v650 = vpop.f32.mrf.mxu0
  %v651 = vadd.f32 %v612, %v650
  %652 = vmatmul.bf16.gmra.mxu0 %v241
  %v653 = vpop.f32.mrf.mxu0
  %v654 = vadd.f32 %v615, %v653
  %v655 = vpop.f32.mrf.mxu0
  %v656 = vadd.f32 %v617, %v655
  %657 = vmatmul.bf16.gmra.mxu0 %v246
  %v658 = vpop.f32.mrf.mxu0
  %v659 = vadd.f32 %v620, %v658
  %v660 = vpop.f32.mrf.mxu0
  %v661 = vadd.f32 %v622, %v660
  %662 = vmatmul.bf16.gmra.mxu0 %v251
  %v663 = vpop.f32.mrf.mxu0
  %v664 = vadd.f32 %v625, %v663
  %v665 = vpop.f32.mrf.mxu0
  %v666 = vadd.f32 %v627, %v665
  %667 = vdwg.mxu0
  %668 = vmatpush.bf16.msra.mxu0 0
  %669 = vmatpush.bf16.msra.mxu0 0
  %670 = vmatpush.bf16.msra.mxu0 0
  %671 = vmatpush.bf16.msra.mxu0 0
  %672 = vmatpush.bf16.msra.mxu0 %v456
  %673 = vmatpush.bf16.msra.mxu0 %v455
  %674 = vmatpush.bf16.msra.mxu0 %v454
  %675 = vmatpush.bf16.msra.mxu0 %v453
  %676 = vmatmul.bf16.gmra.mxu0 %v495
  %v677 = vpop.f32.mrf.mxu0
  %v678 = vadd.f32 %v639, %v677
  %v679 = vpop.f32.mrf.mxu0
  %v680 = vadd.f32 %v641, %v679
  %681 = vmatmul.bf16.gmra.mxu0 %v498
  %v682 = vpop.f32.mrf.mxu0
  %v683 = vadd.f32 %v644, %v682
  %v684 = vpop.f32.mrf.mxu0
  %v685 = vadd.f32 %v646, %v684
  %686 = vmatmul.bf16.gmra.mxu0 %v501
  %v687 = vpop.f32.mrf.mxu0
  %v688 = vadd.f32 %v649, %v687
  %v689 = vpop.f32.mrf.mxu0
  %v690 = vadd.f32 %v651, %v689
  %691 = vmatmul.bf16.gmra.mxu0 %v504
  %v692 = vpop.f32.mrf.mxu0
  %v693 = vadd.f32 %v654, %v692
  %v694 = vpop.f32.mrf.mxu0
  %v695 = vadd.f32 %v656, %v694
  %696 = vmatmul.bf16.gmra.mxu0 %v507
  %v697 = vpop.f32.mrf.mxu0
  %v698 = vadd.f32 %v659, %v697
  %v699 = vpop.f32.mrf.mxu0
  %v700 = vadd.f32 %v661, %v699
  %701 = vmatmul.bf16.gmra.mxu0 %v510
  %v702 = vpop.f32.mrf.mxu0
  %v703 = vadd.f32 %v664, %v702
  %v704 = vpop.f32.mrf.mxu0
  %v705 = vadd.f32 %v666, %v704
  %706 = vdwg.mxu0
  %v707 = vmax.f32 %v678, 0.0
  %v708 = vmax.f32 %v680, 0.0
  %v709 = vmax.f32 %v683, 0.0
  %v710 = vmax.f32 %v685, 0.0
  %v711 = vmax.f32 %v688, 0.0
  %v712 = vmax.f32 %v690, 0.0
  %v713 = vmax.f32 %v693, 0.0
  %v714 = vmax.f32 %v695, 0.0
  %v715 = vmax.f32 %v698, 0.0
  %v716 = vmax.f32 %v700, 0.0
  %v717 = vmax.f32 %v703, 0.0
  %v718 = vmax.f32 %v705, 0.0
  %719 = vst.msk [vmem:[%s3] sm:$0xff] %vm493, %v707
  %720 = vst.msk [vmem:[%s3 + $0x8] sm:$0xff] %vm493, %v708
  %721 = vst.msk [vmem:[%s3 + $0x10] sm:$0xff] %vm493, %v709
  %722 = vst.msk [vmem:[%s3 + $0x18] sm:$0xff] %vm493, %v710
  %723 = vst.msk [vmem:[%s3 + $0x20] sm:$0xff] %vm493, %v711
  %724 = vst.msk [vmem:[%s3 + $0x28] sm:$0xff] %vm493, %v712
  %725 = vst.msk [vmem:[%s3 + $0x30] sm:$0xff] %vm493, %v713
  %726 = vst.msk [vmem:[%s3 + $0x38] sm:$0xff] %vm493, %v714
  %727 = vst.msk [vmem:[%s3 + $0x40] sm:$0xff] %vm493, %v715
  %728 = vst.msk [vmem:[%s3 + $0x48] sm:$0xff] %vm493, %v716
  %729 = vst.msk [vmem:[%s3 + $0x50] sm:$0xff] %vm493, %v717
  %730 = vst.msk [vmem:[%s3 + $0x58] sm:$0xff] %vm493, %v718
  // Predicated region
  $region14: #{_forward_impl.21} parent=0 // pred_check
    _
  $region15: #{_forward_impl.21} parent=0 // pred_check_branch
    %732 = sbr.rel (0) target = $region17
  $region16: #{_forward_impl.21} parent=0 // pred_region
    _
  $region17: #{_forward_impl.21} parent=0 // pred_fallthru
    _
  // Predicated region
  $region18: #{_forward_impl.21} parent=0 // pred_check
    _
  $region19: #{_forward_impl.21} parent=0 // pred_check_branch
    %734 = sbr.rel (0) target = $region21
  $region20: #{_forward_impl.21} parent=0 // pred_region
    _
  $region21: #{_forward_impl.21} parent=0 // pred_fallthru
    _

// kernel: _forward_impl.22
$region0: #{_forward_impl.22}
  #allocation0 [shape = 'u32[]', space=smem, size = 0x4, offset = 0x4, fixed_abs, tag = 'smem constant byte address 0x4 - core index']
  #allocation1 [shape = 'u32[72,128]{1,0:T(1,128)}', space=vmem, size = 0x9000, scoped, tag = 'internal scratch']
  %s0 = inlined_call_operand.vmem [shape: bf16[96,64], index: 0, kind: input, shape index: {}]
  %s1 = inlined_call_operand.vmem [shape: bf16[64,259], index: 1, kind: input, shape index: {}]
  %s2 = inlined_call_operand.vmem [shape: f32[1,259], index: 2, kind: input, shape index: {}]
  %s3 = inlined_call_operand.vmem [shape: f32[96,259], index: 3, kind: output, shape index: {}]
  %s4 = sld [smem:[#allocation0]]
  $region22: #{_forward_impl.22} parent=0
    _
  %s6 = ssub.s32 1, %s4
  %s7 = scalar_select 0, %s6, %s4
  // Predicated region
  $region2: #{_forward_impl.22} parent=0 // pred_check
    _
  $region3: #{_forward_impl.22} parent=0 // pred_check_branch
    %9 = sbr.rel (0) target = $region5
  $region4: #{_forward_impl.22} parent=0 // pred_region
    _
  $region5: #{_forward_impl.22} parent=0 // pred_fallthru
    _
  // Predicated region
  $region6: #{_forward_impl.22} parent=0 // pred_check
    _
  $region7: #{_forward_impl.22} parent=0 // pred_check_branch
    %11 = sbr.rel (0) target = $region9
  $region8: #{_forward_impl.22} parent=0 // pred_region
    _
  $region9: #{_forward_impl.22} parent=0 // pred_fallthru
    _
  // Predicated region
  $region10: #{_forward_impl.22} parent=0 // pred_check
    _
  $region11: #{_forward_impl.22} parent=0 // pred_check_branch
    %13 = sbr.rel (0) target = $region13
  $region12: #{_forward_impl.22} parent=0 // pred_region
    _
  $region13: #{_forward_impl.22} parent=0 // pred_fallthru
    _
  %v15 = vld [vmem:[%s0] sm:$0xf]
  %v16 = vld [vmem:[%s0 + $0x4] sm:$0xf]
  %v17 = vld [vmem:[%s0 + $0x8] sm:$0xf]
  %v18 = vld [vmem:[%s0 + $0xc] sm:$0xf]
  %v19 = vld [vmem:[%s0 + $0x10] sm:$0xf]
  %v20 = vld [vmem:[%s0 + $0x14] sm:$0xf]
  %v21 = vld [vmem:[%s0 + $0x18] sm:$0xf]
  %v22 = vld [vmem:[%s0 + $0x1c] sm:$0xf]
  %v23 = vld [vmem:[%s0 + $0x20] sm:$0xf]
  %v24 = vld [vmem:[%s0 + $0x24] sm:$0xf]
  %v25 = vld [vmem:[%s0 + $0x28] sm:$0xf]
  %v26 = vld [vmem:[%s0 + $0x2c] sm:$0xf]
  %v27 = vld [vmem:[%s1] sm:$0xff]
  %v28 = vld [vmem:[%s1 + $0x8] sm:$0xf]
  %v29 = vld [vmem:[%s1 + $0xc] sm:$0xff]
  %v30 = vld [vmem:[%s1 + $0x14] sm:$0xf]
  %v31 = vld [vmem:[%s1 + $0x18] sm:$0xff]
  %v32 = vld [vmem:[%s1 + $0x20] sm:$0xf]
  %v33 = vld [vmem:[%s1 + $0x24] sm:$0xff]
  %v34 = vld [vmem:[%s1 + $0x2c] sm:$0xf]
  %v35 = vld [vmem:[%s1 + $0x30] sm:$0xff]
  %v36 = vld [vmem:[%s1 + $0x38] sm:$0xf]
  %v37 = vld [vmem:[%s1 + $0x3c] sm:$0xff]
  %v38 = vld [vmem:[%s1 + $0x44] sm:$0xf]
  %v39 = vld [vmem:[%s1 + $0x48] sm:$0xff]
  %v40 = vld [vmem:[%s1 + $0x50] sm:$0xf]
  %v41 = vld [vmem:[%s1 + $0x54] sm:$0xff]
  %v42 = vld [vmem:[%s1 + $0x5c] sm:$0xf]
  %v43 = vld [vmem:[%s2] sm:$0x7]
  %v45 = vperm.slane %v43, 0
  %v46 = vperm.slane %v43, 1
  %v47 = vperm.slane %v43, 2
  %v63 = vunpack.c.l.b16 %v15
  %v64 = vunpack.c.l.b16 %v16
  %v65 = vunpack.c.l.b16 %v17
  %v66 = vunpack.c.l.b16 %v18
  %v67 = vunpack.c.l.b16 %v19
  %v68 = vunpack.c.l.b16 %v20
  %v69 = vunpack.c.l.b16 %v21
  %v70 = vunpack.c.l.b16 %v22
  %v71 = vunpack.c.l.b16 %v23
  %v72 = vunpack.c.l.b16 %v24
  %v73 = vunpack.c.l.b16 %v25
  %v74 = vunpack.c.l.b16 %v26
  %v75 = vpack.c.b16 %v64, %v63
  %v76 = vpack.c.b16 %v66, %v65
  %v77 = vpack.c.b16 %v68, %v67
  %v78 = vpack.c.b16 %v70, %v69
  %v79 = vpack.c.b16 %v72, %v71
  %v80 = vpack.c.b16 %v74, %v73
  %v97 = vunpack.c.l.b16 %v27
  %v98 = vunpack.c.h.b16 %v27
  %v99 = vunpack.c.l.b16 %v28
  %v100 = vunpack.c.l.b16 %v29
  %v101 = vunpack.c.h.b16 %v29
  %v102 = vunpack.c.l.b16 %v30
  %v103 = vunpack.c.l.b16 %v31
  %v104 = vunpack.c.h.b16 %v31
  %v105 = vunpack.c.l.b16 %v32
  %v106 = vunpack.c.l.b16 %v33
  %v107 = vunpack.c.h.b16 %v33
  %v108 = vunpack.c.l.b16 %v34
  %v109 = vunpack.c.l.b16 %v35
  %v110 = vunpack.c.h.b16 %v35
  %v111 = vunpack.c.l.b16 %v36
  %v112 = vunpack.c.l.b16 %v37
  %v113 = vunpack.c.h.b16 %v37
  %v114 = vunpack.c.l.b16 %v38
  %v115 = vunpack.c.l.b16 %v39
  %v116 = vunpack.c.h.b16 %v39
  %v117 = vunpack.c.l.b16 %v40
  %v118 = vunpack.c.l.b16 %v41
  %v119 = vunpack.c.h.b16 %v41
  %v120 = vunpack.c.l.b16 %v42
  %v121 = vpack.c.b16 %v100, %v97
  %v122 = vpack.c.b16 %v101, %v98
  %v123 = vpack.c.b16 %v102, %v99
  %v124 = vpack.c.b16 %v106, %v103
  %v125 = vpack.c.b16 %v107, %v104
  %v126 = vpack.c.b16 %v108, %v105
  %v127 = vpack.c.b16 %v112, %v109
  %v128 = vpack.c.b16 %v113, %v110
  %v129 = vpack.c.b16 %v114, %v111
  %v130 = vpack.c.b16 %v118, %v115
  %v131 = vpack.c.b16 %v119, %v116
  %v132 = vpack.c.b16 %v120, %v117
  %vm145 = vcmask 523264
  %v147 = vsel %vm145, %v75, 0
  %v150 = vsel %vm145, %v76, 0
  %v153 = vsel %vm145, %v77, 0
  %v156 = vsel %vm145, %v78, 0
  %v159 = vsel %vm145, %v79, 0
  %v162 = vsel %vm145, %v80, 0
  %164 = vmatpush.bf16.msra.mxu0 0
  %165 = vmatpush.bf16.msra.mxu0 0
  %166 = vmatpush.bf16.msra.mxu0 0
  %167 = vmatpush.bf16.msra.mxu0 0
  %168 = vmatpush.bf16.msra.mxu0 %v130
  %169 = vmatpush.bf16.msra.mxu0 %v127
  %170 = vmatpush.bf16.msra.mxu0 %v124
  %171 = vmatpush.bf16.msra.mxu0 %v121
  %172 = vmatmul.bf16.gmra.mxu0 %v147
  %v173 = vpop.f32.mrf.mxu0
  %v174 = vadd.f32 %v45, %v173
  %v175 = vpop.f32.mrf.mxu0
  %v176 = vadd.f32 %v45, %v175
  %177 = vmatmul.bf16.gmra.mxu0 %v150
  %v178 = vpop.f32.mrf.mxu0
  %v179 = vadd.f32 %v45, %v178
  %v180 = vpop.f32.mrf.mxu0
  %v181 = vadd.f32 %v45, %v180
  %182 = vmatmul.bf16.gmra.mxu0 %v153
  %v183 = vpop.f32.mrf.mxu0
  %v184 = vadd.f32 %v45, %v183
  %v185 = vpop.f32.mrf.mxu0
  %v186 = vadd.f32 %v45, %v185
  %187 = vmatmul.bf16.gmra.mxu0 %v156
  %v188 = vpop.f32.mrf.mxu0
  %v189 = vadd.f32 %v45, %v188
  %v190 = vpop.f32.mrf.mxu0
  %v191 = vadd.f32 %v45, %v190
  %192 = vmatmul.bf16.gmra.mxu0 %v159
  %v193 = vpop.f32.mrf.mxu0
  %v194 = vadd.f32 %v45, %v193
  %v195 = vpop.f32.mrf.mxu0
  %v196 = vadd.f32 %v45, %v195
  %197 = vmatmul.bf16.gmra.mxu0 %v162
  %v198 = vpop.f32.mrf.mxu0
  %v199 = vadd.f32 %v45, %v198
  %v200 = vpop.f32.mrf.mxu0
  %v201 = vadd.f32 %v45, %v200
  %202 = vdwg.mxu0
  %203 = vmatpush.bf16.msra.mxu0 0
  %204 = vmatpush.bf16.msra.mxu0 0
  %205 = vmatpush.bf16.msra.mxu0 0
  %206 = vmatpush.bf16.msra.mxu0 0
  %207 = vmatpush.bf16.msra.mxu0 %v131
  %208 = vmatpush.bf16.msra.mxu0 %v128
  %209 = vmatpush.bf16.msra.mxu0 %v125
  %210 = vmatpush.bf16.msra.mxu0 %v122
  %211 = vmatmul.bf16.gmra.mxu0 %v147
  %v212 = vpop.f32.mrf.mxu0
  %v213 = vadd.f32 %v46, %v212
  %v214 = vpop.f32.mrf.mxu0
  %v215 = vadd.f32 %v46, %v214
  %216 = vmatmul.bf16.gmra.mxu0 %v150
  %v217 = vpop.f32.mrf.mxu0
  %v218 = vadd.f32 %v46, %v217
  %v219 = vpop.f32.mrf.mxu0
  %v220 = vadd.f32 %v46, %v219
  %221 = vmatmul.bf16.gmra.mxu0 %v153
  %v222 = vpop.f32.mrf.mxu0
  %v223 = vadd.f32 %v46, %v222
  %v224 = vpop.f32.mrf.mxu0
  %v225 = vadd.f32 %v46, %v224
  %226 = vmatmul.bf16.gmra.mxu0 %v156
  %v227 = vpop.f32.mrf.mxu0
  %v228 = vadd.f32 %v46, %v227
  %v229 = vpop.f32.mrf.mxu0
  %v230 = vadd.f32 %v46, %v229
  %231 = vmatmul.bf16.gmra.mxu0 %v159
  %v232 = vpop.f32.mrf.mxu0
  %v233 = vadd.f32 %v46, %v232
  %v234 = vpop.f32.mrf.mxu0
  %v235 = vadd.f32 %v46, %v234
  %236 = vmatmul.bf16.gmra.mxu0 %v162
  %v237 = vpop.f32.mrf.mxu0
  %v238 = vadd.f32 %v46, %v237
  %v239 = vpop.f32.mrf.mxu0
  %v240 = vadd.f32 %v46, %v239
  %241 = vdwg.mxu0
  %242 = vmatpush.bf16.msra.mxu0 0
  %243 = vmatpush.bf16.msra.mxu0 0
  %244 = vmatpush.bf16.msra.mxu0 0
  %245 = vmatpush.bf16.msra.mxu0 0
  %246 = vmatpush.bf16.msra.mxu0 %v132
  %247 = vmatpush.bf16.msra.mxu0 %v129
  %248 = vmatpush.bf16.msra.mxu0 %v126
  %249 = vmatpush.bf16.msra.mxu0 %v123
  %250 = vmatmul.bf16.gmra.mxu0 %v147
  %v251 = vpop.f32.mrf.mxu0
  %v252 = vadd.f32 %v47, %v251
  %v253 = vpop.f32.mrf.mxu0
  %v254 = vadd.f32 %v47, %v253
  %255 = vmatmul.bf16.gmra.mxu0 %v150
  %v256 = vpop.f32.mrf.mxu0
  %v257 = vadd.f32 %v47, %v256
  %v258 = vpop.f32.mrf.mxu0
  %v259 = vadd.f32 %v47, %v258
  %260 = vmatmul.bf16.gmra.mxu0 %v153
  %v261 = vpop.f32.mrf.mxu0
  %v262 = vadd.f32 %v47, %v261
  %v263 = vpop.f32.mrf.mxu0
  %v264 = vadd.f32 %v47, %v263
  %265 = vmatmul.bf16.gmra.mxu0 %v156
  %v266 = vpop.f32.mrf.mxu0
  %v267 = vadd.f32 %v47, %v266
  %v268 = vpop.f32.mrf.mxu0
  %v269 = vadd.f32 %v47, %v268
  %270 = vmatmul.bf16.gmra.mxu0 %v159
  %v271 = vpop.f32.mrf.mxu0
  %v272 = vadd.f32 %v47, %v271
  %v273 = vpop.f32.mrf.mxu0
  %v274 = vadd.f32 %v47, %v273
  %275 = vmatmul.bf16.gmra.mxu0 %v162
  %v276 = vpop.f32.mrf.mxu0
  %v277 = vadd.f32 %v47, %v276
  %v278 = vpop.f32.mrf.mxu0
  %v279 = vadd.f32 %v47, %v278
  %280 = vdwg.mxu0
  %281 = vst [vmem:[%s3] sm:$0xff] %v174
  %282 = vst [vmem:[%s3 + $0x8] sm:$0xff] %v213
  %vm283 = vcmask 23552
  %284 = vst.msk [vmem:[%s3 + $0x10] sm:$0xff] %vm283, %v252
  %285 = vst [vmem:[%s3 + $0x18] sm:$0xff] %v176
  %286 = vst [vmem:[%s3 + $0x20] sm:$0xff] %v215
  %287 = vst.msk [vmem:[%s3 + $0x28] sm:$0xff] %vm283, %v254
  %288 = vst [vmem:[%s3 + $0x30] sm:$0xff] %v179
  %289 = vst [vmem:[%s3 + $0x38] sm:$0xff] %v218
  %290 = vst.msk [vmem:[%s3 + $0x40] sm:$0xff] %vm283, %v257
  %291 = vst [vmem:[%s3 + $0x48] sm:$0xff] %v181
  %292 = vst [vmem:[%s3 + $0x50] sm:$0xff] %v220
  %293 = vst.msk [vmem:[%s3 + $0x58] sm:$0xff] %vm283, %v259
  %294 = vst [vmem:[%s3 + $0x60] sm:$0xff] %v184
  %295 = vst [vmem:[%s3 + $0x68] sm:$0xff] %v223
  %296 = vst.msk [vmem:[%s3 + $0x70] sm:$0xff] %vm283, %v262
  %297 = vst [vmem:[%s3 + $0x78] sm:$0xff] %v186
  %298 = vst [vmem:[%s3 + $0x80] sm:$0xff] %v225
  %299 = vst.msk [vmem:[%s3 + $0x88] sm:$0xff] %vm283, %v264
  %300 = vst [vmem:[%s3 + $0x90] sm:$0xff] %v189
  %301 = vst [vmem:[%s3 + $0x98] sm:$0xff] %v228
  %302 = vst.msk [vmem:[%s3 + $0xa0] sm:$0xff] %vm283, %v267
  %303 = vst [vmem:[%s3 + $0xa8] sm:$0xff] %v191
  %304 = vst [vmem:[%s3 + $0xb0] sm:$0xff] %v230
  %305 = vst.msk [vmem:[%s3 + $0xb8] sm:$0xff] %vm283, %v269
  %306 = vst [vmem:[%s3 + $0xc0] sm:$0xff] %v194
  %307 = vst [vmem:[%s3 + $0xc8] sm:$0xff] %v233
  %308 = vst.msk [vmem:[%s3 + $0xd0] sm:$0xff] %vm283, %v272
  %309 = vst [vmem:[%s3 + $0xd8] sm:$0xff] %v196
  %310 = vst [vmem:[%s3 + $0xe0] sm:$0xff] %v235
  %311 = vst.msk [vmem:[%s3 + $0xe8] sm:$0xff] %vm283, %v274
  %312 = vst [vmem:[%s3 + $0xf0] sm:$0xff] %v199
  %313 = vst [vmem:[%s3 + $0xf8] sm:$0xff] %v238
  %314 = vst.msk [vmem:[%s3 + $0x100] sm:$0xff] %vm283, %v277
  %315 = vst [vmem:[%s3 + $0x108] sm:$0xff] %v201
  %316 = vst [vmem:[%s3 + $0x110] sm:$0xff] %v240
  %317 = vst.msk [vmem:[%s3 + $0x118] sm:$0xff] %vm283, %v279
  // Predicated region
  $region14: #{_forward_impl.22} parent=0 // pred_check
    _
  $region15: #{_forward_impl.22} parent=0 // pred_check_branch
    %319 = sbr.rel (0) target = $region17
  $region16: #{_forward_impl.22} parent=0 // pred_region
    _
  $region17: #{_forward_impl.22} parent=0 // pred_fallthru
    _
  // Predicated region
  $region18: #{_forward_impl.22} parent=0 // pred_check
    _
  $region19: #{_forward_impl.22} parent=0 // pred_check_branch
    %321 = sbr.rel (0) target = $region21
  $region20: #{_forward_impl.22} parent=0 // pred_region
    _
  $region21: #{_forward_impl.22} parent=0 // pred_fallthru
    _

// kernel: _forward_impl.23
$region0: #{_forward_impl.23}
  #allocation0 [shape = 'u32[]', space=smem, size = 0x4, offset = 0x4, fixed_abs, tag = 'smem constant byte address 0x4 - core index']
  #allocation1 [shape = 'u32[72,128]{1,0:T(1,128)}', space=vmem, size = 0x9000, scoped, tag = 'internal scratch']
  %s0 = inlined_call_operand.vmem [shape: bf16[4,16,256], index: 0, kind: input, shape index: {}]
  %s1 = inlined_call_operand.vmem [shape: bf16[4,16,256], index: 1, kind: input, shape index: {}]
  %s2 = inlined_call_operand.vmem [shape: f32[4,16,16], index: 2, kind: output, shape index: {}]
  %s3 = sld [smem:[#allocation0]]
  $region41: #{_forward_impl.23} parent=0
    _
  %s5 = ssub.s32 1, %s3
  %s6 = scalar_select 0, %s5, %s3
  loop: start=0, step=1, limit=6
  $region2: #{_forward_impl.23} parent=0 // loop_pre_header
    _
  $region3: #{_forward_impl.23} parent=0 // loop_header
    %s8 = sphi 0, %s12
    %p9 = scmp.ge.s32.totalorder %s8, 6
    %s18 = sphi 0, %s20
    %s21 = sphi 0, %s18
    %s22 = sphi 0, %s21
    %s38 = sphi 0, %s22
    %s44 = sphi 0, %s46
    %s47 = sphi 0, %s44
    %s48 = sphi 0, %s47
    %s64 = sphi 0, %s48
    %s70 = sphi 0, %s72
    %s73 = sphi 0, %s70
    %s74 = sphi 0, %s73
    %s90 = sphi 0, %s74
  $region4: #{_forward_impl.23} parent=0 // loop_header_branch
    %11 = sbr.rel (%p9) target = $region8
  $region5: #{_forward_impl.23} parent=0 // loop_body
    %s13 = ssub.s32 %s8, 1
    %s14 = ssub.s32 %s8, 2
    %s15 = sadd.s32 %s8, 1
    %s16 = ssub.s32 %s8, %s15
    %p17 = scmp.eq.s32.totalorder %s16, 0
    %s19 = sadd.s32 %s18, 1
    %s20 = scalar_select %p17, %s18, %s19
    %p23 = pneg %p17
    %p24 = scmp.eq.s32.totalorder %s8, 3
    %p25 = por %p23, %p24
    %p26 = scmp.ne.s32.totalorder %s18, %s21
    %p27 = scmp.eq.s32.totalorder %s8, 0
    %p28 = por %p26, %p27
    %p29 = scmp.ne.s32.totalorder %s18, %s21
    %p30 = scmp.eq.s32.totalorder %s13, 3
    %p31 = por %p29, %p30
    %p32 = scmp.ne.s32.totalorder %s21, %s22
    %p33 = scmp.eq.s32.totalorder %s13, 0
    %p34 = por %p32, %p33
    %p35 = scmp.ne.s32.totalorder %s21, %s22
    %p36 = scmp.eq.s32.totalorder %s14, 3
    %p37 = por %p35, %p36
    %p39 = scmp.ne.s32.totalorder %s22, %s38
    %p40 = scmp.eq.s32.totalorder %s14, 0
    %p41 = por %p39, %p40
    %s42 = ssub.s32 %s8, %s15
    %p43 = scmp.eq.s32.totalorder %s42, 0
    %s45 = sadd.s32 %s44, 1
    %s46 = scalar_select %p43, %s44, %s45
    %p49 = pneg %p43
    %p50 = scmp.eq.s32.totalorder %s8, 3
    %p51 = por %p49, %p50
    %p52 = scmp.ne.s32.totalorder %s44, %s47
    %p53 = scmp.eq.s32.totalorder %s8, 0
    %p54 = por %p52, %p53
    %p55 = scmp.ne.s32.totalorder %s44, %s47
    %p56 = scmp.eq.s32.totalorder %s13, 3
    %p57 = por %p55, %p56
    %p58 = scmp.ne.s32.totalorder %s47, %s48
    %p59 = scmp.eq.s32.totalorder %s13, 0
    %p60 = por %p58, %p59
    %p61 = scmp.ne.s32.totalorder %s47, %s48
    %p62 = scmp.eq.s32.totalorder %s14, 3
    %p63 = por %p61, %p62
    %p65 = scmp.ne.s32.totalorder %s48, %s64
    %p66 = scmp.eq.s32.totalorder %s14, 0
    %p67 = por %p65, %p66
    %s68 = ssub.s32 %s8, %s15
    %p69 = scmp.eq.s32.totalorder %s68, 0
    %s71 = sadd.s32 %s70, 1
    %s72 = scalar_select %p69, %s70, %s71
    %p75 = pneg %p69
    %p76 = scmp.eq.s32.totalorder %s8, 3
    %p77 = por %p75, %p76
    %p78 = scmp.ne.s32.totalorder %s70, %s73
    %p79 = scmp.eq.s32.totalorder %s8, 0
    %p80 = por %p78, %p79
    %p81 = scmp.ne.s32.totalorder %s70, %s73
    %p82 = scmp.eq.s32.totalorder %s13, 3
    %p83 = por %p81, %p82
    %p84 = scmp.ne.s32.totalorder %s73, %s74
    %p85 = scmp.eq.s32.totalorder %s13, 0
    %p86 = por %p84, %p85
    %p87 = scmp.ne.s32.totalorder %s73, %s74
    %p88 = scmp.eq.s32.totalorder %s14, 3
    %p89 = por %p87, %p88
    %p91 = scmp.ne.s32.totalorder %s74, %s90
    %p92 = scmp.eq.s32.totalorder %s14, 0
    %p93 = por %p91, %p92
    %p94 = scmp.le.s32.totalorder 1, %s8
    %p95 = scmp.lt.s32.totalorder %s8, 5
    %p96 = pnand %p94, %p95
    %p97 = pneg %p96
    // Predicated region
    $region9: #{_forward_impl.23} parent=5 // pred_check
      _
    $region10: #{_forward_impl.23} parent=5 // pred_check_branch
      %99 = sbr.rel (%p96) target = $region12
    $region11: #{_forward_impl.23} parent=5 // pred_region
      %s100 = ssub.s32 %s8, 1
    $region12: #{_forward_impl.23} parent=5 // pred_fallthru
      _
    %p101 = scmp.lt.s32.totalorder %s8, 4
    // Predicated region
    $region13: #{_forward_impl.23} parent=5 // pred_check
      %p102 = pneg %p101
    $region14: #{_forward_impl.23} parent=5 // pred_check_branch
      %104 = sbr.rel (%p102) target = $region16
    $region15: #{_forward_impl.23} parent=5 // pred_region
      // Predicated region
      $region17: #{_forward_impl.23} parent=15 // pred_check
        %p105 = pneg %p28
      $region18: #{_forward_impl.23} parent=15 // pred_check_branch
        %107 = sbr.rel (%p105) target = $region20
      $region19: #{_forward_impl.23} parent=15 // pred_region
        %p108 = scmp.lt.s32.totalorder %s8, 3
        %s109 = scalar_select %p108, %s8, 3
        %s110 = smul.addr %s109, 4
        %s111 = smul.addr %s110, 4
        %s112 = scalar_lea.vmem %s0, %s111
      $region20: #{_forward_impl.23} parent=15 // pred_fallthru
        _
      // Predicated region
      $region21: #{_forward_impl.23} parent=15 // pred_check
        %p113 = pneg %p54
      $region22: #{_forward_impl.23} parent=15 // pred_check_branch
        %115 = sbr.rel (%p113) target = $region24
      $region23: #{_forward_impl.23} parent=15 // pred_region
        %p116 = scmp.lt.s32.totalorder %s8, 3
        %s117 = scalar_select %p116, %s8, 3
        %s118 = smul.addr %s117, 4
        %s119 = smul.addr %s118, 4
        %s120 = scalar_lea.vmem %s1, %s119
      $region24: #{_forward_impl.23} parent=15 // pred_fallthru
        _
    $region16: #{_forward_impl.23} parent=5 // pred_fallthru
      _
    %p121 = scmp.le.s32.totalorder 1, %s8
    %p122 = scmp.lt.s32.totalorder %s8, 5
    %p123 = pnand %p121, %p122
    %p124 = pneg %p123
    // Predicated region
    $region25: #{_forward_impl.23} parent=5 // pred_check
      _
    $region26: #{_forward_impl.23} parent=5 // pred_check_branch
      %126 = sbr.rel (%p123) target = $region28
    $region27: #{_forward_impl.23} parent=5 // pred_region
      %s127 = ssub.s32 %s8, 1
      %p128 = scmp.lt.s32.totalorder %s13, 3
      %s129 = scalar_select %p128, %s13, 3
      %s130 = smul.addr %s129, 4
      %s131 = smul.addr %s130, 4
      %s132 = scalar_lea.vmem %s0, %s131
      %p133 = pneg %p34
      %p134 = pneg %p31
      %p135 = scmp.lt.s32.totalorder %s13, 3
      %s136 = scalar_select %p135, %s13, 3
      %s137 = smul.addr %s136, 4
      %s138 = smul.addr %s137, 4
      %s139 = scalar_lea.vmem %s1, %s138
      %p140 = pneg %p60
      %p141 = pneg %p57
      %p142 = pneg %p86
      %p143 = pneg %p83
      %p144 = scmp.lt.s32.totalorder %s13, 3
      %s145 = scalar_select %p144, %s13, 3
      %s146 = smul.addr %s145, 2
      %s147 = smul.addr %s146, 8
      %s148 = scalar_lea.vmem %s2, %s147
      %p149 = scmp.lt.s32.totalorder %s13, 3
      %s150 = scalar_select %p149, %s13, 3
      %s151 = smul.addr %s150, 4
      %s152 = smul.addr %s151, 4
      %s153 = scalar_lea.vmem %s0, %s152
      %p154 = scmp.lt.s32.totalorder %s13, 3
      %s155 = scalar_select %p154, %s13, 3
      %s156 = smul.addr %s155, 4
      %s157 = smul.addr %s156, 4
      %s158 = scalar_lea.vmem %s1, %s157
      %p159 = scmp.lt.s32.totalorder %s13, 3
      %s160 = scalar_select %p159, %s13, 3
      %s161 = smul.addr %s160, 2
      %s162 = smul.addr %s161, 8
      %s163 = scalar_lea.vmem %s2, %s162
      %v165 = vld [vmem:[%s153] sm:$0xff]
      %v166 = vld [vmem:[%s153 + $0x8] sm:$0xff]
      %v167 = vld [vmem:[%s158] sm:$0xff]
      %v168 = vld [vmem:[%s158 + $0x8] sm:$0xff]
      %v171 = vunpack.c.l.b16 %v165
      %v172 = vunpack.c.h.b16 %v165
      %v173 = vunpack.c.l.b16 %v166
      %v174 = vunpack.c.h.b16 %v166
      %v175 = vpack.c.b16 %v173, %v171
      %v176 = vpack.c.b16 %v174, %v172
      %v181 = vunpack.c.l.b16 %v167
      %v182 = vunpack.c.h.b16 %v167
      %v183 = vunpack.c.l.b16 %v168
      %v184 = vunpack.c.h.b16 %v168
      %v185 = vpack.c.b16 %v183, %v181
      %v186 = vpack.c.b16 %v184, %v182
      %189 = vmatpush.bf16.xpose.msra.mxu0 0
      %190 = vmatpush.bf16.xpose.msra.mxu0 0
      %191 = vmatpush.bf16.xpose.msra.mxu0 0
      %192 = vmatpush.bf16.xpose.msra.mxu0 0
      %193 = vmatpush.bf16.xpose.msra.mxu0 0
      %194 = vmatpush.bf16.xpose.msra.mxu0 0
      %195 = vmatpush.bf16.xpose.msra.mxu0 0
      %196 = vmatpush.bf16.xpose.msra.mxu0 %v185
      %197 = vmatmul.bf16.gmra.mxu0 %v175
      %v198 = vpop.f32.mrf.mxu0
      %v199 = vadd.f32 0.0, %v198
      %v200 = vpop.f32.mrf.mxu0
      %v201 = vadd.f32 0.0, %v200
      %202 = vdwg.mxu0
      %203 = vmatpush.bf16.xpose.msra.mxu0 0
      %204 = vmatpush.bf16.xpose.msra.mxu0 0
      %205 = vmatpush.bf16.xpose.msra.mxu0 0
      %206 = vmatpush.bf16.xpose.msra.mxu0 0
      %207 = vmatpush.bf16.xpose.msra.mxu0 0
      %208 = vmatpush.bf16.xpose.msra.mxu0 0
      %209 = vmatpush.bf16.xpose.msra.mxu0 0
      %210 = vmatpush.bf16.xpose.msra.mxu0 %v186
      %211 = vmatmul.bf16.gmra.mxu0 %v176
      %v212 = vpop.f32.mrf.mxu0
      %v213 = vadd.f32 %v199, %v212
      %v214 = vpop.f32.mrf.mxu0
      %v215 = vadd.f32 %v201, %v214
      %216 = vdwg.mxu0
      %vm217 = vcmask 130048
      %218 = vst.msk [vmem:[%s163] sm:$0xff] %vm217, %v213
      %219 = vst.msk [vmem:[%s163 + $0x8] sm:$0xff] %vm217, %v215
      %p220 = scmp.lt.s32.totalorder %s13, 3
      %s221 = scalar_select %p220, %s13, 3
      %s222 = smul.addr %s221, 2
      %s223 = smul.addr %s222, 8
      %s224 = scalar_lea.vmem %s2, %s223
      // Predicated region
      $region29: #{_forward_impl.23} parent=27 // pred_check
        %p225 = pneg %p83
      $region30: #{_forward_impl.23} parent=27 // pred_check_branch
        %227 = sbr.rel (%p225) target = $region32
      $region31: #{_forward_impl.23} parent=27 // pred_region
        _
      $region32: #{_forward_impl.23} parent=27 // pred_fallthru
        _
    $region28: #{_forward_impl.23} parent=5 // pred_fallthru
      _
    %p228 = scmp.le.s32.totalorder 2, %s8
    // Predicated region
    $region33: #{_forward_impl.23} parent=5 // pred_check
      %p229 = pneg %p228
    $region34: #{_forward_impl.23} parent=5 // pred_check_branch
      %231 = sbr.rel (%p229) target = $region36
    $region35: #{_forward_impl.23} parent=5 // pred_region
      %s232 = ssub.s32 %s8, 2
      // Predicated region
      $region37: #{_forward_impl.23} parent=35 // pred_check
        %p233 = pneg %p89
      $region38: #{_forward_impl.23} parent=35 // pred_check_branch
        %235 = sbr.rel (%p233) target = $region40
      $region39: #{_forward_impl.23} parent=35 // pred_region
        %p236 = scmp.lt.s32.totalorder %s14, 3
        %s237 = scalar_select %p236, %s14, 3
        %s238 = smul.addr %s237, 2
        %s239 = smul.addr %s238, 8
        %s240 = scalar_lea.vmem %s2, %s239
      $region40: #{_forward_impl.23} parent=35 // pred_fallthru
        _
    $region36: #{_forward_impl.23} parent=5 // pred_fallthru
      _
  $region6: #{_forward_impl.23} parent=0 // loop_footer
    %s12 = sadd.s32 1, %s8
  $region7: #{_forward_impl.23} parent=0 // loop_footer_branch
    %7 = sbr.rel target = $region3
  $region8: #{_forward_impl.23} parent=0 // loop_exit
    _

</llo_original>
